<compile_context>
chip_gen: v7x
topology: tpu7x:2x2x1
jax: 0.10.0
libtpu: 0.0.40
codegen_flags: <defaults>
</compile_context>

<pallas_src>
import functools

import jax
import jax.numpy as jnp
import numpy as np
from jax import lax
from jax.experimental import pallas as pl
from jax.experimental.pallas import tpu as pltpu

MARGIN = 0.3
EPS = 1e-12


# ---------------------------------------------------------------------------
# Fused kernel: one grid step handles a block of tm anchor rows end-to-end.
# ---------------------------------------------------------------------------
def _aligned_triplet_kernel(xa_ref, sqa_ref, sqb_ref, tcol_ref, tblk_ref, lt_ref,
                            out_ref, *, n_stripes, n_chan):
    L = n_stripes
    C = n_chan
    n = xa_ref.shape[0]
    tm = out_ref.shape[2]
    row0 = pl.multiple_of(pl.program_id(0) * tm, tm)     # first anchor row of this block

    # ---- squared pairwise distances, transposed orientation (N, tm) ----
    xa = xa_ref[...]                                      # (N, D)  all rows
    xb = xa_ref[pl.ds(row0, tm), :]                       # (tm, D) this block's anchors
    gram_t = lax.dot_general(xa, xb, (((1,), (1,)), ((), ())),
                             preferred_element_type=jnp.float32)           # (N, tm)
    d2 = jnp.maximum(sqa_ref[...] + sqb_ref[0] - 2.0 * gram_t, EPS)        # (N, tm)

    # ---- hard positive / negative mining on squared distances ----
    is_pos = tcol_ref[...] == tblk_ref[0]                                  # (N, tm)
    d_pos = jnp.where(is_pos, d2, -jnp.inf)
    d_neg = jnp.where(is_pos, jnp.inf, d2)
    ap2 = jnp.max(d_pos, axis=0, keepdims=True)                            # (1, tm)
    an2 = jnp.min(d_neg, axis=0, keepdims=True)                            # (1, tm)
    dist_ap = jnp.sqrt(ap2)            # sqrt deferred to the reduced rows (feedback #1)
    dist_an = jnp.sqrt(an2)

    row_i = lax.broadcasted_iota(jnp.int32, (n, tm), 0)
    lane_i = lax.broadcasted_iota(jnp.int32, (n, tm), 1)
    big = jnp.int32(n)
    p_ind = jnp.min(jnp.where(d_pos == ap2, row_i, big), axis=0, keepdims=True)  # (1, tm)
    n_ind = jnp.min(jnp.where(d_neg == an2, row_i, big), axis=0, keepdims=True)  # (1, tm)

    # ---- fused one-hot gather: [anchor | hard-pos | hard-neg] in one MXU matmul ----
    onehot = jnp.concatenate(
        [(row_i == lane_i + row0).astype(jnp.float32),
         (row_i == p_ind).astype(jnp.float32),
         (row_i == n_ind).astype(jnp.float32)], axis=1)                    # (N, 3tm)
    feats = jnp.dot(lt_ref[...], onehot, preferred_element_type=jnp.float32)  # (L*C, 3tm)
    feats = feats.reshape(L, C, 3 * tm)
    a_loc = feats[:, :, :tm]           # (L, C, tm)   anchor local features
    y_loc = feats[:, :, tm:]           # (L, C, 2tm)  [hard-pos | hard-neg]

    # ---- local distances: batch in lanes, stripes/channels in sublanes ----
    aa = jnp.sum(a_loc * a_loc, axis=1)                    # (L, tm)   anchor norms (once)
    aa2 = jnp.concatenate([aa, aa], axis=1)                # (L, 2tm)
    bb = jnp.sum(y_loc * y_loc, axis=1)                    # (L, 2tm)
    a2 = jnp.concatenate([a_loc, a_loc], axis=2)           # (L, C, 2tm)

    # dcols[b][a, :] = normalized local distance d[a, b] for the whole (pos|neg) batch.
    dcols = []
    for b in range(L):
        cross = jnp.sum(a2 * y_loc[b:b + 1], axis=1)       # (L, 2tm)
        db2 = jnp.maximum(aa2 + bb[b:b + 1, :] - 2.0 * cross, EPS)
        dcols.append(jnp.tanh(0.5 * jnp.sqrt(db2)))        # == (e^d - 1) / (e^d + 1)

    # ---- shortest-path DP as an anti-diagonal wavefront over (L, 2tm) slabs ----
    # Sublane slot a holds dp[row=a, col=t-a] at diagonal t; invalid slots stay +inf
    # (or finite garbage that never feeds a valid cell).  With the lane-dense layout the
    # DP state is only ceil(2tm/128) vregs per slab, so the pad+slice shift is already
    # negligible (pltpu.roll along sublanes would move it to the XLU if ever needed).
    srow = lax.broadcasted_iota(jnp.int32, (L, 2 * tm), 0)
    inf = jnp.float32(jnp.inf)
    inf_row = jnp.full((1, 2 * tm), inf, jnp.float32)

    def diag_costs(t):                 # (L, 2tm): slot a -> d[a, t - a]
        acc = None
        for b in range(max(0, t - L + 1), min(t, L - 1) + 1):
            term = jnp.where(srow == t - b, dcols[b], 0.0)
            acc = term if acc is None else acc + term
        return acc

    dp = jnp.where(srow == 0, dcols[0], inf)               # t = 0: only cell (0, 0)
    for t in range(1, 2 * L - 1):
        from_up = jnp.concatenate([inf_row, dp[:L - 1, :]], axis=0)
        from_left = jnp.where(srow == t, inf, dp) if t < L else dp
        dp = jnp.minimum(from_left, from_up) + diag_costs(t)

    total = dp[L - 1:L, :]                                 # (1, 2tm)

    # ---- single lane-dense store: rows = [dist_ap, dist_an, local_ap, local_an] ----
    out_ref[...] = jnp.concatenate(
        [dist_ap, dist_an, total[:, :tm], total[:, tm:]], axis=0).reshape(1, 4, tm)


# ---------------------------------------------------------------------------
# Wrapper
# ---------------------------------------------------------------------------
def _pick_row_block(n, max_rows=256):
    """Largest divisor of n (pref. multiple of 8) that keeps >= 2 grid steps when possible."""
    cap = min(max_rows, n)
    if n >= 16:
        cap = min(cap, n // 2)        # >= 2 grid steps -> both v7x TensorCores get work
    best = 0
    for tm in range(cap, 0, -1):
        if n % tm == 0:
            if tm % 8 == 0:
                return tm
            if best == 0:
                best = tm
    return best if best >= 8 else n


def _vmem_limit_bytes():
    # ~3/4 of physical VMEM per TensorCore: ~96 MiB on v5e/v6e (128 MiB), ~48 MiB on v7x.
    try:
        cap = int(pltpu.get_tpu_info().vmem_capacity_bytes)
    except Exception:
        cap = 64 * 1024 * 1024        # conservative (v7x-sized) fallback
    return int(min(cap * 3 // 4, 96 * 1024 * 1024))


def triplet_loss_aligned_reid(inputs, targets, local_features, margin=MARGIN,
                              single_buffer_invariants=True):
    """Mirrors TripletLossAlignedReID.forward (mutual_flag=False).

    inputs:         (N, D)    global features
    targets:        (N,)      integer labels
    local_features: (N, C, L) channels-first local features
    Returns (global_loss, local_loss).
    """
    inputs = inputs.astype(jnp.float32)
    n, d = inputs.shape
    _, c, l = local_features.shape

    tm = _pick_row_block(n)
    g = n // tm

    # Hoisted, grid-invariant prep (one pass each, outside the kernel).
    sq = jnp.sum(inputs * inputs, axis=1)                 # squared norms of every row
    sq_col = sq.reshape(n, 1)                             # column form (distance columns)
    sq_blk = sq.reshape(g, 1, tm)                         # per-block row form
    tgt = targets.astype(jnp.int32)
    tcol = tgt.reshape(n, 1)
    tblk = tgt.reshape(g, 1, tm)
    # (N, C, L) -> (L, C, N) -> (L*C, N): stripe-major rows, batch in lanes.
    local_t = jnp.transpose(local_features.astype(jnp.float32), (2, 1, 0)).reshape(l * c, n)

    def _inv(shape):                                       # grid-invariant full operand
        kwargs = {}
        if single_buffer_invariants:
            kwargs["pipeline_mode"] = pl.Buffered(1)       # no pointless double buffer
        return pl.BlockSpec(shape, lambda i: (0, 0), **kwargs)

    flops = int(2 * n * n * d + 6 * n * n * l * c + 8 * n * l * l * c)
    transcendentals = int(4 * n * l * l + 4 * n)
    bytes_accessed = int(4 * (n * d + n * l * c + 8 * n))

    out = pl.pallas_call(
        functools.partial(_aligned_triplet_kernel, n_stripes=l, n_chan=c),
        grid=(g,),
        in_specs=[
            _inv((n, d)),                                   # all global features
            _inv((n, 1)),                                   # squared norms (columns)
            pl.BlockSpec((1, 1, tm), lambda i: (i, 0, 0)),  # squared norms (block row)
            _inv((n, 1)),                                   # labels (columns)
            pl.BlockSpec((1, 1, tm), lambda i: (i, 0, 0)),  # labels (block row)
            _inv((l * c, n)),                               # local features, transposed
        ],
        out_specs=pl.BlockSpec((1, 4, tm), lambda i: (i, 0, 0)),
        out_shape=jax.ShapeDtypeStruct((g, 4, tm), jnp.float32),
        compiler_params=pltpu.CompilerParams(
            dimension_semantics=("parallel",),
            vmem_limit_bytes=_vmem_limit_bytes()),
        cost_estimate=pl.CostEstimate(flops=flops,
                                      transcendentals=transcendentals,
                                      bytes_accessed=bytes_accessed),
    )(inputs, sq_col, sq_blk, tcol, tblk, local_t)

    # out[g, q, i]: q = 0..3 -> dist_ap, dist_an, local_ap, local_an for anchor g*tm+i.
    res = out.transpose(1, 0, 2).reshape(4, n)
    dist_ap, dist_an, l_ap, l_an = res[0], res[1], res[2], res[3]

    # MarginRankingLoss(x1=dist_an, x2=dist_ap, y=1), mean reduction.  Tiny epilogue on
    # (N,) vectors, kept outside so the row-block axis stays "parallel".
    g_loss = jnp.mean(jnp.maximum(dist_ap - dist_an + margin, 0.0))
    l_loss = jnp.mean(jnp.maximum(l_ap - l_an + margin, 0.0))
    # TODO(synk): mutual_flag=True branch (also returning the full dist matrix) not implemented.
    return g_loss, l_loss


# ---------------------------------------------------------------------------
# Pure numpy reference (mirrors the PyTorch forward exactly)
# ---------------------------------------------------------------------------
def _reference(inputs, targets, local_features, margin=MARGIN):
    x = np.asarray(inputs, np.float64)
    t = np.asarray(targets)
    lf = np.transpose(np.asarray(local_features, np.float64), (0, 2, 1))

    sq = (x ** 2).sum(1)
    dist = np.sqrt(np.maximum(sq[:, None] + sq[None, :] - 2.0 * x @ x.T, 1e-12))
    is_pos = t[:, None] == t[None, :]
    dist_ap = np.where(is_pos, dist, -np.inf).max(1)
    dist_an = np.where(~is_pos, dist, np.inf).min(1)
    p_inds = np.where(is_pos, dist, -np.inf).argmax(1)
    n_inds = np.where(~is_pos, dist, np.inf).argmin(1)

    def local_dist(a, b):
        aa = (a ** 2).sum(-1)[:, :, None]
        bb = (b ** 2).sum(-1)[:, None, :]
        d = np.sqrt(np.maximum(aa + bb - 2.0 * np.einsum('iad,ibd->iab', a, b), 1e-12))
        d = (np.exp(d) - 1.0) / (np.exp(d) + 1.0)
        length = d.shape[1]
        dp = [[None] * length for _ in range(length)]
        for i in range(length):
            for j in range(length):
                if i == 0 and j == 0:
                    dp[i][j] = d[:, i, j]
                elif i == 0:
                    dp[i][j] = dp[i][j - 1] + d[:, i, j]
                elif j == 0:
                    dp[i][j] = dp[i - 1][j] + d[:, i, j]
                else:
                    dp[i][j] = np.minimum(dp[i - 1][j], dp[i][j - 1]) + d[:, i, j]
        return dp[-1][-1]

    l_ap = local_dist(lf, lf[p_inds])
    l_an = local_dist(lf, lf[n_inds])
    g = np.maximum(dist_ap - dist_an + margin, 0.0).mean()
    l = np.maximum(l_ap - l_an + margin, 0.0).mean()
    return g, l


if __name__ == "__main__":
    key = jax.random.PRNGKey(0)
    k1, k2 = jax.random.split(key)

    # batch, global feat dim, local channels, #stripes (P x K = 16 x 4 sampling)
    N, D, C, L = 64, 128, 32, 8
    inputs = jax.random.normal(k1, (N, D), jnp.float32)
    targets = jnp.repeat(jnp.arange(N // 4, dtype=jnp.int32), 4)
    local_features = jax.random.normal(k2, (N, C, L), jnp.float32)

    g_ref, l_ref = _reference(inputs, targets, local_features)

    def _run(single_buffer):
        fn = jax.jit(functools.partial(triplet_loss_aligned_reid,
                                       single_buffer_invariants=single_buffer))
        g, l = jax.block_until_ready(fn(inputs, targets, local_features))
        g, l = float(g), float(l)
        np.testing.assert_allclose(g, g_ref, rtol=5e-2, atol=5e-2)
        np.testing.assert_allclose(l, l_ref, rtol=5e-2, atol=5e-2)
        return g, l

    try:
        gloss, lloss = _run(True)
    except Exception:
        # pipeline_mode=pl.Buffered(1) (single-buffering of grid-invariant operands) is
        # a recent knob; fall back to default double buffering if this build rejects it.
        gloss, lloss = _run(False)

    print("KERNEL_OK")
</pallas_src>

<mosaic_0001>
module attributes {stable_mosaic.version = 11 : i64} {
  func.func @_aligned_triplet_kernel(%arg0: i32, %arg1: memref<64x128xf32, #tpu.memory_space<vmem>>, %arg2: memref<64x1xf32, #tpu.memory_space<vmem>>, %arg3: memref<1x1x32xf32, #tpu.memory_space<vmem>>, %arg4: memref<64x1xi32, #tpu.memory_space<vmem>>, %arg5: memref<1x1x32xi32, #tpu.memory_space<vmem>>, %arg6: memref<256x64xf32, #tpu.memory_space<vmem>>, %arg7: memref<1x4x32xf32, #tpu.memory_space<vmem>>) attributes {dimension_semantics = [#tpu.dimension_semantics<parallel>], iteration_bounds = array<i64: 2>, scalar_prefetch = 0 : i64, scratch_operands = 0 : i64, tpu.core_type = #tpu.core_type<tc>, window_params = [{pipeline_mode = #tpu.pipeline_mode<synchronous>, transform_indices = @transform_0, window_bounds = array<i64: 64, 128>}, {pipeline_mode = #tpu.pipeline_mode<synchronous>, transform_indices = @transform_1, window_bounds = array<i64: 64, 1>}, {transform_indices = @transform_2, window_bounds = array<i64: 1, 1, 32>}, {pipeline_mode = #tpu.pipeline_mode<synchronous>, transform_indices = @transform_3, window_bounds = array<i64: 64, 1>}, {transform_indices = @transform_4, window_bounds = array<i64: 1, 1, 32>}, {pipeline_mode = #tpu.pipeline_mode<synchronous>, transform_indices = @transform_5, window_bounds = array<i64: 256, 64>}, {transform_indices = @transform_6, window_bounds = array<i64: 1, 4, 32>}]} {
    %c32_i32 = arith.constant 32 : i32
    %0 = arith.muli %arg0, %c32_i32 : i32
    %1 = tpu.assume_multiple %0, 32 : i32
    %c0 = arith.constant 0 : index
    %c0_0 = arith.constant 0 : index
    %2 = vector.load %arg1[%c0, %c0_0] : memref<64x128xf32, #tpu.memory_space<vmem>>, vector<64x128xf32>
    %3 = arith.index_cast %1 : i32 to index
    %c0_1 = arith.constant 0 : index
    %4 = vector.load %arg1[%3, %c0_1] : memref<64x128xf32, #tpu.memory_space<vmem>>, vector<32x128xf32>
    %cst = arith.constant dense<0.000000e+00> : vector<64x32xf32>
    %5 = tpu.matmul %2, %4, %cst {dimension_numbers = #tpu.dot_dimension_numbers<[1], [1], [0], [0], [0, 0, 1, 0], [], []>} : vector<64x128xf32>, vector<32x128xf32>, vector<64x32xf32> -> vector<64x32xf32>
    %c0_2 = arith.constant 0 : index
    %c0_3 = arith.constant 0 : index
    %6 = vector.load %arg2[%c0_2, %c0_3] : memref<64x1xf32, #tpu.memory_space<vmem>>, vector<64x1xf32>
    %c0_4 = arith.constant 0 : index
    %c0_5 = arith.constant 0 : index
    %c0_6 = arith.constant 0 : index
    %7 = vector.load %arg3[%c0_4, %c0_5, %c0_6] : memref<1x1x32xf32, #tpu.memory_space<vmem>>, vector<1x1x32xf32>
    %8 = vector.shape_cast %7 : vector<1x1x32xf32> to vector<1x32xf32>
    %9 = vector.broadcast %6 : vector<64x1xf32> to vector<64x32xf32>
    %10 = vector.broadcast %8 : vector<1x32xf32> to vector<64x32xf32>
    %11 = arith.addf %9, %10 : vector<64x32xf32>
    %cst_7 = arith.constant 2.000000e+00 : f32
    %12 = vector.broadcast %cst_7 : f32 to vector<64x32xf32>
    %13 = arith.mulf %12, %5 : vector<64x32xf32>
    %14 = arith.subf %11, %13 : vector<64x32xf32>
    %cst_8 = arith.constant 9.99999996E-13 : f32
    %15 = vector.broadcast %cst_8 : f32 to vector<64x32xf32>
    %16 = arith.maximumf %14, %15 : vector<64x32xf32>
    %c0_9 = arith.constant 0 : index
    %c0_10 = arith.constant 0 : index
    %17 = vector.load %arg4[%c0_9, %c0_10] : memref<64x1xi32, #tpu.memory_space<vmem>>, vector<64x1xi32>
    %c0_11 = arith.constant 0 : index
    %c0_12 = arith.constant 0 : index
    %c0_13 = arith.constant 0 : index
    %18 = vector.load %arg5[%c0_11, %c0_12, %c0_13] : memref<1x1x32xi32, #tpu.memory_space<vmem>>, vector<1x1x32xi32>
    %19 = vector.shape_cast %18 : vector<1x1x32xi32> to vector<1x32xi32>
    %20 = vector.broadcast %17 : vector<64x1xi32> to vector<64x32xi32>
    %21 = vector.broadcast %19 : vector<1x32xi32> to vector<64x32xi32>
    %22 = arith.cmpi eq, %20, %21 : vector<64x32xi32>
    %cst_14 = arith.constant 0xFF800000 : f32
    %23 = vector.broadcast %cst_14 : f32 to vector<64x32xf32>
    %24 = arith.select %22, %16, %23 : vector<64x32xi1>, vector<64x32xf32>
    %cst_15 = arith.constant 0x7F800000 : f32
    %25 = vector.broadcast %cst_15 : f32 to vector<64x32xf32>
    %26 = arith.select %22, %25, %16 : vector<64x32xi1>, vector<64x32xf32>
    %cst_16 = arith.constant dense<0xFF800000> : vector<32xf32>
    %27 = vector.multi_reduction <maximumf>, %24, %cst_16 [0] : vector<64x32xf32> to vector<32xf32>
    %28 = vector.shape_cast %27 : vector<32xf32> to vector<1x32xf32>
    %cst_17 = arith.constant dense<0x7F800000> : vector<32xf32>
    %29 = vector.multi_reduction <minimumf>, %26, %cst_17 [0] : vector<64x32xf32> to vector<32xf32>
    %30 = vector.shape_cast %29 : vector<32xf32> to vector<1x32xf32>
    %31 = math.sqrt %28 : vector<1x32xf32>
    %32 = math.sqrt %30 : vector<1x32xf32>
    %33 = tpu.iota {dimensions = array<i32: 0>} : vector<64x32xi32>
    %34 = tpu.iota {dimensions = array<i32: 1>} : vector<64x32xi32>
    %35 = vector.broadcast %28 : vector<1x32xf32> to vector<64x32xf32>
    %36 = arith.cmpf oeq, %24, %35 : vector<64x32xf32>
    %c64_i32 = arith.constant 64 : i32
    %37 = vector.broadcast %c64_i32 : i32 to vector<64x32xi32>
    %38 = arith.select %36, %33, %37 : vector<64x32xi1>, vector<64x32xi32>
    %cst_18 = arith.constant dense<2147483647> : vector<32xi32>
    %39 = vector.multi_reduction <minsi>, %38, %cst_18 [0] : vector<64x32xi32> to vector<32xi32>
    %40 = vector.shape_cast %39 : vector<32xi32> to vector<1x32xi32>
    %41 = vector.broadcast %30 : vector<1x32xf32> to vector<64x32xf32>
    %42 = arith.cmpf oeq, %26, %41 : vector<64x32xf32>
    %c64_i32_19 = arith.constant 64 : i32
    %43 = vector.broadcast %c64_i32_19 : i32 to vector<64x32xi32>
    %44 = arith.select %42, %33, %43 : vector<64x32xi1>, vector<64x32xi32>
    %cst_20 = arith.constant dense<2147483647> : vector<32xi32>
    %45 = vector.multi_reduction <minsi>, %44, %cst_20 [0] : vector<64x32xi32> to vector<32xi32>
    %46 = vector.shape_cast %45 : vector<32xi32> to vector<1x32xi32>
    %47 = vector.broadcast %1 : i32 to vector<64x32xi32>
    %48 = arith.addi %34, %47 : vector<64x32xi32>
    %49 = arith.cmpi eq, %33, %48 : vector<64x32xi32>
    %50 = arith.extui %49 : vector<64x32xi1> to vector<64x32xi32>
    %51 = arith.sitofp %50 : vector<64x32xi32> to vector<64x32xf32>
    %52 = vector.broadcast %40 : vector<1x32xi32> to vector<64x32xi32>
    %53 = arith.cmpi eq, %33, %52 : vector<64x32xi32>
    %54 = arith.extui %53 : vector<64x32xi1> to vector<64x32xi32>
    %55 = arith.sitofp %54 : vector<64x32xi32> to vector<64x32xf32>
    %56 = vector.broadcast %46 : vector<1x32xi32> to vector<64x32xi32>
    %57 = arith.cmpi eq, %33, %56 : vector<64x32xi32>
    %58 = arith.extui %57 : vector<64x32xi1> to vector<64x32xi32>
    %59 = arith.sitofp %58 : vector<64x32xi32> to vector<64x32xf32>
    %60 = tpu.concatenate %51, %55, %59 in 1 : vector<64x32xf32>, vector<64x32xf32>, vector<64x32xf32> -> vector<64x96xf32>
    %c0_21 = arith.constant 0 : index
    %c0_22 = arith.constant 0 : index
    %61 = vector.load %arg6[%c0_21, %c0_22] : memref<256x64xf32, #tpu.memory_space<vmem>>, vector<256x64xf32>
    %cst_23 = arith.constant dense<0.000000e+00> : vector<256x96xf32>
    %62 = tpu.matmul %61, %60, %cst_23 {dimension_numbers = #tpu.dot_dimension_numbers<[1], [0], [0], [1], [0, 0, 1, 1], [], []>} : vector<256x64xf32>, vector<64x96xf32>, vector<256x96xf32> -> vector<256x96xf32>
    %63 = vector.shape_cast %62 : vector<256x96xf32> to vector<8x32x96xf32>
    %64 = vector.extract_strided_slice %63 {offsets = [0, 0, 0], sizes = [8, 32, 32], strides = [1, 1, 1]} : vector<8x32x96xf32> to vector<8x32x32xf32>
    %65 = vector.extract_strided_slice %63 {offsets = [0, 0, 32], sizes = [8, 32, 64], strides = [1, 1, 1]} : vector<8x32x96xf32> to vector<8x32x64xf32>
    %66 = arith.mulf %64, %64 : vector<8x32x32xf32>
    %cst_24 = arith.constant dense<0.000000e+00> : vector<8x32xf32>
    %67 = vector.multi_reduction <add>, %66, %cst_24 [1] : vector<8x32x32xf32> to vector<8x32xf32>
    %68 = tpu.concatenate %67, %67 in 1 : vector<8x32xf32>, vector<8x32xf32> -> vector<8x64xf32>
    %69 = arith.mulf %65, %65 : vector<8x32x64xf32>
    %cst_25 = arith.constant dense<0.000000e+00> : vector<8x64xf32>
    %70 = vector.multi_reduction <add>, %69, %cst_25 [1] : vector<8x32x64xf32> to vector<8x64xf32>
    %71 = tpu.concatenate %64, %64 in 2 : vector<8x32x32xf32>, vector<8x32x32xf32> -> vector<8x32x64xf32>
    %72 = vector.extract_strided_slice %65 {offsets = [0, 0, 0], sizes = [1, 32, 64], strides = [1, 1, 1]} : vector<8x32x64xf32> to vector<1x32x64xf32>
    %73 = vector.broadcast %72 : vector<1x32x64xf32> to vector<8x32x64xf32>
    %74 = arith.mulf %71, %73 : vector<8x32x64xf32>
    %cst_26 = arith.constant dense<0.000000e+00> : vector<8x64xf32>
    %75 = vector.multi_reduction <add>, %74, %cst_26 [1] : vector<8x32x64xf32> to vector<8x64xf32>
    %76 = vector.extract_strided_slice %70 {offsets = [0, 0], sizes = [1, 64], strides = [1, 1]} : vector<8x64xf32> to vector<1x64xf32>
    %77 = vector.broadcast %76 : vector<1x64xf32> to vector<8x64xf32>
    %78 = arith.addf %68, %77 : vector<8x64xf32>
    %cst_27 = arith.constant 2.000000e+00 : f32
    %79 = vector.broadcast %cst_27 : f32 to vector<8x64xf32>
    %80 = arith.mulf %79, %75 : vector<8x64xf32>
    %81 = arith.subf %78, %80 : vector<8x64xf32>
    %cst_28 = arith.constant 9.99999996E-13 : f32
    %82 = vector.broadcast %cst_28 : f32 to vector<8x64xf32>
    %83 = arith.maximumf %81, %82 : vector<8x64xf32>
    %84 = math.sqrt %83 : vector<8x64xf32>
    %cst_29 = arith.constant 5.000000e-01 : f32
    %85 = vector.broadcast %cst_29 : f32 to vector<8x64xf32>
    %86 = arith.mulf %85, %84 : vector<8x64xf32>
    %87 = math.tanh %86 : vector<8x64xf32>
    %88 = vector.extract_strided_slice %65 {offsets = [1, 0, 0], sizes = [1, 32, 64], strides = [1, 1, 1]} : vector<8x32x64xf32> to vector<1x32x64xf32>
    %89 = vector.broadcast %88 : vector<1x32x64xf32> to vector<8x32x64xf32>
    %90 = arith.mulf %71, %89 : vector<8x32x64xf32>
    %cst_30 = arith.constant dense<0.000000e+00> : vector<8x64xf32>
    %91 = vector.multi_reduction <add>, %90, %cst_30 [1] : vector<8x32x64xf32> to vector<8x64xf32>
    %92 = vector.extract_strided_slice %70 {offsets = [1, 0], sizes = [1, 64], strides = [1, 1]} : vector<8x64xf32> to vector<1x64xf32>
    %93 = vector.broadcast %92 : vector<1x64xf32> to vector<8x64xf32>
    %94 = arith.addf %68, %93 : vector<8x64xf32>
    %cst_31 = arith.constant 2.000000e+00 : f32
    %95 = vector.broadcast %cst_31 : f32 to vector<8x64xf32>
    %96 = arith.mulf %95, %91 : vector<8x64xf32>
    %97 = arith.subf %94, %96 : vector<8x64xf32>
    %cst_32 = arith.constant 9.99999996E-13 : f32
    %98 = vector.broadcast %cst_32 : f32 to vector<8x64xf32>
    %99 = arith.maximumf %97, %98 : vector<8x64xf32>
    %100 = math.sqrt %99 : vector<8x64xf32>
    %cst_33 = arith.constant 5.000000e-01 : f32
    %101 = vector.broadcast %cst_33 : f32 to vector<8x64xf32>
    %102 = arith.mulf %101, %100 : vector<8x64xf32>
    %103 = math.tanh %102 : vector<8x64xf32>
    %104 = vector.extract_strided_slice %65 {offsets = [2, 0, 0], sizes = [1, 32, 64], strides = [1, 1, 1]} : vector<8x32x64xf32> to vector<1x32x64xf32>
    %105 = vector.broadcast %104 : vector<1x32x64xf32> to vector<8x32x64xf32>
    %106 = arith.mulf %71, %105 : vector<8x32x64xf32>
    %cst_34 = arith.constant dense<0.000000e+00> : vector<8x64xf32>
    %107 = vector.multi_reduction <add>, %106, %cst_34 [1] : vector<8x32x64xf32> to vector<8x64xf32>
    %108 = vector.extract_strided_slice %70 {offsets = [2, 0], sizes = [1, 64], strides = [1, 1]} : vector<8x64xf32> to vector<1x64xf32>
    %109 = vector.broadcast %108 : vector<1x64xf32> to vector<8x64xf32>
    %110 = arith.addf %68, %109 : vector<8x64xf32>
    %cst_35 = arith.constant 2.000000e+00 : f32
    %111 = vector.broadcast %cst_35 : f32 to vector<8x64xf32>
    %112 = arith.mulf %111, %107 : vector<8x64xf32>
    %113 = arith.subf %110, %112 : vector<8x64xf32>
    %cst_36 = arith.constant 9.99999996E-13 : f32
    %114 = vector.broadcast %cst_36 : f32 to vector<8x64xf32>
    %115 = arith.maximumf %113, %114 : vector<8x64xf32>
    %116 = math.sqrt %115 : vector<8x64xf32>
    %cst_37 = arith.constant 5.000000e-01 : f32
    %117 = vector.broadcast %cst_37 : f32 to vector<8x64xf32>
    %118 = arith.mulf %117, %116 : vector<8x64xf32>
    %119 = math.tanh %118 : vector<8x64xf32>
    %120 = vector.extract_strided_slice %65 {offsets = [3, 0, 0], sizes = [1, 32, 64], strides = [1, 1, 1]} : vector<8x32x64xf32> to vector<1x32x64xf32>
    %121 = vector.broadcast %120 : vector<1x32x64xf32> to vector<8x32x64xf32>
    %122 = arith.mulf %71, %121 : vector<8x32x64xf32>
    %cst_38 = arith.constant dense<0.000000e+00> : vector<8x64xf32>
    %123 = vector.multi_reduction <add>, %122, %cst_38 [1] : vector<8x32x64xf32> to vector<8x64xf32>
    %124 = vector.extract_strided_slice %70 {offsets = [3, 0], sizes = [1, 64], strides = [1, 1]} : vector<8x64xf32> to vector<1x64xf32>
    %125 = vector.broadcast %124 : vector<1x64xf32> to vector<8x64xf32>
    %126 = arith.addf %68, %125 : vector<8x64xf32>
    %cst_39 = arith.constant 2.000000e+00 : f32
    %127 = vector.broadcast %cst_39 : f32 to vector<8x64xf32>
    %128 = arith.mulf %127, %123 : vector<8x64xf32>
    %129 = arith.subf %126, %128 : vector<8x64xf32>
    %cst_40 = arith.constant 9.99999996E-13 : f32
    %130 = vector.broadcast %cst_40 : f32 to vector<8x64xf32>
    %131 = arith.maximumf %129, %130 : vector<8x64xf32>
    %132 = math.sqrt %131 : vector<8x64xf32>
    %cst_41 = arith.constant 5.000000e-01 : f32
    %133 = vector.broadcast %cst_41 : f32 to vector<8x64xf32>
    %134 = arith.mulf %133, %132 : vector<8x64xf32>
    %135 = math.tanh %134 : vector<8x64xf32>
    %136 = vector.extract_strided_slice %65 {offsets = [4, 0, 0], sizes = [1, 32, 64], strides = [1, 1, 1]} : vector<8x32x64xf32> to vector<1x32x64xf32>
    %137 = vector.broadcast %136 : vector<1x32x64xf32> to vector<8x32x64xf32>
    %138 = arith.mulf %71, %137 : vector<8x32x64xf32>
    %cst_42 = arith.constant dense<0.000000e+00> : vector<8x64xf32>
    %139 = vector.multi_reduction <add>, %138, %cst_42 [1] : vector<8x32x64xf32> to vector<8x64xf32>
    %140 = vector.extract_strided_slice %70 {offsets = [4, 0], sizes = [1, 64], strides = [1, 1]} : vector<8x64xf32> to vector<1x64xf32>
    %141 = vector.broadcast %140 : vector<1x64xf32> to vector<8x64xf32>
    %142 = arith.addf %68, %141 : vector<8x64xf32>
    %cst_43 = arith.constant 2.000000e+00 : f32
    %143 = vector.broadcast %cst_43 : f32 to vector<8x64xf32>
    %144 = arith.mulf %143, %139 : vector<8x64xf32>
    %145 = arith.subf %142, %144 : vector<8x64xf32>
    %cst_44 = arith.constant 9.99999996E-13 : f32
    %146 = vector.broadcast %cst_44 : f32 to vector<8x64xf32>
    %147 = arith.maximumf %145, %146 : vector<8x64xf32>
    %148 = math.sqrt %147 : vector<8x64xf32>
    %cst_45 = arith.constant 5.000000e-01 : f32
    %149 = vector.broadcast %cst_45 : f32 to vector<8x64xf32>
    %150 = arith.mulf %149, %148 : vector<8x64xf32>
    %151 = math.tanh %150 : vector<8x64xf32>
    %152 = vector.extract_strided_slice %65 {offsets = [5, 0, 0], sizes = [1, 32, 64], strides = [1, 1, 1]} : vector<8x32x64xf32> to vector<1x32x64xf32>
    %153 = vector.broadcast %152 : vector<1x32x64xf32> to vector<8x32x64xf32>
    %154 = arith.mulf %71, %153 : vector<8x32x64xf32>
    %cst_46 = arith.constant dense<0.000000e+00> : vector<8x64xf32>
    %155 = vector.multi_reduction <add>, %154, %cst_46 [1] : vector<8x32x64xf32> to vector<8x64xf32>
    %156 = vector.extract_strided_slice %70 {offsets = [5, 0], sizes = [1, 64], strides = [1, 1]} : vector<8x64xf32> to vector<1x64xf32>
    %157 = vector.broadcast %156 : vector<1x64xf32> to vector<8x64xf32>
    %158 = arith.addf %68, %157 : vector<8x64xf32>
    %cst_47 = arith.constant 2.000000e+00 : f32
    %159 = vector.broadcast %cst_47 : f32 to vector<8x64xf32>
    %160 = arith.mulf %159, %155 : vector<8x64xf32>
    %161 = arith.subf %158, %160 : vector<8x64xf32>
    %cst_48 = arith.constant 9.99999996E-13 : f32
    %162 = vector.broadcast %cst_48 : f32 to vector<8x64xf32>
    %163 = arith.maximumf %161, %162 : vector<8x64xf32>
    %164 = math.sqrt %163 : vector<8x64xf32>
    %cst_49 = arith.constant 5.000000e-01 : f32
    %165 = vector.broadcast %cst_49 : f32 to vector<8x64xf32>
    %166 = arith.mulf %165, %164 : vector<8x64xf32>
    %167 = math.tanh %166 : vector<8x64xf32>
    %168 = vector.extract_strided_slice %65 {offsets = [6, 0, 0], sizes = [1, 32, 64], strides = [1, 1, 1]} : vector<8x32x64xf32> to vector<1x32x64xf32>
    %169 = vector.broadcast %168 : vector<1x32x64xf32> to vector<8x32x64xf32>
    %170 = arith.mulf %71, %169 : vector<8x32x64xf32>
    %cst_50 = arith.constant dense<0.000000e+00> : vector<8x64xf32>
    %171 = vector.multi_reduction <add>, %170, %cst_50 [1] : vector<8x32x64xf32> to vector<8x64xf32>
    %172 = vector.extract_strided_slice %70 {offsets = [6, 0], sizes = [1, 64], strides = [1, 1]} : vector<8x64xf32> to vector<1x64xf32>
    %173 = vector.broadcast %172 : vector<1x64xf32> to vector<8x64xf32>
    %174 = arith.addf %68, %173 : vector<8x64xf32>
    %cst_51 = arith.constant 2.000000e+00 : f32
    %175 = vector.broadcast %cst_51 : f32 to vector<8x64xf32>
    %176 = arith.mulf %175, %171 : vector<8x64xf32>
    %177 = arith.subf %174, %176 : vector<8x64xf32>
    %cst_52 = arith.constant 9.99999996E-13 : f32
    %178 = vector.broadcast %cst_52 : f32 to vector<8x64xf32>
    %179 = arith.maximumf %177, %178 : vector<8x64xf32>
    %180 = math.sqrt %179 : vector<8x64xf32>
    %cst_53 = arith.constant 5.000000e-01 : f32
    %181 = vector.broadcast %cst_53 : f32 to vector<8x64xf32>
    %182 = arith.mulf %181, %180 : vector<8x64xf32>
    %183 = math.tanh %182 : vector<8x64xf32>
    %184 = vector.extract_strided_slice %65 {offsets = [7, 0, 0], sizes = [1, 32, 64], strides = [1, 1, 1]} : vector<8x32x64xf32> to vector<1x32x64xf32>
    %185 = vector.broadcast %184 : vector<1x32x64xf32> to vector<8x32x64xf32>
    %186 = arith.mulf %71, %185 : vector<8x32x64xf32>
    %cst_54 = arith.constant dense<0.000000e+00> : vector<8x64xf32>
    %187 = vector.multi_reduction <add>, %186, %cst_54 [1] : vector<8x32x64xf32> to vector<8x64xf32>
    %188 = vector.extract_strided_slice %70 {offsets = [7, 0], sizes = [1, 64], strides = [1, 1]} : vector<8x64xf32> to vector<1x64xf32>
    %189 = vector.broadcast %188 : vector<1x64xf32> to vector<8x64xf32>
    %190 = arith.addf %68, %189 : vector<8x64xf32>
    %cst_55 = arith.constant 2.000000e+00 : f32
    %191 = vector.broadcast %cst_55 : f32 to vector<8x64xf32>
    %192 = arith.mulf %191, %187 : vector<8x64xf32>
    %193 = arith.subf %190, %192 : vector<8x64xf32>
    %cst_56 = arith.constant 9.99999996E-13 : f32
    %194 = vector.broadcast %cst_56 : f32 to vector<8x64xf32>
    %195 = arith.maximumf %193, %194 : vector<8x64xf32>
    %196 = math.sqrt %195 : vector<8x64xf32>
    %cst_57 = arith.constant 5.000000e-01 : f32
    %197 = vector.broadcast %cst_57 : f32 to vector<8x64xf32>
    %198 = arith.mulf %197, %196 : vector<8x64xf32>
    %199 = math.tanh %198 : vector<8x64xf32>
    %200 = tpu.iota {dimensions = array<i32: 0>} : vector<8x64xi32>
    %cst_58 = arith.constant 0x7F800000 : f32
    %201 = vector.broadcast %cst_58 : f32 to vector<1x64xf32>
    %c0_i32 = arith.constant 0 : i32
    %202 = vector.broadcast %c0_i32 : i32 to vector<8x64xi32>
    %203 = arith.cmpi eq, %200, %202 : vector<8x64xi32>
    %cst_59 = arith.constant 0x7F800000 : f32
    %204 = vector.broadcast %cst_59 : f32 to vector<8x64xf32>
    %205 = arith.select %203, %87, %204 : vector<8x64xi1>, vector<8x64xf32>
    %206 = vector.extract_strided_slice %205 {offsets = [0, 0], sizes = [7, 64], strides = [1, 1]} : vector<8x64xf32> to vector<7x64xf32>
    %207 = tpu.concatenate %201, %206 in 0 : vector<1x64xf32>, vector<7x64xf32> -> vector<8x64xf32>
    %c1_i32 = arith.constant 1 : i32
    %208 = vector.broadcast %c1_i32 : i32 to vector<8x64xi32>
    %209 = arith.cmpi eq, %200, %208 : vector<8x64xi32>
    %cst_60 = arith.constant 0x7F800000 : f32
    %210 = vector.broadcast %cst_60 : f32 to vector<8x64xf32>
    %211 = arith.select %209, %210, %205 : vector<8x64xi1>, vector<8x64xf32>
    %212 = arith.minimumf %211, %207 : vector<8x64xf32>
    %c1_i32_61 = arith.constant 1 : i32
    %213 = vector.broadcast %c1_i32_61 : i32 to vector<8x64xi32>
    %214 = arith.cmpi eq, %200, %213 : vector<8x64xi32>
    %cst_62 = arith.constant 0.000000e+00 : f32
    %215 = vector.broadcast %cst_62 : f32 to vector<8x64xf32>
    %216 = arith.select %214, %87, %215 : vector<8x64xi1>, vector<8x64xf32>
    %c0_i32_63 = arith.constant 0 : i32
    %217 = vector.broadcast %c0_i32_63 : i32 to vector<8x64xi32>
    %218 = arith.cmpi eq, %200, %217 : vector<8x64xi32>
    %cst_64 = arith.constant 0.000000e+00 : f32
    %219 = vector.broadcast %cst_64 : f32 to vector<8x64xf32>
    %220 = arith.select %218, %103, %219 : vector<8x64xi1>, vector<8x64xf32>
    %221 = arith.addf %216, %220 : vector<8x64xf32>
    %222 = arith.addf %212, %221 : vector<8x64xf32>
    %223 = vector.extract_strided_slice %222 {offsets = [0, 0], sizes = [7, 64], strides = [1, 1]} : vector<8x64xf32> to vector<7x64xf32>
    %224 = tpu.concatenate %201, %223 in 0 : vector<1x64xf32>, vector<7x64xf32> -> vector<8x64xf32>
    %c2_i32 = arith.constant 2 : i32
    %225 = vector.broadcast %c2_i32 : i32 to vector<8x64xi32>
    %226 = arith.cmpi eq, %200, %225 : vector<8x64xi32>
    %cst_65 = arith.constant 0x7F800000 : f32
    %227 = vector.broadcast %cst_65 : f32 to vector<8x64xf32>
    %228 = arith.select %226, %227, %222 : vector<8x64xi1>, vector<8x64xf32>
    %229 = arith.minimumf %228, %224 : vector<8x64xf32>
    %c2_i32_66 = arith.constant 2 : i32
    %230 = vector.broadcast %c2_i32_66 : i32 to vector<8x64xi32>
    %231 = arith.cmpi eq, %200, %230 : vector<8x64xi32>
    %cst_67 = arith.constant 0.000000e+00 : f32
    %232 = vector.broadcast %cst_67 : f32 to vector<8x64xf32>
    %233 = arith.select %231, %87, %232 : vector<8x64xi1>, vector<8x64xf32>
    %c1_i32_68 = arith.constant 1 : i32
    %234 = vector.broadcast %c1_i32_68 : i32 to vector<8x64xi32>
    %235 = arith.cmpi eq, %200, %234 : vector<8x64xi32>
    %cst_69 = arith.constant 0.000000e+00 : f32
    %236 = vector.broadcast %cst_69 : f32 to vector<8x64xf32>
    %237 = arith.select %235, %103, %236 : vector<8x64xi1>, vector<8x64xf32>
    %238 = arith.addf %233, %237 : vector<8x64xf32>
    %c0_i32_70 = arith.constant 0 : i32
    %239 = vector.broadcast %c0_i32_70 : i32 to vector<8x64xi32>
    %240 = arith.cmpi eq, %200, %239 : vector<8x64xi32>
    %cst_71 = arith.constant 0.000000e+00 : f32
    %241 = vector.broadcast %cst_71 : f32 to vector<8x64xf32>
    %242 = arith.select %240, %119, %241 : vector<8x64xi1>, vector<8x64xf32>
    %243 = arith.addf %238, %242 : vector<8x64xf32>
    %244 = arith.addf %229, %243 : vector<8x64xf32>
    %245 = vector.extract_strided_slice %244 {offsets = [0, 0], sizes = [7, 64], strides = [1, 1]} : vector<8x64xf32> to vector<7x64xf32>
    %246 = tpu.concatenate %201, %245 in 0 : vector<1x64xf32>, vector<7x64xf32> -> vector<8x64xf32>
    %c3_i32 = arith.constant 3 : i32
    %247 = vector.broadcast %c3_i32 : i32 to vector<8x64xi32>
    %248 = arith.cmpi eq, %200, %247 : vector<8x64xi32>
    %cst_72 = arith.constant 0x7F800000 : f32
    %249 = vector.broadcast %cst_72 : f32 to vector<8x64xf32>
    %250 = arith.select %248, %249, %244 : vector<8x64xi1>, vector<8x64xf32>
    %251 = arith.minimumf %250, %246 : vector<8x64xf32>
    %c3_i32_73 = arith.constant 3 : i32
    %252 = vector.broadcast %c3_i32_73 : i32 to vector<8x64xi32>
    %253 = arith.cmpi eq, %200, %252 : vector<8x64xi32>
    %cst_74 = arith.constant 0.000000e+00 : f32
    %254 = vector.broadcast %cst_74 : f32 to vector<8x64xf32>
    %255 = arith.select %253, %87, %254 : vector<8x64xi1>, vector<8x64xf32>
    %c2_i32_75 = arith.constant 2 : i32
    %256 = vector.broadcast %c2_i32_75 : i32 to vector<8x64xi32>
    %257 = arith.cmpi eq, %200, %256 : vector<8x64xi32>
    %cst_76 = arith.constant 0.000000e+00 : f32
    %258 = vector.broadcast %cst_76 : f32 to vector<8x64xf32>
    %259 = arith.select %257, %103, %258 : vector<8x64xi1>, vector<8x64xf32>
    %260 = arith.addf %255, %259 : vector<8x64xf32>
    %c1_i32_77 = arith.constant 1 : i32
    %261 = vector.broadcast %c1_i32_77 : i32 to vector<8x64xi32>
    %262 = arith.cmpi eq, %200, %261 : vector<8x64xi32>
    %cst_78 = arith.constant 0.000000e+00 : f32
    %263 = vector.broadcast %cst_78 : f32 to vector<8x64xf32>
    %264 = arith.select %262, %119, %263 : vector<8x64xi1>, vector<8x64xf32>
    %265 = arith.addf %260, %264 : vector<8x64xf32>
    %c0_i32_79 = arith.constant 0 : i32
    %266 = vector.broadcast %c0_i32_79 : i32 to vector<8x64xi32>
    %267 = arith.cmpi eq, %200, %266 : vector<8x64xi32>
    %cst_80 = arith.constant 0.000000e+00 : f32
    %268 = vector.broadcast %cst_80 : f32 to vector<8x64xf32>
    %269 = arith.select %267, %135, %268 : vector<8x64xi1>, vector<8x64xf32>
    %270 = arith.addf %265, %269 : vector<8x64xf32>
    %271 = arith.addf %251, %270 : vector<8x64xf32>
    %272 = vector.extract_strided_slice %271 {offsets = [0, 0], sizes = [7, 64], strides = [1, 1]} : vector<8x64xf32> to vector<7x64xf32>
    %273 = tpu.concatenate %201, %272 in 0 : vector<1x64xf32>, vector<7x64xf32> -> vector<8x64xf32>
    %c4_i32 = arith.constant 4 : i32
    %274 = vector.broadcast %c4_i32 : i32 to vector<8x64xi32>
    %275 = arith.cmpi eq, %200, %274 : vector<8x64xi32>
    %cst_81 = arith.constant 0x7F800000 : f32
    %276 = vector.broadcast %cst_81 : f32 to vector<8x64xf32>
    %277 = arith.select %275, %276, %271 : vector<8x64xi1>, vector<8x64xf32>
    %278 = arith.minimumf %277, %273 : vector<8x64xf32>
    %c4_i32_82 = arith.constant 4 : i32
    %279 = vector.broadcast %c4_i32_82 : i32 to vector<8x64xi32>
    %280 = arith.cmpi eq, %200, %279 : vector<8x64xi32>
    %cst_83 = arith.constant 0.000000e+00 : f32
    %281 = vector.broadcast %cst_83 : f32 to vector<8x64xf32>
    %282 = arith.select %280, %87, %281 : vector<8x64xi1>, vector<8x64xf32>
    %c3_i32_84 = arith.constant 3 : i32
    %283 = vector.broadcast %c3_i32_84 : i32 to vector<8x64xi32>
    %284 = arith.cmpi eq, %200, %283 : vector<8x64xi32>
    %cst_85 = arith.constant 0.000000e+00 : f32
    %285 = vector.broadcast %cst_85 : f32 to vector<8x64xf32>
    %286 = arith.select %284, %103, %285 : vector<8x64xi1>, vector<8x64xf32>
    %287 = arith.addf %282, %286 : vector<8x64xf32>
    %c2_i32_86 = arith.constant 2 : i32
    %288 = vector.broadcast %c2_i32_86 : i32 to vector<8x64xi32>
    %289 = arith.cmpi eq, %200, %288 : vector<8x64xi32>
    %cst_87 = arith.constant 0.000000e+00 : f32
    %290 = vector.broadcast %cst_87 : f32 to vector<8x64xf32>
    %291 = arith.select %289, %119, %290 : vector<8x64xi1>, vector<8x64xf32>
    %292 = arith.addf %287, %291 : vector<8x64xf32>
    %c1_i32_88 = arith.constant 1 : i32
    %293 = vector.broadcast %c1_i32_88 : i32 to vector<8x64xi32>
    %294 = arith.cmpi eq, %200, %293 : vector<8x64xi32>
    %cst_89 = arith.constant 0.000000e+00 : f32
    %295 = vector.broadcast %cst_89 : f32 to vector<8x64xf32>
    %296 = arith.select %294, %135, %295 : vector<8x64xi1>, vector<8x64xf32>
    %297 = arith.addf %292, %296 : vector<8x64xf32>
    %c0_i32_90 = arith.constant 0 : i32
    %298 = vector.broadcast %c0_i32_90 : i32 to vector<8x64xi32>
    %299 = arith.cmpi eq, %200, %298 : vector<8x64xi32>
    %cst_91 = arith.constant 0.000000e+00 : f32
    %300 = vector.broadcast %cst_91 : f32 to vector<8x64xf32>
    %301 = arith.select %299, %151, %300 : vector<8x64xi1>, vector<8x64xf32>
    %302 = arith.addf %297, %301 : vector<8x64xf32>
    %303 = arith.addf %278, %302 : vector<8x64xf32>
    %304 = vector.extract_strided_slice %303 {offsets = [0, 0], sizes = [7, 64], strides = [1, 1]} : vector<8x64xf32> to vector<7x64xf32>
    %305 = tpu.concatenate %201, %304 in 0 : vector<1x64xf32>, vector<7x64xf32> -> vector<8x64xf32>
    %c5_i32 = arith.constant 5 : i32
    %306 = vector.broadcast %c5_i32 : i32 to vector<8x64xi32>
    %307 = arith.cmpi eq, %200, %306 : vector<8x64xi32>
    %cst_92 = arith.constant 0x7F800000 : f32
    %308 = vector.broadcast %cst_92 : f32 to vector<8x64xf32>
    %309 = arith.select %307, %308, %303 : vector<8x64xi1>, vector<8x64xf32>
    %310 = arith.minimumf %309, %305 : vector<8x64xf32>
    %c5_i32_93 = arith.constant 5 : i32
    %311 = vector.broadcast %c5_i32_93 : i32 to vector<8x64xi32>
    %312 = arith.cmpi eq, %200, %311 : vector<8x64xi32>
    %cst_94 = arith.constant 0.000000e+00 : f32
    %313 = vector.broadcast %cst_94 : f32 to vector<8x64xf32>
    %314 = arith.select %312, %87, %313 : vector<8x64xi1>, vector<8x64xf32>
    %c4_i32_95 = arith.constant 4 : i32
    %315 = vector.broadcast %c4_i32_95 : i32 to vector<8x64xi32>
    %316 = arith.cmpi eq, %200, %315 : vector<8x64xi32>
    %cst_96 = arith.constant 0.000000e+00 : f32
    %317 = vector.broadcast %cst_96 : f32 to vector<8x64xf32>
    %318 = arith.select %316, %103, %317 : vector<8x64xi1>, vector<8x64xf32>
    %319 = arith.addf %314, %318 : vector<8x64xf32>
    %c3_i32_97 = arith.constant 3 : i32
    %320 = vector.broadcast %c3_i32_97 : i32 to vector<8x64xi32>
    %321 = arith.cmpi eq, %200, %320 : vector<8x64xi32>
    %cst_98 = arith.constant 0.000000e+00 : f32
    %322 = vector.broadcast %cst_98 : f32 to vector<8x64xf32>
    %323 = arith.select %321, %119, %322 : vector<8x64xi1>, vector<8x64xf32>
    %324 = arith.addf %319, %323 : vector<8x64xf32>
    %c2_i32_99 = arith.constant 2 : i32
    %325 = vector.broadcast %c2_i32_99 : i32 to vector<8x64xi32>
    %326 = arith.cmpi eq, %200, %325 : vector<8x64xi32>
    %cst_100 = arith.constant 0.000000e+00 : f32
    %327 = vector.broadcast %cst_100 : f32 to vector<8x64xf32>
    %328 = arith.select %326, %135, %327 : vector<8x64xi1>, vector<8x64xf32>
    %329 = arith.addf %324, %328 : vector<8x64xf32>
    %c1_i32_101 = arith.constant 1 : i32
    %330 = vector.broadcast %c1_i32_101 : i32 to vector<8x64xi32>
    %331 = arith.cmpi eq, %200, %330 : vector<8x64xi32>
    %cst_102 = arith.constant 0.000000e+00 : f32
    %332 = vector.broadcast %cst_102 : f32 to vector<8x64xf32>
    %333 = arith.select %331, %151, %332 : vector<8x64xi1>, vector<8x64xf32>
    %334 = arith.addf %329, %333 : vector<8x64xf32>
    %c0_i32_103 = arith.constant 0 : i32
    %335 = vector.broadcast %c0_i32_103 : i32 to vector<8x64xi32>
    %336 = arith.cmpi eq, %200, %335 : vector<8x64xi32>
    %cst_104 = arith.constant 0.000000e+00 : f32
    %337 = vector.broadcast %cst_104 : f32 to vector<8x64xf32>
    %338 = arith.select %336, %167, %337 : vector<8x64xi1>, vector<8x64xf32>
    %339 = arith.addf %334, %338 : vector<8x64xf32>
    %340 = arith.addf %310, %339 : vector<8x64xf32>
    %341 = vector.extract_strided_slice %340 {offsets = [0, 0], sizes = [7, 64], strides = [1, 1]} : vector<8x64xf32> to vector<7x64xf32>
    %342 = tpu.concatenate %201, %341 in 0 : vector<1x64xf32>, vector<7x64xf32> -> vector<8x64xf32>
    %c6_i32 = arith.constant 6 : i32
    %343 = vector.broadcast %c6_i32 : i32 to vector<8x64xi32>
    %344 = arith.cmpi eq, %200, %343 : vector<8x64xi32>
    %cst_105 = arith.constant 0x7F800000 : f32
    %345 = vector.broadcast %cst_105 : f32 to vector<8x64xf32>
    %346 = arith.select %344, %345, %340 : vector<8x64xi1>, vector<8x64xf32>
    %347 = arith.minimumf %346, %342 : vector<8x64xf32>
    %c6_i32_106 = arith.constant 6 : i32
    %348 = vector.broadcast %c6_i32_106 : i32 to vector<8x64xi32>
    %349 = arith.cmpi eq, %200, %348 : vector<8x64xi32>
    %cst_107 = arith.constant 0.000000e+00 : f32
    %350 = vector.broadcast %cst_107 : f32 to vector<8x64xf32>
    %351 = arith.select %349, %87, %350 : vector<8x64xi1>, vector<8x64xf32>
    %c5_i32_108 = arith.constant 5 : i32
    %352 = vector.broadcast %c5_i32_108 : i32 to vector<8x64xi32>
    %353 = arith.cmpi eq, %200, %352 : vector<8x64xi32>
    %cst_109 = arith.constant 0.000000e+00 : f32
    %354 = vector.broadcast %cst_109 : f32 to vector<8x64xf32>
    %355 = arith.select %353, %103, %354 : vector<8x64xi1>, vector<8x64xf32>
    %356 = arith.addf %351, %355 : vector<8x64xf32>
    %c4_i32_110 = arith.constant 4 : i32
    %357 = vector.broadcast %c4_i32_110 : i32 to vector<8x64xi32>
    %358 = arith.cmpi eq, %200, %357 : vector<8x64xi32>
    %cst_111 = arith.constant 0.000000e+00 : f32
    %359 = vector.broadcast %cst_111 : f32 to vector<8x64xf32>
    %360 = arith.select %358, %119, %359 : vector<8x64xi1>, vector<8x64xf32>
    %361 = arith.addf %356, %360 : vector<8x64xf32>
    %c3_i32_112 = arith.constant 3 : i32
    %362 = vector.broadcast %c3_i32_112 : i32 to vector<8x64xi32>
    %363 = arith.cmpi eq, %200, %362 : vector<8x64xi32>
    %cst_113 = arith.constant 0.000000e+00 : f32
    %364 = vector.broadcast %cst_113 : f32 to vector<8x64xf32>
    %365 = arith.select %363, %135, %364 : vector<8x64xi1>, vector<8x64xf32>
    %366 = arith.addf %361, %365 : vector<8x64xf32>
    %c2_i32_114 = arith.constant 2 : i32
    %367 = vector.broadcast %c2_i32_114 : i32 to vector<8x64xi32>
    %368 = arith.cmpi eq, %200, %367 : vector<8x64xi32>
    %cst_115 = arith.constant 0.000000e+00 : f32
    %369 = vector.broadcast %cst_115 : f32 to vector<8x64xf32>
    %370 = arith.select %368, %151, %369 : vector<8x64xi1>, vector<8x64xf32>
    %371 = arith.addf %366, %370 : vector<8x64xf32>
    %c1_i32_116 = arith.constant 1 : i32
    %372 = vector.broadcast %c1_i32_116 : i32 to vector<8x64xi32>
    %373 = arith.cmpi eq, %200, %372 : vector<8x64xi32>
    %cst_117 = arith.constant 0.000000e+00 : f32
    %374 = vector.broadcast %cst_117 : f32 to vector<8x64xf32>
    %375 = arith.select %373, %167, %374 : vector<8x64xi1>, vector<8x64xf32>
    %376 = arith.addf %371, %375 : vector<8x64xf32>
    %c0_i32_118 = arith.constant 0 : i32
    %377 = vector.broadcast %c0_i32_118 : i32 to vector<8x64xi32>
    %378 = arith.cmpi eq, %200, %377 : vector<8x64xi32>
    %cst_119 = arith.constant 0.000000e+00 : f32
    %379 = vector.broadcast %cst_119 : f32 to vector<8x64xf32>
    %380 = arith.select %378, %183, %379 : vector<8x64xi1>, vector<8x64xf32>
    %381 = arith.addf %376, %380 : vector<8x64xf32>
    %382 = arith.addf %347, %381 : vector<8x64xf32>
    %383 = vector.extract_strided_slice %382 {offsets = [0, 0], sizes = [7, 64], strides = [1, 1]} : vector<8x64xf32> to vector<7x64xf32>
    %384 = tpu.concatenate %201, %383 in 0 : vector<1x64xf32>, vector<7x64xf32> -> vector<8x64xf32>
    %c7_i32 = arith.constant 7 : i32
    %385 = vector.broadcast %c7_i32 : i32 to vector<8x64xi32>
    %386 = arith.cmpi eq, %200, %385 : vector<8x64xi32>
    %cst_120 = arith.constant 0x7F800000 : f32
    %387 = vector.broadcast %cst_120 : f32 to vector<8x64xf32>
    %388 = arith.select %386, %387, %382 : vector<8x64xi1>, vector<8x64xf32>
    %389 = arith.minimumf %388, %384 : vector<8x64xf32>
    %c7_i32_121 = arith.constant 7 : i32
    %390 = vector.broadcast %c7_i32_121 : i32 to vector<8x64xi32>
    %391 = arith.cmpi eq, %200, %390 : vector<8x64xi32>
    %cst_122 = arith.constant 0.000000e+00 : f32
    %392 = vector.broadcast %cst_122 : f32 to vector<8x64xf32>
    %393 = arith.select %391, %87, %392 : vector<8x64xi1>, vector<8x64xf32>
    %c6_i32_123 = arith.constant 6 : i32
    %394 = vector.broadcast %c6_i32_123 : i32 to vector<8x64xi32>
    %395 = arith.cmpi eq, %200, %394 : vector<8x64xi32>
    %cst_124 = arith.constant 0.000000e+00 : f32
    %396 = vector.broadcast %cst_124 : f32 to vector<8x64xf32>
    %397 = arith.select %395, %103, %396 : vector<8x64xi1>, vector<8x64xf32>
    %398 = arith.addf %393, %397 : vector<8x64xf32>
    %c5_i32_125 = arith.constant 5 : i32
    %399 = vector.broadcast %c5_i32_125 : i32 to vector<8x64xi32>
    %400 = arith.cmpi eq, %200, %399 : vector<8x64xi32>
    %cst_126 = arith.constant 0.000000e+00 : f32
    %401 = vector.broadcast %cst_126 : f32 to vector<8x64xf32>
    %402 = arith.select %400, %119, %401 : vector<8x64xi1>, vector<8x64xf32>
    %403 = arith.addf %398, %402 : vector<8x64xf32>
    %c4_i32_127 = arith.constant 4 : i32
    %404 = vector.broadcast %c4_i32_127 : i32 to vector<8x64xi32>
    %405 = arith.cmpi eq, %200, %404 : vector<8x64xi32>
    %cst_128 = arith.constant 0.000000e+00 : f32
    %406 = vector.broadcast %cst_128 : f32 to vector<8x64xf32>
    %407 = arith.select %405, %135, %406 : vector<8x64xi1>, vector<8x64xf32>
    %408 = arith.addf %403, %407 : vector<8x64xf32>
    %c3_i32_129 = arith.constant 3 : i32
    %409 = vector.broadcast %c3_i32_129 : i32 to vector<8x64xi32>
    %410 = arith.cmpi eq, %200, %409 : vector<8x64xi32>
    %cst_130 = arith.constant 0.000000e+00 : f32
    %411 = vector.broadcast %cst_130 : f32 to vector<8x64xf32>
    %412 = arith.select %410, %151, %411 : vector<8x64xi1>, vector<8x64xf32>
    %413 = arith.addf %408, %412 : vector<8x64xf32>
    %c2_i32_131 = arith.constant 2 : i32
    %414 = vector.broadcast %c2_i32_131 : i32 to vector<8x64xi32>
    %415 = arith.cmpi eq, %200, %414 : vector<8x64xi32>
    %cst_132 = arith.constant 0.000000e+00 : f32
    %416 = vector.broadcast %cst_132 : f32 to vector<8x64xf32>
    %417 = arith.select %415, %167, %416 : vector<8x64xi1>, vector<8x64xf32>
    %418 = arith.addf %413, %417 : vector<8x64xf32>
    %c1_i32_133 = arith.constant 1 : i32
    %419 = vector.broadcast %c1_i32_133 : i32 to vector<8x64xi32>
    %420 = arith.cmpi eq, %200, %419 : vector<8x64xi32>
    %cst_134 = arith.constant 0.000000e+00 : f32
    %421 = vector.broadcast %cst_134 : f32 to vector<8x64xf32>
    %422 = arith.select %420, %183, %421 : vector<8x64xi1>, vector<8x64xf32>
    %423 = arith.addf %418, %422 : vector<8x64xf32>
    %c0_i32_135 = arith.constant 0 : i32
    %424 = vector.broadcast %c0_i32_135 : i32 to vector<8x64xi32>
    %425 = arith.cmpi eq, %200, %424 : vector<8x64xi32>
    %cst_136 = arith.constant 0.000000e+00 : f32
    %426 = vector.broadcast %cst_136 : f32 to vector<8x64xf32>
    %427 = arith.select %425, %199, %426 : vector<8x64xi1>, vector<8x64xf32>
    %428 = arith.addf %423, %427 : vector<8x64xf32>
    %429 = arith.addf %389, %428 : vector<8x64xf32>
    %430 = vector.extract_strided_slice %429 {offsets = [0, 0], sizes = [7, 64], strides = [1, 1]} : vector<8x64xf32> to vector<7x64xf32>
    %431 = tpu.concatenate %201, %430 in 0 : vector<1x64xf32>, vector<7x64xf32> -> vector<8x64xf32>
    %432 = arith.minimumf %429, %431 : vector<8x64xf32>
    %c7_i32_137 = arith.constant 7 : i32
    %433 = vector.broadcast %c7_i32_137 : i32 to vector<8x64xi32>
    %434 = arith.cmpi eq, %200, %433 : vector<8x64xi32>
    %cst_138 = arith.constant 0.000000e+00 : f32
    %435 = vector.broadcast %cst_138 : f32 to vector<8x64xf32>
    %436 = arith.select %434, %103, %435 : vector<8x64xi1>, vector<8x64xf32>
    %c6_i32_139 = arith.constant 6 : i32
    %437 = vector.broadcast %c6_i32_139 : i32 to vector<8x64xi32>
    %438 = arith.cmpi eq, %200, %437 : vector<8x64xi32>
    %cst_140 = arith.constant 0.000000e+00 : f32
    %439 = vector.broadcast %cst_140 : f32 to vector<8x64xf32>
    %440 = arith.select %438, %119, %439 : vector<8x64xi1>, vector<8x64xf32>
    %441 = arith.addf %436, %440 : vector<8x64xf32>
    %c5_i32_141 = arith.constant 5 : i32
    %442 = vector.broadcast %c5_i32_141 : i32 to vector<8x64xi32>
    %443 = arith.cmpi eq, %200, %442 : vector<8x64xi32>
    %cst_142 = arith.constant 0.000000e+00 : f32
    %444 = vector.broadcast %cst_142 : f32 to vector<8x64xf32>
    %445 = arith.select %443, %135, %444 : vector<8x64xi1>, vector<8x64xf32>
    %446 = arith.addf %441, %445 : vector<8x64xf32>
    %c4_i32_143 = arith.constant 4 : i32
    %447 = vector.broadcast %c4_i32_143 : i32 to vector<8x64xi32>
    %448 = arith.cmpi eq, %200, %447 : vector<8x64xi32>
    %cst_144 = arith.constant 0.000000e+00 : f32
    %449 = vector.broadcast %cst_144 : f32 to vector<8x64xf32>
    %450 = arith.select %448, %151, %449 : vector<8x64xi1>, vector<8x64xf32>
    %451 = arith.addf %446, %450 : vector<8x64xf32>
    %c3_i32_145 = arith.constant 3 : i32
    %452 = vector.broadcast %c3_i32_145 : i32 to vector<8x64xi32>
    %453 = arith.cmpi eq, %200, %452 : vector<8x64xi32>
    %cst_146 = arith.constant 0.000000e+00 : f32
    %454 = vector.broadcast %cst_146 : f32 to vector<8x64xf32>
    %455 = arith.select %453, %167, %454 : vector<8x64xi1>, vector<8x64xf32>
    %456 = arith.addf %451, %455 : vector<8x64xf32>
    %c2_i32_147 = arith.constant 2 : i32
    %457 = vector.broadcast %c2_i32_147 : i32 to vector<8x64xi32>
    %458 = arith.cmpi eq, %200, %457 : vector<8x64xi32>
    %cst_148 = arith.constant 0.000000e+00 : f32
    %459 = vector.broadcast %cst_148 : f32 to vector<8x64xf32>
    %460 = arith.select %458, %183, %459 : vector<8x64xi1>, vector<8x64xf32>
    %461 = arith.addf %456, %460 : vector<8x64xf32>
    %c1_i32_149 = arith.constant 1 : i32
    %462 = vector.broadcast %c1_i32_149 : i32 to vector<8x64xi32>
    %463 = arith.cmpi eq, %200, %462 : vector<8x64xi32>
    %cst_150 = arith.constant 0.000000e+00 : f32
    %464 = vector.broadcast %cst_150 : f32 to vector<8x64xf32>
    %465 = arith.select %463, %199, %464 : vector<8x64xi1>, vector<8x64xf32>
    %466 = arith.addf %461, %465 : vector<8x64xf32>
    %467 = arith.addf %432, %466 : vector<8x64xf32>
    %468 = vector.extract_strided_slice %467 {offsets = [0, 0], sizes = [7, 64], strides = [1, 1]} : vector<8x64xf32> to vector<7x64xf32>
    %469 = tpu.concatenate %201, %468 in 0 : vector<1x64xf32>, vector<7x64xf32> -> vector<8x64xf32>
    %470 = arith.minimumf %467, %469 : vector<8x64xf32>
    %c7_i32_151 = arith.constant 7 : i32
    %471 = vector.broadcast %c7_i32_151 : i32 to vector<8x64xi32>
    %472 = arith.cmpi eq, %200, %471 : vector<8x64xi32>
    %cst_152 = arith.constant 0.000000e+00 : f32
    %473 = vector.broadcast %cst_152 : f32 to vector<8x64xf32>
    %474 = arith.select %472, %119, %473 : vector<8x64xi1>, vector<8x64xf32>
    %c6_i32_153 = arith.constant 6 : i32
    %475 = vector.broadcast %c6_i32_153 : i32 to vector<8x64xi32>
    %476 = arith.cmpi eq, %200, %475 : vector<8x64xi32>
    %cst_154 = arith.constant 0.000000e+00 : f32
    %477 = vector.broadcast %cst_154 : f32 to vector<8x64xf32>
    %478 = arith.select %476, %135, %477 : vector<8x64xi1>, vector<8x64xf32>
    %479 = arith.addf %474, %478 : vector<8x64xf32>
    %c5_i32_155 = arith.constant 5 : i32
    %480 = vector.broadcast %c5_i32_155 : i32 to vector<8x64xi32>
    %481 = arith.cmpi eq, %200, %480 : vector<8x64xi32>
    %cst_156 = arith.constant 0.000000e+00 : f32
    %482 = vector.broadcast %cst_156 : f32 to vector<8x64xf32>
    %483 = arith.select %481, %151, %482 : vector<8x64xi1>, vector<8x64xf32>
    %484 = arith.addf %479, %483 : vector<8x64xf32>
    %c4_i32_157 = arith.constant 4 : i32
    %485 = vector.broadcast %c4_i32_157 : i32 to vector<8x64xi32>
    %486 = arith.cmpi eq, %200, %485 : vector<8x64xi32>
    %cst_158 = arith.constant 0.000000e+00 : f32
    %487 = vector.broadcast %cst_158 : f32 to vector<8x64xf32>
    %488 = arith.select %486, %167, %487 : vector<8x64xi1>, vector<8x64xf32>
    %489 = arith.addf %484, %488 : vector<8x64xf32>
    %c3_i32_159 = arith.constant 3 : i32
    %490 = vector.broadcast %c3_i32_159 : i32 to vector<8x64xi32>
    %491 = arith.cmpi eq, %200, %490 : vector<8x64xi32>
    %cst_160 = arith.constant 0.000000e+00 : f32
    %492 = vector.broadcast %cst_160 : f32 to vector<8x64xf32>
    %493 = arith.select %491, %183, %492 : vector<8x64xi1>, vector<8x64xf32>
    %494 = arith.addf %489, %493 : vector<8x64xf32>
    %c2_i32_161 = arith.constant 2 : i32
    %495 = vector.broadcast %c2_i32_161 : i32 to vector<8x64xi32>
    %496 = arith.cmpi eq, %200, %495 : vector<8x64xi32>
    %cst_162 = arith.constant 0.000000e+00 : f32
    %497 = vector.broadcast %cst_162 : f32 to vector<8x64xf32>
    %498 = arith.select %496, %199, %497 : vector<8x64xi1>, vector<8x64xf32>
    %499 = arith.addf %494, %498 : vector<8x64xf32>
    %500 = arith.addf %470, %499 : vector<8x64xf32>
    %501 = vector.extract_strided_slice %500 {offsets = [0, 0], sizes = [7, 64], strides = [1, 1]} : vector<8x64xf32> to vector<7x64xf32>
    %502 = tpu.concatenate %201, %501 in 0 : vector<1x64xf32>, vector<7x64xf32> -> vector<8x64xf32>
    %503 = arith.minimumf %500, %502 : vector<8x64xf32>
    %c7_i32_163 = arith.constant 7 : i32
    %504 = vector.broadcast %c7_i32_163 : i32 to vector<8x64xi32>
    %505 = arith.cmpi eq, %200, %504 : vector<8x64xi32>
    %cst_164 = arith.constant 0.000000e+00 : f32
    %506 = vector.broadcast %cst_164 : f32 to vector<8x64xf32>
    %507 = arith.select %505, %135, %506 : vector<8x64xi1>, vector<8x64xf32>
    %c6_i32_165 = arith.constant 6 : i32
    %508 = vector.broadcast %c6_i32_165 : i32 to vector<8x64xi32>
    %509 = arith.cmpi eq, %200, %508 : vector<8x64xi32>
    %cst_166 = arith.constant 0.000000e+00 : f32
    %510 = vector.broadcast %cst_166 : f32 to vector<8x64xf32>
    %511 = arith.select %509, %151, %510 : vector<8x64xi1>, vector<8x64xf32>
    %512 = arith.addf %507, %511 : vector<8x64xf32>
    %c5_i32_167 = arith.constant 5 : i32
    %513 = vector.broadcast %c5_i32_167 : i32 to vector<8x64xi32>
    %514 = arith.cmpi eq, %200, %513 : vector<8x64xi32>
    %cst_168 = arith.constant 0.000000e+00 : f32
    %515 = vector.broadcast %cst_168 : f32 to vector<8x64xf32>
    %516 = arith.select %514, %167, %515 : vector<8x64xi1>, vector<8x64xf32>
    %517 = arith.addf %512, %516 : vector<8x64xf32>
    %c4_i32_169 = arith.constant 4 : i32
    %518 = vector.broadcast %c4_i32_169 : i32 to vector<8x64xi32>
    %519 = arith.cmpi eq, %200, %518 : vector<8x64xi32>
    %cst_170 = arith.constant 0.000000e+00 : f32
    %520 = vector.broadcast %cst_170 : f32 to vector<8x64xf32>
    %521 = arith.select %519, %183, %520 : vector<8x64xi1>, vector<8x64xf32>
    %522 = arith.addf %517, %521 : vector<8x64xf32>
    %c3_i32_171 = arith.constant 3 : i32
    %523 = vector.broadcast %c3_i32_171 : i32 to vector<8x64xi32>
    %524 = arith.cmpi eq, %200, %523 : vector<8x64xi32>
    %cst_172 = arith.constant 0.000000e+00 : f32
    %525 = vector.broadcast %cst_172 : f32 to vector<8x64xf32>
    %526 = arith.select %524, %199, %525 : vector<8x64xi1>, vector<8x64xf32>
    %527 = arith.addf %522, %526 : vector<8x64xf32>
    %528 = arith.addf %503, %527 : vector<8x64xf32>
    %529 = vector.extract_strided_slice %528 {offsets = [0, 0], sizes = [7, 64], strides = [1, 1]} : vector<8x64xf32> to vector<7x64xf32>
    %530 = tpu.concatenate %201, %529 in 0 : vector<1x64xf32>, vector<7x64xf32> -> vector<8x64xf32>
    %531 = arith.minimumf %528, %530 : vector<8x64xf32>
    %c7_i32_173 = arith.constant 7 : i32
    %532 = vector.broadcast %c7_i32_173 : i32 to vector<8x64xi32>
    %533 = arith.cmpi eq, %200, %532 : vector<8x64xi32>
    %cst_174 = arith.constant 0.000000e+00 : f32
    %534 = vector.broadcast %cst_174 : f32 to vector<8x64xf32>
    %535 = arith.select %533, %151, %534 : vector<8x64xi1>, vector<8x64xf32>
    %c6_i32_175 = arith.constant 6 : i32
    %536 = vector.broadcast %c6_i32_175 : i32 to vector<8x64xi32>
    %537 = arith.cmpi eq, %200, %536 : vector<8x64xi32>
    %cst_176 = arith.constant 0.000000e+00 : f32
    %538 = vector.broadcast %cst_176 : f32 to vector<8x64xf32>
    %539 = arith.select %537, %167, %538 : vector<8x64xi1>, vector<8x64xf32>
    %540 = arith.addf %535, %539 : vector<8x64xf32>
    %c5_i32_177 = arith.constant 5 : i32
    %541 = vector.broadcast %c5_i32_177 : i32 to vector<8x64xi32>
    %542 = arith.cmpi eq, %200, %541 : vector<8x64xi32>
    %cst_178 = arith.constant 0.000000e+00 : f32
    %543 = vector.broadcast %cst_178 : f32 to vector<8x64xf32>
    %544 = arith.select %542, %183, %543 : vector<8x64xi1>, vector<8x64xf32>
    %545 = arith.addf %540, %544 : vector<8x64xf32>
    %c4_i32_179 = arith.constant 4 : i32
    %546 = vector.broadcast %c4_i32_179 : i32 to vector<8x64xi32>
    %547 = arith.cmpi eq, %200, %546 : vector<8x64xi32>
    %cst_180 = arith.constant 0.000000e+00 : f32
    %548 = vector.broadcast %cst_180 : f32 to vector<8x64xf32>
    %549 = arith.select %547, %199, %548 : vector<8x64xi1>, vector<8x64xf32>
    %550 = arith.addf %545, %549 : vector<8x64xf32>
    %551 = arith.addf %531, %550 : vector<8x64xf32>
    %552 = vector.extract_strided_slice %551 {offsets = [0, 0], sizes = [7, 64], strides = [1, 1]} : vector<8x64xf32> to vector<7x64xf32>
    %553 = tpu.concatenate %201, %552 in 0 : vector<1x64xf32>, vector<7x64xf32> -> vector<8x64xf32>
    %554 = arith.minimumf %551, %553 : vector<8x64xf32>
    %c7_i32_181 = arith.constant 7 : i32
    %555 = vector.broadcast %c7_i32_181 : i32 to vector<8x64xi32>
    %556 = arith.cmpi eq, %200, %555 : vector<8x64xi32>
    %cst_182 = arith.constant 0.000000e+00 : f32
    %557 = vector.broadcast %cst_182 : f32 to vector<8x64xf32>
    %558 = arith.select %556, %167, %557 : vector<8x64xi1>, vector<8x64xf32>
    %c6_i32_183 = arith.constant 6 : i32
    %559 = vector.broadcast %c6_i32_183 : i32 to vector<8x64xi32>
    %560 = arith.cmpi eq, %200, %559 : vector<8x64xi32>
    %cst_184 = arith.constant 0.000000e+00 : f32
    %561 = vector.broadcast %cst_184 : f32 to vector<8x64xf32>
    %562 = arith.select %560, %183, %561 : vector<8x64xi1>, vector<8x64xf32>
    %563 = arith.addf %558, %562 : vector<8x64xf32>
    %c5_i32_185 = arith.constant 5 : i32
    %564 = vector.broadcast %c5_i32_185 : i32 to vector<8x64xi32>
    %565 = arith.cmpi eq, %200, %564 : vector<8x64xi32>
    %cst_186 = arith.constant 0.000000e+00 : f32
    %566 = vector.broadcast %cst_186 : f32 to vector<8x64xf32>
    %567 = arith.select %565, %199, %566 : vector<8x64xi1>, vector<8x64xf32>
    %568 = arith.addf %563, %567 : vector<8x64xf32>
    %569 = arith.addf %554, %568 : vector<8x64xf32>
    %570 = vector.extract_strided_slice %569 {offsets = [0, 0], sizes = [7, 64], strides = [1, 1]} : vector<8x64xf32> to vector<7x64xf32>
    %571 = tpu.concatenate %201, %570 in 0 : vector<1x64xf32>, vector<7x64xf32> -> vector<8x64xf32>
    %572 = arith.minimumf %569, %571 : vector<8x64xf32>
    %c7_i32_187 = arith.constant 7 : i32
    %573 = vector.broadcast %c7_i32_187 : i32 to vector<8x64xi32>
    %574 = arith.cmpi eq, %200, %573 : vector<8x64xi32>
    %cst_188 = arith.constant 0.000000e+00 : f32
    %575 = vector.broadcast %cst_188 : f32 to vector<8x64xf32>
    %576 = arith.select %574, %183, %575 : vector<8x64xi1>, vector<8x64xf32>
    %c6_i32_189 = arith.constant 6 : i32
    %577 = vector.broadcast %c6_i32_189 : i32 to vector<8x64xi32>
    %578 = arith.cmpi eq, %200, %577 : vector<8x64xi32>
    %cst_190 = arith.constant 0.000000e+00 : f32
    %579 = vector.broadcast %cst_190 : f32 to vector<8x64xf32>
    %580 = arith.select %578, %199, %579 : vector<8x64xi1>, vector<8x64xf32>
    %581 = arith.addf %576, %580 : vector<8x64xf32>
    %582 = arith.addf %572, %581 : vector<8x64xf32>
    %583 = vector.extract_strided_slice %582 {offsets = [0, 0], sizes = [7, 64], strides = [1, 1]} : vector<8x64xf32> to vector<7x64xf32>
    %584 = tpu.concatenate %201, %583 in 0 : vector<1x64xf32>, vector<7x64xf32> -> vector<8x64xf32>
    %585 = arith.minimumf %582, %584 : vector<8x64xf32>
    %c7_i32_191 = arith.constant 7 : i32
    %586 = vector.broadcast %c7_i32_191 : i32 to vector<8x64xi32>
    %587 = arith.cmpi eq, %200, %586 : vector<8x64xi32>
    %cst_192 = arith.constant 0.000000e+00 : f32
    %588 = vector.broadcast %cst_192 : f32 to vector<8x64xf32>
    %589 = arith.select %587, %199, %588 : vector<8x64xi1>, vector<8x64xf32>
    %590 = arith.addf %585, %589 : vector<8x64xf32>
    %591 = vector.extract_strided_slice %590 {offsets = [7, 0], sizes = [1, 64], strides = [1, 1]} : vector<8x64xf32> to vector<1x64xf32>
    %592 = vector.extract_strided_slice %591 {offsets = [0, 0], sizes = [1, 32], strides = [1, 1]} : vector<1x64xf32> to vector<1x32xf32>
    %593 = vector.extract_strided_slice %591 {offsets = [0, 32], sizes = [1, 32], strides = [1, 1]} : vector<1x64xf32> to vector<1x32xf32>
    %594 = tpu.concatenate %31, %32, %592, %593 in 0 : vector<1x32xf32>, vector<1x32xf32>, vector<1x32xf32>, vector<1x32xf32> -> vector<4x32xf32>
    %595 = vector.shape_cast %594 : vector<4x32xf32> to vector<1x4x32xf32>
    %c0_193 = arith.constant 0 : index
    %c0_194 = arith.constant 0 : index
    %c0_195 = arith.constant 0 : index
    %596 = vector.load %arg7[%c0_193, %c0_194, %c0_195] : memref<1x4x32xf32, #tpu.memory_space<vmem>>, vector<1x4x32xf32>
    tpu.vector_store %arg7[%c0_193, %c0_194, %c0_195], %595 {strides = array<i32>} : memref<1x4x32xf32, #tpu.memory_space<vmem>>, vector<1x4x32xf32>,
    return
  }
  func.func @transform_0(%arg0: i32) -> (i32, i32) {
    %c0_i32 = arith.constant 0 : i32
    %c0_i32_0 = arith.constant 0 : i32
    %c0_i32_1 = arith.constant 0 : i32
    return %c0_i32, %c0_i32_0 : i32, i32
  }
  func.func @transform_1(%arg0: i32) -> (i32, i32) {
    %c0_i32 = arith.constant 0 : i32
    %c0_i32_0 = arith.constant 0 : i32
    %c0_i32_1 = arith.constant 0 : i32
    return %c0_i32, %c0_i32_0 : i32, i32
  }
  func.func @transform_2(%arg0: i32) -> (i32, i32, i32) {
    %c0_i32 = arith.constant 0 : i32
    %c0_i32_0 = arith.constant 0 : i32
    %c0_i32_1 = arith.constant 0 : i32
    return %arg0, %c0_i32, %c0_i32_0 : i32, i32, i32
  }
  func.func @transform_3(%arg0: i32) -> (i32, i32) {
    %c0_i32 = arith.constant 0 : i32
    %c0_i32_0 = arith.constant 0 : i32
    %c0_i32_1 = arith.constant 0 : i32
    return %c0_i32, %c0_i32_0 : i32, i32
  }
  func.func @transform_4(%arg0: i32) -> (i32, i32, i32) {
    %c0_i32 = arith.constant 0 : i32
    %c0_i32_0 = arith.constant 0 : i32
    %c0_i32_1 = arith.constant 0 : i32
    return %arg0, %c0_i32, %c0_i32_0 : i32, i32, i32
  }
  func.func @transform_5(%arg0: i32) -> (i32, i32) {
    %c0_i32 = arith.constant 0 : i32
    %c0_i32_0 = arith.constant 0 : i32
    %c0_i32_1 = arith.constant 0 : i32
    return %c0_i32, %c0_i32_0 : i32, i32
  }
  func.func @transform_6(%arg0: i32) -> (i32, i32, i32) {
    %c0_i32 = arith.constant 0 : i32
    %c0_i32_0 = arith.constant 0 : i32
    %c0_i32_1 = arith.constant 0 : i32
    return %arg0, %c0_i32, %c0_i32_0 : i32, i32, i32
  }
}

module attributes {stable_mosaic.version = 11 : i64} {
  func.func @_aligned_triplet_kernel(%arg0: i32, %arg1: memref<64x128xf32, #tpu.memory_space<vmem>>, %arg2: memref<64x1xf32, #tpu.memory_space<vmem>>, %arg3: memref<1x1x32xf32, #tpu.memory_space<vmem>>, %arg4: memref<64x1xi32, #tpu.memory_space<vmem>>, %arg5: memref<1x1x32xi32, #tpu.memory_space<vmem>>, %arg6: memref<256x64xf32, #tpu.memory_space<vmem>>, %arg7: memref<1x4x32xf32, #tpu.memory_space<vmem>>) attributes {dimension_semantics = [#tpu.dimension_semantics<parallel>], iteration_bounds = array<i64: 2>, scalar_prefetch = 0 : i64, scratch_operands = 0 : i64, tpu.core_type = #tpu.core_type<tc>, window_params = [{pipeline_mode = #tpu.pipeline_mode<synchronous>, transform_indices = @transform_0, window_bounds = array<i64: 64, 128>}, {pipeline_mode = #tpu.pipeline_mode<synchronous>, transform_indices = @transform_1, window_bounds = array<i64: 64, 1>}, {transform_indices = @transform_2, window_bounds = array<i64: 1, 1, 32>}, {pipeline_mode = #tpu.pipeline_mode<synchronous>, transform_indices = @transform_3, window_bounds = array<i64: 64, 1>}, {transform_indices = @transform_4, window_bounds = array<i64: 1, 1, 32>}, {pipeline_mode = #tpu.pipeline_mode<synchronous>, transform_indices = @transform_5, window_bounds = array<i64: 256, 64>}, {transform_indices = @transform_6, window_bounds = array<i64: 1, 4, 32>}]} {
    %c32_i32 = arith.constant 32 : i32
    %0 = arith.muli %arg0, %c32_i32 : i32
    %1 = tpu.assume_multiple %0, 32 : i32
    %c0 = arith.constant 0 : index
    %c0_0 = arith.constant 0 : index
    %2 = vector.load %arg1[%c0, %c0_0] : memref<64x128xf32, #tpu.memory_space<vmem>>, vector<64x128xf32>
    %3 = arith.index_cast %1 : i32 to index
    %c0_1 = arith.constant 0 : index
    %4 = vector.load %arg1[%3, %c0_1] : memref<64x128xf32, #tpu.memory_space<vmem>>, vector<32x128xf32>
    %cst = arith.constant dense<0.000000e+00> : vector<64x32xf32>
    %5 = tpu.matmul %2, %4, %cst {dimension_numbers = #tpu.dot_dimension_numbers<[1], [1], [0], [0], [0, 0, 1, 0], [], []>} : vector<64x128xf32>, vector<32x128xf32>, vector<64x32xf32> -> vector<64x32xf32>
    %c0_2 = arith.constant 0 : index
    %c0_3 = arith.constant 0 : index
    %6 = vector.load %arg2[%c0_2, %c0_3] : memref<64x1xf32, #tpu.memory_space<vmem>>, vector<64x1xf32>
    %c0_4 = arith.constant 0 : index
    %c0_5 = arith.constant 0 : index
    %c0_6 = arith.constant 0 : index
    %7 = vector.load %arg3[%c0_4, %c0_5, %c0_6] : memref<1x1x32xf32, #tpu.memory_space<vmem>>, vector<1x1x32xf32>
    %8 = vector.shape_cast %7 : vector<1x1x32xf32> to vector<1x32xf32>
    %9 = vector.broadcast %6 : vector<64x1xf32> to vector<64x32xf32>
    %10 = vector.broadcast %8 : vector<1x32xf32> to vector<64x32xf32>
    %11 = arith.addf %9, %10 : vector<64x32xf32>
    %cst_7 = arith.constant 2.000000e+00 : f32
    %12 = vector.broadcast %cst_7 : f32 to vector<64x32xf32>
    %13 = arith.mulf %12, %5 : vector<64x32xf32>
    %14 = arith.subf %11, %13 : vector<64x32xf32>
    %cst_8 = arith.constant 9.99999996E-13 : f32
    %15 = vector.broadcast %cst_8 : f32 to vector<64x32xf32>
    %16 = arith.maximumf %14, %15 : vector<64x32xf32>
    %c0_9 = arith.constant 0 : index
    %c0_10 = arith.constant 0 : index
    %17 = vector.load %arg4[%c0_9, %c0_10] : memref<64x1xi32, #tpu.memory_space<vmem>>, vector<64x1xi32>
    %c0_11 = arith.constant 0 : index
    %c0_12 = arith.constant 0 : index
    %c0_13 = arith.constant 0 : index
    %18 = vector.load %arg5[%c0_11, %c0_12, %c0_13] : memref<1x1x32xi32, #tpu.memory_space<vmem>>, vector<1x1x32xi32>
    %19 = vector.shape_cast %18 : vector<1x1x32xi32> to vector<1x32xi32>
    %20 = vector.broadcast %17 : vector<64x1xi32> to vector<64x32xi32>
    %21 = vector.broadcast %19 : vector<1x32xi32> to vector<64x32xi32>
    %22 = arith.cmpi eq, %20, %21 : vector<64x32xi32>
    %cst_14 = arith.constant 0xFF800000 : f32
    %23 = vector.broadcast %cst_14 : f32 to vector<64x32xf32>
    %24 = arith.select %22, %16, %23 : vector<64x32xi1>, vector<64x32xf32>
    %cst_15 = arith.constant 0x7F800000 : f32
    %25 = vector.broadcast %cst_15 : f32 to vector<64x32xf32>
    %26 = arith.select %22, %25, %16 : vector<64x32xi1>, vector<64x32xf32>
    %cst_16 = arith.constant dense<0xFF800000> : vector<32xf32>
    %27 = vector.multi_reduction <maximumf>, %24, %cst_16 [0] : vector<64x32xf32> to vector<32xf32>
    %28 = vector.shape_cast %27 : vector<32xf32> to vector<1x32xf32>
    %cst_17 = arith.constant dense<0x7F800000> : vector<32xf32>
    %29 = vector.multi_reduction <minimumf>, %26, %cst_17 [0] : vector<64x32xf32> to vector<32xf32>
    %30 = vector.shape_cast %29 : vector<32xf32> to vector<1x32xf32>
    %31 = math.sqrt %28 : vector<1x32xf32>
    %32 = math.sqrt %30 : vector<1x32xf32>
    %33 = tpu.iota {dimensions = array<i32: 0>} : vector<64x32xi32>
    %34 = tpu.iota {dimensions = array<i32: 1>} : vector<64x32xi32>
    %35 = vector.broadcast %28 : vector<1x32xf32> to vector<64x32xf32>
    %36 = arith.cmpf oeq, %24, %35 : vector<64x32xf32>
    %c64_i32 = arith.constant 64 : i32
    %37 = vector.broadcast %c64_i32 : i32 to vector<64x32xi32>
    %38 = arith.select %36, %33, %37 : vector<64x32xi1>, vector<64x32xi32>
    %cst_18 = arith.constant dense<2147483647> : vector<32xi32>
    %39 = vector.multi_reduction <minsi>, %38, %cst_18 [0] : vector<64x32xi32> to vector<32xi32>
    %40 = vector.shape_cast %39 : vector<32xi32> to vector<1x32xi32>
    %41 = vector.broadcast %30 : vector<1x32xf32> to vector<64x32xf32>
    %42 = arith.cmpf oeq, %26, %41 : vector<64x32xf32>
    %c64_i32_19 = arith.constant 64 : i32
    %43 = vector.broadcast %c64_i32_19 : i32 to vector<64x32xi32>
    %44 = arith.select %42, %33, %43 : vector<64x32xi1>, vector<64x32xi32>
    %cst_20 = arith.constant dense<2147483647> : vector<32xi32>
    %45 = vector.multi_reduction <minsi>, %44, %cst_20 [0] : vector<64x32xi32> to vector<32xi32>
    %46 = vector.shape_cast %45 : vector<32xi32> to vector<1x32xi32>
    %47 = vector.broadcast %1 : i32 to vector<64x32xi32>
    %48 = arith.addi %34, %47 : vector<64x32xi32>
    %49 = arith.cmpi eq, %33, %48 : vector<64x32xi32>
    %50 = arith.extui %49 : vector<64x32xi1> to vector<64x32xi32>
    %51 = arith.sitofp %50 : vector<64x32xi32> to vector<64x32xf32>
    %52 = vector.broadcast %40 : vector<1x32xi32> to vector<64x32xi32>
    %53 = arith.cmpi eq, %33, %52 : vector<64x32xi32>
    %54 = arith.extui %53 : vector<64x32xi1> to vector<64x32xi32>
    %55 = arith.sitofp %54 : vector<64x32xi32> to vector<64x32xf32>
    %56 = vector.broadcast %46 : vector<1x32xi32> to vector<64x32xi32>
    %57 = arith.cmpi eq, %33, %56 : vector<64x32xi32>
    %58 = arith.extui %57 : vector<64x32xi1> to vector<64x32xi32>
    %59 = arith.sitofp %58 : vector<64x32xi32> to vector<64x32xf32>
    %60 = tpu.concatenate %51, %55, %59 in 1 : vector<64x32xf32>, vector<64x32xf32>, vector<64x32xf32> -> vector<64x96xf32>
    %c0_21 = arith.constant 0 : index
    %c0_22 = arith.constant 0 : index
    %61 = vector.load %arg6[%c0_21, %c0_22] : memref<256x64xf32, #tpu.memory_space<vmem>>, vector<256x64xf32>
    %cst_23 = arith.constant dense<0.000000e+00> : vector<256x96xf32>
    %62 = tpu.matmul %61, %60, %cst_23 {dimension_numbers = #tpu.dot_dimension_numbers<[1], [0], [0], [1], [0, 0, 1, 1], [], []>} : vector<256x64xf32>, vector<64x96xf32>, vector<256x96xf32> -> vector<256x96xf32>
    %63 = vector.shape_cast %62 : vector<256x96xf32> to vector<8x32x96xf32>
    %64 = vector.extract_strided_slice %63 {offsets = [0, 0, 0], sizes = [8, 32, 32], strides = [1, 1, 1]} : vector<8x32x96xf32> to vector<8x32x32xf32>
    %65 = vector.extract_strided_slice %63 {offsets = [0, 0, 32], sizes = [8, 32, 64], strides = [1, 1, 1]} : vector<8x32x96xf32> to vector<8x32x64xf32>
    %66 = arith.mulf %64, %64 : vector<8x32x32xf32>
    %cst_24 = arith.constant dense<0.000000e+00> : vector<8x32xf32>
    %67 = vector.multi_reduction <add>, %66, %cst_24 [1] : vector<8x32x32xf32> to vector<8x32xf32>
    %68 = tpu.concatenate %67, %67 in 1 : vector<8x32xf32>, vector<8x32xf32> -> vector<8x64xf32>
    %69 = arith.mulf %65, %65 : vector<8x32x64xf32>
    %cst_25 = arith.constant dense<0.000000e+00> : vector<8x64xf32>
    %70 = vector.multi_reduction <add>, %69, %cst_25 [1] : vector<8x32x64xf32> to vector<8x64xf32>
    %71 = tpu.concatenate %64, %64 in 2 : vector<8x32x32xf32>, vector<8x32x32xf32> -> vector<8x32x64xf32>
    %72 = vector.extract_strided_slice %65 {offsets = [0, 0, 0], sizes = [1, 32, 64], strides = [1, 1, 1]} : vector<8x32x64xf32> to vector<1x32x64xf32>
    %73 = vector.broadcast %72 : vector<1x32x64xf32> to vector<8x32x64xf32>
    %74 = arith.mulf %71, %73 : vector<8x32x64xf32>
    %cst_26 = arith.constant dense<0.000000e+00> : vector<8x64xf32>
    %75 = vector.multi_reduction <add>, %74, %cst_26 [1] : vector<8x32x64xf32> to vector<8x64xf32>
    %76 = vector.extract_strided_slice %70 {offsets = [0, 0], sizes = [1, 64], strides = [1, 1]} : vector<8x64xf32> to vector<1x64xf32>
    %77 = vector.broadcast %76 : vector<1x64xf32> to vector<8x64xf32>
    %78 = arith.addf %68, %77 : vector<8x64xf32>
    %cst_27 = arith.constant 2.000000e+00 : f32
    %79 = vector.broadcast %cst_27 : f32 to vector<8x64xf32>
    %80 = arith.mulf %79, %75 : vector<8x64xf32>
    %81 = arith.subf %78, %80 : vector<8x64xf32>
    %cst_28 = arith.constant 9.99999996E-13 : f32
    %82 = vector.broadcast %cst_28 : f32 to vector<8x64xf32>
    %83 = arith.maximumf %81, %82 : vector<8x64xf32>
    %84 = math.sqrt %83 : vector<8x64xf32>
    %cst_29 = arith.constant 5.000000e-01 : f32
    %85 = vector.broadcast %cst_29 : f32 to vector<8x64xf32>
    %86 = arith.mulf %85, %84 : vector<8x64xf32>
    %87 = math.tanh %86 : vector<8x64xf32>
    %88 = vector.extract_strided_slice %65 {offsets = [1, 0, 0], sizes = [1, 32, 64], strides = [1, 1, 1]} : vector<8x32x64xf32> to vector<1x32x64xf32>
    %89 = vector.broadcast %88 : vector<1x32x64xf32> to vector<8x32x64xf32>
    %90 = arith.mulf %71, %89 : vector<8x32x64xf32>
    %cst_30 = arith.constant dense<0.000000e+00> : vector<8x64xf32>
    %91 = vector.multi_reduction <add>, %90, %cst_30 [1] : vector<8x32x64xf32> to vector<8x64xf32>
    %92 = vector.extract_strided_slice %70 {offsets = [1, 0], sizes = [1, 64], strides = [1, 1]} : vector<8x64xf32> to vector<1x64xf32>
    %93 = vector.broadcast %92 : vector<1x64xf32> to vector<8x64xf32>
    %94 = arith.addf %68, %93 : vector<8x64xf32>
    %cst_31 = arith.constant 2.000000e+00 : f32
    %95 = vector.broadcast %cst_31 : f32 to vector<8x64xf32>
    %96 = arith.mulf %95, %91 : vector<8x64xf32>
    %97 = arith.subf %94, %96 : vector<8x64xf32>
    %cst_32 = arith.constant 9.99999996E-13 : f32
    %98 = vector.broadcast %cst_32 : f32 to vector<8x64xf32>
    %99 = arith.maximumf %97, %98 : vector<8x64xf32>
    %100 = math.sqrt %99 : vector<8x64xf32>
    %cst_33 = arith.constant 5.000000e-01 : f32
    %101 = vector.broadcast %cst_33 : f32 to vector<8x64xf32>
    %102 = arith.mulf %101, %100 : vector<8x64xf32>
    %103 = math.tanh %102 : vector<8x64xf32>
    %104 = vector.extract_strided_slice %65 {offsets = [2, 0, 0], sizes = [1, 32, 64], strides = [1, 1, 1]} : vector<8x32x64xf32> to vector<1x32x64xf32>
    %105 = vector.broadcast %104 : vector<1x32x64xf32> to vector<8x32x64xf32>
    %106 = arith.mulf %71, %105 : vector<8x32x64xf32>
    %cst_34 = arith.constant dense<0.000000e+00> : vector<8x64xf32>
    %107 = vector.multi_reduction <add>, %106, %cst_34 [1] : vector<8x32x64xf32> to vector<8x64xf32>
    %108 = vector.extract_strided_slice %70 {offsets = [2, 0], sizes = [1, 64], strides = [1, 1]} : vector<8x64xf32> to vector<1x64xf32>
    %109 = vector.broadcast %108 : vector<1x64xf32> to vector<8x64xf32>
    %110 = arith.addf %68, %109 : vector<8x64xf32>
    %cst_35 = arith.constant 2.000000e+00 : f32
    %111 = vector.broadcast %cst_35 : f32 to vector<8x64xf32>
    %112 = arith.mulf %111, %107 : vector<8x64xf32>
    %113 = arith.subf %110, %112 : vector<8x64xf32>
    %cst_36 = arith.constant 9.99999996E-13 : f32
    %114 = vector.broadcast %cst_36 : f32 to vector<8x64xf32>
    %115 = arith.maximumf %113, %114 : vector<8x64xf32>
    %116 = math.sqrt %115 : vector<8x64xf32>
    %cst_37 = arith.constant 5.000000e-01 : f32
    %117 = vector.broadcast %cst_37 : f32 to vector<8x64xf32>
    %118 = arith.mulf %117, %116 : vector<8x64xf32>
    %119 = math.tanh %118 : vector<8x64xf32>
    %120 = vector.extract_strided_slice %65 {offsets = [3, 0, 0], sizes = [1, 32, 64], strides = [1, 1, 1]} : vector<8x32x64xf32> to vector<1x32x64xf32>
    %121 = vector.broadcast %120 : vector<1x32x64xf32> to vector<8x32x64xf32>
    %122 = arith.mulf %71, %121 : vector<8x32x64xf32>
    %cst_38 = arith.constant dense<0.000000e+00> : vector<8x64xf32>
    %123 = vector.multi_reduction <add>, %122, %cst_38 [1] : vector<8x32x64xf32> to vector<8x64xf32>
    %124 = vector.extract_strided_slice %70 {offsets = [3, 0], sizes = [1, 64], strides = [1, 1]} : vector<8x64xf32> to vector<1x64xf32>
    %125 = vector.broadcast %124 : vector<1x64xf32> to vector<8x64xf32>
    %126 = arith.addf %68, %125 : vector<8x64xf32>
    %cst_39 = arith.constant 2.000000e+00 : f32
    %127 = vector.broadcast %cst_39 : f32 to vector<8x64xf32>
    %128 = arith.mulf %127, %123 : vector<8x64xf32>
    %129 = arith.subf %126, %128 : vector<8x64xf32>
    %cst_40 = arith.constant 9.99999996E-13 : f32
    %130 = vector.broadcast %cst_40 : f32 to vector<8x64xf32>
    %131 = arith.maximumf %129, %130 : vector<8x64xf32>
    %132 = math.sqrt %131 : vector<8x64xf32>
    %cst_41 = arith.constant 5.000000e-01 : f32
    %133 = vector.broadcast %cst_41 : f32 to vector<8x64xf32>
    %134 = arith.mulf %133, %132 : vector<8x64xf32>
    %135 = math.tanh %134 : vector<8x64xf32>
    %136 = vector.extract_strided_slice %65 {offsets = [4, 0, 0], sizes = [1, 32, 64], strides = [1, 1, 1]} : vector<8x32x64xf32> to vector<1x32x64xf32>
    %137 = vector.broadcast %136 : vector<1x32x64xf32> to vector<8x32x64xf32>
    %138 = arith.mulf %71, %137 : vector<8x32x64xf32>
    %cst_42 = arith.constant dense<0.000000e+00> : vector<8x64xf32>
    %139 = vector.multi_reduction <add>, %138, %cst_42 [1] : vector<8x32x64xf32> to vector<8x64xf32>
    %140 = vector.extract_strided_slice %70 {offsets = [4, 0], sizes = [1, 64], strides = [1, 1]} : vector<8x64xf32> to vector<1x64xf32>
    %141 = vector.broadcast %140 : vector<1x64xf32> to vector<8x64xf32>
    %142 = arith.addf %68, %141 : vector<8x64xf32>
    %cst_43 = arith.constant 2.000000e+00 : f32
    %143 = vector.broadcast %cst_43 : f32 to vector<8x64xf32>
    %144 = arith.mulf %143, %139 : vector<8x64xf32>
    %145 = arith.subf %142, %144 : vector<8x64xf32>
    %cst_44 = arith.constant 9.99999996E-13 : f32
    %146 = vector.broadcast %cst_44 : f32 to vector<8x64xf32>
    %147 = arith.maximumf %145, %146 : vector<8x64xf32>
    %148 = math.sqrt %147 : vector<8x64xf32>
    %cst_45 = arith.constant 5.000000e-01 : f32
    %149 = vector.broadcast %cst_45 : f32 to vector<8x64xf32>
    %150 = arith.mulf %149, %148 : vector<8x64xf32>
    %151 = math.tanh %150 : vector<8x64xf32>
    %152 = vector.extract_strided_slice %65 {offsets = [5, 0, 0], sizes = [1, 32, 64], strides = [1, 1, 1]} : vector<8x32x64xf32> to vector<1x32x64xf32>
    %153 = vector.broadcast %152 : vector<1x32x64xf32> to vector<8x32x64xf32>
    %154 = arith.mulf %71, %153 : vector<8x32x64xf32>
    %cst_46 = arith.constant dense<0.000000e+00> : vector<8x64xf32>
    %155 = vector.multi_reduction <add>, %154, %cst_46 [1] : vector<8x32x64xf32> to vector<8x64xf32>
    %156 = vector.extract_strided_slice %70 {offsets = [5, 0], sizes = [1, 64], strides = [1, 1]} : vector<8x64xf32> to vector<1x64xf32>
    %157 = vector.broadcast %156 : vector<1x64xf32> to vector<8x64xf32>
    %158 = arith.addf %68, %157 : vector<8x64xf32>
    %cst_47 = arith.constant 2.000000e+00 : f32
    %159 = vector.broadcast %cst_47 : f32 to vector<8x64xf32>
    %160 = arith.mulf %159, %155 : vector<8x64xf32>
    %161 = arith.subf %158, %160 : vector<8x64xf32>
    %cst_48 = arith.constant 9.99999996E-13 : f32
    %162 = vector.broadcast %cst_48 : f32 to vector<8x64xf32>
    %163 = arith.maximumf %161, %162 : vector<8x64xf32>
    %164 = math.sqrt %163 : vector<8x64xf32>
    %cst_49 = arith.constant 5.000000e-01 : f32
    %165 = vector.broadcast %cst_49 : f32 to vector<8x64xf32>
    %166 = arith.mulf %165, %164 : vector<8x64xf32>
    %167 = math.tanh %166 : vector<8x64xf32>
    %168 = vector.extract_strided_slice %65 {offsets = [6, 0, 0], sizes = [1, 32, 64], strides = [1, 1, 1]} : vector<8x32x64xf32> to vector<1x32x64xf32>
    %169 = vector.broadcast %168 : vector<1x32x64xf32> to vector<8x32x64xf32>
    %170 = arith.mulf %71, %169 : vector<8x32x64xf32>
    %cst_50 = arith.constant dense<0.000000e+00> : vector<8x64xf32>
    %171 = vector.multi_reduction <add>, %170, %cst_50 [1] : vector<8x32x64xf32> to vector<8x64xf32>
    %172 = vector.extract_strided_slice %70 {offsets = [6, 0], sizes = [1, 64], strides = [1, 1]} : vector<8x64xf32> to vector<1x64xf32>
    %173 = vector.broadcast %172 : vector<1x64xf32> to vector<8x64xf32>
    %174 = arith.addf %68, %173 : vector<8x64xf32>
    %cst_51 = arith.constant 2.000000e+00 : f32
    %175 = vector.broadcast %cst_51 : f32 to vector<8x64xf32>
    %176 = arith.mulf %175, %171 : vector<8x64xf32>
    %177 = arith.subf %174, %176 : vector<8x64xf32>
    %cst_52 = arith.constant 9.99999996E-13 : f32
    %178 = vector.broadcast %cst_52 : f32 to vector<8x64xf32>
    %179 = arith.maximumf %177, %178 : vector<8x64xf32>
    %180 = math.sqrt %179 : vector<8x64xf32>
    %cst_53 = arith.constant 5.000000e-01 : f32
    %181 = vector.broadcast %cst_53 : f32 to vector<8x64xf32>
    %182 = arith.mulf %181, %180 : vector<8x64xf32>
    %183 = math.tanh %182 : vector<8x64xf32>
    %184 = vector.extract_strided_slice %65 {offsets = [7, 0, 0], sizes = [1, 32, 64], strides = [1, 1, 1]} : vector<8x32x64xf32> to vector<1x32x64xf32>
    %185 = vector.broadcast %184 : vector<1x32x64xf32> to vector<8x32x64xf32>
    %186 = arith.mulf %71, %185 : vector<8x32x64xf32>
    %cst_54 = arith.constant dense<0.000000e+00> : vector<8x64xf32>
    %187 = vector.multi_reduction <add>, %186, %cst_54 [1] : vector<8x32x64xf32> to vector<8x64xf32>
    %188 = vector.extract_strided_slice %70 {offsets = [7, 0], sizes = [1, 64], strides = [1, 1]} : vector<8x64xf32> to vector<1x64xf32>
    %189 = vector.broadcast %188 : vector<1x64xf32> to vector<8x64xf32>
    %190 = arith.addf %68, %189 : vector<8x64xf32>
    %cst_55 = arith.constant 2.000000e+00 : f32
    %191 = vector.broadcast %cst_55 : f32 to vector<8x64xf32>
    %192 = arith.mulf %191, %187 : vector<8x64xf32>
    %193 = arith.subf %190, %192 : vector<8x64xf32>
    %cst_56 = arith.constant 9.99999996E-13 : f32
    %194 = vector.broadcast %cst_56 : f32 to vector<8x64xf32>
    %195 = arith.maximumf %193, %194 : vector<8x64xf32>
    %196 = math.sqrt %195 : vector<8x64xf32>
    %cst_57 = arith.constant 5.000000e-01 : f32
    %197 = vector.broadcast %cst_57 : f32 to vector<8x64xf32>
    %198 = arith.mulf %197, %196 : vector<8x64xf32>
    %199 = math.tanh %198 : vector<8x64xf32>
    %200 = tpu.iota {dimensions = array<i32: 0>} : vector<8x64xi32>
    %cst_58 = arith.constant 0x7F800000 : f32
    %201 = vector.broadcast %cst_58 : f32 to vector<1x64xf32>
    %c0_i32 = arith.constant 0 : i32
    %202 = vector.broadcast %c0_i32 : i32 to vector<8x64xi32>
    %203 = arith.cmpi eq, %200, %202 : vector<8x64xi32>
    %cst_59 = arith.constant 0x7F800000 : f32
    %204 = vector.broadcast %cst_59 : f32 to vector<8x64xf32>
    %205 = arith.select %203, %87, %204 : vector<8x64xi1>, vector<8x64xf32>
    %206 = vector.extract_strided_slice %205 {offsets = [0, 0], sizes = [7, 64], strides = [1, 1]} : vector<8x64xf32> to vector<7x64xf32>
    %207 = tpu.concatenate %201, %206 in 0 : vector<1x64xf32>, vector<7x64xf32> -> vector<8x64xf32>
    %c1_i32 = arith.constant 1 : i32
    %208 = vector.broadcast %c1_i32 : i32 to vector<8x64xi32>
    %209 = arith.cmpi eq, %200, %208 : vector<8x64xi32>
    %cst_60 = arith.constant 0x7F800000 : f32
    %210 = vector.broadcast %cst_60 : f32 to vector<8x64xf32>
    %211 = arith.select %209, %210, %205 : vector<8x64xi1>, vector<8x64xf32>
    %212 = arith.minimumf %211, %207 : vector<8x64xf32>
    %c1_i32_61 = arith.constant 1 : i32
    %213 = vector.broadcast %c1_i32_61 : i32 to vector<8x64xi32>
    %214 = arith.cmpi eq, %200, %213 : vector<8x64xi32>
    %cst_62 = arith.constant 0.000000e+00 : f32
    %215 = vector.broadcast %cst_62 : f32 to vector<8x64xf32>
    %216 = arith.select %214, %87, %215 : vector<8x64xi1>, vector<8x64xf32>
    %c0_i32_63 = arith.constant 0 : i32
    %217 = vector.broadcast %c0_i32_63 : i32 to vector<8x64xi32>
    %218 = arith.cmpi eq, %200, %217 : vector<8x64xi32>
    %cst_64 = arith.constant 0.000000e+00 : f32
    %219 = vector.broadcast %cst_64 : f32 to vector<8x64xf32>
    %220 = arith.select %218, %103, %219 : vector<8x64xi1>, vector<8x64xf32>
    %221 = arith.addf %216, %220 : vector<8x64xf32>
    %222 = arith.addf %212, %221 : vector<8x64xf32>
    %223 = vector.extract_strided_slice %222 {offsets = [0, 0], sizes = [7, 64], strides = [1, 1]} : vector<8x64xf32> to vector<7x64xf32>
    %224 = tpu.concatenate %201, %223 in 0 : vector<1x64xf32>, vector<7x64xf32> -> vector<8x64xf32>
    %c2_i32 = arith.constant 2 : i32
    %225 = vector.broadcast %c2_i32 : i32 to vector<8x64xi32>
    %226 = arith.cmpi eq, %200, %225 : vector<8x64xi32>
    %cst_65 = arith.constant 0x7F800000 : f32
    %227 = vector.broadcast %cst_65 : f32 to vector<8x64xf32>
    %228 = arith.select %226, %227, %222 : vector<8x64xi1>, vector<8x64xf32>
    %229 = arith.minimumf %228, %224 : vector<8x64xf32>
    %c2_i32_66 = arith.constant 2 : i32
    %230 = vector.broadcast %c2_i32_66 : i32 to vector<8x64xi32>
    %231 = arith.cmpi eq, %200, %230 : vector<8x64xi32>
    %cst_67 = arith.constant 0.000000e+00 : f32
    %232 = vector.broadcast %cst_67 : f32 to vector<8x64xf32>
    %233 = arith.select %231, %87, %232 : vector<8x64xi1>, vector<8x64xf32>
    %c1_i32_68 = arith.constant 1 : i32
    %234 = vector.broadcast %c1_i32_68 : i32 to vector<8x64xi32>
    %235 = arith.cmpi eq, %200, %234 : vector<8x64xi32>
    %cst_69 = arith.constant 0.000000e+00 : f32
    %236 = vector.broadcast %cst_69 : f32 to vector<8x64xf32>
    %237 = arith.select %235, %103, %236 : vector<8x64xi1>, vector<8x64xf32>
    %238 = arith.addf %233, %237 : vector<8x64xf32>
    %c0_i32_70 = arith.constant 0 : i32
    %239 = vector.broadcast %c0_i32_70 : i32 to vector<8x64xi32>
    %240 = arith.cmpi eq, %200, %239 : vector<8x64xi32>
    %cst_71 = arith.constant 0.000000e+00 : f32
    %241 = vector.broadcast %cst_71 : f32 to vector<8x64xf32>
    %242 = arith.select %240, %119, %241 : vector<8x64xi1>, vector<8x64xf32>
    %243 = arith.addf %238, %242 : vector<8x64xf32>
    %244 = arith.addf %229, %243 : vector<8x64xf32>
    %245 = vector.extract_strided_slice %244 {offsets = [0, 0], sizes = [7, 64], strides = [1, 1]} : vector<8x64xf32> to vector<7x64xf32>
    %246 = tpu.concatenate %201, %245 in 0 : vector<1x64xf32>, vector<7x64xf32> -> vector<8x64xf32>
    %c3_i32 = arith.constant 3 : i32
    %247 = vector.broadcast %c3_i32 : i32 to vector<8x64xi32>
    %248 = arith.cmpi eq, %200, %247 : vector<8x64xi32>
    %cst_72 = arith.constant 0x7F800000 : f32
    %249 = vector.broadcast %cst_72 : f32 to vector<8x64xf32>
    %250 = arith.select %248, %249, %244 : vector<8x64xi1>, vector<8x64xf32>
    %251 = arith.minimumf %250, %246 : vector<8x64xf32>
    %c3_i32_73 = arith.constant 3 : i32
    %252 = vector.broadcast %c3_i32_73 : i32 to vector<8x64xi32>
    %253 = arith.cmpi eq, %200, %252 : vector<8x64xi32>
    %cst_74 = arith.constant 0.000000e+00 : f32
    %254 = vector.broadcast %cst_74 : f32 to vector<8x64xf32>
    %255 = arith.select %253, %87, %254 : vector<8x64xi1>, vector<8x64xf32>
    %c2_i32_75 = arith.constant 2 : i32
    %256 = vector.broadcast %c2_i32_75 : i32 to vector<8x64xi32>
    %257 = arith.cmpi eq, %200, %256 : vector<8x64xi32>
    %cst_76 = arith.constant 0.000000e+00 : f32
    %258 = vector.broadcast %cst_76 : f32 to vector<8x64xf32>
    %259 = arith.select %257, %103, %258 : vector<8x64xi1>, vector<8x64xf32>
    %260 = arith.addf %255, %259 : vector<8x64xf32>
    %c1_i32_77 = arith.constant 1 : i32
    %261 = vector.broadcast %c1_i32_77 : i32 to vector<8x64xi32>
    %262 = arith.cmpi eq, %200, %261 : vector<8x64xi32>
    %cst_78 = arith.constant 0.000000e+00 : f32
    %263 = vector.broadcast %cst_78 : f32 to vector<8x64xf32>
    %264 = arith.select %262, %119, %263 : vector<8x64xi1>, vector<8x64xf32>
    %265 = arith.addf %260, %264 : vector<8x64xf32>
    %c0_i32_79 = arith.constant 0 : i32
    %266 = vector.broadcast %c0_i32_79 : i32 to vector<8x64xi32>
    %267 = arith.cmpi eq, %200, %266 : vector<8x64xi32>
    %cst_80 = arith.constant 0.000000e+00 : f32
    %268 = vector.broadcast %cst_80 : f32 to vector<8x64xf32>
    %269 = arith.select %267, %135, %268 : vector<8x64xi1>, vector<8x64xf32>
    %270 = arith.addf %265, %269 : vector<8x64xf32>
    %271 = arith.addf %251, %270 : vector<8x64xf32>
    %272 = vector.extract_strided_slice %271 {offsets = [0, 0], sizes = [7, 64], strides = [1, 1]} : vector<8x64xf32> to vector<7x64xf32>
    %273 = tpu.concatenate %201, %272 in 0 : vector<1x64xf32>, vector<7x64xf32> -> vector<8x64xf32>
    %c4_i32 = arith.constant 4 : i32
    %274 = vector.broadcast %c4_i32 : i32 to vector<8x64xi32>
    %275 = arith.cmpi eq, %200, %274 : vector<8x64xi32>
    %cst_81 = arith.constant 0x7F800000 : f32
    %276 = vector.broadcast %cst_81 : f32 to vector<8x64xf32>
    %277 = arith.select %275, %276, %271 : vector<8x64xi1>, vector<8x64xf32>
    %278 = arith.minimumf %277, %273 : vector<8x64xf32>
    %c4_i32_82 = arith.constant 4 : i32
    %279 = vector.broadcast %c4_i32_82 : i32 to vector<8x64xi32>
    %280 = arith.cmpi eq, %200, %279 : vector<8x64xi32>
    %cst_83 = arith.constant 0.000000e+00 : f32
    %281 = vector.broadcast %cst_83 : f32 to vector<8x64xf32>
    %282 = arith.select %280, %87, %281 : vector<8x64xi1>, vector<8x64xf32>
    %c3_i32_84 = arith.constant 3 : i32
    %283 = vector.broadcast %c3_i32_84 : i32 to vector<8x64xi32>
    %284 = arith.cmpi eq, %200, %283 : vector<8x64xi32>
    %cst_85 = arith.constant 0.000000e+00 : f32
    %285 = vector.broadcast %cst_85 : f32 to vector<8x64xf32>
    %286 = arith.select %284, %103, %285 : vector<8x64xi1>, vector<8x64xf32>
    %287 = arith.addf %282, %286 : vector<8x64xf32>
    %c2_i32_86 = arith.constant 2 : i32
    %288 = vector.broadcast %c2_i32_86 : i32 to vector<8x64xi32>
    %289 = arith.cmpi eq, %200, %288 : vector<8x64xi32>
    %cst_87 = arith.constant 0.000000e+00 : f32
    %290 = vector.broadcast %cst_87 : f32 to vector<8x64xf32>
    %291 = arith.select %289, %119, %290 : vector<8x64xi1>, vector<8x64xf32>
    %292 = arith.addf %287, %291 : vector<8x64xf32>
    %c1_i32_88 = arith.constant 1 : i32
    %293 = vector.broadcast %c1_i32_88 : i32 to vector<8x64xi32>
    %294 = arith.cmpi eq, %200, %293 : vector<8x64xi32>
    %cst_89 = arith.constant 0.000000e+00 : f32
    %295 = vector.broadcast %cst_89 : f32 to vector<8x64xf32>
    %296 = arith.select %294, %135, %295 : vector<8x64xi1>, vector<8x64xf32>
    %297 = arith.addf %292, %296 : vector<8x64xf32>
    %c0_i32_90 = arith.constant 0 : i32
    %298 = vector.broadcast %c0_i32_90 : i32 to vector<8x64xi32>
    %299 = arith.cmpi eq, %200, %298 : vector<8x64xi32>
    %cst_91 = arith.constant 0.000000e+00 : f32
    %300 = vector.broadcast %cst_91 : f32 to vector<8x64xf32>
    %301 = arith.select %299, %151, %300 : vector<8x64xi1>, vector<8x64xf32>
    %302 = arith.addf %297, %301 : vector<8x64xf32>
    %303 = arith.addf %278, %302 : vector<8x64xf32>
    %304 = vector.extract_strided_slice %303 {offsets = [0, 0], sizes = [7, 64], strides = [1, 1]} : vector<8x64xf32> to vector<7x64xf32>
    %305 = tpu.concatenate %201, %304 in 0 : vector<1x64xf32>, vector<7x64xf32> -> vector<8x64xf32>
    %c5_i32 = arith.constant 5 : i32
    %306 = vector.broadcast %c5_i32 : i32 to vector<8x64xi32>
    %307 = arith.cmpi eq, %200, %306 : vector<8x64xi32>
    %cst_92 = arith.constant 0x7F800000 : f32
    %308 = vector.broadcast %cst_92 : f32 to vector<8x64xf32>
    %309 = arith.select %307, %308, %303 : vector<8x64xi1>, vector<8x64xf32>
    %310 = arith.minimumf %309, %305 : vector<8x64xf32>
    %c5_i32_93 = arith.constant 5 : i32
    %311 = vector.broadcast %c5_i32_93 : i32 to vector<8x64xi32>
    %312 = arith.cmpi eq, %200, %311 : vector<8x64xi32>
    %cst_94 = arith.constant 0.000000e+00 : f32
    %313 = vector.broadcast %cst_94 : f32 to vector<8x64xf32>
    %314 = arith.select %312, %87, %313 : vector<8x64xi1>, vector<8x64xf32>
    %c4_i32_95 = arith.constant 4 : i32
    %315 = vector.broadcast %c4_i32_95 : i32 to vector<8x64xi32>
    %316 = arith.cmpi eq, %200, %315 : vector<8x64xi32>
    %cst_96 = arith.constant 0.000000e+00 : f32
    %317 = vector.broadcast %cst_96 : f32 to vector<8x64xf32>
    %318 = arith.select %316, %103, %317 : vector<8x64xi1>, vector<8x64xf32>
    %319 = arith.addf %314, %318 : vector<8x64xf32>
    %c3_i32_97 = arith.constant 3 : i32
    %320 = vector.broadcast %c3_i32_97 : i32 to vector<8x64xi32>
    %321 = arith.cmpi eq, %200, %320 : vector<8x64xi32>
    %cst_98 = arith.constant 0.000000e+00 : f32
    %322 = vector.broadcast %cst_98 : f32 to vector<8x64xf32>
    %323 = arith.select %321, %119, %322 : vector<8x64xi1>, vector<8x64xf32>
    %324 = arith.addf %319, %323 : vector<8x64xf32>
    %c2_i32_99 = arith.constant 2 : i32
    %325 = vector.broadcast %c2_i32_99 : i32 to vector<8x64xi32>
    %326 = arith.cmpi eq, %200, %325 : vector<8x64xi32>
    %cst_100 = arith.constant 0.000000e+00 : f32
    %327 = vector.broadcast %cst_100 : f32 to vector<8x64xf32>
    %328 = arith.select %326, %135, %327 : vector<8x64xi1>, vector<8x64xf32>
    %329 = arith.addf %324, %328 : vector<8x64xf32>
    %c1_i32_101 = arith.constant 1 : i32
    %330 = vector.broadcast %c1_i32_101 : i32 to vector<8x64xi32>
    %331 = arith.cmpi eq, %200, %330 : vector<8x64xi32>
    %cst_102 = arith.constant 0.000000e+00 : f32
    %332 = vector.broadcast %cst_102 : f32 to vector<8x64xf32>
    %333 = arith.select %331, %151, %332 : vector<8x64xi1>, vector<8x64xf32>
    %334 = arith.addf %329, %333 : vector<8x64xf32>
    %c0_i32_103 = arith.constant 0 : i32
    %335 = vector.broadcast %c0_i32_103 : i32 to vector<8x64xi32>
    %336 = arith.cmpi eq, %200, %335 : vector<8x64xi32>
    %cst_104 = arith.constant 0.000000e+00 : f32
    %337 = vector.broadcast %cst_104 : f32 to vector<8x64xf32>
    %338 = arith.select %336, %167, %337 : vector<8x64xi1>, vector<8x64xf32>
    %339 = arith.addf %334, %338 : vector<8x64xf32>
    %340 = arith.addf %310, %339 : vector<8x64xf32>
    %341 = vector.extract_strided_slice %340 {offsets = [0, 0], sizes = [7, 64], strides = [1, 1]} : vector<8x64xf32> to vector<7x64xf32>
    %342 = tpu.concatenate %201, %341 in 0 : vector<1x64xf32>, vector<7x64xf32> -> vector<8x64xf32>
    %c6_i32 = arith.constant 6 : i32
    %343 = vector.broadcast %c6_i32 : i32 to vector<8x64xi32>
    %344 = arith.cmpi eq, %200, %343 : vector<8x64xi32>
    %cst_105 = arith.constant 0x7F800000 : f32
    %345 = vector.broadcast %cst_105 : f32 to vector<8x64xf32>
    %346 = arith.select %344, %345, %340 : vector<8x64xi1>, vector<8x64xf32>
    %347 = arith.minimumf %346, %342 : vector<8x64xf32>
    %c6_i32_106 = arith.constant 6 : i32
    %348 = vector.broadcast %c6_i32_106 : i32 to vector<8x64xi32>
    %349 = arith.cmpi eq, %200, %348 : vector<8x64xi32>
    %cst_107 = arith.constant 0.000000e+00 : f32
    %350 = vector.broadcast %cst_107 : f32 to vector<8x64xf32>
    %351 = arith.select %349, %87, %350 : vector<8x64xi1>, vector<8x64xf32>
    %c5_i32_108 = arith.constant 5 : i32
    %352 = vector.broadcast %c5_i32_108 : i32 to vector<8x64xi32>
    %353 = arith.cmpi eq, %200, %352 : vector<8x64xi32>
    %cst_109 = arith.constant 0.000000e+00 : f32
    %354 = vector.broadcast %cst_109 : f32 to vector<8x64xf32>
    %355 = arith.select %353, %103, %354 : vector<8x64xi1>, vector<8x64xf32>
    %356 = arith.addf %351, %355 : vector<8x64xf32>
    %c4_i32_110 = arith.constant 4 : i32
    %357 = vector.broadcast %c4_i32_110 : i32 to vector<8x64xi32>
    %358 = arith.cmpi eq, %200, %357 : vector<8x64xi32>
    %cst_111 = arith.constant 0.000000e+00 : f32
    %359 = vector.broadcast %cst_111 : f32 to vector<8x64xf32>
    %360 = arith.select %358, %119, %359 : vector<8x64xi1>, vector<8x64xf32>
    %361 = arith.addf %356, %360 : vector<8x64xf32>
    %c3_i32_112 = arith.constant 3 : i32
    %362 = vector.broadcast %c3_i32_112 : i32 to vector<8x64xi32>
    %363 = arith.cmpi eq, %200, %362 : vector<8x64xi32>
    %cst_113 = arith.constant 0.000000e+00 : f32
    %364 = vector.broadcast %cst_113 : f32 to vector<8x64xf32>
    %365 = arith.select %363, %135, %364 : vector<8x64xi1>, vector<8x64xf32>
    %366 = arith.addf %361, %365 : vector<8x64xf32>
    %c2_i32_114 = arith.constant 2 : i32
    %367 = vector.broadcast %c2_i32_114 : i32 to vector<8x64xi32>
    %368 = arith.cmpi eq, %200, %367 : vector<8x64xi32>
    %cst_115 = arith.constant 0.000000e+00 : f32
    %369 = vector.broadcast %cst_115 : f32 to vector<8x64xf32>
    %370 = arith.select %368, %151, %369 : vector<8x64xi1>, vector<8x64xf32>
    %371 = arith.addf %366, %370 : vector<8x64xf32>
    %c1_i32_116 = arith.constant 1 : i32
    %372 = vector.broadcast %c1_i32_116 : i32 to vector<8x64xi32>
    %373 = arith.cmpi eq, %200, %372 : vector<8x64xi32>
    %cst_117 = arith.constant 0.000000e+00 : f32
    %374 = vector.broadcast %cst_117 : f32 to vector<8x64xf32>
    %375 = arith.select %373, %167, %374 : vector<8x64xi1>, vector<8x64xf32>
    %376 = arith.addf %371, %375 : vector<8x64xf32>
    %c0_i32_118 = arith.constant 0 : i32
    %377 = vector.broadcast %c0_i32_118 : i32 to vector<8x64xi32>
    %378 = arith.cmpi eq, %200, %377 : vector<8x64xi32>
    %cst_119 = arith.constant 0.000000e+00 : f32
    %379 = vector.broadcast %cst_119 : f32 to vector<8x64xf32>
    %380 = arith.select %378, %183, %379 : vector<8x64xi1>, vector<8x64xf32>
    %381 = arith.addf %376, %380 : vector<8x64xf32>
    %382 = arith.addf %347, %381 : vector<8x64xf32>
    %383 = vector.extract_strided_slice %382 {offsets = [0, 0], sizes = [7, 64], strides = [1, 1]} : vector<8x64xf32> to vector<7x64xf32>
    %384 = tpu.concatenate %201, %383 in 0 : vector<1x64xf32>, vector<7x64xf32> -> vector<8x64xf32>
    %c7_i32 = arith.constant 7 : i32
    %385 = vector.broadcast %c7_i32 : i32 to vector<8x64xi32>
    %386 = arith.cmpi eq, %200, %385 : vector<8x64xi32>
    %cst_120 = arith.constant 0x7F800000 : f32
    %387 = vector.broadcast %cst_120 : f32 to vector<8x64xf32>
    %388 = arith.select %386, %387, %382 : vector<8x64xi1>, vector<8x64xf32>
    %389 = arith.minimumf %388, %384 : vector<8x64xf32>
    %c7_i32_121 = arith.constant 7 : i32
    %390 = vector.broadcast %c7_i32_121 : i32 to vector<8x64xi32>
    %391 = arith.cmpi eq, %200, %390 : vector<8x64xi32>
    %cst_122 = arith.constant 0.000000e+00 : f32
    %392 = vector.broadcast %cst_122 : f32 to vector<8x64xf32>
    %393 = arith.select %391, %87, %392 : vector<8x64xi1>, vector<8x64xf32>
    %c6_i32_123 = arith.constant 6 : i32
    %394 = vector.broadcast %c6_i32_123 : i32 to vector<8x64xi32>
    %395 = arith.cmpi eq, %200, %394 : vector<8x64xi32>
    %cst_124 = arith.constant 0.000000e+00 : f32
    %396 = vector.broadcast %cst_124 : f32 to vector<8x64xf32>
    %397 = arith.select %395, %103, %396 : vector<8x64xi1>, vector<8x64xf32>
    %398 = arith.addf %393, %397 : vector<8x64xf32>
    %c5_i32_125 = arith.constant 5 : i32
    %399 = vector.broadcast %c5_i32_125 : i32 to vector<8x64xi32>
    %400 = arith.cmpi eq, %200, %399 : vector<8x64xi32>
    %cst_126 = arith.constant 0.000000e+00 : f32
    %401 = vector.broadcast %cst_126 : f32 to vector<8x64xf32>
    %402 = arith.select %400, %119, %401 : vector<8x64xi1>, vector<8x64xf32>
    %403 = arith.addf %398, %402 : vector<8x64xf32>
    %c4_i32_127 = arith.constant 4 : i32
    %404 = vector.broadcast %c4_i32_127 : i32 to vector<8x64xi32>
    %405 = arith.cmpi eq, %200, %404 : vector<8x64xi32>
    %cst_128 = arith.constant 0.000000e+00 : f32
    %406 = vector.broadcast %cst_128 : f32 to vector<8x64xf32>
    %407 = arith.select %405, %135, %406 : vector<8x64xi1>, vector<8x64xf32>
    %408 = arith.addf %403, %407 : vector<8x64xf32>
    %c3_i32_129 = arith.constant 3 : i32
    %409 = vector.broadcast %c3_i32_129 : i32 to vector<8x64xi32>
    %410 = arith.cmpi eq, %200, %409 : vector<8x64xi32>
    %cst_130 = arith.constant 0.000000e+00 : f32
    %411 = vector.broadcast %cst_130 : f32 to vector<8x64xf32>
    %412 = arith.select %410, %151, %411 : vector<8x64xi1>, vector<8x64xf32>
    %413 = arith.addf %408, %412 : vector<8x64xf32>
    %c2_i32_131 = arith.constant 2 : i32
    %414 = vector.broadcast %c2_i32_131 : i32 to vector<8x64xi32>
    %415 = arith.cmpi eq, %200, %414 : vector<8x64xi32>
    %cst_132 = arith.constant 0.000000e+00 : f32
    %416 = vector.broadcast %cst_132 : f32 to vector<8x64xf32>
    %417 = arith.select %415, %167, %416 : vector<8x64xi1>, vector<8x64xf32>
    %418 = arith.addf %413, %417 : vector<8x64xf32>
    %c1_i32_133 = arith.constant 1 : i32
    %419 = vector.broadcast %c1_i32_133 : i32 to vector<8x64xi32>
    %420 = arith.cmpi eq, %200, %419 : vector<8x64xi32>
    %cst_134 = arith.constant 0.000000e+00 : f32
    %421 = vector.broadcast %cst_134 : f32 to vector<8x64xf32>
    %422 = arith.select %420, %183, %421 : vector<8x64xi1>, vector<8x64xf32>
    %423 = arith.addf %418, %422 : vector<8x64xf32>
    %c0_i32_135 = arith.constant 0 : i32
    %424 = vector.broadcast %c0_i32_135 : i32 to vector<8x64xi32>
    %425 = arith.cmpi eq, %200, %424 : vector<8x64xi32>
    %cst_136 = arith.constant 0.000000e+00 : f32
    %426 = vector.broadcast %cst_136 : f32 to vector<8x64xf32>
    %427 = arith.select %425, %199, %426 : vector<8x64xi1>, vector<8x64xf32>
    %428 = arith.addf %423, %427 : vector<8x64xf32>
    %429 = arith.addf %389, %428 : vector<8x64xf32>
    %430 = vector.extract_strided_slice %429 {offsets = [0, 0], sizes = [7, 64], strides = [1, 1]} : vector<8x64xf32> to vector<7x64xf32>
    %431 = tpu.concatenate %201, %430 in 0 : vector<1x64xf32>, vector<7x64xf32> -> vector<8x64xf32>
    %432 = arith.minimumf %429, %431 : vector<8x64xf32>
    %c7_i32_137 = arith.constant 7 : i32
    %433 = vector.broadcast %c7_i32_137 : i32 to vector<8x64xi32>
    %434 = arith.cmpi eq, %200, %433 : vector<8x64xi32>
    %cst_138 = arith.constant 0.000000e+00 : f32
    %435 = vector.broadcast %cst_138 : f32 to vector<8x64xf32>
    %436 = arith.select %434, %103, %435 : vector<8x64xi1>, vector<8x64xf32>
    %c6_i32_139 = arith.constant 6 : i32
    %437 = vector.broadcast %c6_i32_139 : i32 to vector<8x64xi32>
    %438 = arith.cmpi eq, %200, %437 : vector<8x64xi32>
    %cst_140 = arith.constant 0.000000e+00 : f32
    %439 = vector.broadcast %cst_140 : f32 to vector<8x64xf32>
    %440 = arith.select %438, %119, %439 : vector<8x64xi1>, vector<8x64xf32>
    %441 = arith.addf %436, %440 : vector<8x64xf32>
    %c5_i32_141 = arith.constant 5 : i32
    %442 = vector.broadcast %c5_i32_141 : i32 to vector<8x64xi32>
    %443 = arith.cmpi eq, %200, %442 : vector<8x64xi32>
    %cst_142 = arith.constant 0.000000e+00 : f32
    %444 = vector.broadcast %cst_142 : f32 to vector<8x64xf32>
    %445 = arith.select %443, %135, %444 : vector<8x64xi1>, vector<8x64xf32>
    %446 = arith.addf %441, %445 : vector<8x64xf32>
    %c4_i32_143 = arith.constant 4 : i32
    %447 = vector.broadcast %c4_i32_143 : i32 to vector<8x64xi32>
    %448 = arith.cmpi eq, %200, %447 : vector<8x64xi32>
    %cst_144 = arith.constant 0.000000e+00 : f32
    %449 = vector.broadcast %cst_144 : f32 to vector<8x64xf32>
    %450 = arith.select %448, %151, %449 : vector<8x64xi1>, vector<8x64xf32>
    %451 = arith.addf %446, %450 : vector<8x64xf32>
    %c3_i32_145 = arith.constant 3 : i32
    %452 = vector.broadcast %c3_i32_145 : i32 to vector<8x64xi32>
    %453 = arith.cmpi eq, %200, %452 : vector<8x64xi32>
    %cst_146 = arith.constant 0.000000e+00 : f32
    %454 = vector.broadcast %cst_146 : f32 to vector<8x64xf32>
    %455 = arith.select %453, %167, %454 : vector<8x64xi1>, vector<8x64xf32>
    %456 = arith.addf %451, %455 : vector<8x64xf32>
    %c2_i32_147 = arith.constant 2 : i32
    %457 = vector.broadcast %c2_i32_147 : i32 to vector<8x64xi32>
    %458 = arith.cmpi eq, %200, %457 : vector<8x64xi32>
    %cst_148 = arith.constant 0.000000e+00 : f32
    %459 = vector.broadcast %cst_148 : f32 to vector<8x64xf32>
    %460 = arith.select %458, %183, %459 : vector<8x64xi1>, vector<8x64xf32>
    %461 = arith.addf %456, %460 : vector<8x64xf32>
    %c1_i32_149 = arith.constant 1 : i32
    %462 = vector.broadcast %c1_i32_149 : i32 to vector<8x64xi32>
    %463 = arith.cmpi eq, %200, %462 : vector<8x64xi32>
    %cst_150 = arith.constant 0.000000e+00 : f32
    %464 = vector.broadcast %cst_150 : f32 to vector<8x64xf32>
    %465 = arith.select %463, %199, %464 : vector<8x64xi1>, vector<8x64xf32>
    %466 = arith.addf %461, %465 : vector<8x64xf32>
    %467 = arith.addf %432, %466 : vector<8x64xf32>
    %468 = vector.extract_strided_slice %467 {offsets = [0, 0], sizes = [7, 64], strides = [1, 1]} : vector<8x64xf32> to vector<7x64xf32>
    %469 = tpu.concatenate %201, %468 in 0 : vector<1x64xf32>, vector<7x64xf32> -> vector<8x64xf32>
    %470 = arith.minimumf %467, %469 : vector<8x64xf32>
    %c7_i32_151 = arith.constant 7 : i32
    %471 = vector.broadcast %c7_i32_151 : i32 to vector<8x64xi32>
    %472 = arith.cmpi eq, %200, %471 : vector<8x64xi32>
    %cst_152 = arith.constant 0.000000e+00 : f32
    %473 = vector.broadcast %cst_152 : f32 to vector<8x64xf32>
    %474 = arith.select %472, %119, %473 : vector<8x64xi1>, vector<8x64xf32>
    %c6_i32_153 = arith.constant 6 : i32
    %475 = vector.broadcast %c6_i32_153 : i32 to vector<8x64xi32>
    %476 = arith.cmpi eq, %200, %475 : vector<8x64xi32>
    %cst_154 = arith.constant 0.000000e+00 : f32
    %477 = vector.broadcast %cst_154 : f32 to vector<8x64xf32>
    %478 = arith.select %476, %135, %477 : vector<8x64xi1>, vector<8x64xf32>
    %479 = arith.addf %474, %478 : vector<8x64xf32>
    %c5_i32_155 = arith.constant 5 : i32
    %480 = vector.broadcast %c5_i32_155 : i32 to vector<8x64xi32>
    %481 = arith.cmpi eq, %200, %480 : vector<8x64xi32>
    %cst_156 = arith.constant 0.000000e+00 : f32
    %482 = vector.broadcast %cst_156 : f32 to vector<8x64xf32>
    %483 = arith.select %481, %151, %482 : vector<8x64xi1>, vector<8x64xf32>
    %484 = arith.addf %479, %483 : vector<8x64xf32>
    %c4_i32_157 = arith.constant 4 : i32
    %485 = vector.broadcast %c4_i32_157 : i32 to vector<8x64xi32>
    %486 = arith.cmpi eq, %200, %485 : vector<8x64xi32>
    %cst_158 = arith.constant 0.000000e+00 : f32
    %487 = vector.broadcast %cst_158 : f32 to vector<8x64xf32>
    %488 = arith.select %486, %167, %487 : vector<8x64xi1>, vector<8x64xf32>
    %489 = arith.addf %484, %488 : vector<8x64xf32>
    %c3_i32_159 = arith.constant 3 : i32
    %490 = vector.broadcast %c3_i32_159 : i32 to vector<8x64xi32>
    %491 = arith.cmpi eq, %200, %490 : vector<8x64xi32>
    %cst_160 = arith.constant 0.000000e+00 : f32
    %492 = vector.broadcast %cst_160 : f32 to vector<8x64xf32>
    %493 = arith.select %491, %183, %492 : vector<8x64xi1>, vector<8x64xf32>
    %494 = arith.addf %489, %493 : vector<8x64xf32>
    %c2_i32_161 = arith.constant 2 : i32
    %495 = vector.broadcast %c2_i32_161 : i32 to vector<8x64xi32>
    %496 = arith.cmpi eq, %200, %495 : vector<8x64xi32>
    %cst_162 = arith.constant 0.000000e+00 : f32
    %497 = vector.broadcast %cst_162 : f32 to vector<8x64xf32>
    %498 = arith.select %496, %199, %497 : vector<8x64xi1>, vector<8x64xf32>
    %499 = arith.addf %494, %498 : vector<8x64xf32>
    %500 = arith.addf %470, %499 : vector<8x64xf32>
    %501 = vector.extract_strided_slice %500 {offsets = [0, 0], sizes = [7, 64], strides = [1, 1]} : vector<8x64xf32> to vector<7x64xf32>
    %502 = tpu.concatenate %201, %501 in 0 : vector<1x64xf32>, vector<7x64xf32> -> vector<8x64xf32>
    %503 = arith.minimumf %500, %502 : vector<8x64xf32>
    %c7_i32_163 = arith.constant 7 : i32
    %504 = vector.broadcast %c7_i32_163 : i32 to vector<8x64xi32>
    %505 = arith.cmpi eq, %200, %504 : vector<8x64xi32>
    %cst_164 = arith.constant 0.000000e+00 : f32
    %506 = vector.broadcast %cst_164 : f32 to vector<8x64xf32>
    %507 = arith.select %505, %135, %506 : vector<8x64xi1>, vector<8x64xf32>
    %c6_i32_165 = arith.constant 6 : i32
    %508 = vector.broadcast %c6_i32_165 : i32 to vector<8x64xi32>
    %509 = arith.cmpi eq, %200, %508 : vector<8x64xi32>
    %cst_166 = arith.constant 0.000000e+00 : f32
    %510 = vector.broadcast %cst_166 : f32 to vector<8x64xf32>
    %511 = arith.select %509, %151, %510 : vector<8x64xi1>, vector<8x64xf32>
    %512 = arith.addf %507, %511 : vector<8x64xf32>
    %c5_i32_167 = arith.constant 5 : i32
    %513 = vector.broadcast %c5_i32_167 : i32 to vector<8x64xi32>
    %514 = arith.cmpi eq, %200, %513 : vector<8x64xi32>
    %cst_168 = arith.constant 0.000000e+00 : f32
    %515 = vector.broadcast %cst_168 : f32 to vector<8x64xf32>
    %516 = arith.select %514, %167, %515 : vector<8x64xi1>, vector<8x64xf32>
    %517 = arith.addf %512, %516 : vector<8x64xf32>
    %c4_i32_169 = arith.constant 4 : i32
    %518 = vector.broadcast %c4_i32_169 : i32 to vector<8x64xi32>
    %519 = arith.cmpi eq, %200, %518 : vector<8x64xi32>
    %cst_170 = arith.constant 0.000000e+00 : f32
    %520 = vector.broadcast %cst_170 : f32 to vector<8x64xf32>
    %521 = arith.select %519, %183, %520 : vector<8x64xi1>, vector<8x64xf32>
    %522 = arith.addf %517, %521 : vector<8x64xf32>
    %c3_i32_171 = arith.constant 3 : i32
    %523 = vector.broadcast %c3_i32_171 : i32 to vector<8x64xi32>
    %524 = arith.cmpi eq, %200, %523 : vector<8x64xi32>
    %cst_172 = arith.constant 0.000000e+00 : f32
    %525 = vector.broadcast %cst_172 : f32 to vector<8x64xf32>
    %526 = arith.select %524, %199, %525 : vector<8x64xi1>, vector<8x64xf32>
    %527 = arith.addf %522, %526 : vector<8x64xf32>
    %528 = arith.addf %503, %527 : vector<8x64xf32>
    %529 = vector.extract_strided_slice %528 {offsets = [0, 0], sizes = [7, 64], strides = [1, 1]} : vector<8x64xf32> to vector<7x64xf32>
    %530 = tpu.concatenate %201, %529 in 0 : vector<1x64xf32>, vector<7x64xf32> -> vector<8x64xf32>
    %531 = arith.minimumf %528, %530 : vector<8x64xf32>
    %c7_i32_173 = arith.constant 7 : i32
    %532 = vector.broadcast %c7_i32_173 : i32 to vector<8x64xi32>
    %533 = arith.cmpi eq, %200, %532 : vector<8x64xi32>
    %cst_174 = arith.constant 0.000000e+00 : f32
    %534 = vector.broadcast %cst_174 : f32 to vector<8x64xf32>
    %535 = arith.select %533, %151, %534 : vector<8x64xi1>, vector<8x64xf32>
    %c6_i32_175 = arith.constant 6 : i32
    %536 = vector.broadcast %c6_i32_175 : i32 to vector<8x64xi32>
    %537 = arith.cmpi eq, %200, %536 : vector<8x64xi32>
    %cst_176 = arith.constant 0.000000e+00 : f32
    %538 = vector.broadcast %cst_176 : f32 to vector<8x64xf32>
    %539 = arith.select %537, %167, %538 : vector<8x64xi1>, vector<8x64xf32>
    %540 = arith.addf %535, %539 : vector<8x64xf32>
    %c5_i32_177 = arith.constant 5 : i32
    %541 = vector.broadcast %c5_i32_177 : i32 to vector<8x64xi32>
    %542 = arith.cmpi eq, %200, %541 : vector<8x64xi32>
    %cst_178 = arith.constant 0.000000e+00 : f32
    %543 = vector.broadcast %cst_178 : f32 to vector<8x64xf32>
    %544 = arith.select %542, %183, %543 : vector<8x64xi1>, vector<8x64xf32>
    %545 = arith.addf %540, %544 : vector<8x64xf32>
    %c4_i32_179 = arith.constant 4 : i32
    %546 = vector.broadcast %c4_i32_179 : i32 to vector<8x64xi32>
    %547 = arith.cmpi eq, %200, %546 : vector<8x64xi32>
    %cst_180 = arith.constant 0.000000e+00 : f32
    %548 = vector.broadcast %cst_180 : f32 to vector<8x64xf32>
    %549 = arith.select %547, %199, %548 : vector<8x64xi1>, vector<8x64xf32>
    %550 = arith.addf %545, %549 : vector<8x64xf32>
    %551 = arith.addf %531, %550 : vector<8x64xf32>
    %552 = vector.extract_strided_slice %551 {offsets = [0, 0], sizes = [7, 64], strides = [1, 1]} : vector<8x64xf32> to vector<7x64xf32>
    %553 = tpu.concatenate %201, %552 in 0 : vector<1x64xf32>, vector<7x64xf32> -> vector<8x64xf32>
    %554 = arith.minimumf %551, %553 : vector<8x64xf32>
    %c7_i32_181 = arith.constant 7 : i32
    %555 = vector.broadcast %c7_i32_181 : i32 to vector<8x64xi32>
    %556 = arith.cmpi eq, %200, %555 : vector<8x64xi32>
    %cst_182 = arith.constant 0.000000e+00 : f32
    %557 = vector.broadcast %cst_182 : f32 to vector<8x64xf32>
    %558 = arith.select %556, %167, %557 : vector<8x64xi1>, vector<8x64xf32>
    %c6_i32_183 = arith.constant 6 : i32
    %559 = vector.broadcast %c6_i32_183 : i32 to vector<8x64xi32>
    %560 = arith.cmpi eq, %200, %559 : vector<8x64xi32>
    %cst_184 = arith.constant 0.000000e+00 : f32
    %561 = vector.broadcast %cst_184 : f32 to vector<8x64xf32>
    %562 = arith.select %560, %183, %561 : vector<8x64xi1>, vector<8x64xf32>
    %563 = arith.addf %558, %562 : vector<8x64xf32>
    %c5_i32_185 = arith.constant 5 : i32
    %564 = vector.broadcast %c5_i32_185 : i32 to vector<8x64xi32>
    %565 = arith.cmpi eq, %200, %564 : vector<8x64xi32>
    %cst_186 = arith.constant 0.000000e+00 : f32
    %566 = vector.broadcast %cst_186 : f32 to vector<8x64xf32>
    %567 = arith.select %565, %199, %566 : vector<8x64xi1>, vector<8x64xf32>
    %568 = arith.addf %563, %567 : vector<8x64xf32>
    %569 = arith.addf %554, %568 : vector<8x64xf32>
    %570 = vector.extract_strided_slice %569 {offsets = [0, 0], sizes = [7, 64], strides = [1, 1]} : vector<8x64xf32> to vector<7x64xf32>
    %571 = tpu.concatenate %201, %570 in 0 : vector<1x64xf32>, vector<7x64xf32> -> vector<8x64xf32>
    %572 = arith.minimumf %569, %571 : vector<8x64xf32>
    %c7_i32_187 = arith.constant 7 : i32
    %573 = vector.broadcast %c7_i32_187 : i32 to vector<8x64xi32>
    %574 = arith.cmpi eq, %200, %573 : vector<8x64xi32>
    %cst_188 = arith.constant 0.000000e+00 : f32
    %575 = vector.broadcast %cst_188 : f32 to vector<8x64xf32>
    %576 = arith.select %574, %183, %575 : vector<8x64xi1>, vector<8x64xf32>
    %c6_i32_189 = arith.constant 6 : i32
    %577 = vector.broadcast %c6_i32_189 : i32 to vector<8x64xi32>
    %578 = arith.cmpi eq, %200, %577 : vector<8x64xi32>
    %cst_190 = arith.constant 0.000000e+00 : f32
    %579 = vector.broadcast %cst_190 : f32 to vector<8x64xf32>
    %580 = arith.select %578, %199, %579 : vector<8x64xi1>, vector<8x64xf32>
    %581 = arith.addf %576, %580 : vector<8x64xf32>
    %582 = arith.addf %572, %581 : vector<8x64xf32>
    %583 = vector.extract_strided_slice %582 {offsets = [0, 0], sizes = [7, 64], strides = [1, 1]} : vector<8x64xf32> to vector<7x64xf32>
    %584 = tpu.concatenate %201, %583 in 0 : vector<1x64xf32>, vector<7x64xf32> -> vector<8x64xf32>
    %585 = arith.minimumf %582, %584 : vector<8x64xf32>
    %c7_i32_191 = arith.constant 7 : i32
    %586 = vector.broadcast %c7_i32_191 : i32 to vector<8x64xi32>
    %587 = arith.cmpi eq, %200, %586 : vector<8x64xi32>
    %cst_192 = arith.constant 0.000000e+00 : f32
    %588 = vector.broadcast %cst_192 : f32 to vector<8x64xf32>
    %589 = arith.select %587, %199, %588 : vector<8x64xi1>, vector<8x64xf32>
    %590 = arith.addf %585, %589 : vector<8x64xf32>
    %591 = vector.extract_strided_slice %590 {offsets = [7, 0], sizes = [1, 64], strides = [1, 1]} : vector<8x64xf32> to vector<1x64xf32>
    %592 = vector.extract_strided_slice %591 {offsets = [0, 0], sizes = [1, 32], strides = [1, 1]} : vector<1x64xf32> to vector<1x32xf32>
    %593 = vector.extract_strided_slice %591 {offsets = [0, 32], sizes = [1, 32], strides = [1, 1]} : vector<1x64xf32> to vector<1x32xf32>
    %594 = tpu.concatenate %31, %32, %592, %593 in 0 : vector<1x32xf32>, vector<1x32xf32>, vector<1x32xf32>, vector<1x32xf32> -> vector<4x32xf32>
    %595 = vector.shape_cast %594 : vector<4x32xf32> to vector<1x4x32xf32>
    %c0_193 = arith.constant 0 : index
    %c0_194 = arith.constant 0 : index
    %c0_195 = arith.constant 0 : index
    %596 = vector.load %arg7[%c0_193, %c0_194, %c0_195] : memref<1x4x32xf32, #tpu.memory_space<vmem>>, vector<1x4x32xf32>
    tpu.vector_store %arg7[%c0_193, %c0_194, %c0_195], %595 {strides = array<i32>} : memref<1x4x32xf32, #tpu.memory_space<vmem>>, vector<1x4x32xf32>,
    return
  }
  func.func @transform_0(%arg0: i32) -> (i32, i32) {
    %c0_i32 = arith.constant 0 : i32
    %c0_i32_0 = arith.constant 0 : i32
    %c0_i32_1 = arith.constant 0 : i32
    return %c0_i32, %c0_i32_0 : i32, i32
  }
  func.func @transform_1(%arg0: i32) -> (i32, i32) {
    %c0_i32 = arith.constant 0 : i32
    %c0_i32_0 = arith.constant 0 : i32
    %c0_i32_1 = arith.constant 0 : i32
    return %c0_i32, %c0_i32_0 : i32, i32
  }
  func.func @transform_2(%arg0: i32) -> (i32, i32, i32) {
    %c0_i32 = arith.constant 0 : i32
    %c0_i32_0 = arith.constant 0 : i32
    %c0_i32_1 = arith.constant 0 : i32
    return %arg0, %c0_i32, %c0_i32_0 : i32, i32, i32
  }
  func.func @transform_3(%arg0: i32) -> (i32, i32) {
    %c0_i32 = arith.constant 0 : i32
    %c0_i32_0 = arith.constant 0 : i32
    %c0_i32_1 = arith.constant 0 : i32
    return %c0_i32, %c0_i32_0 : i32, i32
  }
  func.func @transform_4(%arg0: i32) -> (i32, i32, i32) {
    %c0_i32 = arith.constant 0 : i32
    %c0_i32_0 = arith.constant 0 : i32
    %c0_i32_1 = arith.constant 0 : i32
    return %arg0, %c0_i32, %c0_i32_0 : i32, i32, i32
  }
  func.func @transform_5(%arg0: i32) -> (i32, i32) {
    %c0_i32 = arith.constant 0 : i32
    %c0_i32_0 = arith.constant 0 : i32
    %c0_i32_1 = arith.constant 0 : i32
    return %c0_i32, %c0_i32_0 : i32, i32
  }
  func.func @transform_6(%arg0: i32) -> (i32, i32, i32) {
    %c0_i32 = arith.constant 0 : i32
    %c0_i32_0 = arith.constant 0 : i32
    %c0_i32_1 = arith.constant 0 : i32
    return %arg0, %c0_i32, %c0_i32_0 : i32, i32, i32
  }
}

</mosaic_0001>

<llo_original>
// kernel: triplet_loss_aligned_reid.1
$region0: #{triplet_loss_aligned_reid.1}
  #allocation0 [shape = 'u32[]', space=smem, size = 0x4, offset = 0x4, fixed_abs, tag = 'smem constant byte address 0x4 - core index']
  #allocation1 [shape = 'u32[144,128]{1,0:T(1,128)}', space=vmem, size = 0x12000, scoped, tag = 'internal scratch']
  %s0 = inlined_call_operand.vmem [shape: f32[64,128], index: 0, kind: input, shape index: {}]
  %s1 = inlined_call_operand.vmem [shape: f32[64,1], index: 1, kind: input, shape index: {}]
  %s2 = inlined_call_operand.vmem [shape: f32[2,1,32], index: 2, kind: input, shape index: {}]
  %s3 = inlined_call_operand.vmem [shape: s32[64,1], index: 3, kind: input, shape index: {}]
  %s4 = inlined_call_operand.vmem [shape: s32[2,1,32], index: 4, kind: input, shape index: {}]
  %s5 = inlined_call_operand.vmem [shape: f32[256,64], index: 5, kind: input, shape index: {}]
  %s6 = inlined_call_operand.vmem [shape: f32[2,4,32], index: 6, kind: output, shape index: {}]
  %s7 = sld [smem:[#allocation0]]
  $region57: #{triplet_loss_aligned_reid.1} parent=0
    _
  %s9 = ssub.s32 1, %s7
  %s10 = scalar_select 0, %s9, %s7
  loop: start=0, step=1, limit=4
  $region2: #{triplet_loss_aligned_reid.1} parent=0 // loop_pre_header
    _
  $region3: #{triplet_loss_aligned_reid.1} parent=0 // loop_header
    %s12 = sphi 0, %s16
    %p13 = scmp.ge.s32.totalorder %s12, 4
    %s20 = sphi 0, %s20
    %s22 = sphi 0, %s20
    %s23 = sphi 0, %s22
    %s37 = sphi 0, %s23
    %s41 = sphi 0, %s41
    %s43 = sphi 0, %s41
    %s44 = sphi 0, %s43
    %s58 = sphi 0, %s44
    %s64 = sphi 0, %s66
    %s67 = sphi 0, %s64
    %s68 = sphi 0, %s67
    %s84 = sphi 0, %s68
    %s88 = sphi 0, %s88
    %s90 = sphi 0, %s88
    %s91 = sphi 0, %s90
    %s105 = sphi 0, %s91
    %s111 = sphi 0, %s113
    %s114 = sphi 0, %s111
    %s115 = sphi 0, %s114
    %s131 = sphi 0, %s115
    %s135 = sphi 0, %s135
    %s137 = sphi 0, %s135
    %s138 = sphi 0, %s137
    %s152 = sphi 0, %s138
    %s158 = sphi 0, %s160
    %s161 = sphi 0, %s158
    %s162 = sphi 0, %s161
    %s178 = sphi 0, %s162
  $region4: #{triplet_loss_aligned_reid.1} parent=0 // loop_header_branch
    %15 = sbr.rel (%p13) target = $region8
  $region5: #{triplet_loss_aligned_reid.1} parent=0 // loop_body
    %s17 = ssub.s32 %s12, 1
    %s18 = ssub.s32 %s12, 2
    %s19 = sadd.s32 %s12, 1
    %s21 = sadd.s32 %s20, 1
    %p24 = scmp.eq.s32.totalorder %s12, 1
    %p25 = scmp.ne.s32.totalorder %s20, %s22
    %p26 = scmp.eq.s32.totalorder %s12, 0
    %p27 = por %p25, %p26
    %p28 = scmp.ne.s32.totalorder %s20, %s22
    %p29 = scmp.eq.s32.totalorder %s17, 1
    %p30 = por %p28, %p29
    %p31 = scmp.ne.s32.totalorder %s22, %s23
    %p32 = scmp.eq.s32.totalorder %s17, 0
    %p33 = por %p31, %p32
    %p34 = scmp.ne.s32.totalorder %s22, %s23
    %p35 = scmp.eq.s32.totalorder %s18, 1
    %p36 = por %p34, %p35
    %p38 = scmp.ne.s32.totalorder %s23, %s37
    %p39 = scmp.eq.s32.totalorder %s18, 0
    %p40 = por %p38, %p39
    %s42 = sadd.s32 %s41, 1
    %p45 = scmp.eq.s32.totalorder %s12, 1
    %p46 = scmp.ne.s32.totalorder %s41, %s43
    %p47 = scmp.eq.s32.totalorder %s12, 0
    %p48 = por %p46, %p47
    %p49 = scmp.ne.s32.totalorder %s41, %s43
    %p50 = scmp.eq.s32.totalorder %s17, 1
    %p51 = por %p49, %p50
    %p52 = scmp.ne.s32.totalorder %s43, %s44
    %p53 = scmp.eq.s32.totalorder %s17, 0
    %p54 = por %p52, %p53
    %p55 = scmp.ne.s32.totalorder %s43, %s44
    %p56 = scmp.eq.s32.totalorder %s18, 1
    %p57 = por %p55, %p56
    %p59 = scmp.ne.s32.totalorder %s44, %s58
    %p60 = scmp.eq.s32.totalorder %s18, 0
    %p61 = por %p59, %p60
    %s62 = ssub.s32 %s12, %s19
    %p63 = scmp.eq.s32.totalorder %s62, 0
    %s65 = sadd.s32 %s64, 1
    %s66 = scalar_select %p63, %s64, %s65
    %p69 = pneg %p63
    %p70 = scmp.eq.s32.totalorder %s12, 1
    %p71 = por %p69, %p70
    %p72 = scmp.ne.s32.totalorder %s64, %s67
    %p73 = scmp.eq.s32.totalorder %s12, 0
    %p74 = por %p72, %p73
    %p75 = scmp.ne.s32.totalorder %s64, %s67
    %p76 = scmp.eq.s32.totalorder %s17, 1
    %p77 = por %p75, %p76
    %p78 = scmp.ne.s32.totalorder %s67, %s68
    %p79 = scmp.eq.s32.totalorder %s17, 0
    %p80 = por %p78, %p79
    %p81 = scmp.ne.s32.totalorder %s67, %s68
    %p82 = scmp.eq.s32.totalorder %s18, 1
    %p83 = por %p81, %p82
    %p85 = scmp.ne.s32.totalorder %s68, %s84
    %p86 = scmp.eq.s32.totalorder %s18, 0
    %p87 = por %p85, %p86
    %s89 = sadd.s32 %s88, 1
    %p92 = scmp.eq.s32.totalorder %s12, 1
    %p93 = scmp.ne.s32.totalorder %s88, %s90
    %p94 = scmp.eq.s32.totalorder %s12, 0
    %p95 = por %p93, %p94
    %p96 = scmp.ne.s32.totalorder %s88, %s90
    %p97 = scmp.eq.s32.totalorder %s17, 1
    %p98 = por %p96, %p97
    %p99 = scmp.ne.s32.totalorder %s90, %s91
    %p100 = scmp.eq.s32.totalorder %s17, 0
    %p101 = por %p99, %p100
    %p102 = scmp.ne.s32.totalorder %s90, %s91
    %p103 = scmp.eq.s32.totalorder %s18, 1
    %p104 = por %p102, %p103
    %p106 = scmp.ne.s32.totalorder %s91, %s105
    %p107 = scmp.eq.s32.totalorder %s18, 0
    %p108 = por %p106, %p107
    %s109 = ssub.s32 %s12, %s19
    %p110 = scmp.eq.s32.totalorder %s109, 0
    %s112 = sadd.s32 %s111, 1
    %s113 = scalar_select %p110, %s111, %s112
    %p116 = pneg %p110
    %p117 = scmp.eq.s32.totalorder %s12, 1
    %p118 = por %p116, %p117
    %p119 = scmp.ne.s32.totalorder %s111, %s114
    %p120 = scmp.eq.s32.totalorder %s12, 0
    %p121 = por %p119, %p120
    %p122 = scmp.ne.s32.totalorder %s111, %s114
    %p123 = scmp.eq.s32.totalorder %s17, 1
    %p124 = por %p122, %p123
    %p125 = scmp.ne.s32.totalorder %s114, %s115
    %p126 = scmp.eq.s32.totalorder %s17, 0
    %p127 = por %p125, %p126
    %p128 = scmp.ne.s32.totalorder %s114, %s115
    %p129 = scmp.eq.s32.totalorder %s18, 1
    %p130 = por %p128, %p129
    %p132 = scmp.ne.s32.totalorder %s115, %s131
    %p133 = scmp.eq.s32.totalorder %s18, 0
    %p134 = por %p132, %p133
    %s136 = sadd.s32 %s135, 1
    %p139 = scmp.eq.s32.totalorder %s12, 1
    %p140 = scmp.ne.s32.totalorder %s135, %s137
    %p141 = scmp.eq.s32.totalorder %s12, 0
    %p142 = por %p140, %p141
    %p143 = scmp.ne.s32.totalorder %s135, %s137
    %p144 = scmp.eq.s32.totalorder %s17, 1
    %p145 = por %p143, %p144
    %p146 = scmp.ne.s32.totalorder %s137, %s138
    %p147 = scmp.eq.s32.totalorder %s17, 0
    %p148 = por %p146, %p147
    %p149 = scmp.ne.s32.totalorder %s137, %s138
    %p150 = scmp.eq.s32.totalorder %s18, 1
    %p151 = por %p149, %p150
    %p153 = scmp.ne.s32.totalorder %s138, %s152
    %p154 = scmp.eq.s32.totalorder %s18, 0
    %p155 = por %p153, %p154
    %s156 = ssub.s32 %s12, %s19
    %p157 = scmp.eq.s32.totalorder %s156, 0
    %s159 = sadd.s32 %s158, 1
    %s160 = scalar_select %p157, %s158, %s159
    %p163 = pneg %p157
    %p164 = scmp.eq.s32.totalorder %s12, 1
    %p165 = por %p163, %p164
    %p166 = scmp.ne.s32.totalorder %s158, %s161
    %p167 = scmp.eq.s32.totalorder %s12, 0
    %p168 = por %p166, %p167
    %p169 = scmp.ne.s32.totalorder %s158, %s161
    %p170 = scmp.eq.s32.totalorder %s17, 1
    %p171 = por %p169, %p170
    %p172 = scmp.ne.s32.totalorder %s161, %s162
    %p173 = scmp.eq.s32.totalorder %s17, 0
    %p174 = por %p172, %p173
    %p175 = scmp.ne.s32.totalorder %s161, %s162
    %p176 = scmp.eq.s32.totalorder %s18, 1
    %p177 = por %p175, %p176
    %p179 = scmp.ne.s32.totalorder %s162, %s178
    %p180 = scmp.eq.s32.totalorder %s18, 0
    %p181 = por %p179, %p180
    %p182 = scmp.le.s32.totalorder 1, %s12
    %p183 = scmp.lt.s32.totalorder %s12, 3
    %p184 = pnand %p182, %p183
    %p185 = pneg %p184
    // Predicated region
    $region9: #{triplet_loss_aligned_reid.1} parent=5 // pred_check
      _
    $region10: #{triplet_loss_aligned_reid.1} parent=5 // pred_check_branch
      %187 = sbr.rel (%p184) target = $region12
    $region11: #{triplet_loss_aligned_reid.1} parent=5 // pred_region
      %s188 = ssub.s32 %s12, 1
      // Predicated region
      $region13: #{triplet_loss_aligned_reid.1} parent=11 // pred_check
        %p189 = pneg %p33
      $region14: #{triplet_loss_aligned_reid.1} parent=11 // pred_check_branch
        %191 = sbr.rel (%p189) target = $region16
      $region15: #{triplet_loss_aligned_reid.1} parent=11 // pred_region
        _
      $region16: #{triplet_loss_aligned_reid.1} parent=11 // pred_fallthru
        _
      // Predicated region
      $region17: #{triplet_loss_aligned_reid.1} parent=11 // pred_check
        %p192 = pneg %p54
      $region18: #{triplet_loss_aligned_reid.1} parent=11 // pred_check_branch
        %194 = sbr.rel (%p192) target = $region20
      $region19: #{triplet_loss_aligned_reid.1} parent=11 // pred_region
        _
      $region20: #{triplet_loss_aligned_reid.1} parent=11 // pred_fallthru
        _
      // Predicated region
      $region21: #{triplet_loss_aligned_reid.1} parent=11 // pred_check
        %p195 = pneg %p101
      $region22: #{triplet_loss_aligned_reid.1} parent=11 // pred_check_branch
        %197 = sbr.rel (%p195) target = $region24
      $region23: #{triplet_loss_aligned_reid.1} parent=11 // pred_region
        _
      $region24: #{triplet_loss_aligned_reid.1} parent=11 // pred_fallthru
        _
      // Predicated region
      $region25: #{triplet_loss_aligned_reid.1} parent=11 // pred_check
        %p198 = pneg %p148
      $region26: #{triplet_loss_aligned_reid.1} parent=11 // pred_check_branch
        %200 = sbr.rel (%p198) target = $region28
      $region27: #{triplet_loss_aligned_reid.1} parent=11 // pred_region
        _
      $region28: #{triplet_loss_aligned_reid.1} parent=11 // pred_fallthru
        _
    $region12: #{triplet_loss_aligned_reid.1} parent=5 // pred_fallthru
      _
    %p201 = scmp.lt.s32.totalorder %s12, 2
    // Predicated region
    $region29: #{triplet_loss_aligned_reid.1} parent=5 // pred_check
      %p202 = pneg %p201
    $region30: #{triplet_loss_aligned_reid.1} parent=5 // pred_check_branch
      %204 = sbr.rel (%p202) target = $region32
    $region31: #{triplet_loss_aligned_reid.1} parent=5 // pred_region
      // Predicated region
      $region33: #{triplet_loss_aligned_reid.1} parent=31 // pred_check
        %p205 = pneg %p74
      $region34: #{triplet_loss_aligned_reid.1} parent=31 // pred_check_branch
        %207 = sbr.rel (%p205) target = $region36
      $region35: #{triplet_loss_aligned_reid.1} parent=31 // pred_region
        %p208 = scmp.lt.s32.totalorder %s12, 1
        %s209 = scalar_select %p208, %s12, 1
        %s210 = scalar_lea.vmem %s2, %s209
      $region36: #{triplet_loss_aligned_reid.1} parent=31 // pred_fallthru
        _
      // Predicated region
      $region37: #{triplet_loss_aligned_reid.1} parent=31 // pred_check
        %p211 = pneg %p121
      $region38: #{triplet_loss_aligned_reid.1} parent=31 // pred_check_branch
        %213 = sbr.rel (%p211) target = $region40
      $region39: #{triplet_loss_aligned_reid.1} parent=31 // pred_region
        %p214 = scmp.lt.s32.totalorder %s12, 1
        %s215 = scalar_select %p214, %s12, 1
        %s216 = scalar_lea.vmem %s4, %s215
      $region40: #{triplet_loss_aligned_reid.1} parent=31 // pred_fallthru
        _
    $region32: #{triplet_loss_aligned_reid.1} parent=5 // pred_fallthru
      _
    %p217 = scmp.le.s32.totalorder 1, %s12
    %p218 = scmp.lt.s32.totalorder %s12, 3
    %p219 = pnand %p217, %p218
    %p220 = pneg %p219
    // Predicated region
    $region41: #{triplet_loss_aligned_reid.1} parent=5 // pred_check
      _
    $region42: #{triplet_loss_aligned_reid.1} parent=5 // pred_check_branch
      %222 = sbr.rel (%p219) target = $region44
    $region43: #{triplet_loss_aligned_reid.1} parent=5 // pred_region
      %s223 = ssub.s32 %s12, 1
      %p224 = pneg %p33
      %p225 = pneg %p30
      %p226 = pneg %p54
      %p227 = pneg %p51
      %p228 = scmp.lt.s32.totalorder %s17, 1
      %s229 = scalar_select %p228, %s17, 1
      %s230 = scalar_lea.vmem %s2, %s229
      %p231 = pneg %p80
      %p232 = pneg %p77
      %p233 = pneg %p101
      %p234 = pneg %p98
      %p235 = scmp.lt.s32.totalorder %s17, 1
      %s236 = scalar_select %p235, %s17, 1
      %s237 = scalar_lea.vmem %s4, %s236
      %p238 = pneg %p127
      %p239 = pneg %p124
      %p240 = pneg %p148
      %p241 = pneg %p145
      %p242 = pneg %p174
      %p243 = pneg %p171
      %p244 = scmp.lt.s32.totalorder %s17, 1
      %s245 = scalar_select %p244, %s17, 1
      %s246 = smul.addr %s245, 4
      %s247 = scalar_lea.vmem %s6, %s246
      %p248 = scmp.lt.s32.totalorder %s17, 1
      %s249 = scalar_select %p248, %s17, 1
      %s250 = scalar_lea.vmem %s2, %s249
      %p251 = scmp.lt.s32.totalorder %s17, 1
      %s252 = scalar_select %p251, %s17, 1
      %s253 = scalar_lea.vmem %s4, %s252
      %p254 = scmp.lt.s32.totalorder %s17, 1
      %s255 = scalar_select %p254, %s17, 1
      %s256 = smul.addr %s255, 4
      %s257 = scalar_lea.vmem %s6, %s256
      %s258 = smul.u32 %s17, 32
      %v259 = vld [vmem:[%s0] sm:$0xff]
      %v260 = vld [vmem:[%s0 + $0x8] sm:$0xff]
      %v261 = vld [vmem:[%s0 + $0x10] sm:$0xff]
      %v262 = vld [vmem:[%s0 + $0x18] sm:$0xff]
      %v263 = vld [vmem:[%s0 + $0x20] sm:$0xff]
      %v264 = vld [vmem:[%s0 + $0x28] sm:$0xff]
      %v265 = vld [vmem:[%s0 + $0x30] sm:$0xff]
      %v266 = vld [vmem:[%s0 + $0x38] sm:$0xff]
      %s267 = scalar_lea.vmem %s0, %s258
      %v268 = vld [vmem:[%s267] sm:$0xff]
      %v269 = vld [vmem:[%s267 + $0x8] sm:$0xff]
      %v270 = vld [vmem:[%s267 + $0x10] sm:$0xff]
      %v271 = vld [vmem:[%s267 + $0x18] sm:$0xff]
      %272 = vmatprep.subr.mxu0 0.0
      %273 = vmatpush1.xpose.msra.mxu0 %v268
      %274 = vmatprep.subr.mxu0 0.0
      %275 = vmatpush1.xpose.msra.mxu0 %v269
      %276 = vmatprep.subr.mxu0 0.0
      %277 = vmatpush1.xpose.msra.mxu0 %v270
      %278 = vmatprep.subr.mxu0 0.0
      %279 = vmatpush1.xpose.msra.mxu0 %v271
      %280 = vmatprep.subr.mxu0 0.0
      %281 = vmatpush1.xpose.msra.mxu0 0.0
      %282 = vmatprep.subr.mxu0 0.0
      %283 = vmatpush1.xpose.msra.mxu0 0.0
      %284 = vmatprep.subr.mxu0 0.0
      %285 = vmatpush1.xpose.msra.mxu0 0.0
      %286 = vmatprep.subr.mxu0 0.0
      %287 = vmatpush1.xpose.msra.mxu0 0.0
      %288 = vmatprep.subr.mxu0 0.0
      %289 = vmatpush1.xpose.msra.mxu0 0.0
      %290 = vmatprep.subr.mxu0 0.0
      %291 = vmatpush1.xpose.msra.mxu0 0.0
      %292 = vmatprep.subr.mxu0 0.0
      %293 = vmatpush1.xpose.msra.mxu0 0.0
      %294 = vmatprep.subr.mxu0 0.0
      %295 = vmatpush1.xpose.msra.mxu0 0.0
      %296 = vmatprep.subr.mxu0 0.0
      %297 = vmatpush1.xpose.msra.mxu0 0.0
      %298 = vmatprep.subr.mxu0 0.0
      %299 = vmatpush1.xpose.msra.mxu0 0.0
      %300 = vmatprep.subr.mxu0 0.0
      %301 = vmatpush1.xpose.msra.mxu0 0.0
      %302 = vmatprep.subr.mxu0 0.0
      %303 = vmatpush1.xpose.msra.mxu0 0.0
      %304 = vmatprep.subr.mxu0 0.0
      %305 = vmatpush1.xpose.msra.mxu0 0.0
      %306 = vmatprep.subr.mxu0 0.0
      %307 = vmatpush1.xpose.msra.mxu0 0.0
      %308 = vmatprep.subr.mxu0 0.0
      %309 = vmatpush1.xpose.msra.mxu0 0.0
      %310 = vmatprep.subr.mxu0 0.0
      %311 = vmatpush1.xpose.msra.mxu0 0.0
      %312 = vmatprep.subr.mxu0 0.0
      %313 = vmatpush1.xpose.msra.mxu0 0.0
      %314 = vmatprep.subr.mxu0 0.0
      %315 = vmatpush1.xpose.msra.mxu0 0.0
      %316 = vmatprep.subr.mxu0 0.0
      %317 = vmatpush1.xpose.msra.mxu0 0.0
      %318 = vmatprep.subr.mxu0 0.0
      %319 = vmatpush1.xpose.msra.mxu0 0.0
      %320 = vmatprep.subr.mxu0 0.0
      %321 = vmatpush1.xpose.msra.mxu0 0.0
      %322 = vmatprep.subr.mxu0 0.0
      %323 = vmatpush1.xpose.msra.mxu0 0.0
      %324 = vmatprep.subr.mxu0 0.0
      %325 = vmatpush1.xpose.msra.mxu0 0.0
      %326 = vmatprep.subr.mxu0 0.0
      %327 = vmatpush1.xpose.msra.mxu0 0.0
      %328 = vmatprep.subr.mxu0 0.0
      %329 = vmatpush1.xpose.msra.mxu0 0.0
      %330 = vmatprep.subr.mxu0 0.0
      %331 = vmatpush1.xpose.msra.mxu0 0.0
      %332 = vmatprep.subr.mxu0 0.0
      %333 = vmatpush1.xpose.msra.mxu0 0.0
      %334 = vmatprep.subr.mxu0 0.0
      %335 = vmatpush1.xpose.msra.mxu0 0.0
      %336 = vmatprep.mubr.f32.mxu0 0.0
      %337 = vmatmul.mubr.f32.gmra.mrb[0].mxu0 %v259
      %v338 = vpop.f32.mrb[0].mxu0
      %v339 = vadd.f32 0.0, %v338
      %v340 = vpop.f32.mrb[0].mxu0
      %341 = vmatprep.mubr.f32.mxu0 0.0
      %342 = vmatmul.mubr.f32.gmra.mrb[0].mxu0 %v260
      %v343 = vpop.f32.mrb[0].mxu0
      %v344 = vadd.f32 0.0, %v343
      %v345 = vpop.f32.mrb[0].mxu0
      %346 = vmatprep.mubr.f32.mxu0 0.0
      %347 = vmatmul.mubr.f32.gmra.mrb[0].mxu0 %v261
      %v348 = vpop.f32.mrb[0].mxu0
      %v349 = vadd.f32 0.0, %v348
      %v350 = vpop.f32.mrb[0].mxu0
      %351 = vmatprep.mubr.f32.mxu0 0.0
      %352 = vmatmul.mubr.f32.gmra.mrb[0].mxu0 %v262
      %v353 = vpop.f32.mrb[0].mxu0
      %v354 = vadd.f32 0.0, %v353
      %v355 = vpop.f32.mrb[0].mxu0
      %356 = vmatprep.mubr.f32.mxu0 0.0
      %357 = vmatmul.mubr.f32.gmra.mrb[0].mxu0 %v263
      %v358 = vpop.f32.mrb[0].mxu0
      %v359 = vadd.f32 0.0, %v358
      %v360 = vpop.f32.mrb[0].mxu0
      %361 = vmatprep.mubr.f32.mxu0 0.0
      %362 = vmatmul.mubr.f32.gmra.mrb[0].mxu0 %v264
      %v363 = vpop.f32.mrb[0].mxu0
      %v364 = vadd.f32 0.0, %v363
      %v365 = vpop.f32.mrb[0].mxu0
      %366 = vmatprep.mubr.f32.mxu0 0.0
      %367 = vmatmul.mubr.f32.gmra.mrb[0].mxu0 %v265
      %v368 = vpop.f32.mrb[0].mxu0
      %v369 = vadd.f32 0.0, %v368
      %v370 = vpop.f32.mrb[0].mxu0
      %371 = vmatprep.mubr.f32.mxu0 0.0
      %372 = vmatmul.mubr.f32.gmra.mrb[0].mxu0 %v266
      %v373 = vpop.f32.mrb[0].mxu0
      %v374 = vadd.f32 0.0, %v373
      %v375 = vpop.f32.mrb[0].mxu0
      %376 = vdwg.mxu0
      %v377 = vld [vmem:[%s1] sm:$0xff]
      %v378 = vld [vmem:[%s1 + $0x8] sm:$0xff]
      %v379 = vld [vmem:[%s1 + $0x10] sm:$0xff]
      %v380 = vld [vmem:[%s1 + $0x18] sm:$0xff]
      %v381 = vld [vmem:[%s1 + $0x20] sm:$0xff]
      %v382 = vld [vmem:[%s1 + $0x28] sm:$0xff]
      %v383 = vld [vmem:[%s1 + $0x30] sm:$0xff]
      %v384 = vld [vmem:[%s1 + $0x38] sm:$0xff]
      %v385 = vld [vmem:[%s250] sm:$0x1]
      %387 = vset.pattern.permute.xlu0 0
      %388 = vperm.xlu0 %387, %v377
      %v389 = vpop.permute.xlu0 %388
      %392 = vset.pattern.permute.xlu0 0
      %393 = vperm.xlu0 %392, %v378
      %v394 = vpop.permute.xlu0 %393
      %397 = vset.pattern.permute.xlu0 0
      %398 = vperm.xlu0 %397, %v379
      %v399 = vpop.permute.xlu0 %398
      %402 = vset.pattern.permute.xlu0 0
      %403 = vperm.xlu0 %402, %v380
      %v404 = vpop.permute.xlu0 %403
      %407 = vset.pattern.permute.xlu0 0
      %408 = vperm.xlu0 %407, %v381
      %v409 = vpop.permute.xlu0 %408
      %412 = vset.pattern.permute.xlu0 0
      %413 = vperm.xlu0 %412, %v382
      %v414 = vpop.permute.xlu0 %413
      %417 = vset.pattern.permute.xlu0 0
      %418 = vperm.xlu0 %417, %v383
      %v419 = vpop.permute.xlu0 %418
      %422 = vset.pattern.permute.xlu0 0
      %423 = vperm.xlu0 %422, %v384
      %v424 = vpop.permute.xlu0 %423
      %v427 = vlaneseq
      %v428 = vshrl.u32 %v427, 7
      %v429 = vsub.s32 0, %v428
      %v430 = vrot.slane %v385, %v429
      %v432 = vadd.f32 %v389, %v430
      %v433 = vadd.f32 %v394, %v430
      %v434 = vadd.f32 %v399, %v430
      %v435 = vadd.f32 %v404, %v430
      %v436 = vadd.f32 %v409, %v430
      %v437 = vadd.f32 %v414, %v430
      %v438 = vadd.f32 %v419, %v430
      %v439 = vadd.f32 %v424, %v430
      %v440 = vmul.f32 %v339, 2.0
      %v441 = vmul.f32 %v344, 2.0
      %v442 = vmul.f32 %v349, 2.0
      %v443 = vmul.f32 %v354, 2.0
      %v444 = vmul.f32 %v359, 2.0
      %v445 = vmul.f32 %v364, 2.0
      %v446 = vmul.f32 %v369, 2.0
      %v447 = vmul.f32 %v374, 2.0
      %v448 = vsub.f32 %v432, %v440
      %v449 = vsub.f32 %v433, %v441
      %v450 = vsub.f32 %v434, %v442
      %v451 = vsub.f32 %v435, %v443
      %v452 = vsub.f32 %v436, %v444
      %v453 = vsub.f32 %v437, %v445
      %v454 = vsub.f32 %v438, %v446
      %v455 = vsub.f32 %v439, %v447
      %v456 = vmax.f32 %v448, 1e-12
      %v457 = vmax.f32 %v449, 1e-12
      %v458 = vmax.f32 %v450, 1e-12
      %v459 = vmax.f32 %v451, 1e-12
      %v460 = vmax.f32 %v452, 1e-12
      %v461 = vmax.f32 %v453, 1e-12
      %v462 = vmax.f32 %v454, 1e-12
      %v463 = vmax.f32 %v455, 1e-12
      %v464 = vld [vmem:[%s3] sm:$0xff]
      %v465 = vld [vmem:[%s3 + $0x8] sm:$0xff]
      %v466 = vld [vmem:[%s3 + $0x10] sm:$0xff]
      %v467 = vld [vmem:[%s3 + $0x18] sm:$0xff]
      %v468 = vld [vmem:[%s3 + $0x20] sm:$0xff]
      %v469 = vld [vmem:[%s3 + $0x28] sm:$0xff]
      %v470 = vld [vmem:[%s3 + $0x30] sm:$0xff]
      %v471 = vld [vmem:[%s3 + $0x38] sm:$0xff]
      %v472 = vld [vmem:[%s253] sm:$0x1]
      %473 = vset.pattern.permute.xlu0 0
      %474 = vperm.xlu0 %473, %v464
      %v475 = vpop.permute.xlu0 %474
      %476 = vset.pattern.permute.xlu0 0
      %477 = vperm.xlu0 %476, %v465
      %v478 = vpop.permute.xlu0 %477
      %479 = vset.pattern.permute.xlu0 0
      %480 = vperm.xlu0 %479, %v466
      %v481 = vpop.permute.xlu0 %480
      %482 = vset.pattern.permute.xlu0 0
      %483 = vperm.xlu0 %482, %v467
      %v484 = vpop.permute.xlu0 %483
      %485 = vset.pattern.permute.xlu0 0
      %486 = vperm.xlu0 %485, %v468
      %v487 = vpop.permute.xlu0 %486
      %488 = vset.pattern.permute.xlu0 0
      %489 = vperm.xlu0 %488, %v469
      %v490 = vpop.permute.xlu0 %489
      %491 = vset.pattern.permute.xlu0 0
      %492 = vperm.xlu0 %491, %v470
      %v493 = vpop.permute.xlu0 %492
      %494 = vset.pattern.permute.xlu0 0
      %495 = vperm.xlu0 %494, %v471
      %v496 = vpop.permute.xlu0 %495
      %v497 = vlaneseq
      %v498 = vshrl.u32 %v497, 7
      %v499 = vsub.s32 0, %v498
      %v500 = vrot.slane %v472, %v499
      %vm501 = vcmp.eq.s32.totalorder %v475, %v500
      %vm502 = vcmp.eq.s32.totalorder %v478, %v500
      %vm503 = vcmp.eq.s32.totalorder %v481, %v500
      %vm504 = vcmp.eq.s32.totalorder %v484, %v500
      %vm505 = vcmp.eq.s32.totalorder %v487, %v500
      %vm506 = vcmp.eq.s32.totalorder %v490, %v500
      %vm507 = vcmp.eq.s32.totalorder %v493, %v500
      %vm508 = vcmp.eq.s32.totalorder %v496, %v500
      %v509 = vsel %vm501, %v456, -inf
      %v510 = vsel %vm502, %v457, -inf
      %v511 = vsel %vm503, %v458, -inf
      %v512 = vsel %vm504, %v459, -inf
      %v513 = vsel %vm505, %v460, -inf
      %v514 = vsel %vm506, %v461, -inf
      %v515 = vsel %vm507, %v462, -inf
      %v516 = vsel %vm508, %v463, -inf
      %v517 = vsel %vm501, inf, %v456
      %v518 = vsel %vm502, inf, %v457
      %v519 = vsel %vm503, inf, %v458
      %v520 = vsel %vm504, inf, %v459
      %v521 = vsel %vm505, inf, %v460
      %v522 = vsel %vm506, inf, %v461
      %v523 = vsel %vm507, inf, %v462
      %v524 = vsel %vm508, inf, %v463
      %vm525 = vcmask 261120
      %v526 = vsel %vm525, %v509, -inf
      %v527 = vsel %vm525, %v510, -inf
      %v528 = vsel %vm525, %v511, -inf
      %v529 = vsel %vm525, %v512, -inf
      %v530 = vsel %vm525, %v513, -inf
      %v531 = vmax.f32 %v526, %v530
      %v532 = vsel %vm525, %v514, -inf
      %v533 = vmax.f32 %v527, %v532
      %v534 = vsel %vm525, %v515, -inf
      %v535 = vmax.f32 %v528, %v534
      %v536 = vsel %vm525, %v516, -inf
      %v537 = vmax.f32 %v529, %v536
      %v538 = vmax.f32 %v531, %v533
      %v539 = vmax.f32 %v535, %v537
      %v540 = vmax.f32 %v538, %v539
      %v541 = vrot.slane %v540, 4
      %v542 = vmax.f32 %v540, %v541
      %v543 = vrot.slane %v542, 2
      %v544 = vmax.f32 %v542, %v543
      %v545 = vrot.slane %v544, 1
      %v546 = vmax.f32 %v544, %v545
      %v547 = vsel %vm525, %v517, inf
      %v548 = vsel %vm525, %v518, inf
      %v549 = vsel %vm525, %v519, inf
      %v550 = vsel %vm525, %v520, inf
      %v551 = vsel %vm525, %v521, inf
      %v552 = vmin.f32 %v547, %v551
      %v553 = vsel %vm525, %v522, inf
      %v554 = vmin.f32 %v548, %v553
      %v555 = vsel %vm525, %v523, inf
      %v556 = vmin.f32 %v549, %v555
      %v557 = vsel %vm525, %v524, inf
      %v558 = vmin.f32 %v550, %v557
      %v559 = vmin.f32 %v552, %v554
      %v560 = vmin.f32 %v556, %v558
      %v561 = vmin.f32 %v559, %v560
      %v562 = vrot.slane %v561, 4
      %v563 = vmin.f32 %v561, %v562
      %v564 = vrot.slane %v563, 2
      %v565 = vmin.f32 %v563, %v564
      %v566 = vrot.slane %v565, 1
      %v567 = vmin.f32 %v565, %v566
      %v568 = vrsqrt.pop %v546
      %v569 = vmul.f32 %v546, %v568
      %vm570 = vcmp.eq.f32.partialorder %v546, inf
      %v571 = vsel %vm570, %v546, %v569
      %vm572 = vcmp.eq.f32.partialorder %v546, 0.0
      %v573 = vand.u32 %v546, 2147483648
      %v574 = vsel %vm572, %v573, %v571
      %v575 = vrsqrt.pop %v567
      %v576 = vmul.f32 %v567, %v575
      %vm577 = vcmp.eq.f32.partialorder %v567, inf
      %v578 = vsel %vm577, %v567, %v576
      %vm579 = vcmp.eq.f32.partialorder %v567, 0.0
      %v580 = vand.u32 %v567, 2147483648
      %v581 = vsel %vm579, %v580, %v578
      %v582 = vlaneseq
      %v583 = vshrl.u32 %v582, 7
      %v584 = vadd.s32 %v583, 8
      %v585 = vadd.s32 %v583, 16
      %v586 = vadd.s32 %v583, 24
      %v587 = vadd.s32 %v583, 32
      %v588 = vadd.s32 %v583, 40
      %v589 = vadd.s32 %v583, 48
      %v590 = vadd.s32 %v583, 56
      %v591 = vlaneseq
      %v592 = vand.u32 %v591, 127
      %vm593 = vcmp.eq.f32.partialorder %v509, %v546
      %vm594 = vcmp.eq.f32.partialorder %v510, %v546
      %vm595 = vcmp.eq.f32.partialorder %v511, %v546
      %vm596 = vcmp.eq.f32.partialorder %v512, %v546
      %vm597 = vcmp.eq.f32.partialorder %v513, %v546
      %vm598 = vcmp.eq.f32.partialorder %v514, %v546
      %vm599 = vcmp.eq.f32.partialorder %v515, %v546
      %vm600 = vcmp.eq.f32.partialorder %v516, %v546
      %v601 = vsel %vm593, %v583, 64
      %v602 = vsel %vm594, %v584, 64
      %v603 = vsel %vm595, %v585, 64
      %v604 = vsel %vm596, %v586, 64
      %v605 = vsel %vm597, %v587, 64
      %v606 = vsel %vm598, %v588, 64
      %v607 = vsel %vm599, %v589, 64
      %v608 = vsel %vm600, %v590, 64
      %v609 = vsel %vm525, %v601, 2147483647
      %v610 = vsel %vm525, %v602, 2147483647
      %v611 = vsel %vm525, %v603, 2147483647
      %v612 = vsel %vm525, %v604, 2147483647
      %v613 = vsel %vm525, %v605, 2147483647
      %vm614 = vcmp.lt.s32.totalorder %v609, %v613
      %v615 = vsel %vm614, %v609, %v613
      %v616 = vsel %vm525, %v606, 2147483647
      %vm617 = vcmp.lt.s32.totalorder %v610, %v616
      %v618 = vsel %vm617, %v610, %v616
      %v619 = vsel %vm525, %v607, 2147483647
      %vm620 = vcmp.lt.s32.totalorder %v611, %v619
      %v621 = vsel %vm620, %v611, %v619
      %v622 = vsel %vm525, %v608, 2147483647
      %vm623 = vcmp.lt.s32.totalorder %v612, %v622
      %v624 = vsel %vm623, %v612, %v622
      %vm625 = vcmp.lt.s32.totalorder %v615, %v618
      %v626 = vsel %vm625, %v615, %v618
      %vm627 = vcmp.lt.s32.totalorder %v621, %v624
      %v628 = vsel %vm627, %v621, %v624
      %vm629 = vcmp.lt.s32.totalorder %v626, %v628
      %v630 = vsel %vm629, %v626, %v628
      %v631 = vrot.slane %v630, 4
      %vm632 = vcmp.lt.s32.totalorder %v630, %v631
      %v633 = vsel %vm632, %v630, %v631
      %v634 = vrot.slane %v633, 2
      %vm635 = vcmp.lt.s32.totalorder %v633, %v634
      %v636 = vsel %vm635, %v633, %v634
      %v637 = vrot.slane %v636, 1
      %vm638 = vcmp.lt.s32.totalorder %v636, %v637
      %v639 = vsel %vm638, %v636, %v637
      %vm640 = vcmp.eq.f32.partialorder %v517, %v567
      %vm641 = vcmp.eq.f32.partialorder %v518, %v567
      %vm642 = vcmp.eq.f32.partialorder %v519, %v567
      %vm643 = vcmp.eq.f32.partialorder %v520, %v567
      %vm644 = vcmp.eq.f32.partialorder %v521, %v567
      %vm645 = vcmp.eq.f32.partialorder %v522, %v567
      %vm646 = vcmp.eq.f32.partialorder %v523, %v567
      %vm647 = vcmp.eq.f32.partialorder %v524, %v567
      %v648 = vsel %vm640, %v583, 64
      %v649 = vsel %vm641, %v584, 64
      %v650 = vsel %vm642, %v585, 64
      %v651 = vsel %vm643, %v586, 64
      %v652 = vsel %vm644, %v587, 64
      %v653 = vsel %vm645, %v588, 64
      %v654 = vsel %vm646, %v589, 64
      %v655 = vsel %vm647, %v590, 64
      %v656 = vsel %vm525, %v648, 2147483647
      %v657 = vsel %vm525, %v649, 2147483647
      %v658 = vsel %vm525, %v650, 2147483647
      %v659 = vsel %vm525, %v651, 2147483647
      %v660 = vsel %vm525, %v652, 2147483647
      %vm661 = vcmp.lt.s32.totalorder %v656, %v660
      %v662 = vsel %vm661, %v656, %v660
      %v663 = vsel %vm525, %v653, 2147483647
      %vm664 = vcmp.lt.s32.totalorder %v657, %v663
      %v665 = vsel %vm664, %v657, %v663
      %v666 = vsel %vm525, %v654, 2147483647
      %vm667 = vcmp.lt.s32.totalorder %v658, %v666
      %v668 = vsel %vm667, %v658, %v666
      %v669 = vsel %vm525, %v655, 2147483647
      %vm670 = vcmp.lt.s32.totalorder %v659, %v669
      %v671 = vsel %vm670, %v659, %v669
      %vm672 = vcmp.lt.s32.totalorder %v662, %v665
      %v673 = vsel %vm672, %v662, %v665
      %vm674 = vcmp.lt.s32.totalorder %v668, %v671
      %v675 = vsel %vm674, %v668, %v671
      %vm676 = vcmp.lt.s32.totalorder %v673, %v675
      %v677 = vsel %vm676, %v673, %v675
      %v678 = vrot.slane %v677, 4
      %vm679 = vcmp.lt.s32.totalorder %v677, %v678
      %v680 = vsel %vm679, %v677, %v678
      %v681 = vrot.slane %v680, 2
      %vm682 = vcmp.lt.s32.totalorder %v680, %v681
      %v683 = vsel %vm682, %v680, %v681
      %v684 = vrot.slane %v683, 1
      %vm685 = vcmp.lt.s32.totalorder %v683, %v684
      %v686 = vsel %vm685, %v683, %v684
      %v687 = vstv %s258
      %v688 = vadd.s32 %v592, %v687
      %vm689 = vcmp.eq.s32.totalorder %v583, %v688
      %vm690 = vcmp.eq.s32.totalorder %v584, %v688
      %vm691 = vcmp.eq.s32.totalorder %v585, %v688
      %vm692 = vcmp.eq.s32.totalorder %v586, %v688
      %vm693 = vcmp.eq.s32.totalorder %v587, %v688
      %vm694 = vcmp.eq.s32.totalorder %v588, %v688
      %vm695 = vcmp.eq.s32.totalorder %v589, %v688
      %vm696 = vcmp.eq.s32.totalorder %v590, %v688
      %v697 = vsel %vm689, 1, 0
      %v698 = vsel %vm690, 1, 0
      %v699 = vsel %vm691, 1, 0
      %v700 = vsel %vm692, 1, 0
      %v701 = vsel %vm693, 1, 0
      %v702 = vsel %vm694, 1, 0
      %v703 = vsel %vm695, 1, 0
      %v704 = vsel %vm696, 1, 0
      %v705 = vcvt.s32.f32 %v697
      %v706 = vcvt.s32.f32 %v698
      %v707 = vcvt.s32.f32 %v699
      %v708 = vcvt.s32.f32 %v700
      %v709 = vcvt.s32.f32 %v701
      %v710 = vcvt.s32.f32 %v702
      %v711 = vcvt.s32.f32 %v703
      %v712 = vcvt.s32.f32 %v704
      %vm713 = vcmp.eq.s32.totalorder %v583, %v639
      %vm714 = vcmp.eq.s32.totalorder %v584, %v639
      %vm715 = vcmp.eq.s32.totalorder %v585, %v639
      %vm716 = vcmp.eq.s32.totalorder %v586, %v639
      %vm717 = vcmp.eq.s32.totalorder %v587, %v639
      %vm718 = vcmp.eq.s32.totalorder %v588, %v639
      %vm719 = vcmp.eq.s32.totalorder %v589, %v639
      %vm720 = vcmp.eq.s32.totalorder %v590, %v639
      %v721 = vsel %vm713, 1, 0
      %v722 = vsel %vm714, 1, 0
      %v723 = vsel %vm715, 1, 0
      %v724 = vsel %vm716, 1, 0
      %v725 = vsel %vm717, 1, 0
      %v726 = vsel %vm718, 1, 0
      %v727 = vsel %vm719, 1, 0
      %v728 = vsel %vm720, 1, 0
      %v729 = vcvt.s32.f32 %v721
      %v730 = vcvt.s32.f32 %v722
      %v731 = vcvt.s32.f32 %v723
      %v732 = vcvt.s32.f32 %v724
      %v733 = vcvt.s32.f32 %v725
      %v734 = vcvt.s32.f32 %v726
      %v735 = vcvt.s32.f32 %v727
      %v736 = vcvt.s32.f32 %v728
      %vm737 = vcmp.eq.s32.totalorder %v583, %v686
      %vm738 = vcmp.eq.s32.totalorder %v584, %v686
      %vm739 = vcmp.eq.s32.totalorder %v585, %v686
      %vm740 = vcmp.eq.s32.totalorder %v586, %v686
      %vm741 = vcmp.eq.s32.totalorder %v587, %v686
      %vm742 = vcmp.eq.s32.totalorder %v588, %v686
      %vm743 = vcmp.eq.s32.totalorder %v589, %v686
      %vm744 = vcmp.eq.s32.totalorder %v590, %v686
      %v745 = vsel %vm737, 1, 0
      %v746 = vsel %vm738, 1, 0
      %v747 = vsel %vm739, 1, 0
      %v748 = vsel %vm740, 1, 0
      %v749 = vsel %vm741, 1, 0
      %v750 = vsel %vm742, 1, 0
      %v751 = vsel %vm743, 1, 0
      %v752 = vsel %vm744, 1, 0
      %v753 = vcvt.s32.f32 %v745
      %v754 = vcvt.s32.f32 %v746
      %v755 = vcvt.s32.f32 %v747
      %v756 = vcvt.s32.f32 %v748
      %v757 = vcvt.s32.f32 %v749
      %v758 = vcvt.s32.f32 %v750
      %v759 = vcvt.s32.f32 %v751
      %v760 = vcvt.s32.f32 %v752
      %769 = vrot.lane.b32.xlu0 %v729, 32
      %v770 = vpop.permute.xlu0 %769
      %771 = vrot.lane.b32.xlu0 %v730, 32
      %v772 = vpop.permute.xlu0 %771
      %773 = vrot.lane.b32.xlu0 %v731, 32
      %v774 = vpop.permute.xlu0 %773
      %775 = vrot.lane.b32.xlu0 %v732, 32
      %v776 = vpop.permute.xlu0 %775
      %777 = vrot.lane.b32.xlu0 %v733, 32
      %v778 = vpop.permute.xlu0 %777
      %779 = vrot.lane.b32.xlu0 %v734, 32
      %v780 = vpop.permute.xlu0 %779
      %781 = vrot.lane.b32.xlu0 %v735, 32
      %v782 = vpop.permute.xlu0 %781
      %783 = vrot.lane.b32.xlu0 %v736, 32
      %v784 = vpop.permute.xlu0 %783
      %801 = vrot.lane.b32.xlu0 %v753, 64
      %v802 = vpop.permute.xlu0 %801
      %803 = vrot.lane.b32.xlu0 %v754, 64
      %v804 = vpop.permute.xlu0 %803
      %805 = vrot.lane.b32.xlu0 %v755, 64
      %v806 = vpop.permute.xlu0 %805
      %807 = vrot.lane.b32.xlu0 %v756, 64
      %v808 = vpop.permute.xlu0 %807
      %809 = vrot.lane.b32.xlu0 %v757, 64
      %v810 = vpop.permute.xlu0 %809
      %811 = vrot.lane.b32.xlu0 %v758, 64
      %v812 = vpop.permute.xlu0 %811
      %813 = vrot.lane.b32.xlu0 %v759, 64
      %v814 = vpop.permute.xlu0 %813
      %815 = vrot.lane.b32.xlu0 %v760, 64
      %v816 = vpop.permute.xlu0 %815
      %v825 = vsel %vm525, %v705, %v770
      %v826 = vsel %vm525, %v706, %v772
      %v827 = vsel %vm525, %v707, %v774
      %v828 = vsel %vm525, %v708, %v776
      %v829 = vsel %vm525, %v709, %v778
      %v830 = vsel %vm525, %v710, %v780
      %v831 = vsel %vm525, %v711, %v782
      %v832 = vsel %vm525, %v712, %v784
      %vm833 = vcmask 523264
      %v834 = vsel %vm833, %v825, %v802
      %v835 = vsel %vm833, %v826, %v804
      %v836 = vsel %vm833, %v827, %v806
      %v837 = vsel %vm833, %v828, %v808
      %v838 = vsel %vm833, %v829, %v810
      %v839 = vsel %vm833, %v830, %v812
      %v840 = vsel %vm833, %v831, %v814
      %v841 = vsel %vm833, %v832, %v816
      %v842 = vld [vmem:[%s5] sm:$0xff]
      %v843 = vld [vmem:[%s5 + $0x8] sm:$0xff]
      %v844 = vld [vmem:[%s5 + $0x10] sm:$0xff]
      %v845 = vld [vmem:[%s5 + $0x18] sm:$0xff]
      %v846 = vld [vmem:[%s5 + $0x20] sm:$0xff]
      %v847 = vld [vmem:[%s5 + $0x28] sm:$0xff]
      %v848 = vld [vmem:[%s5 + $0x30] sm:$0xff]
      %v849 = vld [vmem:[%s5 + $0x38] sm:$0xff]
      %v850 = vld [vmem:[%s5 + $0x40] sm:$0xff]
      %v851 = vld [vmem:[%s5 + $0x48] sm:$0xff]
      %v852 = vld [vmem:[%s5 + $0x50] sm:$0xff]
      %v853 = vld [vmem:[%s5 + $0x58] sm:$0xff]
      %v854 = vld [vmem:[%s5 + $0x60] sm:$0xff]
      %v855 = vld [vmem:[%s5 + $0x68] sm:$0xff]
      %v856 = vld [vmem:[%s5 + $0x70] sm:$0xff]
      %v857 = vld [vmem:[%s5 + $0x78] sm:$0xff]
      %v858 = vld [vmem:[%s5 + $0x80] sm:$0xff]
      %v859 = vld [vmem:[%s5 + $0x88] sm:$0xff]
      %v860 = vld [vmem:[%s5 + $0x90] sm:$0xff]
      %v861 = vld [vmem:[%s5 + $0x98] sm:$0xff]
      %v862 = vld [vmem:[%s5 + $0xa0] sm:$0xff]
      %v863 = vld [vmem:[%s5 + $0xa8] sm:$0xff]
      %v864 = vld [vmem:[%s5 + $0xb0] sm:$0xff]
      %v865 = vld [vmem:[%s5 + $0xb8] sm:$0xff]
      %v866 = vld [vmem:[%s5 + $0xc0] sm:$0xff]
      %v867 = vld [vmem:[%s5 + $0xc8] sm:$0xff]
      %v868 = vld [vmem:[%s5 + $0xd0] sm:$0xff]
      %v869 = vld [vmem:[%s5 + $0xd8] sm:$0xff]
      %v870 = vld [vmem:[%s5 + $0xe0] sm:$0xff]
      %v871 = vld [vmem:[%s5 + $0xe8] sm:$0xff]
      %v872 = vld [vmem:[%s5 + $0xf0] sm:$0xff]
      %v873 = vld [vmem:[%s5 + $0xf8] sm:$0xff]
      %v875 = vsel %vm833, %v842, 0
      %v878 = vsel %vm833, %v843, 0
      %v881 = vsel %vm833, %v844, 0
      %v884 = vsel %vm833, %v845, 0
      %v887 = vsel %vm833, %v846, 0
      %v890 = vsel %vm833, %v847, 0
      %v893 = vsel %vm833, %v848, 0
      %v896 = vsel %vm833, %v849, 0
      %v899 = vsel %vm833, %v850, 0
      %v902 = vsel %vm833, %v851, 0
      %v905 = vsel %vm833, %v852, 0
      %v908 = vsel %vm833, %v853, 0
      %v911 = vsel %vm833, %v854, 0
      %v914 = vsel %vm833, %v855, 0
      %v917 = vsel %vm833, %v856, 0
      %v920 = vsel %vm833, %v857, 0
      %v923 = vsel %vm833, %v858, 0
      %v926 = vsel %vm833, %v859, 0
      %v929 = vsel %vm833, %v860, 0
      %v932 = vsel %vm833, %v861, 0
      %v935 = vsel %vm833, %v862, 0
      %v938 = vsel %vm833, %v863, 0
      %v941 = vsel %vm833, %v864, 0
      %v944 = vsel %vm833, %v865, 0
      %v947 = vsel %vm833, %v866, 0
      %v950 = vsel %vm833, %v867, 0
      %v953 = vsel %vm833, %v868, 0
      %v956 = vsel %vm833, %v869, 0
      %v959 = vsel %vm833, %v870, 0
      %v962 = vsel %vm833, %v871, 0
      %v965 = vsel %vm833, %v872, 0
      %v968 = vsel %vm833, %v873, 0
      %970 = vmatprep.subr.mxu0 0.0
      %971 = vmatpush1.msra.mxu0 %v834
      %972 = vmatprep.subr.mxu0 0.0
      %973 = vmatpush1.msra.mxu0 %v835
      %974 = vmatprep.subr.mxu0 0.0
      %975 = vmatpush1.msra.mxu0 %v836
      %976 = vmatprep.subr.mxu0 0.0
      %977 = vmatpush1.msra.mxu0 %v837
      %978 = vmatprep.subr.mxu0 0.0
      %979 = vmatpush1.msra.mxu0 %v838
      %980 = vmatprep.subr.mxu0 0.0
      %981 = vmatpush1.msra.mxu0 %v839
      %982 = vmatprep.subr.mxu0 0.0
      %983 = vmatpush1.msra.mxu0 %v840
      %984 = vmatprep.subr.mxu0 0.0
      %985 = vmatpush1.msra.mxu0 %v841
      %986 = vmatprep.subr.mxu0 0.0
      %987 = vmatpush1.msra.mxu0 0.0
      %988 = vmatprep.subr.mxu0 0.0
      %989 = vmatpush1.msra.mxu0 0.0
      %990 = vmatprep.subr.mxu0 0.0
      %991 = vmatpush1.msra.mxu0 0.0
      %992 = vmatprep.subr.mxu0 0.0
      %993 = vmatpush1.msra.mxu0 0.0
      %994 = vmatprep.subr.mxu0 0.0
      %995 = vmatpush1.msra.mxu0 0.0
      %996 = vmatprep.subr.mxu0 0.0
      %997 = vmatpush1.msra.mxu0 0.0
      %998 = vmatprep.subr.mxu0 0.0
      %999 = vmatpush1.msra.mxu0 0.0
      %1000 = vmatprep.subr.mxu0 0.0
      %1001 = vmatpush1.msra.mxu0 0.0
      %1002 = vmatprep.subr.mxu0 0.0
      %1003 = vmatpush1.msra.mxu0 0.0
      %1004 = vmatprep.subr.mxu0 0.0
      %1005 = vmatpush1.msra.mxu0 0.0
      %1006 = vmatprep.subr.mxu0 0.0
      %1007 = vmatpush1.msra.mxu0 0.0
      %1008 = vmatprep.subr.mxu0 0.0
      %1009 = vmatpush1.msra.mxu0 0.0
      %1010 = vmatprep.subr.mxu0 0.0
      %1011 = vmatpush1.msra.mxu0 0.0
      %1012 = vmatprep.subr.mxu0 0.0
      %1013 = vmatpush1.msra.mxu0 0.0
      %1014 = vmatprep.subr.mxu0 0.0
      %1015 = vmatpush1.msra.mxu0 0.0
      %1016 = vmatprep.subr.mxu0 0.0
      %1017 = vmatpush1.msra.mxu0 0.0
      %1018 = vmatprep.subr.mxu0 0.0
      %1019 = vmatpush1.msra.mxu0 0.0
      %1020 = vmatprep.subr.mxu0 0.0
      %1021 = vmatpush1.msra.mxu0 0.0
      %1022 = vmatprep.subr.mxu0 0.0
      %1023 = vmatpush1.msra.mxu0 0.0
      %1024 = vmatprep.subr.mxu0 0.0
      %1025 = vmatpush1.msra.mxu0 0.0
      %1026 = vmatprep.subr.mxu0 0.0
      %1027 = vmatpush1.msra.mxu0 0.0
      %1028 = vmatprep.subr.mxu0 0.0
      %1029 = vmatpush1.msra.mxu0 0.0
      %1030 = vmatprep.subr.mxu0 0.0
      %1031 = vmatpush1.msra.mxu0 0.0
      %1032 = vmatprep.subr.mxu0 0.0
      %1033 = vmatpush1.msra.mxu0 0.0
      %1034 = vmatprep.mubr.f32.mxu0 0.0
      %1035 = vmatmul.mubr.f32.gmra.mrb[0].mxu0 %v875
      %v1036 = vpop.f32.mrb[0].mxu0
      %v1037 = vadd.f32 0.0, %v1036
      %v1038 = vpop.f32.mrb[0].mxu0
      %1039 = vmatprep.mubr.f32.mxu0 0.0
      %1040 = vmatmul.mubr.f32.gmra.mrb[0].mxu0 %v878
      %v1041 = vpop.f32.mrb[0].mxu0
      %v1042 = vadd.f32 0.0, %v1041
      %v1043 = vpop.f32.mrb[0].mxu0
      %1044 = vmatprep.mubr.f32.mxu0 0.0
      %1045 = vmatmul.mubr.f32.gmra.mrb[0].mxu0 %v881
      %v1046 = vpop.f32.mrb[0].mxu0
      %v1047 = vadd.f32 0.0, %v1046
      %v1048 = vpop.f32.mrb[0].mxu0
      %1049 = vmatprep.mubr.f32.mxu0 0.0
      %1050 = vmatmul.mubr.f32.gmra.mrb[0].mxu0 %v884
      %v1051 = vpop.f32.mrb[0].mxu0
      %v1052 = vadd.f32 0.0, %v1051
      %v1053 = vpop.f32.mrb[0].mxu0
      %1054 = vmatprep.mubr.f32.mxu0 0.0
      %1055 = vmatmul.mubr.f32.gmra.mrb[0].mxu0 %v887
      %v1056 = vpop.f32.mrb[0].mxu0
      %v1057 = vadd.f32 0.0, %v1056
      %v1058 = vpop.f32.mrb[0].mxu0
      %1059 = vmatprep.mubr.f32.mxu0 0.0
      %1060 = vmatmul.mubr.f32.gmra.mrb[0].mxu0 %v890
      %v1061 = vpop.f32.mrb[0].mxu0
      %v1062 = vadd.f32 0.0, %v1061
      %v1063 = vpop.f32.mrb[0].mxu0
      %1064 = vmatprep.mubr.f32.mxu0 0.0
      %1065 = vmatmul.mubr.f32.gmra.mrb[0].mxu0 %v893
      %v1066 = vpop.f32.mrb[0].mxu0
      %v1067 = vadd.f32 0.0, %v1066
      %v1068 = vpop.f32.mrb[0].mxu0
      %1069 = vmatprep.mubr.f32.mxu0 0.0
      %1070 = vmatmul.mubr.f32.gmra.mrb[0].mxu0 %v896
      %v1071 = vpop.f32.mrb[0].mxu0
      %v1072 = vadd.f32 0.0, %v1071
      %v1073 = vpop.f32.mrb[0].mxu0
      %1074 = vmatprep.mubr.f32.mxu0 0.0
      %1075 = vmatmul.mubr.f32.gmra.mrb[0].mxu0 %v899
      %v1076 = vpop.f32.mrb[0].mxu0
      %v1077 = vadd.f32 0.0, %v1076
      %v1078 = vpop.f32.mrb[0].mxu0
      %1079 = vmatprep.mubr.f32.mxu0 0.0
      %1080 = vmatmul.mubr.f32.gmra.mrb[0].mxu0 %v902
      %v1081 = vpop.f32.mrb[0].mxu0
      %v1082 = vadd.f32 0.0, %v1081
      %v1083 = vpop.f32.mrb[0].mxu0
      %1084 = vmatprep.mubr.f32.mxu0 0.0
      %1085 = vmatmul.mubr.f32.gmra.mrb[0].mxu0 %v905
      %v1086 = vpop.f32.mrb[0].mxu0
      %v1087 = vadd.f32 0.0, %v1086
      %v1088 = vpop.f32.mrb[0].mxu0
      %1089 = vmatprep.mubr.f32.mxu0 0.0
      %1090 = vmatmul.mubr.f32.gmra.mrb[0].mxu0 %v908
      %v1091 = vpop.f32.mrb[0].mxu0
      %v1092 = vadd.f32 0.0, %v1091
      %v1093 = vpop.f32.mrb[0].mxu0
      %1094 = vmatprep.mubr.f32.mxu0 0.0
      %1095 = vmatmul.mubr.f32.gmra.mrb[0].mxu0 %v911
      %v1096 = vpop.f32.mrb[0].mxu0
      %v1097 = vadd.f32 0.0, %v1096
      %v1098 = vpop.f32.mrb[0].mxu0
      %1099 = vmatprep.mubr.f32.mxu0 0.0
      %1100 = vmatmul.mubr.f32.gmra.mrb[0].mxu0 %v914
      %v1101 = vpop.f32.mrb[0].mxu0
      %v1102 = vadd.f32 0.0, %v1101
      %v1103 = vpop.f32.mrb[0].mxu0
      %1104 = vmatprep.mubr.f32.mxu0 0.0
      %1105 = vmatmul.mubr.f32.gmra.mrb[0].mxu0 %v917
      %v1106 = vpop.f32.mrb[0].mxu0
      %v1107 = vadd.f32 0.0, %v1106
      %v1108 = vpop.f32.mrb[0].mxu0
      %1109 = vmatprep.mubr.f32.mxu0 0.0
      %1110 = vmatmul.mubr.f32.gmra.mrb[0].mxu0 %v920
      %v1111 = vpop.f32.mrb[0].mxu0
      %v1112 = vadd.f32 0.0, %v1111
      %v1113 = vpop.f32.mrb[0].mxu0
      %1114 = vmatprep.mubr.f32.mxu0 0.0
      %1115 = vmatmul.mubr.f32.gmra.mrb[0].mxu0 %v923
      %v1116 = vpop.f32.mrb[0].mxu0
      %v1117 = vadd.f32 0.0, %v1116
      %v1118 = vpop.f32.mrb[0].mxu0
      %1119 = vmatprep.mubr.f32.mxu0 0.0
      %1120 = vmatmul.mubr.f32.gmra.mrb[0].mxu0 %v926
      %v1121 = vpop.f32.mrb[0].mxu0
      %v1122 = vadd.f32 0.0, %v1121
      %v1123 = vpop.f32.mrb[0].mxu0
      %1124 = vmatprep.mubr.f32.mxu0 0.0
      %1125 = vmatmul.mubr.f32.gmra.mrb[0].mxu0 %v929
      %v1126 = vpop.f32.mrb[0].mxu0
      %v1127 = vadd.f32 0.0, %v1126
      %v1128 = vpop.f32.mrb[0].mxu0
      %1129 = vmatprep.mubr.f32.mxu0 0.0
      %1130 = vmatmul.mubr.f32.gmra.mrb[0].mxu0 %v932
      %v1131 = vpop.f32.mrb[0].mxu0
      %v1132 = vadd.f32 0.0, %v1131
      %v1133 = vpop.f32.mrb[0].mxu0
      %1134 = vmatprep.mubr.f32.mxu0 0.0
      %1135 = vmatmul.mubr.f32.gmra.mrb[0].mxu0 %v935
      %v1136 = vpop.f32.mrb[0].mxu0
      %v1137 = vadd.f32 0.0, %v1136
      %v1138 = vpop.f32.mrb[0].mxu0
      %1139 = vmatprep.mubr.f32.mxu0 0.0
      %1140 = vmatmul.mubr.f32.gmra.mrb[0].mxu0 %v938
      %v1141 = vpop.f32.mrb[0].mxu0
      %v1142 = vadd.f32 0.0, %v1141
      %v1143 = vpop.f32.mrb[0].mxu0
      %1144 = vmatprep.mubr.f32.mxu0 0.0
      %1145 = vmatmul.mubr.f32.gmra.mrb[0].mxu0 %v941
      %v1146 = vpop.f32.mrb[0].mxu0
      %v1147 = vadd.f32 0.0, %v1146
      %v1148 = vpop.f32.mrb[0].mxu0
      %1149 = vmatprep.mubr.f32.mxu0 0.0
      %1150 = vmatmul.mubr.f32.gmra.mrb[0].mxu0 %v944
      %v1151 = vpop.f32.mrb[0].mxu0
      %v1152 = vadd.f32 0.0, %v1151
      %v1153 = vpop.f32.mrb[0].mxu0
      %1154 = vmatprep.mubr.f32.mxu0 0.0
      %1155 = vmatmul.mubr.f32.gmra.mrb[0].mxu0 %v947
      %v1156 = vpop.f32.mrb[0].mxu0
      %v1157 = vadd.f32 0.0, %v1156
      %v1158 = vpop.f32.mrb[0].mxu0
      %1159 = vmatprep.mubr.f32.mxu0 0.0
      %1160 = vmatmul.mubr.f32.gmra.mrb[0].mxu0 %v950
      %v1161 = vpop.f32.mrb[0].mxu0
      %v1162 = vadd.f32 0.0, %v1161
      %v1163 = vpop.f32.mrb[0].mxu0
      %1164 = vmatprep.mubr.f32.mxu0 0.0
      %1165 = vmatmul.mubr.f32.gmra.mrb[0].mxu0 %v953
      %v1166 = vpop.f32.mrb[0].mxu0
      %v1167 = vadd.f32 0.0, %v1166
      %v1168 = vpop.f32.mrb[0].mxu0
      %1169 = vmatprep.mubr.f32.mxu0 0.0
      %1170 = vmatmul.mubr.f32.gmra.mrb[0].mxu0 %v956
      %v1171 = vpop.f32.mrb[0].mxu0
      %v1172 = vadd.f32 0.0, %v1171
      %v1173 = vpop.f32.mrb[0].mxu0
      %1174 = vmatprep.mubr.f32.mxu0 0.0
      %1175 = vmatmul.mubr.f32.gmra.mrb[0].mxu0 %v959
      %v1176 = vpop.f32.mrb[0].mxu0
      %v1177 = vadd.f32 0.0, %v1176
      %v1178 = vpop.f32.mrb[0].mxu0
      %1179 = vmatprep.mubr.f32.mxu0 0.0
      %1180 = vmatmul.mubr.f32.gmra.mrb[0].mxu0 %v962
      %v1181 = vpop.f32.mrb[0].mxu0
      %v1182 = vadd.f32 0.0, %v1181
      %v1183 = vpop.f32.mrb[0].mxu0
      %1184 = vmatprep.mubr.f32.mxu0 0.0
      %1185 = vmatmul.mubr.f32.gmra.mrb[0].mxu0 %v965
      %v1186 = vpop.f32.mrb[0].mxu0
      %v1187 = vadd.f32 0.0, %v1186
      %v1188 = vpop.f32.mrb[0].mxu0
      %1189 = vmatprep.mubr.f32.mxu0 0.0
      %1190 = vmatmul.mubr.f32.gmra.mrb[0].mxu0 %v968
      %v1191 = vpop.f32.mrb[0].mxu0
      %v1192 = vadd.f32 0.0, %v1191
      %v1193 = vpop.f32.mrb[0].mxu0
      %1194 = vdwg.mxu0
      %v1195 = vmul.f32 %v1037, %v1037
      %v1196 = vmul.f32 %v1042, %v1042
      %v1197 = vmul.f32 %v1047, %v1047
      %v1198 = vmul.f32 %v1052, %v1052
      %v1199 = vmul.f32 %v1057, %v1057
      %v1200 = vmul.f32 %v1062, %v1062
      %v1201 = vmul.f32 %v1067, %v1067
      %v1202 = vmul.f32 %v1072, %v1072
      %v1203 = vmul.f32 %v1077, %v1077
      %v1204 = vmul.f32 %v1082, %v1082
      %v1205 = vmul.f32 %v1087, %v1087
      %v1206 = vmul.f32 %v1092, %v1092
      %v1207 = vmul.f32 %v1097, %v1097
      %v1208 = vmul.f32 %v1102, %v1102
      %v1209 = vmul.f32 %v1107, %v1107
      %v1210 = vmul.f32 %v1112, %v1112
      %v1211 = vmul.f32 %v1117, %v1117
      %v1212 = vmul.f32 %v1122, %v1122
      %v1213 = vmul.f32 %v1127, %v1127
      %v1214 = vmul.f32 %v1132, %v1132
      %v1215 = vmul.f32 %v1137, %v1137
      %v1216 = vmul.f32 %v1142, %v1142
      %v1217 = vmul.f32 %v1147, %v1147
      %v1218 = vmul.f32 %v1152, %v1152
      %v1219 = vmul.f32 %v1157, %v1157
      %v1220 = vmul.f32 %v1162, %v1162
      %v1221 = vmul.f32 %v1167, %v1167
      %v1222 = vmul.f32 %v1172, %v1172
      %v1223 = vmul.f32 %v1177, %v1177
      %v1224 = vmul.f32 %v1182, %v1182
      %v1225 = vmul.f32 %v1187, %v1187
      %v1226 = vmul.f32 %v1192, %v1192
      %v1227 = vsel %vm525, %v1195, 0.0
      %v1228 = vsel %vm525, %v1196, 0.0
      %v1229 = vadd.f32 %v1227, %v1228
      %v1230 = vsel %vm525, %v1197, 0.0
      %v1231 = vadd.f32 %v1229, %v1230
      %v1232 = vsel %vm525, %v1198, 0.0
      %v1233 = vadd.f32 %v1231, %v1232
      %v1234 = vrot.slane %v1233, 4
      %v1235 = vadd.f32 %v1233, %v1234
      %v1236 = vrot.slane %v1235, 2
      %v1237 = vadd.f32 %v1235, %v1236
      %v1238 = vrot.slane %v1237, 1
      %v1239 = vadd.f32 %v1237, %v1238
      %v1240 = vsel %vm525, %v1199, 0.0
      %v1241 = vsel %vm525, %v1200, 0.0
      %v1242 = vadd.f32 %v1240, %v1241
      %v1243 = vsel %vm525, %v1201, 0.0
      %v1244 = vadd.f32 %v1242, %v1243
      %v1245 = vsel %vm525, %v1202, 0.0
      %v1246 = vadd.f32 %v1244, %v1245
      %v1247 = vrot.slane %v1246, 4
      %v1248 = vadd.f32 %v1246, %v1247
      %v1249 = vrot.slane %v1248, 2
      %v1250 = vadd.f32 %v1248, %v1249
      %v1251 = vrot.slane %v1250, 1
      %v1252 = vadd.f32 %v1250, %v1251
      %v1253 = vsel %vm525, %v1203, 0.0
      %v1254 = vsel %vm525, %v1204, 0.0
      %v1255 = vadd.f32 %v1253, %v1254
      %v1256 = vsel %vm525, %v1205, 0.0
      %v1257 = vadd.f32 %v1255, %v1256
      %v1258 = vsel %vm525, %v1206, 0.0
      %v1259 = vadd.f32 %v1257, %v1258
      %v1260 = vrot.slane %v1259, 4
      %v1261 = vadd.f32 %v1259, %v1260
      %v1262 = vrot.slane %v1261, 2
      %v1263 = vadd.f32 %v1261, %v1262
      %v1264 = vrot.slane %v1263, 1
      %v1265 = vadd.f32 %v1263, %v1264
      %v1266 = vsel %vm525, %v1207, 0.0
      %v1267 = vsel %vm525, %v1208, 0.0
      %v1268 = vadd.f32 %v1266, %v1267
      %v1269 = vsel %vm525, %v1209, 0.0
      %v1270 = vadd.f32 %v1268, %v1269
      %v1271 = vsel %vm525, %v1210, 0.0
      %v1272 = vadd.f32 %v1270, %v1271
      %v1273 = vrot.slane %v1272, 4
      %v1274 = vadd.f32 %v1272, %v1273
      %v1275 = vrot.slane %v1274, 2
      %v1276 = vadd.f32 %v1274, %v1275
      %v1277 = vrot.slane %v1276, 1
      %v1278 = vadd.f32 %v1276, %v1277
      %v1279 = vsel %vm525, %v1211, 0.0
      %v1280 = vsel %vm525, %v1212, 0.0
      %v1281 = vadd.f32 %v1279, %v1280
      %v1282 = vsel %vm525, %v1213, 0.0
      %v1283 = vadd.f32 %v1281, %v1282
      %v1284 = vsel %vm525, %v1214, 0.0
      %v1285 = vadd.f32 %v1283, %v1284
      %v1286 = vrot.slane %v1285, 4
      %v1287 = vadd.f32 %v1285, %v1286
      %v1288 = vrot.slane %v1287, 2
      %v1289 = vadd.f32 %v1287, %v1288
      %v1290 = vrot.slane %v1289, 1
      %v1291 = vadd.f32 %v1289, %v1290
      %v1292 = vsel %vm525, %v1215, 0.0
      %v1293 = vsel %vm525, %v1216, 0.0
      %v1294 = vadd.f32 %v1292, %v1293
      %v1295 = vsel %vm525, %v1217, 0.0
      %v1296 = vadd.f32 %v1294, %v1295
      %v1297 = vsel %vm525, %v1218, 0.0
      %v1298 = vadd.f32 %v1296, %v1297
      %v1299 = vrot.slane %v1298, 4
      %v1300 = vadd.f32 %v1298, %v1299
      %v1301 = vrot.slane %v1300, 2
      %v1302 = vadd.f32 %v1300, %v1301
      %v1303 = vrot.slane %v1302, 1
      %v1304 = vadd.f32 %v1302, %v1303
      %v1305 = vsel %vm525, %v1219, 0.0
      %v1306 = vsel %vm525, %v1220, 0.0
      %v1307 = vadd.f32 %v1305, %v1306
      %v1308 = vsel %vm525, %v1221, 0.0
      %v1309 = vadd.f32 %v1307, %v1308
      %v1310 = vsel %vm525, %v1222, 0.0
      %v1311 = vadd.f32 %v1309, %v1310
      %v1312 = vrot.slane %v1311, 4
      %v1313 = vadd.f32 %v1311, %v1312
      %v1314 = vrot.slane %v1313, 2
      %v1315 = vadd.f32 %v1313, %v1314
      %v1316 = vrot.slane %v1315, 1
      %v1317 = vadd.f32 %v1315, %v1316
      %v1318 = vsel %vm525, %v1223, 0.0
      %v1319 = vsel %vm525, %v1224, 0.0
      %v1320 = vadd.f32 %v1318, %v1319
      %v1321 = vsel %vm525, %v1225, 0.0
      %v1322 = vadd.f32 %v1320, %v1321
      %v1323 = vsel %vm525, %v1226, 0.0
      %v1324 = vadd.f32 %v1322, %v1323
      %v1325 = vrot.slane %v1324, 4
      %v1326 = vadd.f32 %v1324, %v1325
      %v1327 = vrot.slane %v1326, 2
      %v1328 = vadd.f32 %v1326, %v1327
      %v1329 = vrot.slane %v1328, 1
      %v1330 = vadd.f32 %v1328, %v1329
      %vm1339 = vcmask 1041409
      %v1340 = vsel %vm1339, %v1252, %v1239
      %vm1341 = vcmask 1042434
      %v1342 = vsel %vm1341, %v1265, %v1340
      %vm1343 = vcmask 1043459
      %v1344 = vsel %vm1343, %v1278, %v1342
      %vm1345 = vcmask 1044484
      %v1346 = vsel %vm1345, %v1291, %v1344
      %vm1347 = vcmask 1045509
      %v1348 = vsel %vm1347, %v1304, %v1346
      %vm1349 = vcmask 1046534
      %v1350 = vsel %vm1349, %v1317, %v1348
      %vm1351 = vcmask 1047559
      %v1352 = vsel %vm1351, %v1330, %v1350
      %1354 = vrot.lane.b32.xlu0 %v1352, 32
      %v1355 = vpop.permute.xlu0 %1354
      %v1357 = vsel %vm525, %v1352, %v1355
      %vm1358 = vcmask 785664
      %v1359 = vsel %vm1358, %v1195, 0.0
      %v1360 = vsel %vm1358, %v1196, 0.0
      %v1361 = vadd.f32 %v1359, %v1360
      %v1362 = vsel %vm1358, %v1197, 0.0
      %v1363 = vadd.f32 %v1361, %v1362
      %v1364 = vsel %vm1358, %v1198, 0.0
      %v1365 = vadd.f32 %v1363, %v1364
      %v1366 = vrot.slane %v1365, 4
      %v1367 = vadd.f32 %v1365, %v1366
      %v1368 = vrot.slane %v1367, 2
      %v1369 = vadd.f32 %v1367, %v1368
      %v1370 = vrot.slane %v1369, 1
      %v1371 = vadd.f32 %v1369, %v1370
      %v1372 = vsel %vm1358, %v1199, 0.0
      %v1373 = vsel %vm1358, %v1200, 0.0
      %v1374 = vadd.f32 %v1372, %v1373
      %v1375 = vsel %vm1358, %v1201, 0.0
      %v1376 = vadd.f32 %v1374, %v1375
      %v1377 = vsel %vm1358, %v1202, 0.0
      %v1378 = vadd.f32 %v1376, %v1377
      %v1379 = vrot.slane %v1378, 4
      %v1380 = vadd.f32 %v1378, %v1379
      %v1381 = vrot.slane %v1380, 2
      %v1382 = vadd.f32 %v1380, %v1381
      %v1383 = vrot.slane %v1382, 1
      %v1384 = vadd.f32 %v1382, %v1383
      %v1385 = vsel %vm1358, %v1203, 0.0
      %v1386 = vsel %vm1358, %v1204, 0.0
      %v1387 = vadd.f32 %v1385, %v1386
      %v1388 = vsel %vm1358, %v1205, 0.0
      %v1389 = vadd.f32 %v1387, %v1388
      %v1390 = vsel %vm1358, %v1206, 0.0
      %v1391 = vadd.f32 %v1389, %v1390
      %v1392 = vrot.slane %v1391, 4
      %v1393 = vadd.f32 %v1391, %v1392
      %v1394 = vrot.slane %v1393, 2
      %v1395 = vadd.f32 %v1393, %v1394
      %v1396 = vrot.slane %v1395, 1
      %v1397 = vadd.f32 %v1395, %v1396
      %v1398 = vsel %vm1358, %v1207, 0.0
      %v1399 = vsel %vm1358, %v1208, 0.0
      %v1400 = vadd.f32 %v1398, %v1399
      %v1401 = vsel %vm1358, %v1209, 0.0
      %v1402 = vadd.f32 %v1400, %v1401
      %v1403 = vsel %vm1358, %v1210, 0.0
      %v1404 = vadd.f32 %v1402, %v1403
      %v1405 = vrot.slane %v1404, 4
      %v1406 = vadd.f32 %v1404, %v1405
      %v1407 = vrot.slane %v1406, 2
      %v1408 = vadd.f32 %v1406, %v1407
      %v1409 = vrot.slane %v1408, 1
      %v1410 = vadd.f32 %v1408, %v1409
      %v1411 = vsel %vm1358, %v1211, 0.0
      %v1412 = vsel %vm1358, %v1212, 0.0
      %v1413 = vadd.f32 %v1411, %v1412
      %v1414 = vsel %vm1358, %v1213, 0.0
      %v1415 = vadd.f32 %v1413, %v1414
      %v1416 = vsel %vm1358, %v1214, 0.0
      %v1417 = vadd.f32 %v1415, %v1416
      %v1418 = vrot.slane %v1417, 4
      %v1419 = vadd.f32 %v1417, %v1418
      %v1420 = vrot.slane %v1419, 2
      %v1421 = vadd.f32 %v1419, %v1420
      %v1422 = vrot.slane %v1421, 1
      %v1423 = vadd.f32 %v1421, %v1422
      %v1424 = vsel %vm1358, %v1215, 0.0
      %v1425 = vsel %vm1358, %v1216, 0.0
      %v1426 = vadd.f32 %v1424, %v1425
      %v1427 = vsel %vm1358, %v1217, 0.0
      %v1428 = vadd.f32 %v1426, %v1427
      %v1429 = vsel %vm1358, %v1218, 0.0
      %v1430 = vadd.f32 %v1428, %v1429
      %v1431 = vrot.slane %v1430, 4
      %v1432 = vadd.f32 %v1430, %v1431
      %v1433 = vrot.slane %v1432, 2
      %v1434 = vadd.f32 %v1432, %v1433
      %v1435 = vrot.slane %v1434, 1
      %v1436 = vadd.f32 %v1434, %v1435
      %v1437 = vsel %vm1358, %v1219, 0.0
      %v1438 = vsel %vm1358, %v1220, 0.0
      %v1439 = vadd.f32 %v1437, %v1438
      %v1440 = vsel %vm1358, %v1221, 0.0
      %v1441 = vadd.f32 %v1439, %v1440
      %v1442 = vsel %vm1358, %v1222, 0.0
      %v1443 = vadd.f32 %v1441, %v1442
      %v1444 = vrot.slane %v1443, 4
      %v1445 = vadd.f32 %v1443, %v1444
      %v1446 = vrot.slane %v1445, 2
      %v1447 = vadd.f32 %v1445, %v1446
      %v1448 = vrot.slane %v1447, 1
      %v1449 = vadd.f32 %v1447, %v1448
      %v1450 = vsel %vm1358, %v1223, 0.0
      %v1451 = vsel %vm1358, %v1224, 0.0
      %v1452 = vadd.f32 %v1450, %v1451
      %v1453 = vsel %vm1358, %v1225, 0.0
      %v1454 = vadd.f32 %v1452, %v1453
      %v1455 = vsel %vm1358, %v1226, 0.0
      %v1456 = vadd.f32 %v1454, %v1455
      %v1457 = vrot.slane %v1456, 4
      %v1458 = vadd.f32 %v1456, %v1457
      %v1459 = vrot.slane %v1458, 2
      %v1460 = vadd.f32 %v1458, %v1459
      %v1461 = vrot.slane %v1460, 1
      %v1462 = vadd.f32 %v1460, %v1461
      %1495 = vrot.lane.b32.xlu0 %v1037, 32
      %v1496 = vpop.permute.xlu0 %1495
      %1497 = vrot.lane.b32.xlu0 %v1042, 32
      %v1498 = vpop.permute.xlu0 %1497
      %1499 = vrot.lane.b32.xlu0 %v1047, 32
      %v1500 = vpop.permute.xlu0 %1499
      %1501 = vrot.lane.b32.xlu0 %v1052, 32
      %v1502 = vpop.permute.xlu0 %1501
      %1503 = vrot.lane.b32.xlu0 %v1057, 32
      %v1504 = vpop.permute.xlu0 %1503
      %1505 = vrot.lane.b32.xlu0 %v1062, 32
      %v1506 = vpop.permute.xlu0 %1505
      %1507 = vrot.lane.b32.xlu0 %v1067, 32
      %v1508 = vpop.permute.xlu0 %1507
      %1509 = vrot.lane.b32.xlu0 %v1072, 32
      %v1510 = vpop.permute.xlu0 %1509
      %1511 = vrot.lane.b32.xlu0 %v1077, 32
      %v1512 = vpop.permute.xlu0 %1511
      %1513 = vrot.lane.b32.xlu0 %v1082, 32
      %v1514 = vpop.permute.xlu0 %1513
      %1515 = vrot.lane.b32.xlu0 %v1087, 32
      %v1516 = vpop.permute.xlu0 %1515
      %1517 = vrot.lane.b32.xlu0 %v1092, 32
      %v1518 = vpop.permute.xlu0 %1517
      %1519 = vrot.lane.b32.xlu0 %v1097, 32
      %v1520 = vpop.permute.xlu0 %1519
      %1521 = vrot.lane.b32.xlu0 %v1102, 32
      %v1522 = vpop.permute.xlu0 %1521
      %1523 = vrot.lane.b32.xlu0 %v1107, 32
      %v1524 = vpop.permute.xlu0 %1523
      %1525 = vrot.lane.b32.xlu0 %v1112, 32
      %v1526 = vpop.permute.xlu0 %1525
      %1527 = vrot.lane.b32.xlu0 %v1117, 32
      %v1528 = vpop.permute.xlu0 %1527
      %1529 = vrot.lane.b32.xlu0 %v1122, 32
      %v1530 = vpop.permute.xlu0 %1529
      %1531 = vrot.lane.b32.xlu0 %v1127, 32
      %v1532 = vpop.permute.xlu0 %1531
      %1533 = vrot.lane.b32.xlu0 %v1132, 32
      %v1534 = vpop.permute.xlu0 %1533
      %1535 = vrot.lane.b32.xlu0 %v1137, 32
      %v1536 = vpop.permute.xlu0 %1535
      %1537 = vrot.lane.b32.xlu0 %v1142, 32
      %v1538 = vpop.permute.xlu0 %1537
      %1539 = vrot.lane.b32.xlu0 %v1147, 32
      %v1540 = vpop.permute.xlu0 %1539
      %1541 = vrot.lane.b32.xlu0 %v1152, 32
      %v1542 = vpop.permute.xlu0 %1541
      %1543 = vrot.lane.b32.xlu0 %v1157, 32
      %v1544 = vpop.permute.xlu0 %1543
      %1545 = vrot.lane.b32.xlu0 %v1162, 32
      %v1546 = vpop.permute.xlu0 %1545
      %1547 = vrot.lane.b32.xlu0 %v1167, 32
      %v1548 = vpop.permute.xlu0 %1547
      %1549 = vrot.lane.b32.xlu0 %v1172, 32
      %v1550 = vpop.permute.xlu0 %1549
      %1551 = vrot.lane.b32.xlu0 %v1177, 32
      %v1552 = vpop.permute.xlu0 %1551
      %1553 = vrot.lane.b32.xlu0 %v1182, 32
      %v1554 = vpop.permute.xlu0 %1553
      %1555 = vrot.lane.b32.xlu0 %v1187, 32
      %v1556 = vpop.permute.xlu0 %1555
      %1557 = vrot.lane.b32.xlu0 %v1192, 32
      %v1558 = vpop.permute.xlu0 %1557
      %v1591 = vsel %vm525, %v1037, %v1496
      %v1592 = vsel %vm525, %v1042, %v1498
      %v1593 = vsel %vm525, %v1047, %v1500
      %v1594 = vsel %vm525, %v1052, %v1502
      %v1595 = vsel %vm525, %v1057, %v1504
      %v1596 = vsel %vm525, %v1062, %v1506
      %v1597 = vsel %vm525, %v1067, %v1508
      %v1598 = vsel %vm525, %v1072, %v1510
      %v1599 = vsel %vm525, %v1077, %v1512
      %v1600 = vsel %vm525, %v1082, %v1514
      %v1601 = vsel %vm525, %v1087, %v1516
      %v1602 = vsel %vm525, %v1092, %v1518
      %v1603 = vsel %vm525, %v1097, %v1520
      %v1604 = vsel %vm525, %v1102, %v1522
      %v1605 = vsel %vm525, %v1107, %v1524
      %v1606 = vsel %vm525, %v1112, %v1526
      %v1607 = vsel %vm525, %v1117, %v1528
      %v1608 = vsel %vm525, %v1122, %v1530
      %v1609 = vsel %vm525, %v1127, %v1532
      %v1610 = vsel %vm525, %v1132, %v1534
      %v1611 = vsel %vm525, %v1137, %v1536
      %v1612 = vsel %vm525, %v1142, %v1538
      %v1613 = vsel %vm525, %v1147, %v1540
      %v1614 = vsel %vm525, %v1152, %v1542
      %v1615 = vsel %vm525, %v1157, %v1544
      %v1616 = vsel %vm525, %v1162, %v1546
      %v1617 = vsel %vm525, %v1167, %v1548
      %v1618 = vsel %vm525, %v1172, %v1550
      %v1619 = vsel %vm525, %v1177, %v1552
      %v1620 = vsel %vm525, %v1182, %v1554
      %v1621 = vsel %vm525, %v1187, %v1556
      %v1622 = vsel %vm525, %v1192, %v1558
      %1623 = vrot.lane.b32.xlu0 %v1037, 96
      %v1624 = vpop.permute.xlu0 %1623
      %1625 = vrot.lane.b32.xlu0 %v1042, 96
      %v1626 = vpop.permute.xlu0 %1625
      %1627 = vrot.lane.b32.xlu0 %v1047, 96
      %v1628 = vpop.permute.xlu0 %1627
      %1629 = vrot.lane.b32.xlu0 %v1052, 96
      %v1630 = vpop.permute.xlu0 %1629
      %v1635 = vmul.f32 %v1591, %v1624
      %v1636 = vmul.f32 %v1592, %v1626
      %v1637 = vmul.f32 %v1593, %v1628
      %v1638 = vmul.f32 %v1594, %v1630
      %v1639 = vmul.f32 %v1595, %v1624
      %v1640 = vmul.f32 %v1596, %v1626
      %v1641 = vmul.f32 %v1597, %v1628
      %v1642 = vmul.f32 %v1598, %v1630
      %v1643 = vmul.f32 %v1599, %v1624
      %v1644 = vmul.f32 %v1600, %v1626
      %v1645 = vmul.f32 %v1601, %v1628
      %v1646 = vmul.f32 %v1602, %v1630
      %v1647 = vmul.f32 %v1603, %v1624
      %v1648 = vmul.f32 %v1604, %v1626
      %v1649 = vmul.f32 %v1605, %v1628
      %v1650 = vmul.f32 %v1606, %v1630
      %v1651 = vmul.f32 %v1607, %v1624
      %v1652 = vmul.f32 %v1608, %v1626
      %v1653 = vmul.f32 %v1609, %v1628
      %v1654 = vmul.f32 %v1610, %v1630
      %v1655 = vmul.f32 %v1611, %v1624
      %v1656 = vmul.f32 %v1612, %v1626
      %v1657 = vmul.f32 %v1613, %v1628
      %v1658 = vmul.f32 %v1614, %v1630
      %v1659 = vmul.f32 %v1615, %v1624
      %v1660 = vmul.f32 %v1616, %v1626
      %v1661 = vmul.f32 %v1617, %v1628
      %v1662 = vmul.f32 %v1618, %v1630
      %v1663 = vmul.f32 %v1619, %v1624
      %v1664 = vmul.f32 %v1620, %v1626
      %v1665 = vmul.f32 %v1621, %v1628
      %v1666 = vmul.f32 %v1622, %v1630
      %v1667 = vsel %vm833, %v1635, 0.0
      %v1668 = vsel %vm833, %v1636, 0.0
      %v1669 = vadd.f32 %v1667, %v1668
      %v1670 = vsel %vm833, %v1637, 0.0
      %v1671 = vadd.f32 %v1669, %v1670
      %v1672 = vsel %vm833, %v1638, 0.0
      %v1673 = vadd.f32 %v1671, %v1672
      %v1674 = vrot.slane %v1673, 4
      %v1675 = vadd.f32 %v1673, %v1674
      %v1676 = vrot.slane %v1675, 2
      %v1677 = vadd.f32 %v1675, %v1676
      %v1678 = vrot.slane %v1677, 1
      %v1679 = vadd.f32 %v1677, %v1678
      %v1680 = vsel %vm833, %v1639, 0.0
      %v1681 = vsel %vm833, %v1640, 0.0
      %v1682 = vadd.f32 %v1680, %v1681
      %v1683 = vsel %vm833, %v1641, 0.0
      %v1684 = vadd.f32 %v1682, %v1683
      %v1685 = vsel %vm833, %v1642, 0.0
      %v1686 = vadd.f32 %v1684, %v1685
      %v1687 = vrot.slane %v1686, 4
      %v1688 = vadd.f32 %v1686, %v1687
      %v1689 = vrot.slane %v1688, 2
      %v1690 = vadd.f32 %v1688, %v1689
      %v1691 = vrot.slane %v1690, 1
      %v1692 = vadd.f32 %v1690, %v1691
      %v1693 = vsel %vm833, %v1643, 0.0
      %v1694 = vsel %vm833, %v1644, 0.0
      %v1695 = vadd.f32 %v1693, %v1694
      %v1696 = vsel %vm833, %v1645, 0.0
      %v1697 = vadd.f32 %v1695, %v1696
      %v1698 = vsel %vm833, %v1646, 0.0
      %v1699 = vadd.f32 %v1697, %v1698
      %v1700 = vrot.slane %v1699, 4
      %v1701 = vadd.f32 %v1699, %v1700
      %v1702 = vrot.slane %v1701, 2
      %v1703 = vadd.f32 %v1701, %v1702
      %v1704 = vrot.slane %v1703, 1
      %v1705 = vadd.f32 %v1703, %v1704
      %v1706 = vsel %vm833, %v1647, 0.0
      %v1707 = vsel %vm833, %v1648, 0.0
      %v1708 = vadd.f32 %v1706, %v1707
      %v1709 = vsel %vm833, %v1649, 0.0
      %v1710 = vadd.f32 %v1708, %v1709
      %v1711 = vsel %vm833, %v1650, 0.0
      %v1712 = vadd.f32 %v1710, %v1711
      %v1713 = vrot.slane %v1712, 4
      %v1714 = vadd.f32 %v1712, %v1713
      %v1715 = vrot.slane %v1714, 2
      %v1716 = vadd.f32 %v1714, %v1715
      %v1717 = vrot.slane %v1716, 1
      %v1718 = vadd.f32 %v1716, %v1717
      %v1719 = vsel %vm833, %v1651, 0.0
      %v1720 = vsel %vm833, %v1652, 0.0
      %v1721 = vadd.f32 %v1719, %v1720
      %v1722 = vsel %vm833, %v1653, 0.0
      %v1723 = vadd.f32 %v1721, %v1722
      %v1724 = vsel %vm833, %v1654, 0.0
      %v1725 = vadd.f32 %v1723, %v1724
      %v1726 = vrot.slane %v1725, 4
      %v1727 = vadd.f32 %v1725, %v1726
      %v1728 = vrot.slane %v1727, 2
      %v1729 = vadd.f32 %v1727, %v1728
      %v1730 = vrot.slane %v1729, 1
      %v1731 = vadd.f32 %v1729, %v1730
      %v1732 = vsel %vm833, %v1655, 0.0
      %v1733 = vsel %vm833, %v1656, 0.0
      %v1734 = vadd.f32 %v1732, %v1733
      %v1735 = vsel %vm833, %v1657, 0.0
      %v1736 = vadd.f32 %v1734, %v1735
      %v1737 = vsel %vm833, %v1658, 0.0
      %v1738 = vadd.f32 %v1736, %v1737
      %v1739 = vrot.slane %v1738, 4
      %v1740 = vadd.f32 %v1738, %v1739
      %v1741 = vrot.slane %v1740, 2
      %v1742 = vadd.f32 %v1740, %v1741
      %v1743 = vrot.slane %v1742, 1
      %v1744 = vadd.f32 %v1742, %v1743
      %v1745 = vsel %vm833, %v1659, 0.0
      %v1746 = vsel %vm833, %v1660, 0.0
      %v1747 = vadd.f32 %v1745, %v1746
      %v1748 = vsel %vm833, %v1661, 0.0
      %v1749 = vadd.f32 %v1747, %v1748
      %v1750 = vsel %vm833, %v1662, 0.0
      %v1751 = vadd.f32 %v1749, %v1750
      %v1752 = vrot.slane %v1751, 4
      %v1753 = vadd.f32 %v1751, %v1752
      %v1754 = vrot.slane %v1753, 2
      %v1755 = vadd.f32 %v1753, %v1754
      %v1756 = vrot.slane %v1755, 1
      %v1757 = vadd.f32 %v1755, %v1756
      %v1758 = vsel %vm833, %v1663, 0.0
      %v1759 = vsel %vm833, %v1664, 0.0
      %v1760 = vadd.f32 %v1758, %v1759
      %v1761 = vsel %vm833, %v1665, 0.0
      %v1762 = vadd.f32 %v1760, %v1761
      %v1763 = vsel %vm833, %v1666, 0.0
      %v1764 = vadd.f32 %v1762, %v1763
      %v1765 = vrot.slane %v1764, 4
      %v1766 = vadd.f32 %v1764, %v1765
      %v1767 = vrot.slane %v1766, 2
      %v1768 = vadd.f32 %v1766, %v1767
      %v1769 = vrot.slane %v1768, 1
      %v1770 = vadd.f32 %v1768, %v1769
      %1772 = vrot.lane.b32.xlu0 %v1371, 96
      %v1773 = vpop.permute.xlu0 %1772
      %v1775 = vadd.f32 %v1357, %v1773
      %v1776 = vmul.f32 %v1679, 2.0
      %v1777 = vmul.f32 %v1692, 2.0
      %v1778 = vmul.f32 %v1705, 2.0
      %v1779 = vmul.f32 %v1718, 2.0
      %v1780 = vmul.f32 %v1731, 2.0
      %v1781 = vmul.f32 %v1744, 2.0
      %v1782 = vmul.f32 %v1757, 2.0
      %v1783 = vmul.f32 %v1770, 2.0
      %v1792 = vsel %vm1339, %v1777, %v1776
      %v1793 = vsel %vm1341, %v1778, %v1792
      %v1794 = vsel %vm1343, %v1779, %v1793
      %v1795 = vsel %vm1345, %v1780, %v1794
      %v1796 = vsel %vm1347, %v1781, %v1795
      %v1797 = vsel %vm1349, %v1782, %v1796
      %v1798 = vsel %vm1351, %v1783, %v1797
      %v1800 = vsub.f32 %v1775, %v1798
      %v1801 = vmax.f32 %v1800, 1e-12
      %v1802 = vrsqrt.pop %v1801
      %v1803 = vmul.f32 %v1801, %v1802
      %vm1804 = vcmp.eq.f32.partialorder %v1801, inf
      %v1805 = vsel %vm1804, %v1801, %v1803
      %vm1806 = vcmp.eq.f32.partialorder %v1801, 0.0
      %v1807 = vand.u32 %v1801, 2147483648
      %v1808 = vsel %vm1806, %v1807, %v1805
      %v1809 = vmul.f32 %v1808, 0.5
      %v1810 = vtanh.pop %v1809
      %1811 = vrot.lane.b32.xlu0 %v1057, 96
      %v1812 = vpop.permute.xlu0 %1811
      %1813 = vrot.lane.b32.xlu0 %v1062, 96
      %v1814 = vpop.permute.xlu0 %1813
      %1815 = vrot.lane.b32.xlu0 %v1067, 96
      %v1816 = vpop.permute.xlu0 %1815
      %1817 = vrot.lane.b32.xlu0 %v1072, 96
      %v1818 = vpop.permute.xlu0 %1817
      %v1823 = vmul.f32 %v1591, %v1812
      %v1824 = vmul.f32 %v1592, %v1814
      %v1825 = vmul.f32 %v1593, %v1816
      %v1826 = vmul.f32 %v1594, %v1818
      %v1827 = vmul.f32 %v1595, %v1812
      %v1828 = vmul.f32 %v1596, %v1814
      %v1829 = vmul.f32 %v1597, %v1816
      %v1830 = vmul.f32 %v1598, %v1818
      %v1831 = vmul.f32 %v1599, %v1812
      %v1832 = vmul.f32 %v1600, %v1814
      %v1833 = vmul.f32 %v1601, %v1816
      %v1834 = vmul.f32 %v1602, %v1818
      %v1835 = vmul.f32 %v1603, %v1812
      %v1836 = vmul.f32 %v1604, %v1814
      %v1837 = vmul.f32 %v1605, %v1816
      %v1838 = vmul.f32 %v1606, %v1818
      %v1839 = vmul.f32 %v1607, %v1812
      %v1840 = vmul.f32 %v1608, %v1814
      %v1841 = vmul.f32 %v1609, %v1816
      %v1842 = vmul.f32 %v1610, %v1818
      %v1843 = vmul.f32 %v1611, %v1812
      %v1844 = vmul.f32 %v1612, %v1814
      %v1845 = vmul.f32 %v1613, %v1816
      %v1846 = vmul.f32 %v1614, %v1818
      %v1847 = vmul.f32 %v1615, %v1812
      %v1848 = vmul.f32 %v1616, %v1814
      %v1849 = vmul.f32 %v1617, %v1816
      %v1850 = vmul.f32 %v1618, %v1818
      %v1851 = vmul.f32 %v1619, %v1812
      %v1852 = vmul.f32 %v1620, %v1814
      %v1853 = vmul.f32 %v1621, %v1816
      %v1854 = vmul.f32 %v1622, %v1818
      %v1855 = vsel %vm833, %v1823, 0.0
      %v1856 = vsel %vm833, %v1824, 0.0
      %v1857 = vadd.f32 %v1855, %v1856
      %v1858 = vsel %vm833, %v1825, 0.0
      %v1859 = vadd.f32 %v1857, %v1858
      %v1860 = vsel %vm833, %v1826, 0.0
      %v1861 = vadd.f32 %v1859, %v1860
      %v1862 = vrot.slane %v1861, 4
      %v1863 = vadd.f32 %v1861, %v1862
      %v1864 = vrot.slane %v1863, 2
      %v1865 = vadd.f32 %v1863, %v1864
      %v1866 = vrot.slane %v1865, 1
      %v1867 = vadd.f32 %v1865, %v1866
      %v1868 = vsel %vm833, %v1827, 0.0
      %v1869 = vsel %vm833, %v1828, 0.0
      %v1870 = vadd.f32 %v1868, %v1869
      %v1871 = vsel %vm833, %v1829, 0.0
      %v1872 = vadd.f32 %v1870, %v1871
      %v1873 = vsel %vm833, %v1830, 0.0
      %v1874 = vadd.f32 %v1872, %v1873
      %v1875 = vrot.slane %v1874, 4
      %v1876 = vadd.f32 %v1874, %v1875
      %v1877 = vrot.slane %v1876, 2
      %v1878 = vadd.f32 %v1876, %v1877
      %v1879 = vrot.slane %v1878, 1
      %v1880 = vadd.f32 %v1878, %v1879
      %v1881 = vsel %vm833, %v1831, 0.0
      %v1882 = vsel %vm833, %v1832, 0.0
      %v1883 = vadd.f32 %v1881, %v1882
      %v1884 = vsel %vm833, %v1833, 0.0
      %v1885 = vadd.f32 %v1883, %v1884
      %v1886 = vsel %vm833, %v1834, 0.0
      %v1887 = vadd.f32 %v1885, %v1886
      %v1888 = vrot.slane %v1887, 4
      %v1889 = vadd.f32 %v1887, %v1888
      %v1890 = vrot.slane %v1889, 2
      %v1891 = vadd.f32 %v1889, %v1890
      %v1892 = vrot.slane %v1891, 1
      %v1893 = vadd.f32 %v1891, %v1892
      %v1894 = vsel %vm833, %v1835, 0.0
      %v1895 = vsel %vm833, %v1836, 0.0
      %v1896 = vadd.f32 %v1894, %v1895
      %v1897 = vsel %vm833, %v1837, 0.0
      %v1898 = vadd.f32 %v1896, %v1897
      %v1899 = vsel %vm833, %v1838, 0.0
      %v1900 = vadd.f32 %v1898, %v1899
      %v1901 = vrot.slane %v1900, 4
      %v1902 = vadd.f32 %v1900, %v1901
      %v1903 = vrot.slane %v1902, 2
      %v1904 = vadd.f32 %v1902, %v1903
      %v1905 = vrot.slane %v1904, 1
      %v1906 = vadd.f32 %v1904, %v1905
      %v1907 = vsel %vm833, %v1839, 0.0
      %v1908 = vsel %vm833, %v1840, 0.0
      %v1909 = vadd.f32 %v1907, %v1908
      %v1910 = vsel %vm833, %v1841, 0.0
      %v1911 = vadd.f32 %v1909, %v1910
      %v1912 = vsel %vm833, %v1842, 0.0
      %v1913 = vadd.f32 %v1911, %v1912
      %v1914 = vrot.slane %v1913, 4
      %v1915 = vadd.f32 %v1913, %v1914
      %v1916 = vrot.slane %v1915, 2
      %v1917 = vadd.f32 %v1915, %v1916
      %v1918 = vrot.slane %v1917, 1
      %v1919 = vadd.f32 %v1917, %v1918
      %v1920 = vsel %vm833, %v1843, 0.0
      %v1921 = vsel %vm833, %v1844, 0.0
      %v1922 = vadd.f32 %v1920, %v1921
      %v1923 = vsel %vm833, %v1845, 0.0
      %v1924 = vadd.f32 %v1922, %v1923
      %v1925 = vsel %vm833, %v1846, 0.0
      %v1926 = vadd.f32 %v1924, %v1925
      %v1927 = vrot.slane %v1926, 4
      %v1928 = vadd.f32 %v1926, %v1927
      %v1929 = vrot.slane %v1928, 2
      %v1930 = vadd.f32 %v1928, %v1929
      %v1931 = vrot.slane %v1930, 1
      %v1932 = vadd.f32 %v1930, %v1931
      %v1933 = vsel %vm833, %v1847, 0.0
      %v1934 = vsel %vm833, %v1848, 0.0
      %v1935 = vadd.f32 %v1933, %v1934
      %v1936 = vsel %vm833, %v1849, 0.0
      %v1937 = vadd.f32 %v1935, %v1936
      %v1938 = vsel %vm833, %v1850, 0.0
      %v1939 = vadd.f32 %v1937, %v1938
      %v1940 = vrot.slane %v1939, 4
      %v1941 = vadd.f32 %v1939, %v1940
      %v1942 = vrot.slane %v1941, 2
      %v1943 = vadd.f32 %v1941, %v1942
      %v1944 = vrot.slane %v1943, 1
      %v1945 = vadd.f32 %v1943, %v1944
      %v1946 = vsel %vm833, %v1851, 0.0
      %v1947 = vsel %vm833, %v1852, 0.0
      %v1948 = vadd.f32 %v1946, %v1947
      %v1949 = vsel %vm833, %v1853, 0.0
      %v1950 = vadd.f32 %v1948, %v1949
      %v1951 = vsel %vm833, %v1854, 0.0
      %v1952 = vadd.f32 %v1950, %v1951
      %v1953 = vrot.slane %v1952, 4
      %v1954 = vadd.f32 %v1952, %v1953
      %v1955 = vrot.slane %v1954, 2
      %v1956 = vadd.f32 %v1954, %v1955
      %v1957 = vrot.slane %v1956, 1
      %v1958 = vadd.f32 %v1956, %v1957
      %1960 = vrot.lane.b32.xlu0 %v1384, 96
      %v1961 = vpop.permute.xlu0 %1960
      %v1963 = vadd.f32 %v1357, %v1961
      %v1964 = vmul.f32 %v1867, 2.0
      %v1965 = vmul.f32 %v1880, 2.0
      %v1966 = vmul.f32 %v1893, 2.0
      %v1967 = vmul.f32 %v1906, 2.0
      %v1968 = vmul.f32 %v1919, 2.0
      %v1969 = vmul.f32 %v1932, 2.0
      %v1970 = vmul.f32 %v1945, 2.0
      %v1971 = vmul.f32 %v1958, 2.0
      %v1980 = vsel %vm1339, %v1965, %v1964
      %v1981 = vsel %vm1341, %v1966, %v1980
      %v1982 = vsel %vm1343, %v1967, %v1981
      %v1983 = vsel %vm1345, %v1968, %v1982
      %v1984 = vsel %vm1347, %v1969, %v1983
      %v1985 = vsel %vm1349, %v1970, %v1984
      %v1986 = vsel %vm1351, %v1971, %v1985
      %v1988 = vsub.f32 %v1963, %v1986
      %v1989 = vmax.f32 %v1988, 1e-12
      %v1990 = vrsqrt.pop %v1989
      %v1991 = vmul.f32 %v1989, %v1990
      %vm1992 = vcmp.eq.f32.partialorder %v1989, inf
      %v1993 = vsel %vm1992, %v1989, %v1991
      %vm1994 = vcmp.eq.f32.partialorder %v1989, 0.0
      %v1995 = vand.u32 %v1989, 2147483648
      %v1996 = vsel %vm1994, %v1995, %v1993
      %v1997 = vmul.f32 %v1996, 0.5
      %v1998 = vtanh.pop %v1997
      %1999 = vrot.lane.b32.xlu0 %v1077, 96
      %v2000 = vpop.permute.xlu0 %1999
      %2001 = vrot.lane.b32.xlu0 %v1082, 96
      %v2002 = vpop.permute.xlu0 %2001
      %2003 = vrot.lane.b32.xlu0 %v1087, 96
      %v2004 = vpop.permute.xlu0 %2003
      %2005 = vrot.lane.b32.xlu0 %v1092, 96
      %v2006 = vpop.permute.xlu0 %2005
      %v2011 = vmul.f32 %v1591, %v2000
      %v2012 = vmul.f32 %v1592, %v2002
      %v2013 = vmul.f32 %v1593, %v2004
      %v2014 = vmul.f32 %v1594, %v2006
      %v2015 = vmul.f32 %v1595, %v2000
      %v2016 = vmul.f32 %v1596, %v2002
      %v2017 = vmul.f32 %v1597, %v2004
      %v2018 = vmul.f32 %v1598, %v2006
      %v2019 = vmul.f32 %v1599, %v2000
      %v2020 = vmul.f32 %v1600, %v2002
      %v2021 = vmul.f32 %v1601, %v2004
      %v2022 = vmul.f32 %v1602, %v2006
      %v2023 = vmul.f32 %v1603, %v2000
      %v2024 = vmul.f32 %v1604, %v2002
      %v2025 = vmul.f32 %v1605, %v2004
      %v2026 = vmul.f32 %v1606, %v2006
      %v2027 = vmul.f32 %v1607, %v2000
      %v2028 = vmul.f32 %v1608, %v2002
      %v2029 = vmul.f32 %v1609, %v2004
      %v2030 = vmul.f32 %v1610, %v2006
      %v2031 = vmul.f32 %v1611, %v2000
      %v2032 = vmul.f32 %v1612, %v2002
      %v2033 = vmul.f32 %v1613, %v2004
      %v2034 = vmul.f32 %v1614, %v2006
      %v2035 = vmul.f32 %v1615, %v2000
      %v2036 = vmul.f32 %v1616, %v2002
      %v2037 = vmul.f32 %v1617, %v2004
      %v2038 = vmul.f32 %v1618, %v2006
      %v2039 = vmul.f32 %v1619, %v2000
      %v2040 = vmul.f32 %v1620, %v2002
      %v2041 = vmul.f32 %v1621, %v2004
      %v2042 = vmul.f32 %v1622, %v2006
      %v2043 = vsel %vm833, %v2011, 0.0
      %v2044 = vsel %vm833, %v2012, 0.0
      %v2045 = vadd.f32 %v2043, %v2044
      %v2046 = vsel %vm833, %v2013, 0.0
      %v2047 = vadd.f32 %v2045, %v2046
      %v2048 = vsel %vm833, %v2014, 0.0
      %v2049 = vadd.f32 %v2047, %v2048
      %v2050 = vrot.slane %v2049, 4
      %v2051 = vadd.f32 %v2049, %v2050
      %v2052 = vrot.slane %v2051, 2
      %v2053 = vadd.f32 %v2051, %v2052
      %v2054 = vrot.slane %v2053, 1
      %v2055 = vadd.f32 %v2053, %v2054
      %v2056 = vsel %vm833, %v2015, 0.0
      %v2057 = vsel %vm833, %v2016, 0.0
      %v2058 = vadd.f32 %v2056, %v2057
      %v2059 = vsel %vm833, %v2017, 0.0
      %v2060 = vadd.f32 %v2058, %v2059
      %v2061 = vsel %vm833, %v2018, 0.0
      %v2062 = vadd.f32 %v2060, %v2061
      %v2063 = vrot.slane %v2062, 4
      %v2064 = vadd.f32 %v2062, %v2063
      %v2065 = vrot.slane %v2064, 2
      %v2066 = vadd.f32 %v2064, %v2065
      %v2067 = vrot.slane %v2066, 1
      %v2068 = vadd.f32 %v2066, %v2067
      %v2069 = vsel %vm833, %v2019, 0.0
      %v2070 = vsel %vm833, %v2020, 0.0
      %v2071 = vadd.f32 %v2069, %v2070
      %v2072 = vsel %vm833, %v2021, 0.0
      %v2073 = vadd.f32 %v2071, %v2072
      %v2074 = vsel %vm833, %v2022, 0.0
      %v2075 = vadd.f32 %v2073, %v2074
      %v2076 = vrot.slane %v2075, 4
      %v2077 = vadd.f32 %v2075, %v2076
      %v2078 = vrot.slane %v2077, 2
      %v2079 = vadd.f32 %v2077, %v2078
      %v2080 = vrot.slane %v2079, 1
      %v2081 = vadd.f32 %v2079, %v2080
      %v2082 = vsel %vm833, %v2023, 0.0
      %v2083 = vsel %vm833, %v2024, 0.0
      %v2084 = vadd.f32 %v2082, %v2083
      %v2085 = vsel %vm833, %v2025, 0.0
      %v2086 = vadd.f32 %v2084, %v2085
      %v2087 = vsel %vm833, %v2026, 0.0
      %v2088 = vadd.f32 %v2086, %v2087
      %v2089 = vrot.slane %v2088, 4
      %v2090 = vadd.f32 %v2088, %v2089
      %v2091 = vrot.slane %v2090, 2
      %v2092 = vadd.f32 %v2090, %v2091
      %v2093 = vrot.slane %v2092, 1
      %v2094 = vadd.f32 %v2092, %v2093
      %v2095 = vsel %vm833, %v2027, 0.0
      %v2096 = vsel %vm833, %v2028, 0.0
      %v2097 = vadd.f32 %v2095, %v2096
      %v2098 = vsel %vm833, %v2029, 0.0
      %v2099 = vadd.f32 %v2097, %v2098
      %v2100 = vsel %vm833, %v2030, 0.0
      %v2101 = vadd.f32 %v2099, %v2100
      %v2102 = vrot.slane %v2101, 4
      %v2103 = vadd.f32 %v2101, %v2102
      %v2104 = vrot.slane %v2103, 2
      %v2105 = vadd.f32 %v2103, %v2104
      %v2106 = vrot.slane %v2105, 1
      %v2107 = vadd.f32 %v2105, %v2106
      %v2108 = vsel %vm833, %v2031, 0.0
      %v2109 = vsel %vm833, %v2032, 0.0
      %v2110 = vadd.f32 %v2108, %v2109
      %v2111 = vsel %vm833, %v2033, 0.0
      %v2112 = vadd.f32 %v2110, %v2111
      %v2113 = vsel %vm833, %v2034, 0.0
      %v2114 = vadd.f32 %v2112, %v2113
      %v2115 = vrot.slane %v2114, 4
      %v2116 = vadd.f32 %v2114, %v2115
      %v2117 = vrot.slane %v2116, 2
      %v2118 = vadd.f32 %v2116, %v2117
      %v2119 = vrot.slane %v2118, 1
      %v2120 = vadd.f32 %v2118, %v2119
      %v2121 = vsel %vm833, %v2035, 0.0
      %v2122 = vsel %vm833, %v2036, 0.0
      %v2123 = vadd.f32 %v2121, %v2122
      %v2124 = vsel %vm833, %v2037, 0.0
      %v2125 = vadd.f32 %v2123, %v2124
      %v2126 = vsel %vm833, %v2038, 0.0
      %v2127 = vadd.f32 %v2125, %v2126
      %v2128 = vrot.slane %v2127, 4
      %v2129 = vadd.f32 %v2127, %v2128
      %v2130 = vrot.slane %v2129, 2
      %v2131 = vadd.f32 %v2129, %v2130
      %v2132 = vrot.slane %v2131, 1
      %v2133 = vadd.f32 %v2131, %v2132
      %v2134 = vsel %vm833, %v2039, 0.0
      %v2135 = vsel %vm833, %v2040, 0.0
      %v2136 = vadd.f32 %v2134, %v2135
      %v2137 = vsel %vm833, %v2041, 0.0
      %v2138 = vadd.f32 %v2136, %v2137
      %v2139 = vsel %vm833, %v2042, 0.0
      %v2140 = vadd.f32 %v2138, %v2139
      %v2141 = vrot.slane %v2140, 4
      %v2142 = vadd.f32 %v2140, %v2141
      %v2143 = vrot.slane %v2142, 2
      %v2144 = vadd.f32 %v2142, %v2143
      %v2145 = vrot.slane %v2144, 1
      %v2146 = vadd.f32 %v2144, %v2145
      %2148 = vrot.lane.b32.xlu0 %v1397, 96
      %v2149 = vpop.permute.xlu0 %2148
      %v2151 = vadd.f32 %v1357, %v2149
      %v2152 = vmul.f32 %v2055, 2.0
      %v2153 = vmul.f32 %v2068, 2.0
      %v2154 = vmul.f32 %v2081, 2.0
      %v2155 = vmul.f32 %v2094, 2.0
      %v2156 = vmul.f32 %v2107, 2.0
      %v2157 = vmul.f32 %v2120, 2.0
      %v2158 = vmul.f32 %v2133, 2.0
      %v2159 = vmul.f32 %v2146, 2.0
      %v2168 = vsel %vm1339, %v2153, %v2152
      %v2169 = vsel %vm1341, %v2154, %v2168
      %v2170 = vsel %vm1343, %v2155, %v2169
      %v2171 = vsel %vm1345, %v2156, %v2170
      %v2172 = vsel %vm1347, %v2157, %v2171
      %v2173 = vsel %vm1349, %v2158, %v2172
      %v2174 = vsel %vm1351, %v2159, %v2173
      %v2176 = vsub.f32 %v2151, %v2174
      %v2177 = vmax.f32 %v2176, 1e-12
      %v2178 = vrsqrt.pop %v2177
      %v2179 = vmul.f32 %v2177, %v2178
      %vm2180 = vcmp.eq.f32.partialorder %v2177, inf
      %v2181 = vsel %vm2180, %v2177, %v2179
      %vm2182 = vcmp.eq.f32.partialorder %v2177, 0.0
      %v2183 = vand.u32 %v2177, 2147483648
      %v2184 = vsel %vm2182, %v2183, %v2181
      %v2185 = vmul.f32 %v2184, 0.5
      %v2186 = vtanh.pop %v2185
      %2187 = vrot.lane.b32.xlu0 %v1097, 96
      %v2188 = vpop.permute.xlu0 %2187
      %2189 = vrot.lane.b32.xlu0 %v1102, 96
      %v2190 = vpop.permute.xlu0 %2189
      %2191 = vrot.lane.b32.xlu0 %v1107, 96
      %v2192 = vpop.permute.xlu0 %2191
      %2193 = vrot.lane.b32.xlu0 %v1112, 96
      %v2194 = vpop.permute.xlu0 %2193
      %v2199 = vmul.f32 %v1591, %v2188
      %v2200 = vmul.f32 %v1592, %v2190
      %v2201 = vmul.f32 %v1593, %v2192
      %v2202 = vmul.f32 %v1594, %v2194
      %v2203 = vmul.f32 %v1595, %v2188
      %v2204 = vmul.f32 %v1596, %v2190
      %v2205 = vmul.f32 %v1597, %v2192
      %v2206 = vmul.f32 %v1598, %v2194
      %v2207 = vmul.f32 %v1599, %v2188
      %v2208 = vmul.f32 %v1600, %v2190
      %v2209 = vmul.f32 %v1601, %v2192
      %v2210 = vmul.f32 %v1602, %v2194
      %v2211 = vmul.f32 %v1603, %v2188
      %v2212 = vmul.f32 %v1604, %v2190
      %v2213 = vmul.f32 %v1605, %v2192
      %v2214 = vmul.f32 %v1606, %v2194
      %v2215 = vmul.f32 %v1607, %v2188
      %v2216 = vmul.f32 %v1608, %v2190
      %v2217 = vmul.f32 %v1609, %v2192
      %v2218 = vmul.f32 %v1610, %v2194
      %v2219 = vmul.f32 %v1611, %v2188
      %v2220 = vmul.f32 %v1612, %v2190
      %v2221 = vmul.f32 %v1613, %v2192
      %v2222 = vmul.f32 %v1614, %v2194
      %v2223 = vmul.f32 %v1615, %v2188
      %v2224 = vmul.f32 %v1616, %v2190
      %v2225 = vmul.f32 %v1617, %v2192
      %v2226 = vmul.f32 %v1618, %v2194
      %v2227 = vmul.f32 %v1619, %v2188
      %v2228 = vmul.f32 %v1620, %v2190
      %v2229 = vmul.f32 %v1621, %v2192
      %v2230 = vmul.f32 %v1622, %v2194
      %v2231 = vsel %vm833, %v2199, 0.0
      %v2232 = vsel %vm833, %v2200, 0.0
      %v2233 = vadd.f32 %v2231, %v2232
      %v2234 = vsel %vm833, %v2201, 0.0
      %v2235 = vadd.f32 %v2233, %v2234
      %v2236 = vsel %vm833, %v2202, 0.0
      %v2237 = vadd.f32 %v2235, %v2236
      %v2238 = vrot.slane %v2237, 4
      %v2239 = vadd.f32 %v2237, %v2238
      %v2240 = vrot.slane %v2239, 2
      %v2241 = vadd.f32 %v2239, %v2240
      %v2242 = vrot.slane %v2241, 1
      %v2243 = vadd.f32 %v2241, %v2242
      %v2244 = vsel %vm833, %v2203, 0.0
      %v2245 = vsel %vm833, %v2204, 0.0
      %v2246 = vadd.f32 %v2244, %v2245
      %v2247 = vsel %vm833, %v2205, 0.0
      %v2248 = vadd.f32 %v2246, %v2247
      %v2249 = vsel %vm833, %v2206, 0.0
      %v2250 = vadd.f32 %v2248, %v2249
      %v2251 = vrot.slane %v2250, 4
      %v2252 = vadd.f32 %v2250, %v2251
      %v2253 = vrot.slane %v2252, 2
      %v2254 = vadd.f32 %v2252, %v2253
      %v2255 = vrot.slane %v2254, 1
      %v2256 = vadd.f32 %v2254, %v2255
      %v2257 = vsel %vm833, %v2207, 0.0
      %v2258 = vsel %vm833, %v2208, 0.0
      %v2259 = vadd.f32 %v2257, %v2258
      %v2260 = vsel %vm833, %v2209, 0.0
      %v2261 = vadd.f32 %v2259, %v2260
      %v2262 = vsel %vm833, %v2210, 0.0
      %v2263 = vadd.f32 %v2261, %v2262
      %v2264 = vrot.slane %v2263, 4
      %v2265 = vadd.f32 %v2263, %v2264
      %v2266 = vrot.slane %v2265, 2
      %v2267 = vadd.f32 %v2265, %v2266
      %v2268 = vrot.slane %v2267, 1
      %v2269 = vadd.f32 %v2267, %v2268
      %v2270 = vsel %vm833, %v2211, 0.0
      %v2271 = vsel %vm833, %v2212, 0.0
      %v2272 = vadd.f32 %v2270, %v2271
      %v2273 = vsel %vm833, %v2213, 0.0
      %v2274 = vadd.f32 %v2272, %v2273
      %v2275 = vsel %vm833, %v2214, 0.0
      %v2276 = vadd.f32 %v2274, %v2275
      %v2277 = vrot.slane %v2276, 4
      %v2278 = vadd.f32 %v2276, %v2277
      %v2279 = vrot.slane %v2278, 2
      %v2280 = vadd.f32 %v2278, %v2279
      %v2281 = vrot.slane %v2280, 1
      %v2282 = vadd.f32 %v2280, %v2281
      %v2283 = vsel %vm833, %v2215, 0.0
      %v2284 = vsel %vm833, %v2216, 0.0
      %v2285 = vadd.f32 %v2283, %v2284
      %v2286 = vsel %vm833, %v2217, 0.0
      %v2287 = vadd.f32 %v2285, %v2286
      %v2288 = vsel %vm833, %v2218, 0.0
      %v2289 = vadd.f32 %v2287, %v2288
      %v2290 = vrot.slane %v2289, 4
      %v2291 = vadd.f32 %v2289, %v2290
      %v2292 = vrot.slane %v2291, 2
      %v2293 = vadd.f32 %v2291, %v2292
      %v2294 = vrot.slane %v2293, 1
      %v2295 = vadd.f32 %v2293, %v2294
      %v2296 = vsel %vm833, %v2219, 0.0
      %v2297 = vsel %vm833, %v2220, 0.0
      %v2298 = vadd.f32 %v2296, %v2297
      %v2299 = vsel %vm833, %v2221, 0.0
      %v2300 = vadd.f32 %v2298, %v2299
      %v2301 = vsel %vm833, %v2222, 0.0
      %v2302 = vadd.f32 %v2300, %v2301
      %v2303 = vrot.slane %v2302, 4
      %v2304 = vadd.f32 %v2302, %v2303
      %v2305 = vrot.slane %v2304, 2
      %v2306 = vadd.f32 %v2304, %v2305
      %v2307 = vrot.slane %v2306, 1
      %v2308 = vadd.f32 %v2306, %v2307
      %v2309 = vsel %vm833, %v2223, 0.0
      %v2310 = vsel %vm833, %v2224, 0.0
      %v2311 = vadd.f32 %v2309, %v2310
      %v2312 = vsel %vm833, %v2225, 0.0
      %v2313 = vadd.f32 %v2311, %v2312
      %v2314 = vsel %vm833, %v2226, 0.0
      %v2315 = vadd.f32 %v2313, %v2314
      %v2316 = vrot.slane %v2315, 4
      %v2317 = vadd.f32 %v2315, %v2316
      %v2318 = vrot.slane %v2317, 2
      %v2319 = vadd.f32 %v2317, %v2318
      %v2320 = vrot.slane %v2319, 1
      %v2321 = vadd.f32 %v2319, %v2320
      %v2322 = vsel %vm833, %v2227, 0.0
      %v2323 = vsel %vm833, %v2228, 0.0
      %v2324 = vadd.f32 %v2322, %v2323
      %v2325 = vsel %vm833, %v2229, 0.0
      %v2326 = vadd.f32 %v2324, %v2325
      %v2327 = vsel %vm833, %v2230, 0.0
      %v2328 = vadd.f32 %v2326, %v2327
      %v2329 = vrot.slane %v2328, 4
      %v2330 = vadd.f32 %v2328, %v2329
      %v2331 = vrot.slane %v2330, 2
      %v2332 = vadd.f32 %v2330, %v2331
      %v2333 = vrot.slane %v2332, 1
      %v2334 = vadd.f32 %v2332, %v2333
      %2336 = vrot.lane.b32.xlu0 %v1410, 96
      %v2337 = vpop.permute.xlu0 %2336
      %v2339 = vadd.f32 %v1357, %v2337
      %v2340 = vmul.f32 %v2243, 2.0
      %v2341 = vmul.f32 %v2256, 2.0
      %v2342 = vmul.f32 %v2269, 2.0
      %v2343 = vmul.f32 %v2282, 2.0
      %v2344 = vmul.f32 %v2295, 2.0
      %v2345 = vmul.f32 %v2308, 2.0
      %v2346 = vmul.f32 %v2321, 2.0
      %v2347 = vmul.f32 %v2334, 2.0
      %v2356 = vsel %vm1339, %v2341, %v2340
      %v2357 = vsel %vm1341, %v2342, %v2356
      %v2358 = vsel %vm1343, %v2343, %v2357
      %v2359 = vsel %vm1345, %v2344, %v2358
      %v2360 = vsel %vm1347, %v2345, %v2359
      %v2361 = vsel %vm1349, %v2346, %v2360
      %v2362 = vsel %vm1351, %v2347, %v2361
      %v2364 = vsub.f32 %v2339, %v2362
      %v2365 = vmax.f32 %v2364, 1e-12
      %v2366 = vrsqrt.pop %v2365
      %v2367 = vmul.f32 %v2365, %v2366
      %vm2368 = vcmp.eq.f32.partialorder %v2365, inf
      %v2369 = vsel %vm2368, %v2365, %v2367
      %vm2370 = vcmp.eq.f32.partialorder %v2365, 0.0
      %v2371 = vand.u32 %v2365, 2147483648
      %v2372 = vsel %vm2370, %v2371, %v2369
      %v2373 = vmul.f32 %v2372, 0.5
      %v2374 = vtanh.pop %v2373
      %2375 = vrot.lane.b32.xlu0 %v1117, 96
      %v2376 = vpop.permute.xlu0 %2375
      %2377 = vrot.lane.b32.xlu0 %v1122, 96
      %v2378 = vpop.permute.xlu0 %2377
      %2379 = vrot.lane.b32.xlu0 %v1127, 96
      %v2380 = vpop.permute.xlu0 %2379
      %2381 = vrot.lane.b32.xlu0 %v1132, 96
      %v2382 = vpop.permute.xlu0 %2381
      %v2387 = vmul.f32 %v1591, %v2376
      %v2388 = vmul.f32 %v1592, %v2378
      %v2389 = vmul.f32 %v1593, %v2380
      %v2390 = vmul.f32 %v1594, %v2382
      %v2391 = vmul.f32 %v1595, %v2376
      %v2392 = vmul.f32 %v1596, %v2378
      %v2393 = vmul.f32 %v1597, %v2380
      %v2394 = vmul.f32 %v1598, %v2382
      %v2395 = vmul.f32 %v1599, %v2376
      %v2396 = vmul.f32 %v1600, %v2378
      %v2397 = vmul.f32 %v1601, %v2380
      %v2398 = vmul.f32 %v1602, %v2382
      %v2399 = vmul.f32 %v1603, %v2376
      %v2400 = vmul.f32 %v1604, %v2378
      %v2401 = vmul.f32 %v1605, %v2380
      %v2402 = vmul.f32 %v1606, %v2382
      %v2403 = vmul.f32 %v1607, %v2376
      %v2404 = vmul.f32 %v1608, %v2378
      %v2405 = vmul.f32 %v1609, %v2380
      %v2406 = vmul.f32 %v1610, %v2382
      %v2407 = vmul.f32 %v1611, %v2376
      %v2408 = vmul.f32 %v1612, %v2378
      %v2409 = vmul.f32 %v1613, %v2380
      %v2410 = vmul.f32 %v1614, %v2382
      %v2411 = vmul.f32 %v1615, %v2376
      %v2412 = vmul.f32 %v1616, %v2378
      %v2413 = vmul.f32 %v1617, %v2380
      %v2414 = vmul.f32 %v1618, %v2382
      %v2415 = vmul.f32 %v1619, %v2376
      %v2416 = vmul.f32 %v1620, %v2378
      %v2417 = vmul.f32 %v1621, %v2380
      %v2418 = vmul.f32 %v1622, %v2382
      %v2419 = vsel %vm833, %v2387, 0.0
      %v2420 = vsel %vm833, %v2388, 0.0
      %v2421 = vadd.f32 %v2419, %v2420
      %v2422 = vsel %vm833, %v2389, 0.0
      %v2423 = vadd.f32 %v2421, %v2422
      %v2424 = vsel %vm833, %v2390, 0.0
      %v2425 = vadd.f32 %v2423, %v2424
      %v2426 = vrot.slane %v2425, 4
      %v2427 = vadd.f32 %v2425, %v2426
      %v2428 = vrot.slane %v2427, 2
      %v2429 = vadd.f32 %v2427, %v2428
      %v2430 = vrot.slane %v2429, 1
      %v2431 = vadd.f32 %v2429, %v2430
      %v2432 = vsel %vm833, %v2391, 0.0
      %v2433 = vsel %vm833, %v2392, 0.0
      %v2434 = vadd.f32 %v2432, %v2433
      %v2435 = vsel %vm833, %v2393, 0.0
      %v2436 = vadd.f32 %v2434, %v2435
      %v2437 = vsel %vm833, %v2394, 0.0
      %v2438 = vadd.f32 %v2436, %v2437
      %v2439 = vrot.slane %v2438, 4
      %v2440 = vadd.f32 %v2438, %v2439
      %v2441 = vrot.slane %v2440, 2
      %v2442 = vadd.f32 %v2440, %v2441
      %v2443 = vrot.slane %v2442, 1
      %v2444 = vadd.f32 %v2442, %v2443
      %v2445 = vsel %vm833, %v2395, 0.0
      %v2446 = vsel %vm833, %v2396, 0.0
      %v2447 = vadd.f32 %v2445, %v2446
      %v2448 = vsel %vm833, %v2397, 0.0
      %v2449 = vadd.f32 %v2447, %v2448
      %v2450 = vsel %vm833, %v2398, 0.0
      %v2451 = vadd.f32 %v2449, %v2450
      %v2452 = vrot.slane %v2451, 4
      %v2453 = vadd.f32 %v2451, %v2452
      %v2454 = vrot.slane %v2453, 2
      %v2455 = vadd.f32 %v2453, %v2454
      %v2456 = vrot.slane %v2455, 1
      %v2457 = vadd.f32 %v2455, %v2456
      %v2458 = vsel %vm833, %v2399, 0.0
      %v2459 = vsel %vm833, %v2400, 0.0
      %v2460 = vadd.f32 %v2458, %v2459
      %v2461 = vsel %vm833, %v2401, 0.0
      %v2462 = vadd.f32 %v2460, %v2461
      %v2463 = vsel %vm833, %v2402, 0.0
      %v2464 = vadd.f32 %v2462, %v2463
      %v2465 = vrot.slane %v2464, 4
      %v2466 = vadd.f32 %v2464, %v2465
      %v2467 = vrot.slane %v2466, 2
      %v2468 = vadd.f32 %v2466, %v2467
      %v2469 = vrot.slane %v2468, 1
      %v2470 = vadd.f32 %v2468, %v2469
      %v2471 = vsel %vm833, %v2403, 0.0
      %v2472 = vsel %vm833, %v2404, 0.0
      %v2473 = vadd.f32 %v2471, %v2472
      %v2474 = vsel %vm833, %v2405, 0.0
      %v2475 = vadd.f32 %v2473, %v2474
      %v2476 = vsel %vm833, %v2406, 0.0
      %v2477 = vadd.f32 %v2475, %v2476
      %v2478 = vrot.slane %v2477, 4
      %v2479 = vadd.f32 %v2477, %v2478
      %v2480 = vrot.slane %v2479, 2
      %v2481 = vadd.f32 %v2479, %v2480
      %v2482 = vrot.slane %v2481, 1
      %v2483 = vadd.f32 %v2481, %v2482
      %v2484 = vsel %vm833, %v2407, 0.0
      %v2485 = vsel %vm833, %v2408, 0.0
      %v2486 = vadd.f32 %v2484, %v2485
      %v2487 = vsel %vm833, %v2409, 0.0
      %v2488 = vadd.f32 %v2486, %v2487
      %v2489 = vsel %vm833, %v2410, 0.0
      %v2490 = vadd.f32 %v2488, %v2489
      %v2491 = vrot.slane %v2490, 4
      %v2492 = vadd.f32 %v2490, %v2491
      %v2493 = vrot.slane %v2492, 2
      %v2494 = vadd.f32 %v2492, %v2493
      %v2495 = vrot.slane %v2494, 1
      %v2496 = vadd.f32 %v2494, %v2495
      %v2497 = vsel %vm833, %v2411, 0.0
      %v2498 = vsel %vm833, %v2412, 0.0
      %v2499 = vadd.f32 %v2497, %v2498
      %v2500 = vsel %vm833, %v2413, 0.0
      %v2501 = vadd.f32 %v2499, %v2500
      %v2502 = vsel %vm833, %v2414, 0.0
      %v2503 = vadd.f32 %v2501, %v2502
      %v2504 = vrot.slane %v2503, 4
      %v2505 = vadd.f32 %v2503, %v2504
      %v2506 = vrot.slane %v2505, 2
      %v2507 = vadd.f32 %v2505, %v2506
      %v2508 = vrot.slane %v2507, 1
      %v2509 = vadd.f32 %v2507, %v2508
      %v2510 = vsel %vm833, %v2415, 0.0
      %v2511 = vsel %vm833, %v2416, 0.0
      %v2512 = vadd.f32 %v2510, %v2511
      %v2513 = vsel %vm833, %v2417, 0.0
      %v2514 = vadd.f32 %v2512, %v2513
      %v2515 = vsel %vm833, %v2418, 0.0
      %v2516 = vadd.f32 %v2514, %v2515
      %v2517 = vrot.slane %v2516, 4
      %v2518 = vadd.f32 %v2516, %v2517
      %v2519 = vrot.slane %v2518, 2
      %v2520 = vadd.f32 %v2518, %v2519
      %v2521 = vrot.slane %v2520, 1
      %v2522 = vadd.f32 %v2520, %v2521
      %2524 = vrot.lane.b32.xlu0 %v1423, 96
      %v2525 = vpop.permute.xlu0 %2524
      %v2527 = vadd.f32 %v1357, %v2525
      %v2528 = vmul.f32 %v2431, 2.0
      %v2529 = vmul.f32 %v2444, 2.0
      %v2530 = vmul.f32 %v2457, 2.0
      %v2531 = vmul.f32 %v2470, 2.0
      %v2532 = vmul.f32 %v2483, 2.0
      %v2533 = vmul.f32 %v2496, 2.0
      %v2534 = vmul.f32 %v2509, 2.0
      %v2535 = vmul.f32 %v2522, 2.0
      %v2544 = vsel %vm1339, %v2529, %v2528
      %v2545 = vsel %vm1341, %v2530, %v2544
      %v2546 = vsel %vm1343, %v2531, %v2545
      %v2547 = vsel %vm1345, %v2532, %v2546
      %v2548 = vsel %vm1347, %v2533, %v2547
      %v2549 = vsel %vm1349, %v2534, %v2548
      %v2550 = vsel %vm1351, %v2535, %v2549
      %v2552 = vsub.f32 %v2527, %v2550
      %v2553 = vmax.f32 %v2552, 1e-12
      %v2554 = vrsqrt.pop %v2553
      %v2555 = vmul.f32 %v2553, %v2554
      %vm2556 = vcmp.eq.f32.partialorder %v2553, inf
      %v2557 = vsel %vm2556, %v2553, %v2555
      %vm2558 = vcmp.eq.f32.partialorder %v2553, 0.0
      %v2559 = vand.u32 %v2553, 2147483648
      %v2560 = vsel %vm2558, %v2559, %v2557
      %v2561 = vmul.f32 %v2560, 0.5
      %v2562 = vtanh.pop %v2561
      %2563 = vrot.lane.b32.xlu0 %v1137, 96
      %v2564 = vpop.permute.xlu0 %2563
      %2565 = vrot.lane.b32.xlu0 %v1142, 96
      %v2566 = vpop.permute.xlu0 %2565
      %2567 = vrot.lane.b32.xlu0 %v1147, 96
      %v2568 = vpop.permute.xlu0 %2567
      %2569 = vrot.lane.b32.xlu0 %v1152, 96
      %v2570 = vpop.permute.xlu0 %2569
      %v2575 = vmul.f32 %v1591, %v2564
      %v2576 = vmul.f32 %v1592, %v2566
      %v2577 = vmul.f32 %v1593, %v2568
      %v2578 = vmul.f32 %v1594, %v2570
      %v2579 = vmul.f32 %v1595, %v2564
      %v2580 = vmul.f32 %v1596, %v2566
      %v2581 = vmul.f32 %v1597, %v2568
      %v2582 = vmul.f32 %v1598, %v2570
      %v2583 = vmul.f32 %v1599, %v2564
      %v2584 = vmul.f32 %v1600, %v2566
      %v2585 = vmul.f32 %v1601, %v2568
      %v2586 = vmul.f32 %v1602, %v2570
      %v2587 = vmul.f32 %v1603, %v2564
      %v2588 = vmul.f32 %v1604, %v2566
      %v2589 = vmul.f32 %v1605, %v2568
      %v2590 = vmul.f32 %v1606, %v2570
      %v2591 = vmul.f32 %v1607, %v2564
      %v2592 = vmul.f32 %v1608, %v2566
      %v2593 = vmul.f32 %v1609, %v2568
      %v2594 = vmul.f32 %v1610, %v2570
      %v2595 = vmul.f32 %v1611, %v2564
      %v2596 = vmul.f32 %v1612, %v2566
      %v2597 = vmul.f32 %v1613, %v2568
      %v2598 = vmul.f32 %v1614, %v2570
      %v2599 = vmul.f32 %v1615, %v2564
      %v2600 = vmul.f32 %v1616, %v2566
      %v2601 = vmul.f32 %v1617, %v2568
      %v2602 = vmul.f32 %v1618, %v2570
      %v2603 = vmul.f32 %v1619, %v2564
      %v2604 = vmul.f32 %v1620, %v2566
      %v2605 = vmul.f32 %v1621, %v2568
      %v2606 = vmul.f32 %v1622, %v2570
      %v2607 = vsel %vm833, %v2575, 0.0
      %v2608 = vsel %vm833, %v2576, 0.0
      %v2609 = vadd.f32 %v2607, %v2608
      %v2610 = vsel %vm833, %v2577, 0.0
      %v2611 = vadd.f32 %v2609, %v2610
      %v2612 = vsel %vm833, %v2578, 0.0
      %v2613 = vadd.f32 %v2611, %v2612
      %v2614 = vrot.slane %v2613, 4
      %v2615 = vadd.f32 %v2613, %v2614
      %v2616 = vrot.slane %v2615, 2
      %v2617 = vadd.f32 %v2615, %v2616
      %v2618 = vrot.slane %v2617, 1
      %v2619 = vadd.f32 %v2617, %v2618
      %v2620 = vsel %vm833, %v2579, 0.0
      %v2621 = vsel %vm833, %v2580, 0.0
      %v2622 = vadd.f32 %v2620, %v2621
      %v2623 = vsel %vm833, %v2581, 0.0
      %v2624 = vadd.f32 %v2622, %v2623
      %v2625 = vsel %vm833, %v2582, 0.0
      %v2626 = vadd.f32 %v2624, %v2625
      %v2627 = vrot.slane %v2626, 4
      %v2628 = vadd.f32 %v2626, %v2627
      %v2629 = vrot.slane %v2628, 2
      %v2630 = vadd.f32 %v2628, %v2629
      %v2631 = vrot.slane %v2630, 1
      %v2632 = vadd.f32 %v2630, %v2631
      %v2633 = vsel %vm833, %v2583, 0.0
      %v2634 = vsel %vm833, %v2584, 0.0
      %v2635 = vadd.f32 %v2633, %v2634
      %v2636 = vsel %vm833, %v2585, 0.0
      %v2637 = vadd.f32 %v2635, %v2636
      %v2638 = vsel %vm833, %v2586, 0.0
      %v2639 = vadd.f32 %v2637, %v2638
      %v2640 = vrot.slane %v2639, 4
      %v2641 = vadd.f32 %v2639, %v2640
      %v2642 = vrot.slane %v2641, 2
      %v2643 = vadd.f32 %v2641, %v2642
      %v2644 = vrot.slane %v2643, 1
      %v2645 = vadd.f32 %v2643, %v2644
      %v2646 = vsel %vm833, %v2587, 0.0
      %v2647 = vsel %vm833, %v2588, 0.0
      %v2648 = vadd.f32 %v2646, %v2647
      %v2649 = vsel %vm833, %v2589, 0.0
      %v2650 = vadd.f32 %v2648, %v2649
      %v2651 = vsel %vm833, %v2590, 0.0
      %v2652 = vadd.f32 %v2650, %v2651
      %v2653 = vrot.slane %v2652, 4
      %v2654 = vadd.f32 %v2652, %v2653
      %v2655 = vrot.slane %v2654, 2
      %v2656 = vadd.f32 %v2654, %v2655
      %v2657 = vrot.slane %v2656, 1
      %v2658 = vadd.f32 %v2656, %v2657
      %v2659 = vsel %vm833, %v2591, 0.0
      %v2660 = vsel %vm833, %v2592, 0.0
      %v2661 = vadd.f32 %v2659, %v2660
      %v2662 = vsel %vm833, %v2593, 0.0
      %v2663 = vadd.f32 %v2661, %v2662
      %v2664 = vsel %vm833, %v2594, 0.0
      %v2665 = vadd.f32 %v2663, %v2664
      %v2666 = vrot.slane %v2665, 4
      %v2667 = vadd.f32 %v2665, %v2666
      %v2668 = vrot.slane %v2667, 2
      %v2669 = vadd.f32 %v2667, %v2668
      %v2670 = vrot.slane %v2669, 1
      %v2671 = vadd.f32 %v2669, %v2670
      %v2672 = vsel %vm833, %v2595, 0.0
      %v2673 = vsel %vm833, %v2596, 0.0
      %v2674 = vadd.f32 %v2672, %v2673
      %v2675 = vsel %vm833, %v2597, 0.0
      %v2676 = vadd.f32 %v2674, %v2675
      %v2677 = vsel %vm833, %v2598, 0.0
      %v2678 = vadd.f32 %v2676, %v2677
      %v2679 = vrot.slane %v2678, 4
      %v2680 = vadd.f32 %v2678, %v2679
      %v2681 = vrot.slane %v2680, 2
      %v2682 = vadd.f32 %v2680, %v2681
      %v2683 = vrot.slane %v2682, 1
      %v2684 = vadd.f32 %v2682, %v2683
      %v2685 = vsel %vm833, %v2599, 0.0
      %v2686 = vsel %vm833, %v2600, 0.0
      %v2687 = vadd.f32 %v2685, %v2686
      %v2688 = vsel %vm833, %v2601, 0.0
      %v2689 = vadd.f32 %v2687, %v2688
      %v2690 = vsel %vm833, %v2602, 0.0
      %v2691 = vadd.f32 %v2689, %v2690
      %v2692 = vrot.slane %v2691, 4
      %v2693 = vadd.f32 %v2691, %v2692
      %v2694 = vrot.slane %v2693, 2
      %v2695 = vadd.f32 %v2693, %v2694
      %v2696 = vrot.slane %v2695, 1
      %v2697 = vadd.f32 %v2695, %v2696
      %v2698 = vsel %vm833, %v2603, 0.0
      %v2699 = vsel %vm833, %v2604, 0.0
      %v2700 = vadd.f32 %v2698, %v2699
      %v2701 = vsel %vm833, %v2605, 0.0
      %v2702 = vadd.f32 %v2700, %v2701
      %v2703 = vsel %vm833, %v2606, 0.0
      %v2704 = vadd.f32 %v2702, %v2703
      %v2705 = vrot.slane %v2704, 4
      %v2706 = vadd.f32 %v2704, %v2705
      %v2707 = vrot.slane %v2706, 2
      %v2708 = vadd.f32 %v2706, %v2707
      %v2709 = vrot.slane %v2708, 1
      %v2710 = vadd.f32 %v2708, %v2709
      %2712 = vrot.lane.b32.xlu0 %v1436, 96
      %v2713 = vpop.permute.xlu0 %2712
      %v2715 = vadd.f32 %v1357, %v2713
      %v2716 = vmul.f32 %v2619, 2.0
      %v2717 = vmul.f32 %v2632, 2.0
      %v2718 = vmul.f32 %v2645, 2.0
      %v2719 = vmul.f32 %v2658, 2.0
      %v2720 = vmul.f32 %v2671, 2.0
      %v2721 = vmul.f32 %v2684, 2.0
      %v2722 = vmul.f32 %v2697, 2.0
      %v2723 = vmul.f32 %v2710, 2.0
      %v2732 = vsel %vm1339, %v2717, %v2716
      %v2733 = vsel %vm1341, %v2718, %v2732
      %v2734 = vsel %vm1343, %v2719, %v2733
      %v2735 = vsel %vm1345, %v2720, %v2734
      %v2736 = vsel %vm1347, %v2721, %v2735
      %v2737 = vsel %vm1349, %v2722, %v2736
      %v2738 = vsel %vm1351, %v2723, %v2737
      %v2740 = vsub.f32 %v2715, %v2738
      %v2741 = vmax.f32 %v2740, 1e-12
      %v2742 = vrsqrt.pop %v2741
      %v2743 = vmul.f32 %v2741, %v2742
      %vm2744 = vcmp.eq.f32.partialorder %v2741, inf
      %v2745 = vsel %vm2744, %v2741, %v2743
      %vm2746 = vcmp.eq.f32.partialorder %v2741, 0.0
      %v2747 = vand.u32 %v2741, 2147483648
      %v2748 = vsel %vm2746, %v2747, %v2745
      %v2749 = vmul.f32 %v2748, 0.5
      %v2750 = vtanh.pop %v2749
      %2751 = vrot.lane.b32.xlu0 %v1157, 96
      %v2752 = vpop.permute.xlu0 %2751
      %2753 = vrot.lane.b32.xlu0 %v1162, 96
      %v2754 = vpop.permute.xlu0 %2753
      %2755 = vrot.lane.b32.xlu0 %v1167, 96
      %v2756 = vpop.permute.xlu0 %2755
      %2757 = vrot.lane.b32.xlu0 %v1172, 96
      %v2758 = vpop.permute.xlu0 %2757
      %v2763 = vmul.f32 %v1591, %v2752
      %v2764 = vmul.f32 %v1592, %v2754
      %v2765 = vmul.f32 %v1593, %v2756
      %v2766 = vmul.f32 %v1594, %v2758
      %v2767 = vmul.f32 %v1595, %v2752
      %v2768 = vmul.f32 %v1596, %v2754
      %v2769 = vmul.f32 %v1597, %v2756
      %v2770 = vmul.f32 %v1598, %v2758
      %v2771 = vmul.f32 %v1599, %v2752
      %v2772 = vmul.f32 %v1600, %v2754
      %v2773 = vmul.f32 %v1601, %v2756
      %v2774 = vmul.f32 %v1602, %v2758
      %v2775 = vmul.f32 %v1603, %v2752
      %v2776 = vmul.f32 %v1604, %v2754
      %v2777 = vmul.f32 %v1605, %v2756
      %v2778 = vmul.f32 %v1606, %v2758
      %v2779 = vmul.f32 %v1607, %v2752
      %v2780 = vmul.f32 %v1608, %v2754
      %v2781 = vmul.f32 %v1609, %v2756
      %v2782 = vmul.f32 %v1610, %v2758
      %v2783 = vmul.f32 %v1611, %v2752
      %v2784 = vmul.f32 %v1612, %v2754
      %v2785 = vmul.f32 %v1613, %v2756
      %v2786 = vmul.f32 %v1614, %v2758
      %v2787 = vmul.f32 %v1615, %v2752
      %v2788 = vmul.f32 %v1616, %v2754
      %v2789 = vmul.f32 %v1617, %v2756
      %v2790 = vmul.f32 %v1618, %v2758
      %v2791 = vmul.f32 %v1619, %v2752
      %v2792 = vmul.f32 %v1620, %v2754
      %v2793 = vmul.f32 %v1621, %v2756
      %v2794 = vmul.f32 %v1622, %v2758
      %v2795 = vsel %vm833, %v2763, 0.0
      %v2796 = vsel %vm833, %v2764, 0.0
      %v2797 = vadd.f32 %v2795, %v2796
      %v2798 = vsel %vm833, %v2765, 0.0
      %v2799 = vadd.f32 %v2797, %v2798
      %v2800 = vsel %vm833, %v2766, 0.0
      %v2801 = vadd.f32 %v2799, %v2800
      %v2802 = vrot.slane %v2801, 4
      %v2803 = vadd.f32 %v2801, %v2802
      %v2804 = vrot.slane %v2803, 2
      %v2805 = vadd.f32 %v2803, %v2804
      %v2806 = vrot.slane %v2805, 1
      %v2807 = vadd.f32 %v2805, %v2806
      %v2808 = vsel %vm833, %v2767, 0.0
      %v2809 = vsel %vm833, %v2768, 0.0
      %v2810 = vadd.f32 %v2808, %v2809
      %v2811 = vsel %vm833, %v2769, 0.0
      %v2812 = vadd.f32 %v2810, %v2811
      %v2813 = vsel %vm833, %v2770, 0.0
      %v2814 = vadd.f32 %v2812, %v2813
      %v2815 = vrot.slane %v2814, 4
      %v2816 = vadd.f32 %v2814, %v2815
      %v2817 = vrot.slane %v2816, 2
      %v2818 = vadd.f32 %v2816, %v2817
      %v2819 = vrot.slane %v2818, 1
      %v2820 = vadd.f32 %v2818, %v2819
      %v2821 = vsel %vm833, %v2771, 0.0
      %v2822 = vsel %vm833, %v2772, 0.0
      %v2823 = vadd.f32 %v2821, %v2822
      %v2824 = vsel %vm833, %v2773, 0.0
      %v2825 = vadd.f32 %v2823, %v2824
      %v2826 = vsel %vm833, %v2774, 0.0
      %v2827 = vadd.f32 %v2825, %v2826
      %v2828 = vrot.slane %v2827, 4
      %v2829 = vadd.f32 %v2827, %v2828
      %v2830 = vrot.slane %v2829, 2
      %v2831 = vadd.f32 %v2829, %v2830
      %v2832 = vrot.slane %v2831, 1
      %v2833 = vadd.f32 %v2831, %v2832
      %v2834 = vsel %vm833, %v2775, 0.0
      %v2835 = vsel %vm833, %v2776, 0.0
      %v2836 = vadd.f32 %v2834, %v2835
      %v2837 = vsel %vm833, %v2777, 0.0
      %v2838 = vadd.f32 %v2836, %v2837
      %v2839 = vsel %vm833, %v2778, 0.0
      %v2840 = vadd.f32 %v2838, %v2839
      %v2841 = vrot.slane %v2840, 4
      %v2842 = vadd.f32 %v2840, %v2841
      %v2843 = vrot.slane %v2842, 2
      %v2844 = vadd.f32 %v2842, %v2843
      %v2845 = vrot.slane %v2844, 1
      %v2846 = vadd.f32 %v2844, %v2845
      %v2847 = vsel %vm833, %v2779, 0.0
      %v2848 = vsel %vm833, %v2780, 0.0
      %v2849 = vadd.f32 %v2847, %v2848
      %v2850 = vsel %vm833, %v2781, 0.0
      %v2851 = vadd.f32 %v2849, %v2850
      %v2852 = vsel %vm833, %v2782, 0.0
      %v2853 = vadd.f32 %v2851, %v2852
      %v2854 = vrot.slane %v2853, 4
      %v2855 = vadd.f32 %v2853, %v2854
      %v2856 = vrot.slane %v2855, 2
      %v2857 = vadd.f32 %v2855, %v2856
      %v2858 = vrot.slane %v2857, 1
      %v2859 = vadd.f32 %v2857, %v2858
      %v2860 = vsel %vm833, %v2783, 0.0
      %v2861 = vsel %vm833, %v2784, 0.0
      %v2862 = vadd.f32 %v2860, %v2861
      %v2863 = vsel %vm833, %v2785, 0.0
      %v2864 = vadd.f32 %v2862, %v2863
      %v2865 = vsel %vm833, %v2786, 0.0
      %v2866 = vadd.f32 %v2864, %v2865
      %v2867 = vrot.slane %v2866, 4
      %v2868 = vadd.f32 %v2866, %v2867
      %v2869 = vrot.slane %v2868, 2
      %v2870 = vadd.f32 %v2868, %v2869
      %v2871 = vrot.slane %v2870, 1
      %v2872 = vadd.f32 %v2870, %v2871
      %v2873 = vsel %vm833, %v2787, 0.0
      %v2874 = vsel %vm833, %v2788, 0.0
      %v2875 = vadd.f32 %v2873, %v2874
      %v2876 = vsel %vm833, %v2789, 0.0
      %v2877 = vadd.f32 %v2875, %v2876
      %v2878 = vsel %vm833, %v2790, 0.0
      %v2879 = vadd.f32 %v2877, %v2878
      %v2880 = vrot.slane %v2879, 4
      %v2881 = vadd.f32 %v2879, %v2880
      %v2882 = vrot.slane %v2881, 2
      %v2883 = vadd.f32 %v2881, %v2882
      %v2884 = vrot.slane %v2883, 1
      %v2885 = vadd.f32 %v2883, %v2884
      %v2886 = vsel %vm833, %v2791, 0.0
      %v2887 = vsel %vm833, %v2792, 0.0
      %v2888 = vadd.f32 %v2886, %v2887
      %v2889 = vsel %vm833, %v2793, 0.0
      %v2890 = vadd.f32 %v2888, %v2889
      %v2891 = vsel %vm833, %v2794, 0.0
      %v2892 = vadd.f32 %v2890, %v2891
      %v2893 = vrot.slane %v2892, 4
      %v2894 = vadd.f32 %v2892, %v2893
      %v2895 = vrot.slane %v2894, 2
      %v2896 = vadd.f32 %v2894, %v2895
      %v2897 = vrot.slane %v2896, 1
      %v2898 = vadd.f32 %v2896, %v2897
      %2900 = vrot.lane.b32.xlu0 %v1449, 96
      %v2901 = vpop.permute.xlu0 %2900
      %v2903 = vadd.f32 %v1357, %v2901
      %v2904 = vmul.f32 %v2807, 2.0
      %v2905 = vmul.f32 %v2820, 2.0
      %v2906 = vmul.f32 %v2833, 2.0
      %v2907 = vmul.f32 %v2846, 2.0
      %v2908 = vmul.f32 %v2859, 2.0
      %v2909 = vmul.f32 %v2872, 2.0
      %v2910 = vmul.f32 %v2885, 2.0
      %v2911 = vmul.f32 %v2898, 2.0
      %v2920 = vsel %vm1339, %v2905, %v2904
      %v2921 = vsel %vm1341, %v2906, %v2920
      %v2922 = vsel %vm1343, %v2907, %v2921
      %v2923 = vsel %vm1345, %v2908, %v2922
      %v2924 = vsel %vm1347, %v2909, %v2923
      %v2925 = vsel %vm1349, %v2910, %v2924
      %v2926 = vsel %vm1351, %v2911, %v2925
      %v2928 = vsub.f32 %v2903, %v2926
      %v2929 = vmax.f32 %v2928, 1e-12
      %v2930 = vrsqrt.pop %v2929
      %v2931 = vmul.f32 %v2929, %v2930
      %vm2932 = vcmp.eq.f32.partialorder %v2929, inf
      %v2933 = vsel %vm2932, %v2929, %v2931
      %vm2934 = vcmp.eq.f32.partialorder %v2929, 0.0
      %v2935 = vand.u32 %v2929, 2147483648
      %v2936 = vsel %vm2934, %v2935, %v2933
      %v2937 = vmul.f32 %v2936, 0.5
      %v2938 = vtanh.pop %v2937
      %2939 = vrot.lane.b32.xlu0 %v1177, 96
      %v2940 = vpop.permute.xlu0 %2939
      %2941 = vrot.lane.b32.xlu0 %v1182, 96
      %v2942 = vpop.permute.xlu0 %2941
      %2943 = vrot.lane.b32.xlu0 %v1187, 96
      %v2944 = vpop.permute.xlu0 %2943
      %2945 = vrot.lane.b32.xlu0 %v1192, 96
      %v2946 = vpop.permute.xlu0 %2945
      %v2951 = vmul.f32 %v1591, %v2940
      %v2952 = vmul.f32 %v1592, %v2942
      %v2953 = vmul.f32 %v1593, %v2944
      %v2954 = vmul.f32 %v1594, %v2946
      %v2955 = vmul.f32 %v1595, %v2940
      %v2956 = vmul.f32 %v1596, %v2942
      %v2957 = vmul.f32 %v1597, %v2944
      %v2958 = vmul.f32 %v1598, %v2946
      %v2959 = vmul.f32 %v1599, %v2940
      %v2960 = vmul.f32 %v1600, %v2942
      %v2961 = vmul.f32 %v1601, %v2944
      %v2962 = vmul.f32 %v1602, %v2946
      %v2963 = vmul.f32 %v1603, %v2940
      %v2964 = vmul.f32 %v1604, %v2942
      %v2965 = vmul.f32 %v1605, %v2944
      %v2966 = vmul.f32 %v1606, %v2946
      %v2967 = vmul.f32 %v1607, %v2940
      %v2968 = vmul.f32 %v1608, %v2942
      %v2969 = vmul.f32 %v1609, %v2944
      %v2970 = vmul.f32 %v1610, %v2946
      %v2971 = vmul.f32 %v1611, %v2940
      %v2972 = vmul.f32 %v1612, %v2942
      %v2973 = vmul.f32 %v1613, %v2944
      %v2974 = vmul.f32 %v1614, %v2946
      %v2975 = vmul.f32 %v1615, %v2940
      %v2976 = vmul.f32 %v1616, %v2942
      %v2977 = vmul.f32 %v1617, %v2944
      %v2978 = vmul.f32 %v1618, %v2946
      %v2979 = vmul.f32 %v1619, %v2940
      %v2980 = vmul.f32 %v1620, %v2942
      %v2981 = vmul.f32 %v1621, %v2944
      %v2982 = vmul.f32 %v1622, %v2946
      %v2983 = vsel %vm833, %v2951, 0.0
      %v2984 = vsel %vm833, %v2952, 0.0
      %v2985 = vadd.f32 %v2983, %v2984
      %v2986 = vsel %vm833, %v2953, 0.0
      %v2987 = vadd.f32 %v2985, %v2986
      %v2988 = vsel %vm833, %v2954, 0.0
      %v2989 = vadd.f32 %v2987, %v2988
      %v2990 = vrot.slane %v2989, 4
      %v2991 = vadd.f32 %v2989, %v2990
      %v2992 = vrot.slane %v2991, 2
      %v2993 = vadd.f32 %v2991, %v2992
      %v2994 = vrot.slane %v2993, 1
      %v2995 = vadd.f32 %v2993, %v2994
      %v2996 = vsel %vm833, %v2955, 0.0
      %v2997 = vsel %vm833, %v2956, 0.0
      %v2998 = vadd.f32 %v2996, %v2997
      %v2999 = vsel %vm833, %v2957, 0.0
      %v3000 = vadd.f32 %v2998, %v2999
      %v3001 = vsel %vm833, %v2958, 0.0
      %v3002 = vadd.f32 %v3000, %v3001
      %v3003 = vrot.slane %v3002, 4
      %v3004 = vadd.f32 %v3002, %v3003
      %v3005 = vrot.slane %v3004, 2
      %v3006 = vadd.f32 %v3004, %v3005
      %v3007 = vrot.slane %v3006, 1
      %v3008 = vadd.f32 %v3006, %v3007
      %v3009 = vsel %vm833, %v2959, 0.0
      %v3010 = vsel %vm833, %v2960, 0.0
      %v3011 = vadd.f32 %v3009, %v3010
      %v3012 = vsel %vm833, %v2961, 0.0
      %v3013 = vadd.f32 %v3011, %v3012
      %v3014 = vsel %vm833, %v2962, 0.0
      %v3015 = vadd.f32 %v3013, %v3014
      %v3016 = vrot.slane %v3015, 4
      %v3017 = vadd.f32 %v3015, %v3016
      %v3018 = vrot.slane %v3017, 2
      %v3019 = vadd.f32 %v3017, %v3018
      %v3020 = vrot.slane %v3019, 1
      %v3021 = vadd.f32 %v3019, %v3020
      %v3022 = vsel %vm833, %v2963, 0.0
      %v3023 = vsel %vm833, %v2964, 0.0
      %v3024 = vadd.f32 %v3022, %v3023
      %v3025 = vsel %vm833, %v2965, 0.0
      %v3026 = vadd.f32 %v3024, %v3025
      %v3027 = vsel %vm833, %v2966, 0.0
      %v3028 = vadd.f32 %v3026, %v3027
      %v3029 = vrot.slane %v3028, 4
      %v3030 = vadd.f32 %v3028, %v3029
      %v3031 = vrot.slane %v3030, 2
      %v3032 = vadd.f32 %v3030, %v3031
      %v3033 = vrot.slane %v3032, 1
      %v3034 = vadd.f32 %v3032, %v3033
      %v3035 = vsel %vm833, %v2967, 0.0
      %v3036 = vsel %vm833, %v2968, 0.0
      %v3037 = vadd.f32 %v3035, %v3036
      %v3038 = vsel %vm833, %v2969, 0.0
      %v3039 = vadd.f32 %v3037, %v3038
      %v3040 = vsel %vm833, %v2970, 0.0
      %v3041 = vadd.f32 %v3039, %v3040
      %v3042 = vrot.slane %v3041, 4
      %v3043 = vadd.f32 %v3041, %v3042
      %v3044 = vrot.slane %v3043, 2
      %v3045 = vadd.f32 %v3043, %v3044
      %v3046 = vrot.slane %v3045, 1
      %v3047 = vadd.f32 %v3045, %v3046
      %v3048 = vsel %vm833, %v2971, 0.0
      %v3049 = vsel %vm833, %v2972, 0.0
      %v3050 = vadd.f32 %v3048, %v3049
      %v3051 = vsel %vm833, %v2973, 0.0
      %v3052 = vadd.f32 %v3050, %v3051
      %v3053 = vsel %vm833, %v2974, 0.0
      %v3054 = vadd.f32 %v3052, %v3053
      %v3055 = vrot.slane %v3054, 4
      %v3056 = vadd.f32 %v3054, %v3055
      %v3057 = vrot.slane %v3056, 2
      %v3058 = vadd.f32 %v3056, %v3057
      %v3059 = vrot.slane %v3058, 1
      %v3060 = vadd.f32 %v3058, %v3059
      %v3061 = vsel %vm833, %v2975, 0.0
      %v3062 = vsel %vm833, %v2976, 0.0
      %v3063 = vadd.f32 %v3061, %v3062
      %v3064 = vsel %vm833, %v2977, 0.0
      %v3065 = vadd.f32 %v3063, %v3064
      %v3066 = vsel %vm833, %v2978, 0.0
      %v3067 = vadd.f32 %v3065, %v3066
      %v3068 = vrot.slane %v3067, 4
      %v3069 = vadd.f32 %v3067, %v3068
      %v3070 = vrot.slane %v3069, 2
      %v3071 = vadd.f32 %v3069, %v3070
      %v3072 = vrot.slane %v3071, 1
      %v3073 = vadd.f32 %v3071, %v3072
      %v3074 = vsel %vm833, %v2979, 0.0
      %v3075 = vsel %vm833, %v2980, 0.0
      %v3076 = vadd.f32 %v3074, %v3075
      %v3077 = vsel %vm833, %v2981, 0.0
      %v3078 = vadd.f32 %v3076, %v3077
      %v3079 = vsel %vm833, %v2982, 0.0
      %v3080 = vadd.f32 %v3078, %v3079
      %v3081 = vrot.slane %v3080, 4
      %v3082 = vadd.f32 %v3080, %v3081
      %v3083 = vrot.slane %v3082, 2
      %v3084 = vadd.f32 %v3082, %v3083
      %v3085 = vrot.slane %v3084, 1
      %v3086 = vadd.f32 %v3084, %v3085
      %3088 = vrot.lane.b32.xlu0 %v1462, 96
      %v3089 = vpop.permute.xlu0 %3088
      %v3091 = vadd.f32 %v1357, %v3089
      %v3092 = vmul.f32 %v2995, 2.0
      %v3093 = vmul.f32 %v3008, 2.0
      %v3094 = vmul.f32 %v3021, 2.0
      %v3095 = vmul.f32 %v3034, 2.0
      %v3096 = vmul.f32 %v3047, 2.0
      %v3097 = vmul.f32 %v3060, 2.0
      %v3098 = vmul.f32 %v3073, 2.0
      %v3099 = vmul.f32 %v3086, 2.0
      %v3108 = vsel %vm1339, %v3093, %v3092
      %v3109 = vsel %vm1341, %v3094, %v3108
      %v3110 = vsel %vm1343, %v3095, %v3109
      %v3111 = vsel %vm1345, %v3096, %v3110
      %v3112 = vsel %vm1347, %v3097, %v3111
      %v3113 = vsel %vm1349, %v3098, %v3112
      %v3114 = vsel %vm1351, %v3099, %v3113
      %v3116 = vsub.f32 %v3091, %v3114
      %v3117 = vmax.f32 %v3116, 1e-12
      %v3118 = vrsqrt.pop %v3117
      %v3119 = vmul.f32 %v3117, %v3118
      %vm3120 = vcmp.eq.f32.partialorder %v3117, inf
      %v3121 = vsel %vm3120, %v3117, %v3119
      %vm3122 = vcmp.eq.f32.partialorder %v3117, 0.0
      %v3123 = vand.u32 %v3117, 2147483648
      %v3124 = vsel %vm3122, %v3123, %v3121
      %v3125 = vmul.f32 %v3124, 0.5
      %v3126 = vtanh.pop %v3125
      %vm3127 = vcmp.eq.s32.totalorder %v583, 0
      %v3128 = vsel %vm3127, %v1810, inf
      %v3130 = vrot.slane %v3128, 7
      %vm3132 = vcmask 1040384
      %v3133 = vsel %vm3132, inf, %v3130
      %vm3134 = vcmp.eq.s32.totalorder %v583, 1
      %v3135 = vsel %vm3134, inf, %v3128
      %v3136 = vmin.f32 %v3135, %v3133
      %v3137 = vsel %vm3134, %v1810, 0.0
      %v3138 = vsel %vm3127, %v1998, 0.0
      %v3139 = vadd.f32 %v3137, %v3138
      %v3140 = vadd.f32 %v3136, %v3139
      %v3142 = vrot.slane %v3140, 7
      %v3144 = vsel %vm3132, inf, %v3142
      %vm3145 = vcmp.eq.s32.totalorder %v583, 2
      %v3146 = vsel %vm3145, inf, %v3140
      %v3147 = vmin.f32 %v3146, %v3144
      %v3148 = vsel %vm3145, %v1810, 0.0
      %v3149 = vsel %vm3134, %v1998, 0.0
      %v3150 = vadd.f32 %v3148, %v3149
      %v3151 = vsel %vm3127, %v2186, 0.0
      %v3152 = vadd.f32 %v3150, %v3151
      %v3153 = vadd.f32 %v3147, %v3152
      %v3155 = vrot.slane %v3153, 7
      %v3157 = vsel %vm3132, inf, %v3155
      %vm3158 = vcmp.eq.s32.totalorder %v583, 3
      %v3159 = vsel %vm3158, inf, %v3153
      %v3160 = vmin.f32 %v3159, %v3157
      %v3161 = vsel %vm3158, %v1810, 0.0
      %v3162 = vsel %vm3145, %v1998, 0.0
      %v3163 = vadd.f32 %v3161, %v3162
      %v3164 = vsel %vm3134, %v2186, 0.0
      %v3165 = vadd.f32 %v3163, %v3164
      %v3166 = vsel %vm3127, %v2374, 0.0
      %v3167 = vadd.f32 %v3165, %v3166
      %v3168 = vadd.f32 %v3160, %v3167
      %v3170 = vrot.slane %v3168, 7
      %v3172 = vsel %vm3132, inf, %v3170
      %vm3173 = vcmp.eq.s32.totalorder %v583, 4
      %v3174 = vsel %vm3173, inf, %v3168
      %v3175 = vmin.f32 %v3174, %v3172
      %v3176 = vsel %vm3173, %v1810, 0.0
      %v3177 = vsel %vm3158, %v1998, 0.0
      %v3178 = vadd.f32 %v3176, %v3177
      %v3179 = vsel %vm3145, %v2186, 0.0
      %v3180 = vadd.f32 %v3178, %v3179
      %v3181 = vsel %vm3134, %v2374, 0.0
      %v3182 = vadd.f32 %v3180, %v3181
      %v3183 = vsel %vm3127, %v2562, 0.0
      %v3184 = vadd.f32 %v3182, %v3183
      %v3185 = vadd.f32 %v3175, %v3184
      %v3187 = vrot.slane %v3185, 7
      %v3189 = vsel %vm3132, inf, %v3187
      %vm3190 = vcmp.eq.s32.totalorder %v583, 5
      %v3191 = vsel %vm3190, inf, %v3185
      %v3192 = vmin.f32 %v3191, %v3189
      %v3193 = vsel %vm3190, %v1810, 0.0
      %v3194 = vsel %vm3173, %v1998, 0.0
      %v3195 = vadd.f32 %v3193, %v3194
      %v3196 = vsel %vm3158, %v2186, 0.0
      %v3197 = vadd.f32 %v3195, %v3196
      %v3198 = vsel %vm3145, %v2374, 0.0
      %v3199 = vadd.f32 %v3197, %v3198
      %v3200 = vsel %vm3134, %v2562, 0.0
      %v3201 = vadd.f32 %v3199, %v3200
      %v3202 = vsel %vm3127, %v2750, 0.0
      %v3203 = vadd.f32 %v3201, %v3202
      %v3204 = vadd.f32 %v3192, %v3203
      %v3206 = vrot.slane %v3204, 7
      %v3208 = vsel %vm3132, inf, %v3206
      %vm3209 = vcmp.eq.s32.totalorder %v583, 6
      %v3210 = vsel %vm3209, inf, %v3204
      %v3211 = vmin.f32 %v3210, %v3208
      %v3212 = vsel %vm3209, %v1810, 0.0
      %v3213 = vsel %vm3190, %v1998, 0.0
      %v3214 = vadd.f32 %v3212, %v3213
      %v3215 = vsel %vm3173, %v2186, 0.0
      %v3216 = vadd.f32 %v3214, %v3215
      %v3217 = vsel %vm3158, %v2374, 0.0
      %v3218 = vadd.f32 %v3216, %v3217
      %v3219 = vsel %vm3145, %v2562, 0.0
      %v3220 = vadd.f32 %v3218, %v3219
      %v3221 = vsel %vm3134, %v2750, 0.0
      %v3222 = vadd.f32 %v3220, %v3221
      %v3223 = vsel %vm3127, %v2938, 0.0
      %v3224 = vadd.f32 %v3222, %v3223
      %v3225 = vadd.f32 %v3211, %v3224
      %v3227 = vrot.slane %v3225, 7
      %v3229 = vsel %vm3132, inf, %v3227
      %vm3230 = vcmp.eq.s32.totalorder %v583, 7
      %v3231 = vsel %vm3230, inf, %v3225
      %v3232 = vmin.f32 %v3231, %v3229
      %v3233 = vsel %vm3230, %v1810, 0.0
      %v3234 = vsel %vm3209, %v1998, 0.0
      %v3235 = vadd.f32 %v3233, %v3234
      %v3236 = vsel %vm3190, %v2186, 0.0
      %v3237 = vadd.f32 %v3235, %v3236
      %v3238 = vsel %vm3173, %v2374, 0.0
      %v3239 = vadd.f32 %v3237, %v3238
      %v3240 = vsel %vm3158, %v2562, 0.0
      %v3241 = vadd.f32 %v3239, %v3240
      %v3242 = vsel %vm3145, %v2750, 0.0
      %v3243 = vadd.f32 %v3241, %v3242
      %v3244 = vsel %vm3134, %v2938, 0.0
      %v3245 = vadd.f32 %v3243, %v3244
      %v3246 = vsel %vm3127, %v3126, 0.0
      %v3247 = vadd.f32 %v3245, %v3246
      %v3248 = vadd.f32 %v3232, %v3247
      %v3250 = vrot.slane %v3248, 7
      %v3252 = vsel %vm3132, inf, %v3250
      %v3253 = vmin.f32 %v3248, %v3252
      %v3254 = vsel %vm3230, %v1998, 0.0
      %v3255 = vsel %vm3209, %v2186, 0.0
      %v3256 = vadd.f32 %v3254, %v3255
      %v3257 = vsel %vm3190, %v2374, 0.0
      %v3258 = vadd.f32 %v3256, %v3257
      %v3259 = vsel %vm3173, %v2562, 0.0
      %v3260 = vadd.f32 %v3258, %v3259
      %v3261 = vsel %vm3158, %v2750, 0.0
      %v3262 = vadd.f32 %v3260, %v3261
      %v3263 = vsel %vm3145, %v2938, 0.0
      %v3264 = vadd.f32 %v3262, %v3263
      %v3265 = vsel %vm3134, %v3126, 0.0
      %v3266 = vadd.f32 %v3264, %v3265
      %v3267 = vadd.f32 %v3253, %v3266
      %v3269 = vrot.slane %v3267, 7
      %v3271 = vsel %vm3132, inf, %v3269
      %v3272 = vmin.f32 %v3267, %v3271
      %v3273 = vsel %vm3230, %v2186, 0.0
      %v3274 = vsel %vm3209, %v2374, 0.0
      %v3275 = vadd.f32 %v3273, %v3274
      %v3276 = vsel %vm3190, %v2562, 0.0
      %v3277 = vadd.f32 %v3275, %v3276
      %v3278 = vsel %vm3173, %v2750, 0.0
      %v3279 = vadd.f32 %v3277, %v3278
      %v3280 = vsel %vm3158, %v2938, 0.0
      %v3281 = vadd.f32 %v3279, %v3280
      %v3282 = vsel %vm3145, %v3126, 0.0
      %v3283 = vadd.f32 %v3281, %v3282
      %v3284 = vadd.f32 %v3272, %v3283
      %v3286 = vrot.slane %v3284, 7
      %v3288 = vsel %vm3132, inf, %v3286
      %v3289 = vmin.f32 %v3284, %v3288
      %v3290 = vsel %vm3230, %v2374, 0.0
      %v3291 = vsel %vm3209, %v2562, 0.0
      %v3292 = vadd.f32 %v3290, %v3291
      %v3293 = vsel %vm3190, %v2750, 0.0
      %v3294 = vadd.f32 %v3292, %v3293
      %v3295 = vsel %vm3173, %v2938, 0.0
      %v3296 = vadd.f32 %v3294, %v3295
      %v3297 = vsel %vm3158, %v3126, 0.0
      %v3298 = vadd.f32 %v3296, %v3297
      %v3299 = vadd.f32 %v3289, %v3298
      %v3301 = vrot.slane %v3299, 7
      %v3303 = vsel %vm3132, inf, %v3301
      %v3304 = vmin.f32 %v3299, %v3303
      %v3305 = vsel %vm3230, %v2562, 0.0
      %v3306 = vsel %vm3209, %v2750, 0.0
      %v3307 = vadd.f32 %v3305, %v3306
      %v3308 = vsel %vm3190, %v2938, 0.0
      %v3309 = vadd.f32 %v3307, %v3308
      %v3310 = vsel %vm3173, %v3126, 0.0
      %v3311 = vadd.f32 %v3309, %v3310
      %v3312 = vadd.f32 %v3304, %v3311
      %v3314 = vrot.slane %v3312, 7
      %v3316 = vsel %vm3132, inf, %v3314
      %v3317 = vmin.f32 %v3312, %v3316
      %v3318 = vsel %vm3230, %v2750, 0.0
      %v3319 = vsel %vm3209, %v2938, 0.0
      %v3320 = vadd.f32 %v3318, %v3319
      %v3321 = vsel %vm3190, %v3126, 0.0
      %v3322 = vadd.f32 %v3320, %v3321
      %v3323 = vadd.f32 %v3317, %v3322
      %v3325 = vrot.slane %v3323, 7
      %v3327 = vsel %vm3132, inf, %v3325
      %v3328 = vmin.f32 %v3323, %v3327
      %v3329 = vsel %vm3230, %v2938, 0.0
      %v3330 = vsel %vm3209, %v3126, 0.0
      %v3331 = vadd.f32 %v3329, %v3330
      %v3332 = vadd.f32 %v3328, %v3331
      %v3334 = vrot.slane %v3332, 7
      %v3336 = vsel %vm3132, inf, %v3334
      %v3337 = vmin.f32 %v3332, %v3336
      %v3338 = vsel %vm3230, %v3126, 0.0
      %v3339 = vadd.f32 %v3337, %v3338
      %v3341 = vrot.slane %v3339, 5
      %v3343 = vrot.slane %v3339, 4
      %3344 = vrot.lane.b32.xlu0 %v3343, 96
      %v3345 = vpop.permute.xlu0 %3344
      %v3347 = vsel %vm3132, %v574, %v581
      %vm3348 = vcmask 1041408
      %v3349 = vsel %vm3348, %v3347, %v3341
      %vm3350 = vcmask 1042432
      %v3351 = vsel %vm3350, %v3349, %v3345
      %vm3352 = vcmask 257024
      %3353 = vst.msk [vmem:[%s257] sm:$0xf] %vm3352, %v3351
      %p3354 = scmp.lt.s32.totalorder %s17, 1
      %s3355 = scalar_select %p3354, %s17, 1
      %s3356 = smul.addr %s3355, 4
      %s3357 = scalar_lea.vmem %s6, %s3356
      // Predicated region
      $region45: #{triplet_loss_aligned_reid.1} parent=43 // pred_check
        %p3358 = pneg %p171
      $region46: #{triplet_loss_aligned_reid.1} parent=43 // pred_check_branch
        %3360 = sbr.rel (%p3358) target = $region48
      $region47: #{triplet_loss_aligned_reid.1} parent=43 // pred_region
        _
      $region48: #{triplet_loss_aligned_reid.1} parent=43 // pred_fallthru
        _
    $region44: #{triplet_loss_aligned_reid.1} parent=5 // pred_fallthru
      _
    %p3361 = scmp.le.s32.totalorder 2, %s12
    // Predicated region
    $region49: #{triplet_loss_aligned_reid.1} parent=5 // pred_check
      %p3362 = pneg %p3361
    $region50: #{triplet_loss_aligned_reid.1} parent=5 // pred_check_branch
      %3364 = sbr.rel (%p3362) target = $region52
    $region51: #{triplet_loss_aligned_reid.1} parent=5 // pred_region
      %s3365 = ssub.s32 %s12, 2
      // Predicated region
      $region53: #{triplet_loss_aligned_reid.1} parent=51 // pred_check
        %p3366 = pneg %p177
      $region54: #{triplet_loss_aligned_reid.1} parent=51 // pred_check_branch
        %3368 = sbr.rel (%p3366) target = $region56
      $region55: #{triplet_loss_aligned_reid.1} parent=51 // pred_region
        %p3369 = scmp.lt.s32.totalorder %s18, 1
        %s3370 = scalar_select %p3369, %s18, 1
        %s3371 = smul.addr %s3370, 4
        %s3372 = scalar_lea.vmem %s6, %s3371
      $region56: #{triplet_loss_aligned_reid.1} parent=51 // pred_fallthru
        _
    $region52: #{triplet_loss_aligned_reid.1} parent=5 // pred_fallthru
      _
  $region6: #{triplet_loss_aligned_reid.1} parent=0 // loop_footer
    %s16 = sadd.s32 1, %s12
  $region7: #{triplet_loss_aligned_reid.1} parent=0 // loop_footer_branch
    %11 = sbr.rel target = $region3
  $region8: #{triplet_loss_aligned_reid.1} parent=0 // loop_exit
    _

// kernel: triplet_loss_aligned_reid.1
$region0: #{triplet_loss_aligned_reid.1}
  #allocation0 [shape = 'u32[]', space=smem, size = 0x4, offset = 0x4, fixed_abs, tag = 'smem constant byte address 0x4 - core index']
  #allocation1 [shape = 'u32[144,128]{1,0:T(1,128)}', space=vmem, size = 0x12000, scoped, tag = 'internal scratch']
  %s0 = inlined_call_operand.vmem [shape: f32[64,128], index: 0, kind: input, shape index: {}]
  %s1 = inlined_call_operand.vmem [shape: f32[64,1], index: 1, kind: input, shape index: {}]
  %s2 = inlined_call_operand.vmem [shape: f32[2,1,32], index: 2, kind: input, shape index: {}]
  %s3 = inlined_call_operand.vmem [shape: s32[64,1], index: 3, kind: input, shape index: {}]
  %s4 = inlined_call_operand.vmem [shape: s32[2,1,32], index: 4, kind: input, shape index: {}]
  %s5 = inlined_call_operand.vmem [shape: f32[256,64], index: 5, kind: input, shape index: {}]
  %s6 = inlined_call_operand.vmem [shape: f32[2,4,32], index: 6, kind: output, shape index: {}]
  %s7 = sld [smem:[#allocation0]]
  $region57: #{triplet_loss_aligned_reid.1} parent=0
    _
  %s9 = ssub.s32 1, %s7
  %s10 = scalar_select 0, %s9, %s7
  loop: start=0, step=1, limit=4
  $region2: #{triplet_loss_aligned_reid.1} parent=0 // loop_pre_header
    _
  $region3: #{triplet_loss_aligned_reid.1} parent=0 // loop_header
    %s12 = sphi 0, %s16
    %p13 = scmp.ge.s32.totalorder %s12, 4
    %s20 = sphi 0, %s20
    %s22 = sphi 0, %s20
    %s23 = sphi 0, %s22
    %s37 = sphi 0, %s23
    %s41 = sphi 0, %s41
    %s43 = sphi 0, %s41
    %s44 = sphi 0, %s43
    %s58 = sphi 0, %s44
    %s64 = sphi 0, %s66
    %s67 = sphi 0, %s64
    %s68 = sphi 0, %s67
    %s84 = sphi 0, %s68
    %s88 = sphi 0, %s88
    %s90 = sphi 0, %s88
    %s91 = sphi 0, %s90
    %s105 = sphi 0, %s91
    %s111 = sphi 0, %s113
    %s114 = sphi 0, %s111
    %s115 = sphi 0, %s114
    %s131 = sphi 0, %s115
    %s135 = sphi 0, %s135
    %s137 = sphi 0, %s135
    %s138 = sphi 0, %s137
    %s152 = sphi 0, %s138
    %s158 = sphi 0, %s160
    %s161 = sphi 0, %s158
    %s162 = sphi 0, %s161
    %s178 = sphi 0, %s162
  $region4: #{triplet_loss_aligned_reid.1} parent=0 // loop_header_branch
    %15 = sbr.rel (%p13) target = $region8
  $region5: #{triplet_loss_aligned_reid.1} parent=0 // loop_body
    %s17 = ssub.s32 %s12, 1
    %s18 = ssub.s32 %s12, 2
    %s19 = sadd.s32 %s12, 1
    %s21 = sadd.s32 %s20, 1
    %p24 = scmp.eq.s32.totalorder %s12, 1
    %p25 = scmp.ne.s32.totalorder %s20, %s22
    %p26 = scmp.eq.s32.totalorder %s12, 0
    %p27 = por %p25, %p26
    %p28 = scmp.ne.s32.totalorder %s20, %s22
    %p29 = scmp.eq.s32.totalorder %s17, 1
    %p30 = por %p28, %p29
    %p31 = scmp.ne.s32.totalorder %s22, %s23
    %p32 = scmp.eq.s32.totalorder %s17, 0
    %p33 = por %p31, %p32
    %p34 = scmp.ne.s32.totalorder %s22, %s23
    %p35 = scmp.eq.s32.totalorder %s18, 1
    %p36 = por %p34, %p35
    %p38 = scmp.ne.s32.totalorder %s23, %s37
    %p39 = scmp.eq.s32.totalorder %s18, 0
    %p40 = por %p38, %p39
    %s42 = sadd.s32 %s41, 1
    %p45 = scmp.eq.s32.totalorder %s12, 1
    %p46 = scmp.ne.s32.totalorder %s41, %s43
    %p47 = scmp.eq.s32.totalorder %s12, 0
    %p48 = por %p46, %p47
    %p49 = scmp.ne.s32.totalorder %s41, %s43
    %p50 = scmp.eq.s32.totalorder %s17, 1
    %p51 = por %p49, %p50
    %p52 = scmp.ne.s32.totalorder %s43, %s44
    %p53 = scmp.eq.s32.totalorder %s17, 0
    %p54 = por %p52, %p53
    %p55 = scmp.ne.s32.totalorder %s43, %s44
    %p56 = scmp.eq.s32.totalorder %s18, 1
    %p57 = por %p55, %p56
    %p59 = scmp.ne.s32.totalorder %s44, %s58
    %p60 = scmp.eq.s32.totalorder %s18, 0
    %p61 = por %p59, %p60
    %s62 = ssub.s32 %s12, %s19
    %p63 = scmp.eq.s32.totalorder %s62, 0
    %s65 = sadd.s32 %s64, 1
    %s66 = scalar_select %p63, %s64, %s65
    %p69 = pneg %p63
    %p70 = scmp.eq.s32.totalorder %s12, 1
    %p71 = por %p69, %p70
    %p72 = scmp.ne.s32.totalorder %s64, %s67
    %p73 = scmp.eq.s32.totalorder %s12, 0
    %p74 = por %p72, %p73
    %p75 = scmp.ne.s32.totalorder %s64, %s67
    %p76 = scmp.eq.s32.totalorder %s17, 1
    %p77 = por %p75, %p76
    %p78 = scmp.ne.s32.totalorder %s67, %s68
    %p79 = scmp.eq.s32.totalorder %s17, 0
    %p80 = por %p78, %p79
    %p81 = scmp.ne.s32.totalorder %s67, %s68
    %p82 = scmp.eq.s32.totalorder %s18, 1
    %p83 = por %p81, %p82
    %p85 = scmp.ne.s32.totalorder %s68, %s84
    %p86 = scmp.eq.s32.totalorder %s18, 0
    %p87 = por %p85, %p86
    %s89 = sadd.s32 %s88, 1
    %p92 = scmp.eq.s32.totalorder %s12, 1
    %p93 = scmp.ne.s32.totalorder %s88, %s90
    %p94 = scmp.eq.s32.totalorder %s12, 0
    %p95 = por %p93, %p94
    %p96 = scmp.ne.s32.totalorder %s88, %s90
    %p97 = scmp.eq.s32.totalorder %s17, 1
    %p98 = por %p96, %p97
    %p99 = scmp.ne.s32.totalorder %s90, %s91
    %p100 = scmp.eq.s32.totalorder %s17, 0
    %p101 = por %p99, %p100
    %p102 = scmp.ne.s32.totalorder %s90, %s91
    %p103 = scmp.eq.s32.totalorder %s18, 1
    %p104 = por %p102, %p103
    %p106 = scmp.ne.s32.totalorder %s91, %s105
    %p107 = scmp.eq.s32.totalorder %s18, 0
    %p108 = por %p106, %p107
    %s109 = ssub.s32 %s12, %s19
    %p110 = scmp.eq.s32.totalorder %s109, 0
    %s112 = sadd.s32 %s111, 1
    %s113 = scalar_select %p110, %s111, %s112
    %p116 = pneg %p110
    %p117 = scmp.eq.s32.totalorder %s12, 1
    %p118 = por %p116, %p117
    %p119 = scmp.ne.s32.totalorder %s111, %s114
    %p120 = scmp.eq.s32.totalorder %s12, 0
    %p121 = por %p119, %p120
    %p122 = scmp.ne.s32.totalorder %s111, %s114
    %p123 = scmp.eq.s32.totalorder %s17, 1
    %p124 = por %p122, %p123
    %p125 = scmp.ne.s32.totalorder %s114, %s115
    %p126 = scmp.eq.s32.totalorder %s17, 0
    %p127 = por %p125, %p126
    %p128 = scmp.ne.s32.totalorder %s114, %s115
    %p129 = scmp.eq.s32.totalorder %s18, 1
    %p130 = por %p128, %p129
    %p132 = scmp.ne.s32.totalorder %s115, %s131
    %p133 = scmp.eq.s32.totalorder %s18, 0
    %p134 = por %p132, %p133
    %s136 = sadd.s32 %s135, 1
    %p139 = scmp.eq.s32.totalorder %s12, 1
    %p140 = scmp.ne.s32.totalorder %s135, %s137
    %p141 = scmp.eq.s32.totalorder %s12, 0
    %p142 = por %p140, %p141
    %p143 = scmp.ne.s32.totalorder %s135, %s137
    %p144 = scmp.eq.s32.totalorder %s17, 1
    %p145 = por %p143, %p144
    %p146 = scmp.ne.s32.totalorder %s137, %s138
    %p147 = scmp.eq.s32.totalorder %s17, 0
    %p148 = por %p146, %p147
    %p149 = scmp.ne.s32.totalorder %s137, %s138
    %p150 = scmp.eq.s32.totalorder %s18, 1
    %p151 = por %p149, %p150
    %p153 = scmp.ne.s32.totalorder %s138, %s152
    %p154 = scmp.eq.s32.totalorder %s18, 0
    %p155 = por %p153, %p154
    %s156 = ssub.s32 %s12, %s19
    %p157 = scmp.eq.s32.totalorder %s156, 0
    %s159 = sadd.s32 %s158, 1
    %s160 = scalar_select %p157, %s158, %s159
    %p163 = pneg %p157
    %p164 = scmp.eq.s32.totalorder %s12, 1
    %p165 = por %p163, %p164
    %p166 = scmp.ne.s32.totalorder %s158, %s161
    %p167 = scmp.eq.s32.totalorder %s12, 0
    %p168 = por %p166, %p167
    %p169 = scmp.ne.s32.totalorder %s158, %s161
    %p170 = scmp.eq.s32.totalorder %s17, 1
    %p171 = por %p169, %p170
    %p172 = scmp.ne.s32.totalorder %s161, %s162
    %p173 = scmp.eq.s32.totalorder %s17, 0
    %p174 = por %p172, %p173
    %p175 = scmp.ne.s32.totalorder %s161, %s162
    %p176 = scmp.eq.s32.totalorder %s18, 1
    %p177 = por %p175, %p176
    %p179 = scmp.ne.s32.totalorder %s162, %s178
    %p180 = scmp.eq.s32.totalorder %s18, 0
    %p181 = por %p179, %p180
    %p182 = scmp.le.s32.totalorder 1, %s12
    %p183 = scmp.lt.s32.totalorder %s12, 3
    %p184 = pnand %p182, %p183
    %p185 = pneg %p184
    // Predicated region
    $region9: #{triplet_loss_aligned_reid.1} parent=5 // pred_check
      _
    $region10: #{triplet_loss_aligned_reid.1} parent=5 // pred_check_branch
      %187 = sbr.rel (%p184) target = $region12
    $region11: #{triplet_loss_aligned_reid.1} parent=5 // pred_region
      %s188 = ssub.s32 %s12, 1
      // Predicated region
      $region13: #{triplet_loss_aligned_reid.1} parent=11 // pred_check
        %p189 = pneg %p33
      $region14: #{triplet_loss_aligned_reid.1} parent=11 // pred_check_branch
        %191 = sbr.rel (%p189) target = $region16
      $region15: #{triplet_loss_aligned_reid.1} parent=11 // pred_region
        _
      $region16: #{triplet_loss_aligned_reid.1} parent=11 // pred_fallthru
        _
      // Predicated region
      $region17: #{triplet_loss_aligned_reid.1} parent=11 // pred_check
        %p192 = pneg %p54
      $region18: #{triplet_loss_aligned_reid.1} parent=11 // pred_check_branch
        %194 = sbr.rel (%p192) target = $region20
      $region19: #{triplet_loss_aligned_reid.1} parent=11 // pred_region
        _
      $region20: #{triplet_loss_aligned_reid.1} parent=11 // pred_fallthru
        _
      // Predicated region
      $region21: #{triplet_loss_aligned_reid.1} parent=11 // pred_check
        %p195 = pneg %p101
      $region22: #{triplet_loss_aligned_reid.1} parent=11 // pred_check_branch
        %197 = sbr.rel (%p195) target = $region24
      $region23: #{triplet_loss_aligned_reid.1} parent=11 // pred_region
        _
      $region24: #{triplet_loss_aligned_reid.1} parent=11 // pred_fallthru
        _
      // Predicated region
      $region25: #{triplet_loss_aligned_reid.1} parent=11 // pred_check
        %p198 = pneg %p148
      $region26: #{triplet_loss_aligned_reid.1} parent=11 // pred_check_branch
        %200 = sbr.rel (%p198) target = $region28
      $region27: #{triplet_loss_aligned_reid.1} parent=11 // pred_region
        _
      $region28: #{triplet_loss_aligned_reid.1} parent=11 // pred_fallthru
        _
    $region12: #{triplet_loss_aligned_reid.1} parent=5 // pred_fallthru
      _
    %p201 = scmp.lt.s32.totalorder %s12, 2
    // Predicated region
    $region29: #{triplet_loss_aligned_reid.1} parent=5 // pred_check
      %p202 = pneg %p201
    $region30: #{triplet_loss_aligned_reid.1} parent=5 // pred_check_branch
      %204 = sbr.rel (%p202) target = $region32
    $region31: #{triplet_loss_aligned_reid.1} parent=5 // pred_region
      // Predicated region
      $region33: #{triplet_loss_aligned_reid.1} parent=31 // pred_check
        %p205 = pneg %p74
      $region34: #{triplet_loss_aligned_reid.1} parent=31 // pred_check_branch
        %207 = sbr.rel (%p205) target = $region36
      $region35: #{triplet_loss_aligned_reid.1} parent=31 // pred_region
        %p208 = scmp.lt.s32.totalorder %s12, 1
        %s209 = scalar_select %p208, %s12, 1
        %s210 = scalar_lea.vmem %s2, %s209
      $region36: #{triplet_loss_aligned_reid.1} parent=31 // pred_fallthru
        _
      // Predicated region
      $region37: #{triplet_loss_aligned_reid.1} parent=31 // pred_check
        %p211 = pneg %p121
      $region38: #{triplet_loss_aligned_reid.1} parent=31 // pred_check_branch
        %213 = sbr.rel (%p211) target = $region40
      $region39: #{triplet_loss_aligned_reid.1} parent=31 // pred_region
        %p214 = scmp.lt.s32.totalorder %s12, 1
        %s215 = scalar_select %p214, %s12, 1
        %s216 = scalar_lea.vmem %s4, %s215
      $region40: #{triplet_loss_aligned_reid.1} parent=31 // pred_fallthru
        _
    $region32: #{triplet_loss_aligned_reid.1} parent=5 // pred_fallthru
      _
    %p217 = scmp.le.s32.totalorder 1, %s12
    %p218 = scmp.lt.s32.totalorder %s12, 3
    %p219 = pnand %p217, %p218
    %p220 = pneg %p219
    // Predicated region
    $region41: #{triplet_loss_aligned_reid.1} parent=5 // pred_check
      _
    $region42: #{triplet_loss_aligned_reid.1} parent=5 // pred_check_branch
      %222 = sbr.rel (%p219) target = $region44
    $region43: #{triplet_loss_aligned_reid.1} parent=5 // pred_region
      %s223 = ssub.s32 %s12, 1
      %p224 = pneg %p33
      %p225 = pneg %p30
      %p226 = pneg %p54
      %p227 = pneg %p51
      %p228 = scmp.lt.s32.totalorder %s17, 1
      %s229 = scalar_select %p228, %s17, 1
      %s230 = scalar_lea.vmem %s2, %s229
      %p231 = pneg %p80
      %p232 = pneg %p77
      %p233 = pneg %p101
      %p234 = pneg %p98
      %p235 = scmp.lt.s32.totalorder %s17, 1
      %s236 = scalar_select %p235, %s17, 1
      %s237 = scalar_lea.vmem %s4, %s236
      %p238 = pneg %p127
      %p239 = pneg %p124
      %p240 = pneg %p148
      %p241 = pneg %p145
      %p242 = pneg %p174
      %p243 = pneg %p171
      %p244 = scmp.lt.s32.totalorder %s17, 1
      %s245 = scalar_select %p244, %s17, 1
      %s246 = smul.addr %s245, 4
      %s247 = scalar_lea.vmem %s6, %s246
      %p248 = scmp.lt.s32.totalorder %s17, 1
      %s249 = scalar_select %p248, %s17, 1
      %s250 = scalar_lea.vmem %s2, %s249
      %p251 = scmp.lt.s32.totalorder %s17, 1
      %s252 = scalar_select %p251, %s17, 1
      %s253 = scalar_lea.vmem %s4, %s252
      %p254 = scmp.lt.s32.totalorder %s17, 1
      %s255 = scalar_select %p254, %s17, 1
      %s256 = smul.addr %s255, 4
      %s257 = scalar_lea.vmem %s6, %s256
      %s258 = smul.u32 %s17, 32
      %v259 = vld [vmem:[%s0] sm:$0xff]
      %v260 = vld [vmem:[%s0 + $0x8] sm:$0xff]
      %v261 = vld [vmem:[%s0 + $0x10] sm:$0xff]
      %v262 = vld [vmem:[%s0 + $0x18] sm:$0xff]
      %v263 = vld [vmem:[%s0 + $0x20] sm:$0xff]
      %v264 = vld [vmem:[%s0 + $0x28] sm:$0xff]
      %v265 = vld [vmem:[%s0 + $0x30] sm:$0xff]
      %v266 = vld [vmem:[%s0 + $0x38] sm:$0xff]
      %s267 = scalar_lea.vmem %s0, %s258
      %v268 = vld [vmem:[%s267] sm:$0xff]
      %v269 = vld [vmem:[%s267 + $0x8] sm:$0xff]
      %v270 = vld [vmem:[%s267 + $0x10] sm:$0xff]
      %v271 = vld [vmem:[%s267 + $0x18] sm:$0xff]
      %272 = vmatprep.subr.mxu0 0.0
      %273 = vmatpush1.xpose.msra.mxu0 %v268
      %274 = vmatprep.subr.mxu0 0.0
      %275 = vmatpush1.xpose.msra.mxu0 %v269
      %276 = vmatprep.subr.mxu0 0.0
      %277 = vmatpush1.xpose.msra.mxu0 %v270
      %278 = vmatprep.subr.mxu0 0.0
      %279 = vmatpush1.xpose.msra.mxu0 %v271
      %280 = vmatprep.subr.mxu0 0.0
      %281 = vmatpush1.xpose.msra.mxu0 0.0
      %282 = vmatprep.subr.mxu0 0.0
      %283 = vmatpush1.xpose.msra.mxu0 0.0
      %284 = vmatprep.subr.mxu0 0.0
      %285 = vmatpush1.xpose.msra.mxu0 0.0
      %286 = vmatprep.subr.mxu0 0.0
      %287 = vmatpush1.xpose.msra.mxu0 0.0
      %288 = vmatprep.subr.mxu0 0.0
      %289 = vmatpush1.xpose.msra.mxu0 0.0
      %290 = vmatprep.subr.mxu0 0.0
      %291 = vmatpush1.xpose.msra.mxu0 0.0
      %292 = vmatprep.subr.mxu0 0.0
      %293 = vmatpush1.xpose.msra.mxu0 0.0
      %294 = vmatprep.subr.mxu0 0.0
      %295 = vmatpush1.xpose.msra.mxu0 0.0
      %296 = vmatprep.subr.mxu0 0.0
      %297 = vmatpush1.xpose.msra.mxu0 0.0
      %298 = vmatprep.subr.mxu0 0.0
      %299 = vmatpush1.xpose.msra.mxu0 0.0
      %300 = vmatprep.subr.mxu0 0.0
      %301 = vmatpush1.xpose.msra.mxu0 0.0
      %302 = vmatprep.subr.mxu0 0.0
      %303 = vmatpush1.xpose.msra.mxu0 0.0
      %304 = vmatprep.subr.mxu0 0.0
      %305 = vmatpush1.xpose.msra.mxu0 0.0
      %306 = vmatprep.subr.mxu0 0.0
      %307 = vmatpush1.xpose.msra.mxu0 0.0
      %308 = vmatprep.subr.mxu0 0.0
      %309 = vmatpush1.xpose.msra.mxu0 0.0
      %310 = vmatprep.subr.mxu0 0.0
      %311 = vmatpush1.xpose.msra.mxu0 0.0
      %312 = vmatprep.subr.mxu0 0.0
      %313 = vmatpush1.xpose.msra.mxu0 0.0
      %314 = vmatprep.subr.mxu0 0.0
      %315 = vmatpush1.xpose.msra.mxu0 0.0
      %316 = vmatprep.subr.mxu0 0.0
      %317 = vmatpush1.xpose.msra.mxu0 0.0
      %318 = vmatprep.subr.mxu0 0.0
      %319 = vmatpush1.xpose.msra.mxu0 0.0
      %320 = vmatprep.subr.mxu0 0.0
      %321 = vmatpush1.xpose.msra.mxu0 0.0
      %322 = vmatprep.subr.mxu0 0.0
      %323 = vmatpush1.xpose.msra.mxu0 0.0
      %324 = vmatprep.subr.mxu0 0.0
      %325 = vmatpush1.xpose.msra.mxu0 0.0
      %326 = vmatprep.subr.mxu0 0.0
      %327 = vmatpush1.xpose.msra.mxu0 0.0
      %328 = vmatprep.subr.mxu0 0.0
      %329 = vmatpush1.xpose.msra.mxu0 0.0
      %330 = vmatprep.subr.mxu0 0.0
      %331 = vmatpush1.xpose.msra.mxu0 0.0
      %332 = vmatprep.subr.mxu0 0.0
      %333 = vmatpush1.xpose.msra.mxu0 0.0
      %334 = vmatprep.subr.mxu0 0.0
      %335 = vmatpush1.xpose.msra.mxu0 0.0
      %336 = vmatprep.mubr.f32.mxu0 0.0
      %337 = vmatmul.mubr.f32.gmra.mrb[0].mxu0 %v259
      %v338 = vpop.f32.mrb[0].mxu0
      %v339 = vadd.f32 0.0, %v338
      %v340 = vpop.f32.mrb[0].mxu0
      %341 = vmatprep.mubr.f32.mxu0 0.0
      %342 = vmatmul.mubr.f32.gmra.mrb[0].mxu0 %v260
      %v343 = vpop.f32.mrb[0].mxu0
      %v344 = vadd.f32 0.0, %v343
      %v345 = vpop.f32.mrb[0].mxu0
      %346 = vmatprep.mubr.f32.mxu0 0.0
      %347 = vmatmul.mubr.f32.gmra.mrb[0].mxu0 %v261
      %v348 = vpop.f32.mrb[0].mxu0
      %v349 = vadd.f32 0.0, %v348
      %v350 = vpop.f32.mrb[0].mxu0
      %351 = vmatprep.mubr.f32.mxu0 0.0
      %352 = vmatmul.mubr.f32.gmra.mrb[0].mxu0 %v262
      %v353 = vpop.f32.mrb[0].mxu0
      %v354 = vadd.f32 0.0, %v353
      %v355 = vpop.f32.mrb[0].mxu0
      %356 = vmatprep.mubr.f32.mxu0 0.0
      %357 = vmatmul.mubr.f32.gmra.mrb[0].mxu0 %v263
      %v358 = vpop.f32.mrb[0].mxu0
      %v359 = vadd.f32 0.0, %v358
      %v360 = vpop.f32.mrb[0].mxu0
      %361 = vmatprep.mubr.f32.mxu0 0.0
      %362 = vmatmul.mubr.f32.gmra.mrb[0].mxu0 %v264
      %v363 = vpop.f32.mrb[0].mxu0
      %v364 = vadd.f32 0.0, %v363
      %v365 = vpop.f32.mrb[0].mxu0
      %366 = vmatprep.mubr.f32.mxu0 0.0
      %367 = vmatmul.mubr.f32.gmra.mrb[0].mxu0 %v265
      %v368 = vpop.f32.mrb[0].mxu0
      %v369 = vadd.f32 0.0, %v368
      %v370 = vpop.f32.mrb[0].mxu0
      %371 = vmatprep.mubr.f32.mxu0 0.0
      %372 = vmatmul.mubr.f32.gmra.mrb[0].mxu0 %v266
      %v373 = vpop.f32.mrb[0].mxu0
      %v374 = vadd.f32 0.0, %v373
      %v375 = vpop.f32.mrb[0].mxu0
      %376 = vdwg.mxu0
      %v377 = vld [vmem:[%s1] sm:$0xff]
      %v378 = vld [vmem:[%s1 + $0x8] sm:$0xff]
      %v379 = vld [vmem:[%s1 + $0x10] sm:$0xff]
      %v380 = vld [vmem:[%s1 + $0x18] sm:$0xff]
      %v381 = vld [vmem:[%s1 + $0x20] sm:$0xff]
      %v382 = vld [vmem:[%s1 + $0x28] sm:$0xff]
      %v383 = vld [vmem:[%s1 + $0x30] sm:$0xff]
      %v384 = vld [vmem:[%s1 + $0x38] sm:$0xff]
      %v385 = vld [vmem:[%s250] sm:$0x1]
      %387 = vset.pattern.permute.xlu0 0
      %388 = vperm.xlu0 %387, %v377
      %v389 = vpop.permute.xlu0 %388
      %392 = vset.pattern.permute.xlu0 0
      %393 = vperm.xlu0 %392, %v378
      %v394 = vpop.permute.xlu0 %393
      %397 = vset.pattern.permute.xlu0 0
      %398 = vperm.xlu0 %397, %v379
      %v399 = vpop.permute.xlu0 %398
      %402 = vset.pattern.permute.xlu0 0
      %403 = vperm.xlu0 %402, %v380
      %v404 = vpop.permute.xlu0 %403
      %407 = vset.pattern.permute.xlu0 0
      %408 = vperm.xlu0 %407, %v381
      %v409 = vpop.permute.xlu0 %408
      %412 = vset.pattern.permute.xlu0 0
      %413 = vperm.xlu0 %412, %v382
      %v414 = vpop.permute.xlu0 %413
      %417 = vset.pattern.permute.xlu0 0
      %418 = vperm.xlu0 %417, %v383
      %v419 = vpop.permute.xlu0 %418
      %422 = vset.pattern.permute.xlu0 0
      %423 = vperm.xlu0 %422, %v384
      %v424 = vpop.permute.xlu0 %423
      %v427 = vlaneseq
      %v428 = vshrl.u32 %v427, 7
      %v429 = vsub.s32 0, %v428
      %v430 = vrot.slane %v385, %v429
      %v432 = vadd.f32 %v389, %v430
      %v433 = vadd.f32 %v394, %v430
      %v434 = vadd.f32 %v399, %v430
      %v435 = vadd.f32 %v404, %v430
      %v436 = vadd.f32 %v409, %v430
      %v437 = vadd.f32 %v414, %v430
      %v438 = vadd.f32 %v419, %v430
      %v439 = vadd.f32 %v424, %v430
      %v440 = vmul.f32 %v339, 2.0
      %v441 = vmul.f32 %v344, 2.0
      %v442 = vmul.f32 %v349, 2.0
      %v443 = vmul.f32 %v354, 2.0
      %v444 = vmul.f32 %v359, 2.0
      %v445 = vmul.f32 %v364, 2.0
      %v446 = vmul.f32 %v369, 2.0
      %v447 = vmul.f32 %v374, 2.0
      %v448 = vsub.f32 %v432, %v440
      %v449 = vsub.f32 %v433, %v441
      %v450 = vsub.f32 %v434, %v442
      %v451 = vsub.f32 %v435, %v443
      %v452 = vsub.f32 %v436, %v444
      %v453 = vsub.f32 %v437, %v445
      %v454 = vsub.f32 %v438, %v446
      %v455 = vsub.f32 %v439, %v447
      %v456 = vmax.f32 %v448, 1e-12
      %v457 = vmax.f32 %v449, 1e-12
      %v458 = vmax.f32 %v450, 1e-12
      %v459 = vmax.f32 %v451, 1e-12
      %v460 = vmax.f32 %v452, 1e-12
      %v461 = vmax.f32 %v453, 1e-12
      %v462 = vmax.f32 %v454, 1e-12
      %v463 = vmax.f32 %v455, 1e-12
      %v464 = vld [vmem:[%s3] sm:$0xff]
      %v465 = vld [vmem:[%s3 + $0x8] sm:$0xff]
      %v466 = vld [vmem:[%s3 + $0x10] sm:$0xff]
      %v467 = vld [vmem:[%s3 + $0x18] sm:$0xff]
      %v468 = vld [vmem:[%s3 + $0x20] sm:$0xff]
      %v469 = vld [vmem:[%s3 + $0x28] sm:$0xff]
      %v470 = vld [vmem:[%s3 + $0x30] sm:$0xff]
      %v471 = vld [vmem:[%s3 + $0x38] sm:$0xff]
      %v472 = vld [vmem:[%s253] sm:$0x1]
      %473 = vset.pattern.permute.xlu0 0
      %474 = vperm.xlu0 %473, %v464
      %v475 = vpop.permute.xlu0 %474
      %476 = vset.pattern.permute.xlu0 0
      %477 = vperm.xlu0 %476, %v465
      %v478 = vpop.permute.xlu0 %477
      %479 = vset.pattern.permute.xlu0 0
      %480 = vperm.xlu0 %479, %v466
      %v481 = vpop.permute.xlu0 %480
      %482 = vset.pattern.permute.xlu0 0
      %483 = vperm.xlu0 %482, %v467
      %v484 = vpop.permute.xlu0 %483
      %485 = vset.pattern.permute.xlu0 0
      %486 = vperm.xlu0 %485, %v468
      %v487 = vpop.permute.xlu0 %486
      %488 = vset.pattern.permute.xlu0 0
      %489 = vperm.xlu0 %488, %v469
      %v490 = vpop.permute.xlu0 %489
      %491 = vset.pattern.permute.xlu0 0
      %492 = vperm.xlu0 %491, %v470
      %v493 = vpop.permute.xlu0 %492
      %494 = vset.pattern.permute.xlu0 0
      %495 = vperm.xlu0 %494, %v471
      %v496 = vpop.permute.xlu0 %495
      %v497 = vlaneseq
      %v498 = vshrl.u32 %v497, 7
      %v499 = vsub.s32 0, %v498
      %v500 = vrot.slane %v472, %v499
      %vm501 = vcmp.eq.s32.totalorder %v475, %v500
      %vm502 = vcmp.eq.s32.totalorder %v478, %v500
      %vm503 = vcmp.eq.s32.totalorder %v481, %v500
      %vm504 = vcmp.eq.s32.totalorder %v484, %v500
      %vm505 = vcmp.eq.s32.totalorder %v487, %v500
      %vm506 = vcmp.eq.s32.totalorder %v490, %v500
      %vm507 = vcmp.eq.s32.totalorder %v493, %v500
      %vm508 = vcmp.eq.s32.totalorder %v496, %v500
      %v509 = vsel %vm501, %v456, -inf
      %v510 = vsel %vm502, %v457, -inf
      %v511 = vsel %vm503, %v458, -inf
      %v512 = vsel %vm504, %v459, -inf
      %v513 = vsel %vm505, %v460, -inf
      %v514 = vsel %vm506, %v461, -inf
      %v515 = vsel %vm507, %v462, -inf
      %v516 = vsel %vm508, %v463, -inf
      %v517 = vsel %vm501, inf, %v456
      %v518 = vsel %vm502, inf, %v457
      %v519 = vsel %vm503, inf, %v458
      %v520 = vsel %vm504, inf, %v459
      %v521 = vsel %vm505, inf, %v460
      %v522 = vsel %vm506, inf, %v461
      %v523 = vsel %vm507, inf, %v462
      %v524 = vsel %vm508, inf, %v463
      %vm525 = vcmask 261120
      %v526 = vsel %vm525, %v509, -inf
      %v527 = vsel %vm525, %v510, -inf
      %v528 = vsel %vm525, %v511, -inf
      %v529 = vsel %vm525, %v512, -inf
      %v530 = vsel %vm525, %v513, -inf
      %v531 = vmax.f32 %v526, %v530
      %v532 = vsel %vm525, %v514, -inf
      %v533 = vmax.f32 %v527, %v532
      %v534 = vsel %vm525, %v515, -inf
      %v535 = vmax.f32 %v528, %v534
      %v536 = vsel %vm525, %v516, -inf
      %v537 = vmax.f32 %v529, %v536
      %v538 = vmax.f32 %v531, %v533
      %v539 = vmax.f32 %v535, %v537
      %v540 = vmax.f32 %v538, %v539
      %v541 = vrot.slane %v540, 4
      %v542 = vmax.f32 %v540, %v541
      %v543 = vrot.slane %v542, 2
      %v544 = vmax.f32 %v542, %v543
      %v545 = vrot.slane %v544, 1
      %v546 = vmax.f32 %v544, %v545
      %v547 = vsel %vm525, %v517, inf
      %v548 = vsel %vm525, %v518, inf
      %v549 = vsel %vm525, %v519, inf
      %v550 = vsel %vm525, %v520, inf
      %v551 = vsel %vm525, %v521, inf
      %v552 = vmin.f32 %v547, %v551
      %v553 = vsel %vm525, %v522, inf
      %v554 = vmin.f32 %v548, %v553
      %v555 = vsel %vm525, %v523, inf
      %v556 = vmin.f32 %v549, %v555
      %v557 = vsel %vm525, %v524, inf
      %v558 = vmin.f32 %v550, %v557
      %v559 = vmin.f32 %v552, %v554
      %v560 = vmin.f32 %v556, %v558
      %v561 = vmin.f32 %v559, %v560
      %v562 = vrot.slane %v561, 4
      %v563 = vmin.f32 %v561, %v562
      %v564 = vrot.slane %v563, 2
      %v565 = vmin.f32 %v563, %v564
      %v566 = vrot.slane %v565, 1
      %v567 = vmin.f32 %v565, %v566
      %v568 = vrsqrt.pop %v546
      %v569 = vmul.f32 %v546, %v568
      %vm570 = vcmp.eq.f32.partialorder %v546, inf
      %v571 = vsel %vm570, %v546, %v569
      %vm572 = vcmp.eq.f32.partialorder %v546, 0.0
      %v573 = vand.u32 %v546, 2147483648
      %v574 = vsel %vm572, %v573, %v571
      %v575 = vrsqrt.pop %v567
      %v576 = vmul.f32 %v567, %v575
      %vm577 = vcmp.eq.f32.partialorder %v567, inf
      %v578 = vsel %vm577, %v567, %v576
      %vm579 = vcmp.eq.f32.partialorder %v567, 0.0
      %v580 = vand.u32 %v567, 2147483648
      %v581 = vsel %vm579, %v580, %v578
      %v582 = vlaneseq
      %v583 = vshrl.u32 %v582, 7
      %v584 = vadd.s32 %v583, 8
      %v585 = vadd.s32 %v583, 16
      %v586 = vadd.s32 %v583, 24
      %v587 = vadd.s32 %v583, 32
      %v588 = vadd.s32 %v583, 40
      %v589 = vadd.s32 %v583, 48
      %v590 = vadd.s32 %v583, 56
      %v591 = vlaneseq
      %v592 = vand.u32 %v591, 127
      %vm593 = vcmp.eq.f32.partialorder %v509, %v546
      %vm594 = vcmp.eq.f32.partialorder %v510, %v546
      %vm595 = vcmp.eq.f32.partialorder %v511, %v546
      %vm596 = vcmp.eq.f32.partialorder %v512, %v546
      %vm597 = vcmp.eq.f32.partialorder %v513, %v546
      %vm598 = vcmp.eq.f32.partialorder %v514, %v546
      %vm599 = vcmp.eq.f32.partialorder %v515, %v546
      %vm600 = vcmp.eq.f32.partialorder %v516, %v546
      %v601 = vsel %vm593, %v583, 64
      %v602 = vsel %vm594, %v584, 64
      %v603 = vsel %vm595, %v585, 64
      %v604 = vsel %vm596, %v586, 64
      %v605 = vsel %vm597, %v587, 64
      %v606 = vsel %vm598, %v588, 64
      %v607 = vsel %vm599, %v589, 64
      %v608 = vsel %vm600, %v590, 64
      %v609 = vsel %vm525, %v601, 2147483647
      %v610 = vsel %vm525, %v602, 2147483647
      %v611 = vsel %vm525, %v603, 2147483647
      %v612 = vsel %vm525, %v604, 2147483647
      %v613 = vsel %vm525, %v605, 2147483647
      %vm614 = vcmp.lt.s32.totalorder %v609, %v613
      %v615 = vsel %vm614, %v609, %v613
      %v616 = vsel %vm525, %v606, 2147483647
      %vm617 = vcmp.lt.s32.totalorder %v610, %v616
      %v618 = vsel %vm617, %v610, %v616
      %v619 = vsel %vm525, %v607, 2147483647
      %vm620 = vcmp.lt.s32.totalorder %v611, %v619
      %v621 = vsel %vm620, %v611, %v619
      %v622 = vsel %vm525, %v608, 2147483647
      %vm623 = vcmp.lt.s32.totalorder %v612, %v622
      %v624 = vsel %vm623, %v612, %v622
      %vm625 = vcmp.lt.s32.totalorder %v615, %v618
      %v626 = vsel %vm625, %v615, %v618
      %vm627 = vcmp.lt.s32.totalorder %v621, %v624
      %v628 = vsel %vm627, %v621, %v624
      %vm629 = vcmp.lt.s32.totalorder %v626, %v628
      %v630 = vsel %vm629, %v626, %v628
      %v631 = vrot.slane %v630, 4
      %vm632 = vcmp.lt.s32.totalorder %v630, %v631
      %v633 = vsel %vm632, %v630, %v631
      %v634 = vrot.slane %v633, 2
      %vm635 = vcmp.lt.s32.totalorder %v633, %v634
      %v636 = vsel %vm635, %v633, %v634
      %v637 = vrot.slane %v636, 1
      %vm638 = vcmp.lt.s32.totalorder %v636, %v637
      %v639 = vsel %vm638, %v636, %v637
      %vm640 = vcmp.eq.f32.partialorder %v517, %v567
      %vm641 = vcmp.eq.f32.partialorder %v518, %v567
      %vm642 = vcmp.eq.f32.partialorder %v519, %v567
      %vm643 = vcmp.eq.f32.partialorder %v520, %v567
      %vm644 = vcmp.eq.f32.partialorder %v521, %v567
      %vm645 = vcmp.eq.f32.partialorder %v522, %v567
      %vm646 = vcmp.eq.f32.partialorder %v523, %v567
      %vm647 = vcmp.eq.f32.partialorder %v524, %v567
      %v648 = vsel %vm640, %v583, 64
      %v649 = vsel %vm641, %v584, 64
      %v650 = vsel %vm642, %v585, 64
      %v651 = vsel %vm643, %v586, 64
      %v652 = vsel %vm644, %v587, 64
      %v653 = vsel %vm645, %v588, 64
      %v654 = vsel %vm646, %v589, 64
      %v655 = vsel %vm647, %v590, 64
      %v656 = vsel %vm525, %v648, 2147483647
      %v657 = vsel %vm525, %v649, 2147483647
      %v658 = vsel %vm525, %v650, 2147483647
      %v659 = vsel %vm525, %v651, 2147483647
      %v660 = vsel %vm525, %v652, 2147483647
      %vm661 = vcmp.lt.s32.totalorder %v656, %v660
      %v662 = vsel %vm661, %v656, %v660
      %v663 = vsel %vm525, %v653, 2147483647
      %vm664 = vcmp.lt.s32.totalorder %v657, %v663
      %v665 = vsel %vm664, %v657, %v663
      %v666 = vsel %vm525, %v654, 2147483647
      %vm667 = vcmp.lt.s32.totalorder %v658, %v666
      %v668 = vsel %vm667, %v658, %v666
      %v669 = vsel %vm525, %v655, 2147483647
      %vm670 = vcmp.lt.s32.totalorder %v659, %v669
      %v671 = vsel %vm670, %v659, %v669
      %vm672 = vcmp.lt.s32.totalorder %v662, %v665
      %v673 = vsel %vm672, %v662, %v665
      %vm674 = vcmp.lt.s32.totalorder %v668, %v671
      %v675 = vsel %vm674, %v668, %v671
      %vm676 = vcmp.lt.s32.totalorder %v673, %v675
      %v677 = vsel %vm676, %v673, %v675
      %v678 = vrot.slane %v677, 4
      %vm679 = vcmp.lt.s32.totalorder %v677, %v678
      %v680 = vsel %vm679, %v677, %v678
      %v681 = vrot.slane %v680, 2
      %vm682 = vcmp.lt.s32.totalorder %v680, %v681
      %v683 = vsel %vm682, %v680, %v681
      %v684 = vrot.slane %v683, 1
      %vm685 = vcmp.lt.s32.totalorder %v683, %v684
      %v686 = vsel %vm685, %v683, %v684
      %v687 = vstv %s258
      %v688 = vadd.s32 %v592, %v687
      %vm689 = vcmp.eq.s32.totalorder %v583, %v688
      %vm690 = vcmp.eq.s32.totalorder %v584, %v688
      %vm691 = vcmp.eq.s32.totalorder %v585, %v688
      %vm692 = vcmp.eq.s32.totalorder %v586, %v688
      %vm693 = vcmp.eq.s32.totalorder %v587, %v688
      %vm694 = vcmp.eq.s32.totalorder %v588, %v688
      %vm695 = vcmp.eq.s32.totalorder %v589, %v688
      %vm696 = vcmp.eq.s32.totalorder %v590, %v688
      %v697 = vsel %vm689, 1, 0
      %v698 = vsel %vm690, 1, 0
      %v699 = vsel %vm691, 1, 0
      %v700 = vsel %vm692, 1, 0
      %v701 = vsel %vm693, 1, 0
      %v702 = vsel %vm694, 1, 0
      %v703 = vsel %vm695, 1, 0
      %v704 = vsel %vm696, 1, 0
      %v705 = vcvt.s32.f32 %v697
      %v706 = vcvt.s32.f32 %v698
      %v707 = vcvt.s32.f32 %v699
      %v708 = vcvt.s32.f32 %v700
      %v709 = vcvt.s32.f32 %v701
      %v710 = vcvt.s32.f32 %v702
      %v711 = vcvt.s32.f32 %v703
      %v712 = vcvt.s32.f32 %v704
      %vm713 = vcmp.eq.s32.totalorder %v583, %v639
      %vm714 = vcmp.eq.s32.totalorder %v584, %v639
      %vm715 = vcmp.eq.s32.totalorder %v585, %v639
      %vm716 = vcmp.eq.s32.totalorder %v586, %v639
      %vm717 = vcmp.eq.s32.totalorder %v587, %v639
      %vm718 = vcmp.eq.s32.totalorder %v588, %v639
      %vm719 = vcmp.eq.s32.totalorder %v589, %v639
      %vm720 = vcmp.eq.s32.totalorder %v590, %v639
      %v721 = vsel %vm713, 1, 0
      %v722 = vsel %vm714, 1, 0
      %v723 = vsel %vm715, 1, 0
      %v724 = vsel %vm716, 1, 0
      %v725 = vsel %vm717, 1, 0
      %v726 = vsel %vm718, 1, 0
      %v727 = vsel %vm719, 1, 0
      %v728 = vsel %vm720, 1, 0
      %v729 = vcvt.s32.f32 %v721
      %v730 = vcvt.s32.f32 %v722
      %v731 = vcvt.s32.f32 %v723
      %v732 = vcvt.s32.f32 %v724
      %v733 = vcvt.s32.f32 %v725
      %v734 = vcvt.s32.f32 %v726
      %v735 = vcvt.s32.f32 %v727
      %v736 = vcvt.s32.f32 %v728
      %vm737 = vcmp.eq.s32.totalorder %v583, %v686
      %vm738 = vcmp.eq.s32.totalorder %v584, %v686
      %vm739 = vcmp.eq.s32.totalorder %v585, %v686
      %vm740 = vcmp.eq.s32.totalorder %v586, %v686
      %vm741 = vcmp.eq.s32.totalorder %v587, %v686
      %vm742 = vcmp.eq.s32.totalorder %v588, %v686
      %vm743 = vcmp.eq.s32.totalorder %v589, %v686
      %vm744 = vcmp.eq.s32.totalorder %v590, %v686
      %v745 = vsel %vm737, 1, 0
      %v746 = vsel %vm738, 1, 0
      %v747 = vsel %vm739, 1, 0
      %v748 = vsel %vm740, 1, 0
      %v749 = vsel %vm741, 1, 0
      %v750 = vsel %vm742, 1, 0
      %v751 = vsel %vm743, 1, 0
      %v752 = vsel %vm744, 1, 0
      %v753 = vcvt.s32.f32 %v745
      %v754 = vcvt.s32.f32 %v746
      %v755 = vcvt.s32.f32 %v747
      %v756 = vcvt.s32.f32 %v748
      %v757 = vcvt.s32.f32 %v749
      %v758 = vcvt.s32.f32 %v750
      %v759 = vcvt.s32.f32 %v751
      %v760 = vcvt.s32.f32 %v752
      %769 = vrot.lane.b32.xlu0 %v729, 32
      %v770 = vpop.permute.xlu0 %769
      %771 = vrot.lane.b32.xlu0 %v730, 32
      %v772 = vpop.permute.xlu0 %771
      %773 = vrot.lane.b32.xlu0 %v731, 32
      %v774 = vpop.permute.xlu0 %773
      %775 = vrot.lane.b32.xlu0 %v732, 32
      %v776 = vpop.permute.xlu0 %775
      %777 = vrot.lane.b32.xlu0 %v733, 32
      %v778 = vpop.permute.xlu0 %777
      %779 = vrot.lane.b32.xlu0 %v734, 32
      %v780 = vpop.permute.xlu0 %779
      %781 = vrot.lane.b32.xlu0 %v735, 32
      %v782 = vpop.permute.xlu0 %781
      %783 = vrot.lane.b32.xlu0 %v736, 32
      %v784 = vpop.permute.xlu0 %783
      %801 = vrot.lane.b32.xlu0 %v753, 64
      %v802 = vpop.permute.xlu0 %801
      %803 = vrot.lane.b32.xlu0 %v754, 64
      %v804 = vpop.permute.xlu0 %803
      %805 = vrot.lane.b32.xlu0 %v755, 64
      %v806 = vpop.permute.xlu0 %805
      %807 = vrot.lane.b32.xlu0 %v756, 64
      %v808 = vpop.permute.xlu0 %807
      %809 = vrot.lane.b32.xlu0 %v757, 64
      %v810 = vpop.permute.xlu0 %809
      %811 = vrot.lane.b32.xlu0 %v758, 64
      %v812 = vpop.permute.xlu0 %811
      %813 = vrot.lane.b32.xlu0 %v759, 64
      %v814 = vpop.permute.xlu0 %813
      %815 = vrot.lane.b32.xlu0 %v760, 64
      %v816 = vpop.permute.xlu0 %815
      %v825 = vsel %vm525, %v705, %v770
      %v826 = vsel %vm525, %v706, %v772
      %v827 = vsel %vm525, %v707, %v774
      %v828 = vsel %vm525, %v708, %v776
      %v829 = vsel %vm525, %v709, %v778
      %v830 = vsel %vm525, %v710, %v780
      %v831 = vsel %vm525, %v711, %v782
      %v832 = vsel %vm525, %v712, %v784
      %vm833 = vcmask 523264
      %v834 = vsel %vm833, %v825, %v802
      %v835 = vsel %vm833, %v826, %v804
      %v836 = vsel %vm833, %v827, %v806
      %v837 = vsel %vm833, %v828, %v808
      %v838 = vsel %vm833, %v829, %v810
      %v839 = vsel %vm833, %v830, %v812
      %v840 = vsel %vm833, %v831, %v814
      %v841 = vsel %vm833, %v832, %v816
      %v842 = vld [vmem:[%s5] sm:$0xff]
      %v843 = vld [vmem:[%s5 + $0x8] sm:$0xff]
      %v844 = vld [vmem:[%s5 + $0x10] sm:$0xff]
      %v845 = vld [vmem:[%s5 + $0x18] sm:$0xff]
      %v846 = vld [vmem:[%s5 + $0x20] sm:$0xff]
      %v847 = vld [vmem:[%s5 + $0x28] sm:$0xff]
      %v848 = vld [vmem:[%s5 + $0x30] sm:$0xff]
      %v849 = vld [vmem:[%s5 + $0x38] sm:$0xff]
      %v850 = vld [vmem:[%s5 + $0x40] sm:$0xff]
      %v851 = vld [vmem:[%s5 + $0x48] sm:$0xff]
      %v852 = vld [vmem:[%s5 + $0x50] sm:$0xff]
      %v853 = vld [vmem:[%s5 + $0x58] sm:$0xff]
      %v854 = vld [vmem:[%s5 + $0x60] sm:$0xff]
      %v855 = vld [vmem:[%s5 + $0x68] sm:$0xff]
      %v856 = vld [vmem:[%s5 + $0x70] sm:$0xff]
      %v857 = vld [vmem:[%s5 + $0x78] sm:$0xff]
      %v858 = vld [vmem:[%s5 + $0x80] sm:$0xff]
      %v859 = vld [vmem:[%s5 + $0x88] sm:$0xff]
      %v860 = vld [vmem:[%s5 + $0x90] sm:$0xff]
      %v861 = vld [vmem:[%s5 + $0x98] sm:$0xff]
      %v862 = vld [vmem:[%s5 + $0xa0] sm:$0xff]
      %v863 = vld [vmem:[%s5 + $0xa8] sm:$0xff]
      %v864 = vld [vmem:[%s5 + $0xb0] sm:$0xff]
      %v865 = vld [vmem:[%s5 + $0xb8] sm:$0xff]
      %v866 = vld [vmem:[%s5 + $0xc0] sm:$0xff]
      %v867 = vld [vmem:[%s5 + $0xc8] sm:$0xff]
      %v868 = vld [vmem:[%s5 + $0xd0] sm:$0xff]
      %v869 = vld [vmem:[%s5 + $0xd8] sm:$0xff]
      %v870 = vld [vmem:[%s5 + $0xe0] sm:$0xff]
      %v871 = vld [vmem:[%s5 + $0xe8] sm:$0xff]
      %v872 = vld [vmem:[%s5 + $0xf0] sm:$0xff]
      %v873 = vld [vmem:[%s5 + $0xf8] sm:$0xff]
      %v875 = vsel %vm833, %v842, 0
      %v878 = vsel %vm833, %v843, 0
      %v881 = vsel %vm833, %v844, 0
      %v884 = vsel %vm833, %v845, 0
      %v887 = vsel %vm833, %v846, 0
      %v890 = vsel %vm833, %v847, 0
      %v893 = vsel %vm833, %v848, 0
      %v896 = vsel %vm833, %v849, 0
      %v899 = vsel %vm833, %v850, 0
      %v902 = vsel %vm833, %v851, 0
      %v905 = vsel %vm833, %v852, 0
      %v908 = vsel %vm833, %v853, 0
      %v911 = vsel %vm833, %v854, 0
      %v914 = vsel %vm833, %v855, 0
      %v917 = vsel %vm833, %v856, 0
      %v920 = vsel %vm833, %v857, 0
      %v923 = vsel %vm833, %v858, 0
      %v926 = vsel %vm833, %v859, 0
      %v929 = vsel %vm833, %v860, 0
      %v932 = vsel %vm833, %v861, 0
      %v935 = vsel %vm833, %v862, 0
      %v938 = vsel %vm833, %v863, 0
      %v941 = vsel %vm833, %v864, 0
      %v944 = vsel %vm833, %v865, 0
      %v947 = vsel %vm833, %v866, 0
      %v950 = vsel %vm833, %v867, 0
      %v953 = vsel %vm833, %v868, 0
      %v956 = vsel %vm833, %v869, 0
      %v959 = vsel %vm833, %v870, 0
      %v962 = vsel %vm833, %v871, 0
      %v965 = vsel %vm833, %v872, 0
      %v968 = vsel %vm833, %v873, 0
      %970 = vmatprep.subr.mxu0 0.0
      %971 = vmatpush1.msra.mxu0 %v834
      %972 = vmatprep.subr.mxu0 0.0
      %973 = vmatpush1.msra.mxu0 %v835
      %974 = vmatprep.subr.mxu0 0.0
      %975 = vmatpush1.msra.mxu0 %v836
      %976 = vmatprep.subr.mxu0 0.0
      %977 = vmatpush1.msra.mxu0 %v837
      %978 = vmatprep.subr.mxu0 0.0
      %979 = vmatpush1.msra.mxu0 %v838
      %980 = vmatprep.subr.mxu0 0.0
      %981 = vmatpush1.msra.mxu0 %v839
      %982 = vmatprep.subr.mxu0 0.0
      %983 = vmatpush1.msra.mxu0 %v840
      %984 = vmatprep.subr.mxu0 0.0
      %985 = vmatpush1.msra.mxu0 %v841
      %986 = vmatprep.subr.mxu0 0.0
      %987 = vmatpush1.msra.mxu0 0.0
      %988 = vmatprep.subr.mxu0 0.0
      %989 = vmatpush1.msra.mxu0 0.0
      %990 = vmatprep.subr.mxu0 0.0
      %991 = vmatpush1.msra.mxu0 0.0
      %992 = vmatprep.subr.mxu0 0.0
      %993 = vmatpush1.msra.mxu0 0.0
      %994 = vmatprep.subr.mxu0 0.0
      %995 = vmatpush1.msra.mxu0 0.0
      %996 = vmatprep.subr.mxu0 0.0
      %997 = vmatpush1.msra.mxu0 0.0
      %998 = vmatprep.subr.mxu0 0.0
      %999 = vmatpush1.msra.mxu0 0.0
      %1000 = vmatprep.subr.mxu0 0.0
      %1001 = vmatpush1.msra.mxu0 0.0
      %1002 = vmatprep.subr.mxu0 0.0
      %1003 = vmatpush1.msra.mxu0 0.0
      %1004 = vmatprep.subr.mxu0 0.0
      %1005 = vmatpush1.msra.mxu0 0.0
      %1006 = vmatprep.subr.mxu0 0.0
      %1007 = vmatpush1.msra.mxu0 0.0
      %1008 = vmatprep.subr.mxu0 0.0
      %1009 = vmatpush1.msra.mxu0 0.0
      %1010 = vmatprep.subr.mxu0 0.0
      %1011 = vmatpush1.msra.mxu0 0.0
      %1012 = vmatprep.subr.mxu0 0.0
      %1013 = vmatpush1.msra.mxu0 0.0
      %1014 = vmatprep.subr.mxu0 0.0
      %1015 = vmatpush1.msra.mxu0 0.0
      %1016 = vmatprep.subr.mxu0 0.0
      %1017 = vmatpush1.msra.mxu0 0.0
      %1018 = vmatprep.subr.mxu0 0.0
      %1019 = vmatpush1.msra.mxu0 0.0
      %1020 = vmatprep.subr.mxu0 0.0
      %1021 = vmatpush1.msra.mxu0 0.0
      %1022 = vmatprep.subr.mxu0 0.0
      %1023 = vmatpush1.msra.mxu0 0.0
      %1024 = vmatprep.subr.mxu0 0.0
      %1025 = vmatpush1.msra.mxu0 0.0
      %1026 = vmatprep.subr.mxu0 0.0
      %1027 = vmatpush1.msra.mxu0 0.0
      %1028 = vmatprep.subr.mxu0 0.0
      %1029 = vmatpush1.msra.mxu0 0.0
      %1030 = vmatprep.subr.mxu0 0.0
      %1031 = vmatpush1.msra.mxu0 0.0
      %1032 = vmatprep.subr.mxu0 0.0
      %1033 = vmatpush1.msra.mxu0 0.0
      %1034 = vmatprep.mubr.f32.mxu0 0.0
      %1035 = vmatmul.mubr.f32.gmra.mrb[0].mxu0 %v875
      %v1036 = vpop.f32.mrb[0].mxu0
      %v1037 = vadd.f32 0.0, %v1036
      %v1038 = vpop.f32.mrb[0].mxu0
      %1039 = vmatprep.mubr.f32.mxu0 0.0
      %1040 = vmatmul.mubr.f32.gmra.mrb[0].mxu0 %v878
      %v1041 = vpop.f32.mrb[0].mxu0
      %v1042 = vadd.f32 0.0, %v1041
      %v1043 = vpop.f32.mrb[0].mxu0
      %1044 = vmatprep.mubr.f32.mxu0 0.0
      %1045 = vmatmul.mubr.f32.gmra.mrb[0].mxu0 %v881
      %v1046 = vpop.f32.mrb[0].mxu0
      %v1047 = vadd.f32 0.0, %v1046
      %v1048 = vpop.f32.mrb[0].mxu0
      %1049 = vmatprep.mubr.f32.mxu0 0.0
      %1050 = vmatmul.mubr.f32.gmra.mrb[0].mxu0 %v884
      %v1051 = vpop.f32.mrb[0].mxu0
      %v1052 = vadd.f32 0.0, %v1051
      %v1053 = vpop.f32.mrb[0].mxu0
      %1054 = vmatprep.mubr.f32.mxu0 0.0
      %1055 = vmatmul.mubr.f32.gmra.mrb[0].mxu0 %v887
      %v1056 = vpop.f32.mrb[0].mxu0
      %v1057 = vadd.f32 0.0, %v1056
      %v1058 = vpop.f32.mrb[0].mxu0
      %1059 = vmatprep.mubr.f32.mxu0 0.0
      %1060 = vmatmul.mubr.f32.gmra.mrb[0].mxu0 %v890
      %v1061 = vpop.f32.mrb[0].mxu0
      %v1062 = vadd.f32 0.0, %v1061
      %v1063 = vpop.f32.mrb[0].mxu0
      %1064 = vmatprep.mubr.f32.mxu0 0.0
      %1065 = vmatmul.mubr.f32.gmra.mrb[0].mxu0 %v893
      %v1066 = vpop.f32.mrb[0].mxu0
      %v1067 = vadd.f32 0.0, %v1066
      %v1068 = vpop.f32.mrb[0].mxu0
      %1069 = vmatprep.mubr.f32.mxu0 0.0
      %1070 = vmatmul.mubr.f32.gmra.mrb[0].mxu0 %v896
      %v1071 = vpop.f32.mrb[0].mxu0
      %v1072 = vadd.f32 0.0, %v1071
      %v1073 = vpop.f32.mrb[0].mxu0
      %1074 = vmatprep.mubr.f32.mxu0 0.0
      %1075 = vmatmul.mubr.f32.gmra.mrb[0].mxu0 %v899
      %v1076 = vpop.f32.mrb[0].mxu0
      %v1077 = vadd.f32 0.0, %v1076
      %v1078 = vpop.f32.mrb[0].mxu0
      %1079 = vmatprep.mubr.f32.mxu0 0.0
      %1080 = vmatmul.mubr.f32.gmra.mrb[0].mxu0 %v902
      %v1081 = vpop.f32.mrb[0].mxu0
      %v1082 = vadd.f32 0.0, %v1081
      %v1083 = vpop.f32.mrb[0].mxu0
      %1084 = vmatprep.mubr.f32.mxu0 0.0
      %1085 = vmatmul.mubr.f32.gmra.mrb[0].mxu0 %v905
      %v1086 = vpop.f32.mrb[0].mxu0
      %v1087 = vadd.f32 0.0, %v1086
      %v1088 = vpop.f32.mrb[0].mxu0
      %1089 = vmatprep.mubr.f32.mxu0 0.0
      %1090 = vmatmul.mubr.f32.gmra.mrb[0].mxu0 %v908
      %v1091 = vpop.f32.mrb[0].mxu0
      %v1092 = vadd.f32 0.0, %v1091
      %v1093 = vpop.f32.mrb[0].mxu0
      %1094 = vmatprep.mubr.f32.mxu0 0.0
      %1095 = vmatmul.mubr.f32.gmra.mrb[0].mxu0 %v911
      %v1096 = vpop.f32.mrb[0].mxu0
      %v1097 = vadd.f32 0.0, %v1096
      %v1098 = vpop.f32.mrb[0].mxu0
      %1099 = vmatprep.mubr.f32.mxu0 0.0
      %1100 = vmatmul.mubr.f32.gmra.mrb[0].mxu0 %v914
      %v1101 = vpop.f32.mrb[0].mxu0
      %v1102 = vadd.f32 0.0, %v1101
      %v1103 = vpop.f32.mrb[0].mxu0
      %1104 = vmatprep.mubr.f32.mxu0 0.0
      %1105 = vmatmul.mubr.f32.gmra.mrb[0].mxu0 %v917
      %v1106 = vpop.f32.mrb[0].mxu0
      %v1107 = vadd.f32 0.0, %v1106
      %v1108 = vpop.f32.mrb[0].mxu0
      %1109 = vmatprep.mubr.f32.mxu0 0.0
      %1110 = vmatmul.mubr.f32.gmra.mrb[0].mxu0 %v920
      %v1111 = vpop.f32.mrb[0].mxu0
      %v1112 = vadd.f32 0.0, %v1111
      %v1113 = vpop.f32.mrb[0].mxu0
      %1114 = vmatprep.mubr.f32.mxu0 0.0
      %1115 = vmatmul.mubr.f32.gmra.mrb[0].mxu0 %v923
      %v1116 = vpop.f32.mrb[0].mxu0
      %v1117 = vadd.f32 0.0, %v1116
      %v1118 = vpop.f32.mrb[0].mxu0
      %1119 = vmatprep.mubr.f32.mxu0 0.0
      %1120 = vmatmul.mubr.f32.gmra.mrb[0].mxu0 %v926
      %v1121 = vpop.f32.mrb[0].mxu0
      %v1122 = vadd.f32 0.0, %v1121
      %v1123 = vpop.f32.mrb[0].mxu0
      %1124 = vmatprep.mubr.f32.mxu0 0.0
      %1125 = vmatmul.mubr.f32.gmra.mrb[0].mxu0 %v929
      %v1126 = vpop.f32.mrb[0].mxu0
      %v1127 = vadd.f32 0.0, %v1126
      %v1128 = vpop.f32.mrb[0].mxu0
      %1129 = vmatprep.mubr.f32.mxu0 0.0
      %1130 = vmatmul.mubr.f32.gmra.mrb[0].mxu0 %v932
      %v1131 = vpop.f32.mrb[0].mxu0
      %v1132 = vadd.f32 0.0, %v1131
      %v1133 = vpop.f32.mrb[0].mxu0
      %1134 = vmatprep.mubr.f32.mxu0 0.0
      %1135 = vmatmul.mubr.f32.gmra.mrb[0].mxu0 %v935
      %v1136 = vpop.f32.mrb[0].mxu0
      %v1137 = vadd.f32 0.0, %v1136
      %v1138 = vpop.f32.mrb[0].mxu0
      %1139 = vmatprep.mubr.f32.mxu0 0.0
      %1140 = vmatmul.mubr.f32.gmra.mrb[0].mxu0 %v938
      %v1141 = vpop.f32.mrb[0].mxu0
      %v1142 = vadd.f32 0.0, %v1141
      %v1143 = vpop.f32.mrb[0].mxu0
      %1144 = vmatprep.mubr.f32.mxu0 0.0
      %1145 = vmatmul.mubr.f32.gmra.mrb[0].mxu0 %v941
      %v1146 = vpop.f32.mrb[0].mxu0
      %v1147 = vadd.f32 0.0, %v1146
      %v1148 = vpop.f32.mrb[0].mxu0
      %1149 = vmatprep.mubr.f32.mxu0 0.0
      %1150 = vmatmul.mubr.f32.gmra.mrb[0].mxu0 %v944
      %v1151 = vpop.f32.mrb[0].mxu0
      %v1152 = vadd.f32 0.0, %v1151
      %v1153 = vpop.f32.mrb[0].mxu0
      %1154 = vmatprep.mubr.f32.mxu0 0.0
      %1155 = vmatmul.mubr.f32.gmra.mrb[0].mxu0 %v947
      %v1156 = vpop.f32.mrb[0].mxu0
      %v1157 = vadd.f32 0.0, %v1156
      %v1158 = vpop.f32.mrb[0].mxu0
      %1159 = vmatprep.mubr.f32.mxu0 0.0
      %1160 = vmatmul.mubr.f32.gmra.mrb[0].mxu0 %v950
      %v1161 = vpop.f32.mrb[0].mxu0
      %v1162 = vadd.f32 0.0, %v1161
      %v1163 = vpop.f32.mrb[0].mxu0
      %1164 = vmatprep.mubr.f32.mxu0 0.0
      %1165 = vmatmul.mubr.f32.gmra.mrb[0].mxu0 %v953
      %v1166 = vpop.f32.mrb[0].mxu0
      %v1167 = vadd.f32 0.0, %v1166
      %v1168 = vpop.f32.mrb[0].mxu0
      %1169 = vmatprep.mubr.f32.mxu0 0.0
      %1170 = vmatmul.mubr.f32.gmra.mrb[0].mxu0 %v956
      %v1171 = vpop.f32.mrb[0].mxu0
      %v1172 = vadd.f32 0.0, %v1171
      %v1173 = vpop.f32.mrb[0].mxu0
      %1174 = vmatprep.mubr.f32.mxu0 0.0
      %1175 = vmatmul.mubr.f32.gmra.mrb[0].mxu0 %v959
      %v1176 = vpop.f32.mrb[0].mxu0
      %v1177 = vadd.f32 0.0, %v1176
      %v1178 = vpop.f32.mrb[0].mxu0
      %1179 = vmatprep.mubr.f32.mxu0 0.0
      %1180 = vmatmul.mubr.f32.gmra.mrb[0].mxu0 %v962
      %v1181 = vpop.f32.mrb[0].mxu0
      %v1182 = vadd.f32 0.0, %v1181
      %v1183 = vpop.f32.mrb[0].mxu0
      %1184 = vmatprep.mubr.f32.mxu0 0.0
      %1185 = vmatmul.mubr.f32.gmra.mrb[0].mxu0 %v965
      %v1186 = vpop.f32.mrb[0].mxu0
      %v1187 = vadd.f32 0.0, %v1186
      %v1188 = vpop.f32.mrb[0].mxu0
      %1189 = vmatprep.mubr.f32.mxu0 0.0
      %1190 = vmatmul.mubr.f32.gmra.mrb[0].mxu0 %v968
      %v1191 = vpop.f32.mrb[0].mxu0
      %v1192 = vadd.f32 0.0, %v1191
      %v1193 = vpop.f32.mrb[0].mxu0
      %1194 = vdwg.mxu0
      %v1195 = vmul.f32 %v1037, %v1037
      %v1196 = vmul.f32 %v1042, %v1042
      %v1197 = vmul.f32 %v1047, %v1047
      %v1198 = vmul.f32 %v1052, %v1052
      %v1199 = vmul.f32 %v1057, %v1057
      %v1200 = vmul.f32 %v1062, %v1062
      %v1201 = vmul.f32 %v1067, %v1067
      %v1202 = vmul.f32 %v1072, %v1072
      %v1203 = vmul.f32 %v1077, %v1077
      %v1204 = vmul.f32 %v1082, %v1082
      %v1205 = vmul.f32 %v1087, %v1087
      %v1206 = vmul.f32 %v1092, %v1092
      %v1207 = vmul.f32 %v1097, %v1097
      %v1208 = vmul.f32 %v1102, %v1102
      %v1209 = vmul.f32 %v1107, %v1107
      %v1210 = vmul.f32 %v1112, %v1112
      %v1211 = vmul.f32 %v1117, %v1117
      %v1212 = vmul.f32 %v1122, %v1122
      %v1213 = vmul.f32 %v1127, %v1127
      %v1214 = vmul.f32 %v1132, %v1132
      %v1215 = vmul.f32 %v1137, %v1137
      %v1216 = vmul.f32 %v1142, %v1142
      %v1217 = vmul.f32 %v1147, %v1147
      %v1218 = vmul.f32 %v1152, %v1152
      %v1219 = vmul.f32 %v1157, %v1157
      %v1220 = vmul.f32 %v1162, %v1162
      %v1221 = vmul.f32 %v1167, %v1167
      %v1222 = vmul.f32 %v1172, %v1172
      %v1223 = vmul.f32 %v1177, %v1177
      %v1224 = vmul.f32 %v1182, %v1182
      %v1225 = vmul.f32 %v1187, %v1187
      %v1226 = vmul.f32 %v1192, %v1192
      %v1227 = vsel %vm525, %v1195, 0.0
      %v1228 = vsel %vm525, %v1196, 0.0
      %v1229 = vadd.f32 %v1227, %v1228
      %v1230 = vsel %vm525, %v1197, 0.0
      %v1231 = vadd.f32 %v1229, %v1230
      %v1232 = vsel %vm525, %v1198, 0.0
      %v1233 = vadd.f32 %v1231, %v1232
      %v1234 = vrot.slane %v1233, 4
      %v1235 = vadd.f32 %v1233, %v1234
      %v1236 = vrot.slane %v1235, 2
      %v1237 = vadd.f32 %v1235, %v1236
      %v1238 = vrot.slane %v1237, 1
      %v1239 = vadd.f32 %v1237, %v1238
      %v1240 = vsel %vm525, %v1199, 0.0
      %v1241 = vsel %vm525, %v1200, 0.0
      %v1242 = vadd.f32 %v1240, %v1241
      %v1243 = vsel %vm525, %v1201, 0.0
      %v1244 = vadd.f32 %v1242, %v1243
      %v1245 = vsel %vm525, %v1202, 0.0
      %v1246 = vadd.f32 %v1244, %v1245
      %v1247 = vrot.slane %v1246, 4
      %v1248 = vadd.f32 %v1246, %v1247
      %v1249 = vrot.slane %v1248, 2
      %v1250 = vadd.f32 %v1248, %v1249
      %v1251 = vrot.slane %v1250, 1
      %v1252 = vadd.f32 %v1250, %v1251
      %v1253 = vsel %vm525, %v1203, 0.0
      %v1254 = vsel %vm525, %v1204, 0.0
      %v1255 = vadd.f32 %v1253, %v1254
      %v1256 = vsel %vm525, %v1205, 0.0
      %v1257 = vadd.f32 %v1255, %v1256
      %v1258 = vsel %vm525, %v1206, 0.0
      %v1259 = vadd.f32 %v1257, %v1258
      %v1260 = vrot.slane %v1259, 4
      %v1261 = vadd.f32 %v1259, %v1260
      %v1262 = vrot.slane %v1261, 2
      %v1263 = vadd.f32 %v1261, %v1262
      %v1264 = vrot.slane %v1263, 1
      %v1265 = vadd.f32 %v1263, %v1264
      %v1266 = vsel %vm525, %v1207, 0.0
      %v1267 = vsel %vm525, %v1208, 0.0
      %v1268 = vadd.f32 %v1266, %v1267
      %v1269 = vsel %vm525, %v1209, 0.0
      %v1270 = vadd.f32 %v1268, %v1269
      %v1271 = vsel %vm525, %v1210, 0.0
      %v1272 = vadd.f32 %v1270, %v1271
      %v1273 = vrot.slane %v1272, 4
      %v1274 = vadd.f32 %v1272, %v1273
      %v1275 = vrot.slane %v1274, 2
      %v1276 = vadd.f32 %v1274, %v1275
      %v1277 = vrot.slane %v1276, 1
      %v1278 = vadd.f32 %v1276, %v1277
      %v1279 = vsel %vm525, %v1211, 0.0
      %v1280 = vsel %vm525, %v1212, 0.0
      %v1281 = vadd.f32 %v1279, %v1280
      %v1282 = vsel %vm525, %v1213, 0.0
      %v1283 = vadd.f32 %v1281, %v1282
      %v1284 = vsel %vm525, %v1214, 0.0
      %v1285 = vadd.f32 %v1283, %v1284
      %v1286 = vrot.slane %v1285, 4
      %v1287 = vadd.f32 %v1285, %v1286
      %v1288 = vrot.slane %v1287, 2
      %v1289 = vadd.f32 %v1287, %v1288
      %v1290 = vrot.slane %v1289, 1
      %v1291 = vadd.f32 %v1289, %v1290
      %v1292 = vsel %vm525, %v1215, 0.0
      %v1293 = vsel %vm525, %v1216, 0.0
      %v1294 = vadd.f32 %v1292, %v1293
      %v1295 = vsel %vm525, %v1217, 0.0
      %v1296 = vadd.f32 %v1294, %v1295
      %v1297 = vsel %vm525, %v1218, 0.0
      %v1298 = vadd.f32 %v1296, %v1297
      %v1299 = vrot.slane %v1298, 4
      %v1300 = vadd.f32 %v1298, %v1299
      %v1301 = vrot.slane %v1300, 2
      %v1302 = vadd.f32 %v1300, %v1301
      %v1303 = vrot.slane %v1302, 1
      %v1304 = vadd.f32 %v1302, %v1303
      %v1305 = vsel %vm525, %v1219, 0.0
      %v1306 = vsel %vm525, %v1220, 0.0
      %v1307 = vadd.f32 %v1305, %v1306
      %v1308 = vsel %vm525, %v1221, 0.0
      %v1309 = vadd.f32 %v1307, %v1308
      %v1310 = vsel %vm525, %v1222, 0.0
      %v1311 = vadd.f32 %v1309, %v1310
      %v1312 = vrot.slane %v1311, 4
      %v1313 = vadd.f32 %v1311, %v1312
      %v1314 = vrot.slane %v1313, 2
      %v1315 = vadd.f32 %v1313, %v1314
      %v1316 = vrot.slane %v1315, 1
      %v1317 = vadd.f32 %v1315, %v1316
      %v1318 = vsel %vm525, %v1223, 0.0
      %v1319 = vsel %vm525, %v1224, 0.0
      %v1320 = vadd.f32 %v1318, %v1319
      %v1321 = vsel %vm525, %v1225, 0.0
      %v1322 = vadd.f32 %v1320, %v1321
      %v1323 = vsel %vm525, %v1226, 0.0
      %v1324 = vadd.f32 %v1322, %v1323
      %v1325 = vrot.slane %v1324, 4
      %v1326 = vadd.f32 %v1324, %v1325
      %v1327 = vrot.slane %v1326, 2
      %v1328 = vadd.f32 %v1326, %v1327
      %v1329 = vrot.slane %v1328, 1
      %v1330 = vadd.f32 %v1328, %v1329
      %vm1339 = vcmask 1041409
      %v1340 = vsel %vm1339, %v1252, %v1239
      %vm1341 = vcmask 1042434
      %v1342 = vsel %vm1341, %v1265, %v1340
      %vm1343 = vcmask 1043459
      %v1344 = vsel %vm1343, %v1278, %v1342
      %vm1345 = vcmask 1044484
      %v1346 = vsel %vm1345, %v1291, %v1344
      %vm1347 = vcmask 1045509
      %v1348 = vsel %vm1347, %v1304, %v1346
      %vm1349 = vcmask 1046534
      %v1350 = vsel %vm1349, %v1317, %v1348
      %vm1351 = vcmask 1047559
      %v1352 = vsel %vm1351, %v1330, %v1350
      %1354 = vrot.lane.b32.xlu0 %v1352, 32
      %v1355 = vpop.permute.xlu0 %1354
      %v1357 = vsel %vm525, %v1352, %v1355
      %vm1358 = vcmask 785664
      %v1359 = vsel %vm1358, %v1195, 0.0
      %v1360 = vsel %vm1358, %v1196, 0.0
      %v1361 = vadd.f32 %v1359, %v1360
      %v1362 = vsel %vm1358, %v1197, 0.0
      %v1363 = vadd.f32 %v1361, %v1362
      %v1364 = vsel %vm1358, %v1198, 0.0
      %v1365 = vadd.f32 %v1363, %v1364
      %v1366 = vrot.slane %v1365, 4
      %v1367 = vadd.f32 %v1365, %v1366
      %v1368 = vrot.slane %v1367, 2
      %v1369 = vadd.f32 %v1367, %v1368
      %v1370 = vrot.slane %v1369, 1
      %v1371 = vadd.f32 %v1369, %v1370
      %v1372 = vsel %vm1358, %v1199, 0.0
      %v1373 = vsel %vm1358, %v1200, 0.0
      %v1374 = vadd.f32 %v1372, %v1373
      %v1375 = vsel %vm1358, %v1201, 0.0
      %v1376 = vadd.f32 %v1374, %v1375
      %v1377 = vsel %vm1358, %v1202, 0.0
      %v1378 = vadd.f32 %v1376, %v1377
      %v1379 = vrot.slane %v1378, 4
      %v1380 = vadd.f32 %v1378, %v1379
      %v1381 = vrot.slane %v1380, 2
      %v1382 = vadd.f32 %v1380, %v1381
      %v1383 = vrot.slane %v1382, 1
      %v1384 = vadd.f32 %v1382, %v1383
      %v1385 = vsel %vm1358, %v1203, 0.0
      %v1386 = vsel %vm1358, %v1204, 0.0
      %v1387 = vadd.f32 %v1385, %v1386
      %v1388 = vsel %vm1358, %v1205, 0.0
      %v1389 = vadd.f32 %v1387, %v1388
      %v1390 = vsel %vm1358, %v1206, 0.0
      %v1391 = vadd.f32 %v1389, %v1390
      %v1392 = vrot.slane %v1391, 4
      %v1393 = vadd.f32 %v1391, %v1392
      %v1394 = vrot.slane %v1393, 2
      %v1395 = vadd.f32 %v1393, %v1394
      %v1396 = vrot.slane %v1395, 1
      %v1397 = vadd.f32 %v1395, %v1396
      %v1398 = vsel %vm1358, %v1207, 0.0
      %v1399 = vsel %vm1358, %v1208, 0.0
      %v1400 = vadd.f32 %v1398, %v1399
      %v1401 = vsel %vm1358, %v1209, 0.0
      %v1402 = vadd.f32 %v1400, %v1401
      %v1403 = vsel %vm1358, %v1210, 0.0
      %v1404 = vadd.f32 %v1402, %v1403
      %v1405 = vrot.slane %v1404, 4
      %v1406 = vadd.f32 %v1404, %v1405
      %v1407 = vrot.slane %v1406, 2
      %v1408 = vadd.f32 %v1406, %v1407
      %v1409 = vrot.slane %v1408, 1
      %v1410 = vadd.f32 %v1408, %v1409
      %v1411 = vsel %vm1358, %v1211, 0.0
      %v1412 = vsel %vm1358, %v1212, 0.0
      %v1413 = vadd.f32 %v1411, %v1412
      %v1414 = vsel %vm1358, %v1213, 0.0
      %v1415 = vadd.f32 %v1413, %v1414
      %v1416 = vsel %vm1358, %v1214, 0.0
      %v1417 = vadd.f32 %v1415, %v1416
      %v1418 = vrot.slane %v1417, 4
      %v1419 = vadd.f32 %v1417, %v1418
      %v1420 = vrot.slane %v1419, 2
      %v1421 = vadd.f32 %v1419, %v1420
      %v1422 = vrot.slane %v1421, 1
      %v1423 = vadd.f32 %v1421, %v1422
      %v1424 = vsel %vm1358, %v1215, 0.0
      %v1425 = vsel %vm1358, %v1216, 0.0
      %v1426 = vadd.f32 %v1424, %v1425
      %v1427 = vsel %vm1358, %v1217, 0.0
      %v1428 = vadd.f32 %v1426, %v1427
      %v1429 = vsel %vm1358, %v1218, 0.0
      %v1430 = vadd.f32 %v1428, %v1429
      %v1431 = vrot.slane %v1430, 4
      %v1432 = vadd.f32 %v1430, %v1431
      %v1433 = vrot.slane %v1432, 2
      %v1434 = vadd.f32 %v1432, %v1433
      %v1435 = vrot.slane %v1434, 1
      %v1436 = vadd.f32 %v1434, %v1435
      %v1437 = vsel %vm1358, %v1219, 0.0
      %v1438 = vsel %vm1358, %v1220, 0.0
      %v1439 = vadd.f32 %v1437, %v1438
      %v1440 = vsel %vm1358, %v1221, 0.0
      %v1441 = vadd.f32 %v1439, %v1440
      %v1442 = vsel %vm1358, %v1222, 0.0
      %v1443 = vadd.f32 %v1441, %v1442
      %v1444 = vrot.slane %v1443, 4
      %v1445 = vadd.f32 %v1443, %v1444
      %v1446 = vrot.slane %v1445, 2
      %v1447 = vadd.f32 %v1445, %v1446
      %v1448 = vrot.slane %v1447, 1
      %v1449 = vadd.f32 %v1447, %v1448
      %v1450 = vsel %vm1358, %v1223, 0.0
      %v1451 = vsel %vm1358, %v1224, 0.0
      %v1452 = vadd.f32 %v1450, %v1451
      %v1453 = vsel %vm1358, %v1225, 0.0
      %v1454 = vadd.f32 %v1452, %v1453
      %v1455 = vsel %vm1358, %v1226, 0.0
      %v1456 = vadd.f32 %v1454, %v1455
      %v1457 = vrot.slane %v1456, 4
      %v1458 = vadd.f32 %v1456, %v1457
      %v1459 = vrot.slane %v1458, 2
      %v1460 = vadd.f32 %v1458, %v1459
      %v1461 = vrot.slane %v1460, 1
      %v1462 = vadd.f32 %v1460, %v1461
      %1495 = vrot.lane.b32.xlu0 %v1037, 32
      %v1496 = vpop.permute.xlu0 %1495
      %1497 = vrot.lane.b32.xlu0 %v1042, 32
      %v1498 = vpop.permute.xlu0 %1497
      %1499 = vrot.lane.b32.xlu0 %v1047, 32
      %v1500 = vpop.permute.xlu0 %1499
      %1501 = vrot.lane.b32.xlu0 %v1052, 32
      %v1502 = vpop.permute.xlu0 %1501
      %1503 = vrot.lane.b32.xlu0 %v1057, 32
      %v1504 = vpop.permute.xlu0 %1503
      %1505 = vrot.lane.b32.xlu0 %v1062, 32
      %v1506 = vpop.permute.xlu0 %1505
      %1507 = vrot.lane.b32.xlu0 %v1067, 32
      %v1508 = vpop.permute.xlu0 %1507
      %1509 = vrot.lane.b32.xlu0 %v1072, 32
      %v1510 = vpop.permute.xlu0 %1509
      %1511 = vrot.lane.b32.xlu0 %v1077, 32
      %v1512 = vpop.permute.xlu0 %1511
      %1513 = vrot.lane.b32.xlu0 %v1082, 32
      %v1514 = vpop.permute.xlu0 %1513
      %1515 = vrot.lane.b32.xlu0 %v1087, 32
      %v1516 = vpop.permute.xlu0 %1515
      %1517 = vrot.lane.b32.xlu0 %v1092, 32
      %v1518 = vpop.permute.xlu0 %1517
      %1519 = vrot.lane.b32.xlu0 %v1097, 32
      %v1520 = vpop.permute.xlu0 %1519
      %1521 = vrot.lane.b32.xlu0 %v1102, 32
      %v1522 = vpop.permute.xlu0 %1521
      %1523 = vrot.lane.b32.xlu0 %v1107, 32
      %v1524 = vpop.permute.xlu0 %1523
      %1525 = vrot.lane.b32.xlu0 %v1112, 32
      %v1526 = vpop.permute.xlu0 %1525
      %1527 = vrot.lane.b32.xlu0 %v1117, 32
      %v1528 = vpop.permute.xlu0 %1527
      %1529 = vrot.lane.b32.xlu0 %v1122, 32
      %v1530 = vpop.permute.xlu0 %1529
      %1531 = vrot.lane.b32.xlu0 %v1127, 32
      %v1532 = vpop.permute.xlu0 %1531
      %1533 = vrot.lane.b32.xlu0 %v1132, 32
      %v1534 = vpop.permute.xlu0 %1533
      %1535 = vrot.lane.b32.xlu0 %v1137, 32
      %v1536 = vpop.permute.xlu0 %1535
      %1537 = vrot.lane.b32.xlu0 %v1142, 32
      %v1538 = vpop.permute.xlu0 %1537
      %1539 = vrot.lane.b32.xlu0 %v1147, 32
      %v1540 = vpop.permute.xlu0 %1539
      %1541 = vrot.lane.b32.xlu0 %v1152, 32
      %v1542 = vpop.permute.xlu0 %1541
      %1543 = vrot.lane.b32.xlu0 %v1157, 32
      %v1544 = vpop.permute.xlu0 %1543
      %1545 = vrot.lane.b32.xlu0 %v1162, 32
      %v1546 = vpop.permute.xlu0 %1545
      %1547 = vrot.lane.b32.xlu0 %v1167, 32
      %v1548 = vpop.permute.xlu0 %1547
      %1549 = vrot.lane.b32.xlu0 %v1172, 32
      %v1550 = vpop.permute.xlu0 %1549
      %1551 = vrot.lane.b32.xlu0 %v1177, 32
      %v1552 = vpop.permute.xlu0 %1551
      %1553 = vrot.lane.b32.xlu0 %v1182, 32
      %v1554 = vpop.permute.xlu0 %1553
      %1555 = vrot.lane.b32.xlu0 %v1187, 32
      %v1556 = vpop.permute.xlu0 %1555
      %1557 = vrot.lane.b32.xlu0 %v1192, 32
      %v1558 = vpop.permute.xlu0 %1557
      %v1591 = vsel %vm525, %v1037, %v1496
      %v1592 = vsel %vm525, %v1042, %v1498
      %v1593 = vsel %vm525, %v1047, %v1500
      %v1594 = vsel %vm525, %v1052, %v1502
      %v1595 = vsel %vm525, %v1057, %v1504
      %v1596 = vsel %vm525, %v1062, %v1506
      %v1597 = vsel %vm525, %v1067, %v1508
      %v1598 = vsel %vm525, %v1072, %v1510
      %v1599 = vsel %vm525, %v1077, %v1512
      %v1600 = vsel %vm525, %v1082, %v1514
      %v1601 = vsel %vm525, %v1087, %v1516
      %v1602 = vsel %vm525, %v1092, %v1518
      %v1603 = vsel %vm525, %v1097, %v1520
      %v1604 = vsel %vm525, %v1102, %v1522
      %v1605 = vsel %vm525, %v1107, %v1524
      %v1606 = vsel %vm525, %v1112, %v1526
      %v1607 = vsel %vm525, %v1117, %v1528
      %v1608 = vsel %vm525, %v1122, %v1530
      %v1609 = vsel %vm525, %v1127, %v1532
      %v1610 = vsel %vm525, %v1132, %v1534
      %v1611 = vsel %vm525, %v1137, %v1536
      %v1612 = vsel %vm525, %v1142, %v1538
      %v1613 = vsel %vm525, %v1147, %v1540
      %v1614 = vsel %vm525, %v1152, %v1542
      %v1615 = vsel %vm525, %v1157, %v1544
      %v1616 = vsel %vm525, %v1162, %v1546
      %v1617 = vsel %vm525, %v1167, %v1548
      %v1618 = vsel %vm525, %v1172, %v1550
      %v1619 = vsel %vm525, %v1177, %v1552
      %v1620 = vsel %vm525, %v1182, %v1554
      %v1621 = vsel %vm525, %v1187, %v1556
      %v1622 = vsel %vm525, %v1192, %v1558
      %1623 = vrot.lane.b32.xlu0 %v1037, 96
      %v1624 = vpop.permute.xlu0 %1623
      %1625 = vrot.lane.b32.xlu0 %v1042, 96
      %v1626 = vpop.permute.xlu0 %1625
      %1627 = vrot.lane.b32.xlu0 %v1047, 96
      %v1628 = vpop.permute.xlu0 %1627
      %1629 = vrot.lane.b32.xlu0 %v1052, 96
      %v1630 = vpop.permute.xlu0 %1629
      %v1635 = vmul.f32 %v1591, %v1624
      %v1636 = vmul.f32 %v1592, %v1626
      %v1637 = vmul.f32 %v1593, %v1628
      %v1638 = vmul.f32 %v1594, %v1630
      %v1639 = vmul.f32 %v1595, %v1624
      %v1640 = vmul.f32 %v1596, %v1626
      %v1641 = vmul.f32 %v1597, %v1628
      %v1642 = vmul.f32 %v1598, %v1630
      %v1643 = vmul.f32 %v1599, %v1624
      %v1644 = vmul.f32 %v1600, %v1626
      %v1645 = vmul.f32 %v1601, %v1628
      %v1646 = vmul.f32 %v1602, %v1630
      %v1647 = vmul.f32 %v1603, %v1624
      %v1648 = vmul.f32 %v1604, %v1626
      %v1649 = vmul.f32 %v1605, %v1628
      %v1650 = vmul.f32 %v1606, %v1630
      %v1651 = vmul.f32 %v1607, %v1624
      %v1652 = vmul.f32 %v1608, %v1626
      %v1653 = vmul.f32 %v1609, %v1628
      %v1654 = vmul.f32 %v1610, %v1630
      %v1655 = vmul.f32 %v1611, %v1624
      %v1656 = vmul.f32 %v1612, %v1626
      %v1657 = vmul.f32 %v1613, %v1628
      %v1658 = vmul.f32 %v1614, %v1630
      %v1659 = vmul.f32 %v1615, %v1624
      %v1660 = vmul.f32 %v1616, %v1626
      %v1661 = vmul.f32 %v1617, %v1628
      %v1662 = vmul.f32 %v1618, %v1630
      %v1663 = vmul.f32 %v1619, %v1624
      %v1664 = vmul.f32 %v1620, %v1626
      %v1665 = vmul.f32 %v1621, %v1628
      %v1666 = vmul.f32 %v1622, %v1630
      %v1667 = vsel %vm833, %v1635, 0.0
      %v1668 = vsel %vm833, %v1636, 0.0
      %v1669 = vadd.f32 %v1667, %v1668
      %v1670 = vsel %vm833, %v1637, 0.0
      %v1671 = vadd.f32 %v1669, %v1670
      %v1672 = vsel %vm833, %v1638, 0.0
      %v1673 = vadd.f32 %v1671, %v1672
      %v1674 = vrot.slane %v1673, 4
      %v1675 = vadd.f32 %v1673, %v1674
      %v1676 = vrot.slane %v1675, 2
      %v1677 = vadd.f32 %v1675, %v1676
      %v1678 = vrot.slane %v1677, 1
      %v1679 = vadd.f32 %v1677, %v1678
      %v1680 = vsel %vm833, %v1639, 0.0
      %v1681 = vsel %vm833, %v1640, 0.0
      %v1682 = vadd.f32 %v1680, %v1681
      %v1683 = vsel %vm833, %v1641, 0.0
      %v1684 = vadd.f32 %v1682, %v1683
      %v1685 = vsel %vm833, %v1642, 0.0
      %v1686 = vadd.f32 %v1684, %v1685
      %v1687 = vrot.slane %v1686, 4
      %v1688 = vadd.f32 %v1686, %v1687
      %v1689 = vrot.slane %v1688, 2
      %v1690 = vadd.f32 %v1688, %v1689
      %v1691 = vrot.slane %v1690, 1
      %v1692 = vadd.f32 %v1690, %v1691
      %v1693 = vsel %vm833, %v1643, 0.0
      %v1694 = vsel %vm833, %v1644, 0.0
      %v1695 = vadd.f32 %v1693, %v1694
      %v1696 = vsel %vm833, %v1645, 0.0
      %v1697 = vadd.f32 %v1695, %v1696
      %v1698 = vsel %vm833, %v1646, 0.0
      %v1699 = vadd.f32 %v1697, %v1698
      %v1700 = vrot.slane %v1699, 4
      %v1701 = vadd.f32 %v1699, %v1700
      %v1702 = vrot.slane %v1701, 2
      %v1703 = vadd.f32 %v1701, %v1702
      %v1704 = vrot.slane %v1703, 1
      %v1705 = vadd.f32 %v1703, %v1704
      %v1706 = vsel %vm833, %v1647, 0.0
      %v1707 = vsel %vm833, %v1648, 0.0
      %v1708 = vadd.f32 %v1706, %v1707
      %v1709 = vsel %vm833, %v1649, 0.0
      %v1710 = vadd.f32 %v1708, %v1709
      %v1711 = vsel %vm833, %v1650, 0.0
      %v1712 = vadd.f32 %v1710, %v1711
      %v1713 = vrot.slane %v1712, 4
      %v1714 = vadd.f32 %v1712, %v1713
      %v1715 = vrot.slane %v1714, 2
      %v1716 = vadd.f32 %v1714, %v1715
      %v1717 = vrot.slane %v1716, 1
      %v1718 = vadd.f32 %v1716, %v1717
      %v1719 = vsel %vm833, %v1651, 0.0
      %v1720 = vsel %vm833, %v1652, 0.0
      %v1721 = vadd.f32 %v1719, %v1720
      %v1722 = vsel %vm833, %v1653, 0.0
      %v1723 = vadd.f32 %v1721, %v1722
      %v1724 = vsel %vm833, %v1654, 0.0
      %v1725 = vadd.f32 %v1723, %v1724
      %v1726 = vrot.slane %v1725, 4
      %v1727 = vadd.f32 %v1725, %v1726
      %v1728 = vrot.slane %v1727, 2
      %v1729 = vadd.f32 %v1727, %v1728
      %v1730 = vrot.slane %v1729, 1
      %v1731 = vadd.f32 %v1729, %v1730
      %v1732 = vsel %vm833, %v1655, 0.0
      %v1733 = vsel %vm833, %v1656, 0.0
      %v1734 = vadd.f32 %v1732, %v1733
      %v1735 = vsel %vm833, %v1657, 0.0
      %v1736 = vadd.f32 %v1734, %v1735
      %v1737 = vsel %vm833, %v1658, 0.0
      %v1738 = vadd.f32 %v1736, %v1737
      %v1739 = vrot.slane %v1738, 4
      %v1740 = vadd.f32 %v1738, %v1739
      %v1741 = vrot.slane %v1740, 2
      %v1742 = vadd.f32 %v1740, %v1741
      %v1743 = vrot.slane %v1742, 1
      %v1744 = vadd.f32 %v1742, %v1743
      %v1745 = vsel %vm833, %v1659, 0.0
      %v1746 = vsel %vm833, %v1660, 0.0
      %v1747 = vadd.f32 %v1745, %v1746
      %v1748 = vsel %vm833, %v1661, 0.0
      %v1749 = vadd.f32 %v1747, %v1748
      %v1750 = vsel %vm833, %v1662, 0.0
      %v1751 = vadd.f32 %v1749, %v1750
      %v1752 = vrot.slane %v1751, 4
      %v1753 = vadd.f32 %v1751, %v1752
      %v1754 = vrot.slane %v1753, 2
      %v1755 = vadd.f32 %v1753, %v1754
      %v1756 = vrot.slane %v1755, 1
      %v1757 = vadd.f32 %v1755, %v1756
      %v1758 = vsel %vm833, %v1663, 0.0
      %v1759 = vsel %vm833, %v1664, 0.0
      %v1760 = vadd.f32 %v1758, %v1759
      %v1761 = vsel %vm833, %v1665, 0.0
      %v1762 = vadd.f32 %v1760, %v1761
      %v1763 = vsel %vm833, %v1666, 0.0
      %v1764 = vadd.f32 %v1762, %v1763
      %v1765 = vrot.slane %v1764, 4
      %v1766 = vadd.f32 %v1764, %v1765
      %v1767 = vrot.slane %v1766, 2
      %v1768 = vadd.f32 %v1766, %v1767
      %v1769 = vrot.slane %v1768, 1
      %v1770 = vadd.f32 %v1768, %v1769
      %1772 = vrot.lane.b32.xlu0 %v1371, 96
      %v1773 = vpop.permute.xlu0 %1772
      %v1775 = vadd.f32 %v1357, %v1773
      %v1776 = vmul.f32 %v1679, 2.0
      %v1777 = vmul.f32 %v1692, 2.0
      %v1778 = vmul.f32 %v1705, 2.0
      %v1779 = vmul.f32 %v1718, 2.0
      %v1780 = vmul.f32 %v1731, 2.0
      %v1781 = vmul.f32 %v1744, 2.0
      %v1782 = vmul.f32 %v1757, 2.0
      %v1783 = vmul.f32 %v1770, 2.0
      %v1792 = vsel %vm1339, %v1777, %v1776
      %v1793 = vsel %vm1341, %v1778, %v1792
      %v1794 = vsel %vm1343, %v1779, %v1793
      %v1795 = vsel %vm1345, %v1780, %v1794
      %v1796 = vsel %vm1347, %v1781, %v1795
      %v1797 = vsel %vm1349, %v1782, %v1796
      %v1798 = vsel %vm1351, %v1783, %v1797
      %v1800 = vsub.f32 %v1775, %v1798
      %v1801 = vmax.f32 %v1800, 1e-12
      %v1802 = vrsqrt.pop %v1801
      %v1803 = vmul.f32 %v1801, %v1802
      %vm1804 = vcmp.eq.f32.partialorder %v1801, inf
      %v1805 = vsel %vm1804, %v1801, %v1803
      %vm1806 = vcmp.eq.f32.partialorder %v1801, 0.0
      %v1807 = vand.u32 %v1801, 2147483648
      %v1808 = vsel %vm1806, %v1807, %v1805
      %v1809 = vmul.f32 %v1808, 0.5
      %v1810 = vtanh.pop %v1809
      %1811 = vrot.lane.b32.xlu0 %v1057, 96
      %v1812 = vpop.permute.xlu0 %1811
      %1813 = vrot.lane.b32.xlu0 %v1062, 96
      %v1814 = vpop.permute.xlu0 %1813
      %1815 = vrot.lane.b32.xlu0 %v1067, 96
      %v1816 = vpop.permute.xlu0 %1815
      %1817 = vrot.lane.b32.xlu0 %v1072, 96
      %v1818 = vpop.permute.xlu0 %1817
      %v1823 = vmul.f32 %v1591, %v1812
      %v1824 = vmul.f32 %v1592, %v1814
      %v1825 = vmul.f32 %v1593, %v1816
      %v1826 = vmul.f32 %v1594, %v1818
      %v1827 = vmul.f32 %v1595, %v1812
      %v1828 = vmul.f32 %v1596, %v1814
      %v1829 = vmul.f32 %v1597, %v1816
      %v1830 = vmul.f32 %v1598, %v1818
      %v1831 = vmul.f32 %v1599, %v1812
      %v1832 = vmul.f32 %v1600, %v1814
      %v1833 = vmul.f32 %v1601, %v1816
      %v1834 = vmul.f32 %v1602, %v1818
      %v1835 = vmul.f32 %v1603, %v1812
      %v1836 = vmul.f32 %v1604, %v1814
      %v1837 = vmul.f32 %v1605, %v1816
      %v1838 = vmul.f32 %v1606, %v1818
      %v1839 = vmul.f32 %v1607, %v1812
      %v1840 = vmul.f32 %v1608, %v1814
      %v1841 = vmul.f32 %v1609, %v1816
      %v1842 = vmul.f32 %v1610, %v1818
      %v1843 = vmul.f32 %v1611, %v1812
      %v1844 = vmul.f32 %v1612, %v1814
      %v1845 = vmul.f32 %v1613, %v1816
      %v1846 = vmul.f32 %v1614, %v1818
      %v1847 = vmul.f32 %v1615, %v1812
      %v1848 = vmul.f32 %v1616, %v1814
      %v1849 = vmul.f32 %v1617, %v1816
      %v1850 = vmul.f32 %v1618, %v1818
      %v1851 = vmul.f32 %v1619, %v1812
      %v1852 = vmul.f32 %v1620, %v1814
      %v1853 = vmul.f32 %v1621, %v1816
      %v1854 = vmul.f32 %v1622, %v1818
      %v1855 = vsel %vm833, %v1823, 0.0
      %v1856 = vsel %vm833, %v1824, 0.0
      %v1857 = vadd.f32 %v1855, %v1856
      %v1858 = vsel %vm833, %v1825, 0.0
      %v1859 = vadd.f32 %v1857, %v1858
      %v1860 = vsel %vm833, %v1826, 0.0
      %v1861 = vadd.f32 %v1859, %v1860
      %v1862 = vrot.slane %v1861, 4
      %v1863 = vadd.f32 %v1861, %v1862
      %v1864 = vrot.slane %v1863, 2
      %v1865 = vadd.f32 %v1863, %v1864
      %v1866 = vrot.slane %v1865, 1
      %v1867 = vadd.f32 %v1865, %v1866
      %v1868 = vsel %vm833, %v1827, 0.0
      %v1869 = vsel %vm833, %v1828, 0.0
      %v1870 = vadd.f32 %v1868, %v1869
      %v1871 = vsel %vm833, %v1829, 0.0
      %v1872 = vadd.f32 %v1870, %v1871
      %v1873 = vsel %vm833, %v1830, 0.0
      %v1874 = vadd.f32 %v1872, %v1873
      %v1875 = vrot.slane %v1874, 4
      %v1876 = vadd.f32 %v1874, %v1875
      %v1877 = vrot.slane %v1876, 2
      %v1878 = vadd.f32 %v1876, %v1877
      %v1879 = vrot.slane %v1878, 1
      %v1880 = vadd.f32 %v1878, %v1879
      %v1881 = vsel %vm833, %v1831, 0.0
      %v1882 = vsel %vm833, %v1832, 0.0
      %v1883 = vadd.f32 %v1881, %v1882
      %v1884 = vsel %vm833, %v1833, 0.0
      %v1885 = vadd.f32 %v1883, %v1884
      %v1886 = vsel %vm833, %v1834, 0.0
      %v1887 = vadd.f32 %v1885, %v1886
      %v1888 = vrot.slane %v1887, 4
      %v1889 = vadd.f32 %v1887, %v1888
      %v1890 = vrot.slane %v1889, 2
      %v1891 = vadd.f32 %v1889, %v1890
      %v1892 = vrot.slane %v1891, 1
      %v1893 = vadd.f32 %v1891, %v1892
      %v1894 = vsel %vm833, %v1835, 0.0
      %v1895 = vsel %vm833, %v1836, 0.0
      %v1896 = vadd.f32 %v1894, %v1895
      %v1897 = vsel %vm833, %v1837, 0.0
      %v1898 = vadd.f32 %v1896, %v1897
      %v1899 = vsel %vm833, %v1838, 0.0
      %v1900 = vadd.f32 %v1898, %v1899
      %v1901 = vrot.slane %v1900, 4
      %v1902 = vadd.f32 %v1900, %v1901
      %v1903 = vrot.slane %v1902, 2
      %v1904 = vadd.f32 %v1902, %v1903
      %v1905 = vrot.slane %v1904, 1
      %v1906 = vadd.f32 %v1904, %v1905
      %v1907 = vsel %vm833, %v1839, 0.0
      %v1908 = vsel %vm833, %v1840, 0.0
      %v1909 = vadd.f32 %v1907, %v1908
      %v1910 = vsel %vm833, %v1841, 0.0
      %v1911 = vadd.f32 %v1909, %v1910
      %v1912 = vsel %vm833, %v1842, 0.0
      %v1913 = vadd.f32 %v1911, %v1912
      %v1914 = vrot.slane %v1913, 4
      %v1915 = vadd.f32 %v1913, %v1914
      %v1916 = vrot.slane %v1915, 2
      %v1917 = vadd.f32 %v1915, %v1916
      %v1918 = vrot.slane %v1917, 1
      %v1919 = vadd.f32 %v1917, %v1918
      %v1920 = vsel %vm833, %v1843, 0.0
      %v1921 = vsel %vm833, %v1844, 0.0
      %v1922 = vadd.f32 %v1920, %v1921
      %v1923 = vsel %vm833, %v1845, 0.0
      %v1924 = vadd.f32 %v1922, %v1923
      %v1925 = vsel %vm833, %v1846, 0.0
      %v1926 = vadd.f32 %v1924, %v1925
      %v1927 = vrot.slane %v1926, 4
      %v1928 = vadd.f32 %v1926, %v1927
      %v1929 = vrot.slane %v1928, 2
      %v1930 = vadd.f32 %v1928, %v1929
      %v1931 = vrot.slane %v1930, 1
      %v1932 = vadd.f32 %v1930, %v1931
      %v1933 = vsel %vm833, %v1847, 0.0
      %v1934 = vsel %vm833, %v1848, 0.0
      %v1935 = vadd.f32 %v1933, %v1934
      %v1936 = vsel %vm833, %v1849, 0.0
      %v1937 = vadd.f32 %v1935, %v1936
      %v1938 = vsel %vm833, %v1850, 0.0
      %v1939 = vadd.f32 %v1937, %v1938
      %v1940 = vrot.slane %v1939, 4
      %v1941 = vadd.f32 %v1939, %v1940
      %v1942 = vrot.slane %v1941, 2
      %v1943 = vadd.f32 %v1941, %v1942
      %v1944 = vrot.slane %v1943, 1
      %v1945 = vadd.f32 %v1943, %v1944
      %v1946 = vsel %vm833, %v1851, 0.0
      %v1947 = vsel %vm833, %v1852, 0.0
      %v1948 = vadd.f32 %v1946, %v1947
      %v1949 = vsel %vm833, %v1853, 0.0
      %v1950 = vadd.f32 %v1948, %v1949
      %v1951 = vsel %vm833, %v1854, 0.0
      %v1952 = vadd.f32 %v1950, %v1951
      %v1953 = vrot.slane %v1952, 4
      %v1954 = vadd.f32 %v1952, %v1953
      %v1955 = vrot.slane %v1954, 2
      %v1956 = vadd.f32 %v1954, %v1955
      %v1957 = vrot.slane %v1956, 1
      %v1958 = vadd.f32 %v1956, %v1957
      %1960 = vrot.lane.b32.xlu0 %v1384, 96
      %v1961 = vpop.permute.xlu0 %1960
      %v1963 = vadd.f32 %v1357, %v1961
      %v1964 = vmul.f32 %v1867, 2.0
      %v1965 = vmul.f32 %v1880, 2.0
      %v1966 = vmul.f32 %v1893, 2.0
      %v1967 = vmul.f32 %v1906, 2.0
      %v1968 = vmul.f32 %v1919, 2.0
      %v1969 = vmul.f32 %v1932, 2.0
      %v1970 = vmul.f32 %v1945, 2.0
      %v1971 = vmul.f32 %v1958, 2.0
      %v1980 = vsel %vm1339, %v1965, %v1964
      %v1981 = vsel %vm1341, %v1966, %v1980
      %v1982 = vsel %vm1343, %v1967, %v1981
      %v1983 = vsel %vm1345, %v1968, %v1982
      %v1984 = vsel %vm1347, %v1969, %v1983
      %v1985 = vsel %vm1349, %v1970, %v1984
      %v1986 = vsel %vm1351, %v1971, %v1985
      %v1988 = vsub.f32 %v1963, %v1986
      %v1989 = vmax.f32 %v1988, 1e-12
      %v1990 = vrsqrt.pop %v1989
      %v1991 = vmul.f32 %v1989, %v1990
      %vm1992 = vcmp.eq.f32.partialorder %v1989, inf
      %v1993 = vsel %vm1992, %v1989, %v1991
      %vm1994 = vcmp.eq.f32.partialorder %v1989, 0.0
      %v1995 = vand.u32 %v1989, 2147483648
      %v1996 = vsel %vm1994, %v1995, %v1993
      %v1997 = vmul.f32 %v1996, 0.5
      %v1998 = vtanh.pop %v1997
      %1999 = vrot.lane.b32.xlu0 %v1077, 96
      %v2000 = vpop.permute.xlu0 %1999
      %2001 = vrot.lane.b32.xlu0 %v1082, 96
      %v2002 = vpop.permute.xlu0 %2001
      %2003 = vrot.lane.b32.xlu0 %v1087, 96
      %v2004 = vpop.permute.xlu0 %2003
      %2005 = vrot.lane.b32.xlu0 %v1092, 96
      %v2006 = vpop.permute.xlu0 %2005
      %v2011 = vmul.f32 %v1591, %v2000
      %v2012 = vmul.f32 %v1592, %v2002
      %v2013 = vmul.f32 %v1593, %v2004
      %v2014 = vmul.f32 %v1594, %v2006
      %v2015 = vmul.f32 %v1595, %v2000
      %v2016 = vmul.f32 %v1596, %v2002
      %v2017 = vmul.f32 %v1597, %v2004
      %v2018 = vmul.f32 %v1598, %v2006
      %v2019 = vmul.f32 %v1599, %v2000
      %v2020 = vmul.f32 %v1600, %v2002
      %v2021 = vmul.f32 %v1601, %v2004
      %v2022 = vmul.f32 %v1602, %v2006
      %v2023 = vmul.f32 %v1603, %v2000
      %v2024 = vmul.f32 %v1604, %v2002
      %v2025 = vmul.f32 %v1605, %v2004
      %v2026 = vmul.f32 %v1606, %v2006
      %v2027 = vmul.f32 %v1607, %v2000
      %v2028 = vmul.f32 %v1608, %v2002
      %v2029 = vmul.f32 %v1609, %v2004
      %v2030 = vmul.f32 %v1610, %v2006
      %v2031 = vmul.f32 %v1611, %v2000
      %v2032 = vmul.f32 %v1612, %v2002
      %v2033 = vmul.f32 %v1613, %v2004
      %v2034 = vmul.f32 %v1614, %v2006
      %v2035 = vmul.f32 %v1615, %v2000
      %v2036 = vmul.f32 %v1616, %v2002
      %v2037 = vmul.f32 %v1617, %v2004
      %v2038 = vmul.f32 %v1618, %v2006
      %v2039 = vmul.f32 %v1619, %v2000
      %v2040 = vmul.f32 %v1620, %v2002
      %v2041 = vmul.f32 %v1621, %v2004
      %v2042 = vmul.f32 %v1622, %v2006
      %v2043 = vsel %vm833, %v2011, 0.0
      %v2044 = vsel %vm833, %v2012, 0.0
      %v2045 = vadd.f32 %v2043, %v2044
      %v2046 = vsel %vm833, %v2013, 0.0
      %v2047 = vadd.f32 %v2045, %v2046
      %v2048 = vsel %vm833, %v2014, 0.0
      %v2049 = vadd.f32 %v2047, %v2048
      %v2050 = vrot.slane %v2049, 4
      %v2051 = vadd.f32 %v2049, %v2050
      %v2052 = vrot.slane %v2051, 2
      %v2053 = vadd.f32 %v2051, %v2052
      %v2054 = vrot.slane %v2053, 1
      %v2055 = vadd.f32 %v2053, %v2054
      %v2056 = vsel %vm833, %v2015, 0.0
      %v2057 = vsel %vm833, %v2016, 0.0
      %v2058 = vadd.f32 %v2056, %v2057
      %v2059 = vsel %vm833, %v2017, 0.0
      %v2060 = vadd.f32 %v2058, %v2059
      %v2061 = vsel %vm833, %v2018, 0.0
      %v2062 = vadd.f32 %v2060, %v2061
      %v2063 = vrot.slane %v2062, 4
      %v2064 = vadd.f32 %v2062, %v2063
      %v2065 = vrot.slane %v2064, 2
      %v2066 = vadd.f32 %v2064, %v2065
      %v2067 = vrot.slane %v2066, 1
      %v2068 = vadd.f32 %v2066, %v2067
      %v2069 = vsel %vm833, %v2019, 0.0
      %v2070 = vsel %vm833, %v2020, 0.0
      %v2071 = vadd.f32 %v2069, %v2070
      %v2072 = vsel %vm833, %v2021, 0.0
      %v2073 = vadd.f32 %v2071, %v2072
      %v2074 = vsel %vm833, %v2022, 0.0
      %v2075 = vadd.f32 %v2073, %v2074
      %v2076 = vrot.slane %v2075, 4
      %v2077 = vadd.f32 %v2075, %v2076
      %v2078 = vrot.slane %v2077, 2
      %v2079 = vadd.f32 %v2077, %v2078
      %v2080 = vrot.slane %v2079, 1
      %v2081 = vadd.f32 %v2079, %v2080
      %v2082 = vsel %vm833, %v2023, 0.0
      %v2083 = vsel %vm833, %v2024, 0.0
      %v2084 = vadd.f32 %v2082, %v2083
      %v2085 = vsel %vm833, %v2025, 0.0
      %v2086 = vadd.f32 %v2084, %v2085
      %v2087 = vsel %vm833, %v2026, 0.0
      %v2088 = vadd.f32 %v2086, %v2087
      %v2089 = vrot.slane %v2088, 4
      %v2090 = vadd.f32 %v2088, %v2089
      %v2091 = vrot.slane %v2090, 2
      %v2092 = vadd.f32 %v2090, %v2091
      %v2093 = vrot.slane %v2092, 1
      %v2094 = vadd.f32 %v2092, %v2093
      %v2095 = vsel %vm833, %v2027, 0.0
      %v2096 = vsel %vm833, %v2028, 0.0
      %v2097 = vadd.f32 %v2095, %v2096
      %v2098 = vsel %vm833, %v2029, 0.0
      %v2099 = vadd.f32 %v2097, %v2098
      %v2100 = vsel %vm833, %v2030, 0.0
      %v2101 = vadd.f32 %v2099, %v2100
      %v2102 = vrot.slane %v2101, 4
      %v2103 = vadd.f32 %v2101, %v2102
      %v2104 = vrot.slane %v2103, 2
      %v2105 = vadd.f32 %v2103, %v2104
      %v2106 = vrot.slane %v2105, 1
      %v2107 = vadd.f32 %v2105, %v2106
      %v2108 = vsel %vm833, %v2031, 0.0
      %v2109 = vsel %vm833, %v2032, 0.0
      %v2110 = vadd.f32 %v2108, %v2109
      %v2111 = vsel %vm833, %v2033, 0.0
      %v2112 = vadd.f32 %v2110, %v2111
      %v2113 = vsel %vm833, %v2034, 0.0
      %v2114 = vadd.f32 %v2112, %v2113
      %v2115 = vrot.slane %v2114, 4
      %v2116 = vadd.f32 %v2114, %v2115
      %v2117 = vrot.slane %v2116, 2
      %v2118 = vadd.f32 %v2116, %v2117
      %v2119 = vrot.slane %v2118, 1
      %v2120 = vadd.f32 %v2118, %v2119
      %v2121 = vsel %vm833, %v2035, 0.0
      %v2122 = vsel %vm833, %v2036, 0.0
      %v2123 = vadd.f32 %v2121, %v2122
      %v2124 = vsel %vm833, %v2037, 0.0
      %v2125 = vadd.f32 %v2123, %v2124
      %v2126 = vsel %vm833, %v2038, 0.0
      %v2127 = vadd.f32 %v2125, %v2126
      %v2128 = vrot.slane %v2127, 4
      %v2129 = vadd.f32 %v2127, %v2128
      %v2130 = vrot.slane %v2129, 2
      %v2131 = vadd.f32 %v2129, %v2130
      %v2132 = vrot.slane %v2131, 1
      %v2133 = vadd.f32 %v2131, %v2132
      %v2134 = vsel %vm833, %v2039, 0.0
      %v2135 = vsel %vm833, %v2040, 0.0
      %v2136 = vadd.f32 %v2134, %v2135
      %v2137 = vsel %vm833, %v2041, 0.0
      %v2138 = vadd.f32 %v2136, %v2137
      %v2139 = vsel %vm833, %v2042, 0.0
      %v2140 = vadd.f32 %v2138, %v2139
      %v2141 = vrot.slane %v2140, 4
      %v2142 = vadd.f32 %v2140, %v2141
      %v2143 = vrot.slane %v2142, 2
      %v2144 = vadd.f32 %v2142, %v2143
      %v2145 = vrot.slane %v2144, 1
      %v2146 = vadd.f32 %v2144, %v2145
      %2148 = vrot.lane.b32.xlu0 %v1397, 96
      %v2149 = vpop.permute.xlu0 %2148
      %v2151 = vadd.f32 %v1357, %v2149
      %v2152 = vmul.f32 %v2055, 2.0
      %v2153 = vmul.f32 %v2068, 2.0
      %v2154 = vmul.f32 %v2081, 2.0
      %v2155 = vmul.f32 %v2094, 2.0
      %v2156 = vmul.f32 %v2107, 2.0
      %v2157 = vmul.f32 %v2120, 2.0
      %v2158 = vmul.f32 %v2133, 2.0
      %v2159 = vmul.f32 %v2146, 2.0
      %v2168 = vsel %vm1339, %v2153, %v2152
      %v2169 = vsel %vm1341, %v2154, %v2168
      %v2170 = vsel %vm1343, %v2155, %v2169
      %v2171 = vsel %vm1345, %v2156, %v2170
      %v2172 = vsel %vm1347, %v2157, %v2171
      %v2173 = vsel %vm1349, %v2158, %v2172
      %v2174 = vsel %vm1351, %v2159, %v2173
      %v2176 = vsub.f32 %v2151, %v2174
      %v2177 = vmax.f32 %v2176, 1e-12
      %v2178 = vrsqrt.pop %v2177
      %v2179 = vmul.f32 %v2177, %v2178
      %vm2180 = vcmp.eq.f32.partialorder %v2177, inf
      %v2181 = vsel %vm2180, %v2177, %v2179
      %vm2182 = vcmp.eq.f32.partialorder %v2177, 0.0
      %v2183 = vand.u32 %v2177, 2147483648
      %v2184 = vsel %vm2182, %v2183, %v2181
      %v2185 = vmul.f32 %v2184, 0.5
      %v2186 = vtanh.pop %v2185
      %2187 = vrot.lane.b32.xlu0 %v1097, 96
      %v2188 = vpop.permute.xlu0 %2187
      %2189 = vrot.lane.b32.xlu0 %v1102, 96
      %v2190 = vpop.permute.xlu0 %2189
      %2191 = vrot.lane.b32.xlu0 %v1107, 96
      %v2192 = vpop.permute.xlu0 %2191
      %2193 = vrot.lane.b32.xlu0 %v1112, 96
      %v2194 = vpop.permute.xlu0 %2193
      %v2199 = vmul.f32 %v1591, %v2188
      %v2200 = vmul.f32 %v1592, %v2190
      %v2201 = vmul.f32 %v1593, %v2192
      %v2202 = vmul.f32 %v1594, %v2194
      %v2203 = vmul.f32 %v1595, %v2188
      %v2204 = vmul.f32 %v1596, %v2190
      %v2205 = vmul.f32 %v1597, %v2192
      %v2206 = vmul.f32 %v1598, %v2194
      %v2207 = vmul.f32 %v1599, %v2188
      %v2208 = vmul.f32 %v1600, %v2190
      %v2209 = vmul.f32 %v1601, %v2192
      %v2210 = vmul.f32 %v1602, %v2194
      %v2211 = vmul.f32 %v1603, %v2188
      %v2212 = vmul.f32 %v1604, %v2190
      %v2213 = vmul.f32 %v1605, %v2192
      %v2214 = vmul.f32 %v1606, %v2194
      %v2215 = vmul.f32 %v1607, %v2188
      %v2216 = vmul.f32 %v1608, %v2190
      %v2217 = vmul.f32 %v1609, %v2192
      %v2218 = vmul.f32 %v1610, %v2194
      %v2219 = vmul.f32 %v1611, %v2188
      %v2220 = vmul.f32 %v1612, %v2190
      %v2221 = vmul.f32 %v1613, %v2192
      %v2222 = vmul.f32 %v1614, %v2194
      %v2223 = vmul.f32 %v1615, %v2188
      %v2224 = vmul.f32 %v1616, %v2190
      %v2225 = vmul.f32 %v1617, %v2192
      %v2226 = vmul.f32 %v1618, %v2194
      %v2227 = vmul.f32 %v1619, %v2188
      %v2228 = vmul.f32 %v1620, %v2190
      %v2229 = vmul.f32 %v1621, %v2192
      %v2230 = vmul.f32 %v1622, %v2194
      %v2231 = vsel %vm833, %v2199, 0.0
      %v2232 = vsel %vm833, %v2200, 0.0
      %v2233 = vadd.f32 %v2231, %v2232
      %v2234 = vsel %vm833, %v2201, 0.0
      %v2235 = vadd.f32 %v2233, %v2234
      %v2236 = vsel %vm833, %v2202, 0.0
      %v2237 = vadd.f32 %v2235, %v2236
      %v2238 = vrot.slane %v2237, 4
      %v2239 = vadd.f32 %v2237, %v2238
      %v2240 = vrot.slane %v2239, 2
      %v2241 = vadd.f32 %v2239, %v2240
      %v2242 = vrot.slane %v2241, 1
      %v2243 = vadd.f32 %v2241, %v2242
      %v2244 = vsel %vm833, %v2203, 0.0
      %v2245 = vsel %vm833, %v2204, 0.0
      %v2246 = vadd.f32 %v2244, %v2245
      %v2247 = vsel %vm833, %v2205, 0.0
      %v2248 = vadd.f32 %v2246, %v2247
      %v2249 = vsel %vm833, %v2206, 0.0
      %v2250 = vadd.f32 %v2248, %v2249
      %v2251 = vrot.slane %v2250, 4
      %v2252 = vadd.f32 %v2250, %v2251
      %v2253 = vrot.slane %v2252, 2
      %v2254 = vadd.f32 %v2252, %v2253
      %v2255 = vrot.slane %v2254, 1
      %v2256 = vadd.f32 %v2254, %v2255
      %v2257 = vsel %vm833, %v2207, 0.0
      %v2258 = vsel %vm833, %v2208, 0.0
      %v2259 = vadd.f32 %v2257, %v2258
      %v2260 = vsel %vm833, %v2209, 0.0
      %v2261 = vadd.f32 %v2259, %v2260
      %v2262 = vsel %vm833, %v2210, 0.0
      %v2263 = vadd.f32 %v2261, %v2262
      %v2264 = vrot.slane %v2263, 4
      %v2265 = vadd.f32 %v2263, %v2264
      %v2266 = vrot.slane %v2265, 2
      %v2267 = vadd.f32 %v2265, %v2266
      %v2268 = vrot.slane %v2267, 1
      %v2269 = vadd.f32 %v2267, %v2268
      %v2270 = vsel %vm833, %v2211, 0.0
      %v2271 = vsel %vm833, %v2212, 0.0
      %v2272 = vadd.f32 %v2270, %v2271
      %v2273 = vsel %vm833, %v2213, 0.0
      %v2274 = vadd.f32 %v2272, %v2273
      %v2275 = vsel %vm833, %v2214, 0.0
      %v2276 = vadd.f32 %v2274, %v2275
      %v2277 = vrot.slane %v2276, 4
      %v2278 = vadd.f32 %v2276, %v2277
      %v2279 = vrot.slane %v2278, 2
      %v2280 = vadd.f32 %v2278, %v2279
      %v2281 = vrot.slane %v2280, 1
      %v2282 = vadd.f32 %v2280, %v2281
      %v2283 = vsel %vm833, %v2215, 0.0
      %v2284 = vsel %vm833, %v2216, 0.0
      %v2285 = vadd.f32 %v2283, %v2284
      %v2286 = vsel %vm833, %v2217, 0.0
      %v2287 = vadd.f32 %v2285, %v2286
      %v2288 = vsel %vm833, %v2218, 0.0
      %v2289 = vadd.f32 %v2287, %v2288
      %v2290 = vrot.slane %v2289, 4
      %v2291 = vadd.f32 %v2289, %v2290
      %v2292 = vrot.slane %v2291, 2
      %v2293 = vadd.f32 %v2291, %v2292
      %v2294 = vrot.slane %v2293, 1
      %v2295 = vadd.f32 %v2293, %v2294
      %v2296 = vsel %vm833, %v2219, 0.0
      %v2297 = vsel %vm833, %v2220, 0.0
      %v2298 = vadd.f32 %v2296, %v2297
      %v2299 = vsel %vm833, %v2221, 0.0
      %v2300 = vadd.f32 %v2298, %v2299
      %v2301 = vsel %vm833, %v2222, 0.0
      %v2302 = vadd.f32 %v2300, %v2301
      %v2303 = vrot.slane %v2302, 4
      %v2304 = vadd.f32 %v2302, %v2303
      %v2305 = vrot.slane %v2304, 2
      %v2306 = vadd.f32 %v2304, %v2305
      %v2307 = vrot.slane %v2306, 1
      %v2308 = vadd.f32 %v2306, %v2307
      %v2309 = vsel %vm833, %v2223, 0.0
      %v2310 = vsel %vm833, %v2224, 0.0
      %v2311 = vadd.f32 %v2309, %v2310
      %v2312 = vsel %vm833, %v2225, 0.0
      %v2313 = vadd.f32 %v2311, %v2312
      %v2314 = vsel %vm833, %v2226, 0.0
      %v2315 = vadd.f32 %v2313, %v2314
      %v2316 = vrot.slane %v2315, 4
      %v2317 = vadd.f32 %v2315, %v2316
      %v2318 = vrot.slane %v2317, 2
      %v2319 = vadd.f32 %v2317, %v2318
      %v2320 = vrot.slane %v2319, 1
      %v2321 = vadd.f32 %v2319, %v2320
      %v2322 = vsel %vm833, %v2227, 0.0
      %v2323 = vsel %vm833, %v2228, 0.0
      %v2324 = vadd.f32 %v2322, %v2323
      %v2325 = vsel %vm833, %v2229, 0.0
      %v2326 = vadd.f32 %v2324, %v2325
      %v2327 = vsel %vm833, %v2230, 0.0
      %v2328 = vadd.f32 %v2326, %v2327
      %v2329 = vrot.slane %v2328, 4
      %v2330 = vadd.f32 %v2328, %v2329
      %v2331 = vrot.slane %v2330, 2
      %v2332 = vadd.f32 %v2330, %v2331
      %v2333 = vrot.slane %v2332, 1
      %v2334 = vadd.f32 %v2332, %v2333
      %2336 = vrot.lane.b32.xlu0 %v1410, 96
      %v2337 = vpop.permute.xlu0 %2336
      %v2339 = vadd.f32 %v1357, %v2337
      %v2340 = vmul.f32 %v2243, 2.0
      %v2341 = vmul.f32 %v2256, 2.0
      %v2342 = vmul.f32 %v2269, 2.0
      %v2343 = vmul.f32 %v2282, 2.0
      %v2344 = vmul.f32 %v2295, 2.0
      %v2345 = vmul.f32 %v2308, 2.0
      %v2346 = vmul.f32 %v2321, 2.0
      %v2347 = vmul.f32 %v2334, 2.0
      %v2356 = vsel %vm1339, %v2341, %v2340
      %v2357 = vsel %vm1341, %v2342, %v2356
      %v2358 = vsel %vm1343, %v2343, %v2357
      %v2359 = vsel %vm1345, %v2344, %v2358
      %v2360 = vsel %vm1347, %v2345, %v2359
      %v2361 = vsel %vm1349, %v2346, %v2360
      %v2362 = vsel %vm1351, %v2347, %v2361
      %v2364 = vsub.f32 %v2339, %v2362
      %v2365 = vmax.f32 %v2364, 1e-12
      %v2366 = vrsqrt.pop %v2365
      %v2367 = vmul.f32 %v2365, %v2366
      %vm2368 = vcmp.eq.f32.partialorder %v2365, inf
      %v2369 = vsel %vm2368, %v2365, %v2367
      %vm2370 = vcmp.eq.f32.partialorder %v2365, 0.0
      %v2371 = vand.u32 %v2365, 2147483648
      %v2372 = vsel %vm2370, %v2371, %v2369
      %v2373 = vmul.f32 %v2372, 0.5
      %v2374 = vtanh.pop %v2373
      %2375 = vrot.lane.b32.xlu0 %v1117, 96
      %v2376 = vpop.permute.xlu0 %2375
      %2377 = vrot.lane.b32.xlu0 %v1122, 96
      %v2378 = vpop.permute.xlu0 %2377
      %2379 = vrot.lane.b32.xlu0 %v1127, 96
      %v2380 = vpop.permute.xlu0 %2379
      %2381 = vrot.lane.b32.xlu0 %v1132, 96
      %v2382 = vpop.permute.xlu0 %2381
      %v2387 = vmul.f32 %v1591, %v2376
      %v2388 = vmul.f32 %v1592, %v2378
      %v2389 = vmul.f32 %v1593, %v2380
      %v2390 = vmul.f32 %v1594, %v2382
      %v2391 = vmul.f32 %v1595, %v2376
      %v2392 = vmul.f32 %v1596, %v2378
      %v2393 = vmul.f32 %v1597, %v2380
      %v2394 = vmul.f32 %v1598, %v2382
      %v2395 = vmul.f32 %v1599, %v2376
      %v2396 = vmul.f32 %v1600, %v2378
      %v2397 = vmul.f32 %v1601, %v2380
      %v2398 = vmul.f32 %v1602, %v2382
      %v2399 = vmul.f32 %v1603, %v2376
      %v2400 = vmul.f32 %v1604, %v2378
      %v2401 = vmul.f32 %v1605, %v2380
      %v2402 = vmul.f32 %v1606, %v2382
      %v2403 = vmul.f32 %v1607, %v2376
      %v2404 = vmul.f32 %v1608, %v2378
      %v2405 = vmul.f32 %v1609, %v2380
      %v2406 = vmul.f32 %v1610, %v2382
      %v2407 = vmul.f32 %v1611, %v2376
      %v2408 = vmul.f32 %v1612, %v2378
      %v2409 = vmul.f32 %v1613, %v2380
      %v2410 = vmul.f32 %v1614, %v2382
      %v2411 = vmul.f32 %v1615, %v2376
      %v2412 = vmul.f32 %v1616, %v2378
      %v2413 = vmul.f32 %v1617, %v2380
      %v2414 = vmul.f32 %v1618, %v2382
      %v2415 = vmul.f32 %v1619, %v2376
      %v2416 = vmul.f32 %v1620, %v2378
      %v2417 = vmul.f32 %v1621, %v2380
      %v2418 = vmul.f32 %v1622, %v2382
      %v2419 = vsel %vm833, %v2387, 0.0
      %v2420 = vsel %vm833, %v2388, 0.0
      %v2421 = vadd.f32 %v2419, %v2420
      %v2422 = vsel %vm833, %v2389, 0.0
      %v2423 = vadd.f32 %v2421, %v2422
      %v2424 = vsel %vm833, %v2390, 0.0
      %v2425 = vadd.f32 %v2423, %v2424
      %v2426 = vrot.slane %v2425, 4
      %v2427 = vadd.f32 %v2425, %v2426
      %v2428 = vrot.slane %v2427, 2
      %v2429 = vadd.f32 %v2427, %v2428
      %v2430 = vrot.slane %v2429, 1
      %v2431 = vadd.f32 %v2429, %v2430
      %v2432 = vsel %vm833, %v2391, 0.0
      %v2433 = vsel %vm833, %v2392, 0.0
      %v2434 = vadd.f32 %v2432, %v2433
      %v2435 = vsel %vm833, %v2393, 0.0
      %v2436 = vadd.f32 %v2434, %v2435
      %v2437 = vsel %vm833, %v2394, 0.0
      %v2438 = vadd.f32 %v2436, %v2437
      %v2439 = vrot.slane %v2438, 4
      %v2440 = vadd.f32 %v2438, %v2439
      %v2441 = vrot.slane %v2440, 2
      %v2442 = vadd.f32 %v2440, %v2441
      %v2443 = vrot.slane %v2442, 1
      %v2444 = vadd.f32 %v2442, %v2443
      %v2445 = vsel %vm833, %v2395, 0.0
      %v2446 = vsel %vm833, %v2396, 0.0
      %v2447 = vadd.f32 %v2445, %v2446
      %v2448 = vsel %vm833, %v2397, 0.0
      %v2449 = vadd.f32 %v2447, %v2448
      %v2450 = vsel %vm833, %v2398, 0.0
      %v2451 = vadd.f32 %v2449, %v2450
      %v2452 = vrot.slane %v2451, 4
      %v2453 = vadd.f32 %v2451, %v2452
      %v2454 = vrot.slane %v2453, 2
      %v2455 = vadd.f32 %v2453, %v2454
      %v2456 = vrot.slane %v2455, 1
      %v2457 = vadd.f32 %v2455, %v2456
      %v2458 = vsel %vm833, %v2399, 0.0
      %v2459 = vsel %vm833, %v2400, 0.0
      %v2460 = vadd.f32 %v2458, %v2459
      %v2461 = vsel %vm833, %v2401, 0.0
      %v2462 = vadd.f32 %v2460, %v2461
      %v2463 = vsel %vm833, %v2402, 0.0
      %v2464 = vadd.f32 %v2462, %v2463
      %v2465 = vrot.slane %v2464, 4
      %v2466 = vadd.f32 %v2464, %v2465
      %v2467 = vrot.slane %v2466, 2
      %v2468 = vadd.f32 %v2466, %v2467
      %v2469 = vrot.slane %v2468, 1
      %v2470 = vadd.f32 %v2468, %v2469
      %v2471 = vsel %vm833, %v2403, 0.0
      %v2472 = vsel %vm833, %v2404, 0.0
      %v2473 = vadd.f32 %v2471, %v2472
      %v2474 = vsel %vm833, %v2405, 0.0
      %v2475 = vadd.f32 %v2473, %v2474
      %v2476 = vsel %vm833, %v2406, 0.0
      %v2477 = vadd.f32 %v2475, %v2476
      %v2478 = vrot.slane %v2477, 4
      %v2479 = vadd.f32 %v2477, %v2478
      %v2480 = vrot.slane %v2479, 2
      %v2481 = vadd.f32 %v2479, %v2480
      %v2482 = vrot.slane %v2481, 1
      %v2483 = vadd.f32 %v2481, %v2482
      %v2484 = vsel %vm833, %v2407, 0.0
      %v2485 = vsel %vm833, %v2408, 0.0
      %v2486 = vadd.f32 %v2484, %v2485
      %v2487 = vsel %vm833, %v2409, 0.0
      %v2488 = vadd.f32 %v2486, %v2487
      %v2489 = vsel %vm833, %v2410, 0.0
      %v2490 = vadd.f32 %v2488, %v2489
      %v2491 = vrot.slane %v2490, 4
      %v2492 = vadd.f32 %v2490, %v2491
      %v2493 = vrot.slane %v2492, 2
      %v2494 = vadd.f32 %v2492, %v2493
      %v2495 = vrot.slane %v2494, 1
      %v2496 = vadd.f32 %v2494, %v2495
      %v2497 = vsel %vm833, %v2411, 0.0
      %v2498 = vsel %vm833, %v2412, 0.0
      %v2499 = vadd.f32 %v2497, %v2498
      %v2500 = vsel %vm833, %v2413, 0.0
      %v2501 = vadd.f32 %v2499, %v2500
      %v2502 = vsel %vm833, %v2414, 0.0
      %v2503 = vadd.f32 %v2501, %v2502
      %v2504 = vrot.slane %v2503, 4
      %v2505 = vadd.f32 %v2503, %v2504
      %v2506 = vrot.slane %v2505, 2
      %v2507 = vadd.f32 %v2505, %v2506
      %v2508 = vrot.slane %v2507, 1
      %v2509 = vadd.f32 %v2507, %v2508
      %v2510 = vsel %vm833, %v2415, 0.0
      %v2511 = vsel %vm833, %v2416, 0.0
      %v2512 = vadd.f32 %v2510, %v2511
      %v2513 = vsel %vm833, %v2417, 0.0
      %v2514 = vadd.f32 %v2512, %v2513
      %v2515 = vsel %vm833, %v2418, 0.0
      %v2516 = vadd.f32 %v2514, %v2515
      %v2517 = vrot.slane %v2516, 4
      %v2518 = vadd.f32 %v2516, %v2517
      %v2519 = vrot.slane %v2518, 2
      %v2520 = vadd.f32 %v2518, %v2519
      %v2521 = vrot.slane %v2520, 1
      %v2522 = vadd.f32 %v2520, %v2521
      %2524 = vrot.lane.b32.xlu0 %v1423, 96
      %v2525 = vpop.permute.xlu0 %2524
      %v2527 = vadd.f32 %v1357, %v2525
      %v2528 = vmul.f32 %v2431, 2.0
      %v2529 = vmul.f32 %v2444, 2.0
      %v2530 = vmul.f32 %v2457, 2.0
      %v2531 = vmul.f32 %v2470, 2.0
      %v2532 = vmul.f32 %v2483, 2.0
      %v2533 = vmul.f32 %v2496, 2.0
      %v2534 = vmul.f32 %v2509, 2.0
      %v2535 = vmul.f32 %v2522, 2.0
      %v2544 = vsel %vm1339, %v2529, %v2528
      %v2545 = vsel %vm1341, %v2530, %v2544
      %v2546 = vsel %vm1343, %v2531, %v2545
      %v2547 = vsel %vm1345, %v2532, %v2546
      %v2548 = vsel %vm1347, %v2533, %v2547
      %v2549 = vsel %vm1349, %v2534, %v2548
      %v2550 = vsel %vm1351, %v2535, %v2549
      %v2552 = vsub.f32 %v2527, %v2550
      %v2553 = vmax.f32 %v2552, 1e-12
      %v2554 = vrsqrt.pop %v2553
      %v2555 = vmul.f32 %v2553, %v2554
      %vm2556 = vcmp.eq.f32.partialorder %v2553, inf
      %v2557 = vsel %vm2556, %v2553, %v2555
      %vm2558 = vcmp.eq.f32.partialorder %v2553, 0.0
      %v2559 = vand.u32 %v2553, 2147483648
      %v2560 = vsel %vm2558, %v2559, %v2557
      %v2561 = vmul.f32 %v2560, 0.5
      %v2562 = vtanh.pop %v2561
      %2563 = vrot.lane.b32.xlu0 %v1137, 96
      %v2564 = vpop.permute.xlu0 %2563
      %2565 = vrot.lane.b32.xlu0 %v1142, 96
      %v2566 = vpop.permute.xlu0 %2565
      %2567 = vrot.lane.b32.xlu0 %v1147, 96
      %v2568 = vpop.permute.xlu0 %2567
      %2569 = vrot.lane.b32.xlu0 %v1152, 96
      %v2570 = vpop.permute.xlu0 %2569
      %v2575 = vmul.f32 %v1591, %v2564
      %v2576 = vmul.f32 %v1592, %v2566
      %v2577 = vmul.f32 %v1593, %v2568
      %v2578 = vmul.f32 %v1594, %v2570
      %v2579 = vmul.f32 %v1595, %v2564
      %v2580 = vmul.f32 %v1596, %v2566
      %v2581 = vmul.f32 %v1597, %v2568
      %v2582 = vmul.f32 %v1598, %v2570
      %v2583 = vmul.f32 %v1599, %v2564
      %v2584 = vmul.f32 %v1600, %v2566
      %v2585 = vmul.f32 %v1601, %v2568
      %v2586 = vmul.f32 %v1602, %v2570
      %v2587 = vmul.f32 %v1603, %v2564
      %v2588 = vmul.f32 %v1604, %v2566
      %v2589 = vmul.f32 %v1605, %v2568
      %v2590 = vmul.f32 %v1606, %v2570
      %v2591 = vmul.f32 %v1607, %v2564
      %v2592 = vmul.f32 %v1608, %v2566
      %v2593 = vmul.f32 %v1609, %v2568
      %v2594 = vmul.f32 %v1610, %v2570
      %v2595 = vmul.f32 %v1611, %v2564
      %v2596 = vmul.f32 %v1612, %v2566
      %v2597 = vmul.f32 %v1613, %v2568
      %v2598 = vmul.f32 %v1614, %v2570
      %v2599 = vmul.f32 %v1615, %v2564
      %v2600 = vmul.f32 %v1616, %v2566
      %v2601 = vmul.f32 %v1617, %v2568
      %v2602 = vmul.f32 %v1618, %v2570
      %v2603 = vmul.f32 %v1619, %v2564
      %v2604 = vmul.f32 %v1620, %v2566
      %v2605 = vmul.f32 %v1621, %v2568
      %v2606 = vmul.f32 %v1622, %v2570
      %v2607 = vsel %vm833, %v2575, 0.0
      %v2608 = vsel %vm833, %v2576, 0.0
      %v2609 = vadd.f32 %v2607, %v2608
      %v2610 = vsel %vm833, %v2577, 0.0
      %v2611 = vadd.f32 %v2609, %v2610
      %v2612 = vsel %vm833, %v2578, 0.0
      %v2613 = vadd.f32 %v2611, %v2612
      %v2614 = vrot.slane %v2613, 4
      %v2615 = vadd.f32 %v2613, %v2614
      %v2616 = vrot.slane %v2615, 2
      %v2617 = vadd.f32 %v2615, %v2616
      %v2618 = vrot.slane %v2617, 1
      %v2619 = vadd.f32 %v2617, %v2618
      %v2620 = vsel %vm833, %v2579, 0.0
      %v2621 = vsel %vm833, %v2580, 0.0
      %v2622 = vadd.f32 %v2620, %v2621
      %v2623 = vsel %vm833, %v2581, 0.0
      %v2624 = vadd.f32 %v2622, %v2623
      %v2625 = vsel %vm833, %v2582, 0.0
      %v2626 = vadd.f32 %v2624, %v2625
      %v2627 = vrot.slane %v2626, 4
      %v2628 = vadd.f32 %v2626, %v2627
      %v2629 = vrot.slane %v2628, 2
      %v2630 = vadd.f32 %v2628, %v2629
      %v2631 = vrot.slane %v2630, 1
      %v2632 = vadd.f32 %v2630, %v2631
      %v2633 = vsel %vm833, %v2583, 0.0
      %v2634 = vsel %vm833, %v2584, 0.0
      %v2635 = vadd.f32 %v2633, %v2634
      %v2636 = vsel %vm833, %v2585, 0.0
      %v2637 = vadd.f32 %v2635, %v2636
      %v2638 = vsel %vm833, %v2586, 0.0
      %v2639 = vadd.f32 %v2637, %v2638
      %v2640 = vrot.slane %v2639, 4
      %v2641 = vadd.f32 %v2639, %v2640
      %v2642 = vrot.slane %v2641, 2
      %v2643 = vadd.f32 %v2641, %v2642
      %v2644 = vrot.slane %v2643, 1
      %v2645 = vadd.f32 %v2643, %v2644
      %v2646 = vsel %vm833, %v2587, 0.0
      %v2647 = vsel %vm833, %v2588, 0.0
      %v2648 = vadd.f32 %v2646, %v2647
      %v2649 = vsel %vm833, %v2589, 0.0
      %v2650 = vadd.f32 %v2648, %v2649
      %v2651 = vsel %vm833, %v2590, 0.0
      %v2652 = vadd.f32 %v2650, %v2651
      %v2653 = vrot.slane %v2652, 4
      %v2654 = vadd.f32 %v2652, %v2653
      %v2655 = vrot.slane %v2654, 2
      %v2656 = vadd.f32 %v2654, %v2655
      %v2657 = vrot.slane %v2656, 1
      %v2658 = vadd.f32 %v2656, %v2657
      %v2659 = vsel %vm833, %v2591, 0.0
      %v2660 = vsel %vm833, %v2592, 0.0
      %v2661 = vadd.f32 %v2659, %v2660
      %v2662 = vsel %vm833, %v2593, 0.0
      %v2663 = vadd.f32 %v2661, %v2662
      %v2664 = vsel %vm833, %v2594, 0.0
      %v2665 = vadd.f32 %v2663, %v2664
      %v2666 = vrot.slane %v2665, 4
      %v2667 = vadd.f32 %v2665, %v2666
      %v2668 = vrot.slane %v2667, 2
      %v2669 = vadd.f32 %v2667, %v2668
      %v2670 = vrot.slane %v2669, 1
      %v2671 = vadd.f32 %v2669, %v2670
      %v2672 = vsel %vm833, %v2595, 0.0
      %v2673 = vsel %vm833, %v2596, 0.0
      %v2674 = vadd.f32 %v2672, %v2673
      %v2675 = vsel %vm833, %v2597, 0.0
      %v2676 = vadd.f32 %v2674, %v2675
      %v2677 = vsel %vm833, %v2598, 0.0
      %v2678 = vadd.f32 %v2676, %v2677
      %v2679 = vrot.slane %v2678, 4
      %v2680 = vadd.f32 %v2678, %v2679
      %v2681 = vrot.slane %v2680, 2
      %v2682 = vadd.f32 %v2680, %v2681
      %v2683 = vrot.slane %v2682, 1
      %v2684 = vadd.f32 %v2682, %v2683
      %v2685 = vsel %vm833, %v2599, 0.0
      %v2686 = vsel %vm833, %v2600, 0.0
      %v2687 = vadd.f32 %v2685, %v2686
      %v2688 = vsel %vm833, %v2601, 0.0
      %v2689 = vadd.f32 %v2687, %v2688
      %v2690 = vsel %vm833, %v2602, 0.0
      %v2691 = vadd.f32 %v2689, %v2690
      %v2692 = vrot.slane %v2691, 4
      %v2693 = vadd.f32 %v2691, %v2692
      %v2694 = vrot.slane %v2693, 2
      %v2695 = vadd.f32 %v2693, %v2694
      %v2696 = vrot.slane %v2695, 1
      %v2697 = vadd.f32 %v2695, %v2696
      %v2698 = vsel %vm833, %v2603, 0.0
      %v2699 = vsel %vm833, %v2604, 0.0
      %v2700 = vadd.f32 %v2698, %v2699
      %v2701 = vsel %vm833, %v2605, 0.0
      %v2702 = vadd.f32 %v2700, %v2701
      %v2703 = vsel %vm833, %v2606, 0.0
      %v2704 = vadd.f32 %v2702, %v2703
      %v2705 = vrot.slane %v2704, 4
      %v2706 = vadd.f32 %v2704, %v2705
      %v2707 = vrot.slane %v2706, 2
      %v2708 = vadd.f32 %v2706, %v2707
      %v2709 = vrot.slane %v2708, 1
      %v2710 = vadd.f32 %v2708, %v2709
      %2712 = vrot.lane.b32.xlu0 %v1436, 96
      %v2713 = vpop.permute.xlu0 %2712
      %v2715 = vadd.f32 %v1357, %v2713
      %v2716 = vmul.f32 %v2619, 2.0
      %v2717 = vmul.f32 %v2632, 2.0
      %v2718 = vmul.f32 %v2645, 2.0
      %v2719 = vmul.f32 %v2658, 2.0
      %v2720 = vmul.f32 %v2671, 2.0
      %v2721 = vmul.f32 %v2684, 2.0
      %v2722 = vmul.f32 %v2697, 2.0
      %v2723 = vmul.f32 %v2710, 2.0
      %v2732 = vsel %vm1339, %v2717, %v2716
      %v2733 = vsel %vm1341, %v2718, %v2732
      %v2734 = vsel %vm1343, %v2719, %v2733
      %v2735 = vsel %vm1345, %v2720, %v2734
      %v2736 = vsel %vm1347, %v2721, %v2735
      %v2737 = vsel %vm1349, %v2722, %v2736
      %v2738 = vsel %vm1351, %v2723, %v2737
      %v2740 = vsub.f32 %v2715, %v2738
      %v2741 = vmax.f32 %v2740, 1e-12
      %v2742 = vrsqrt.pop %v2741
      %v2743 = vmul.f32 %v2741, %v2742
      %vm2744 = vcmp.eq.f32.partialorder %v2741, inf
      %v2745 = vsel %vm2744, %v2741, %v2743
      %vm2746 = vcmp.eq.f32.partialorder %v2741, 0.0
      %v2747 = vand.u32 %v2741, 2147483648
      %v2748 = vsel %vm2746, %v2747, %v2745
      %v2749 = vmul.f32 %v2748, 0.5
      %v2750 = vtanh.pop %v2749
      %2751 = vrot.lane.b32.xlu0 %v1157, 96
      %v2752 = vpop.permute.xlu0 %2751
      %2753 = vrot.lane.b32.xlu0 %v1162, 96
      %v2754 = vpop.permute.xlu0 %2753
      %2755 = vrot.lane.b32.xlu0 %v1167, 96
      %v2756 = vpop.permute.xlu0 %2755
      %2757 = vrot.lane.b32.xlu0 %v1172, 96
      %v2758 = vpop.permute.xlu0 %2757
      %v2763 = vmul.f32 %v1591, %v2752
      %v2764 = vmul.f32 %v1592, %v2754
      %v2765 = vmul.f32 %v1593, %v2756
      %v2766 = vmul.f32 %v1594, %v2758
      %v2767 = vmul.f32 %v1595, %v2752
      %v2768 = vmul.f32 %v1596, %v2754
      %v2769 = vmul.f32 %v1597, %v2756
      %v2770 = vmul.f32 %v1598, %v2758
      %v2771 = vmul.f32 %v1599, %v2752
      %v2772 = vmul.f32 %v1600, %v2754
      %v2773 = vmul.f32 %v1601, %v2756
      %v2774 = vmul.f32 %v1602, %v2758
      %v2775 = vmul.f32 %v1603, %v2752
      %v2776 = vmul.f32 %v1604, %v2754
      %v2777 = vmul.f32 %v1605, %v2756
      %v2778 = vmul.f32 %v1606, %v2758
      %v2779 = vmul.f32 %v1607, %v2752
      %v2780 = vmul.f32 %v1608, %v2754
      %v2781 = vmul.f32 %v1609, %v2756
      %v2782 = vmul.f32 %v1610, %v2758
      %v2783 = vmul.f32 %v1611, %v2752
      %v2784 = vmul.f32 %v1612, %v2754
      %v2785 = vmul.f32 %v1613, %v2756
      %v2786 = vmul.f32 %v1614, %v2758
      %v2787 = vmul.f32 %v1615, %v2752
      %v2788 = vmul.f32 %v1616, %v2754
      %v2789 = vmul.f32 %v1617, %v2756
      %v2790 = vmul.f32 %v1618, %v2758
      %v2791 = vmul.f32 %v1619, %v2752
      %v2792 = vmul.f32 %v1620, %v2754
      %v2793 = vmul.f32 %v1621, %v2756
      %v2794 = vmul.f32 %v1622, %v2758
      %v2795 = vsel %vm833, %v2763, 0.0
      %v2796 = vsel %vm833, %v2764, 0.0
      %v2797 = vadd.f32 %v2795, %v2796
      %v2798 = vsel %vm833, %v2765, 0.0
      %v2799 = vadd.f32 %v2797, %v2798
      %v2800 = vsel %vm833, %v2766, 0.0
      %v2801 = vadd.f32 %v2799, %v2800
      %v2802 = vrot.slane %v2801, 4
      %v2803 = vadd.f32 %v2801, %v2802
      %v2804 = vrot.slane %v2803, 2
      %v2805 = vadd.f32 %v2803, %v2804
      %v2806 = vrot.slane %v2805, 1
      %v2807 = vadd.f32 %v2805, %v2806
      %v2808 = vsel %vm833, %v2767, 0.0
      %v2809 = vsel %vm833, %v2768, 0.0
      %v2810 = vadd.f32 %v2808, %v2809
      %v2811 = vsel %vm833, %v2769, 0.0
      %v2812 = vadd.f32 %v2810, %v2811
      %v2813 = vsel %vm833, %v2770, 0.0
      %v2814 = vadd.f32 %v2812, %v2813
      %v2815 = vrot.slane %v2814, 4
      %v2816 = vadd.f32 %v2814, %v2815
      %v2817 = vrot.slane %v2816, 2
      %v2818 = vadd.f32 %v2816, %v2817
      %v2819 = vrot.slane %v2818, 1
      %v2820 = vadd.f32 %v2818, %v2819
      %v2821 = vsel %vm833, %v2771, 0.0
      %v2822 = vsel %vm833, %v2772, 0.0
      %v2823 = vadd.f32 %v2821, %v2822
      %v2824 = vsel %vm833, %v2773, 0.0
      %v2825 = vadd.f32 %v2823, %v2824
      %v2826 = vsel %vm833, %v2774, 0.0
      %v2827 = vadd.f32 %v2825, %v2826
      %v2828 = vrot.slane %v2827, 4
      %v2829 = vadd.f32 %v2827, %v2828
      %v2830 = vrot.slane %v2829, 2
      %v2831 = vadd.f32 %v2829, %v2830
      %v2832 = vrot.slane %v2831, 1
      %v2833 = vadd.f32 %v2831, %v2832
      %v2834 = vsel %vm833, %v2775, 0.0
      %v2835 = vsel %vm833, %v2776, 0.0
      %v2836 = vadd.f32 %v2834, %v2835
      %v2837 = vsel %vm833, %v2777, 0.0
      %v2838 = vadd.f32 %v2836, %v2837
      %v2839 = vsel %vm833, %v2778, 0.0
      %v2840 = vadd.f32 %v2838, %v2839
      %v2841 = vrot.slane %v2840, 4
      %v2842 = vadd.f32 %v2840, %v2841
      %v2843 = vrot.slane %v2842, 2
      %v2844 = vadd.f32 %v2842, %v2843
      %v2845 = vrot.slane %v2844, 1
      %v2846 = vadd.f32 %v2844, %v2845
      %v2847 = vsel %vm833, %v2779, 0.0
      %v2848 = vsel %vm833, %v2780, 0.0
      %v2849 = vadd.f32 %v2847, %v2848
      %v2850 = vsel %vm833, %v2781, 0.0
      %v2851 = vadd.f32 %v2849, %v2850
      %v2852 = vsel %vm833, %v2782, 0.0
      %v2853 = vadd.f32 %v2851, %v2852
      %v2854 = vrot.slane %v2853, 4
      %v2855 = vadd.f32 %v2853, %v2854
      %v2856 = vrot.slane %v2855, 2
      %v2857 = vadd.f32 %v2855, %v2856
      %v2858 = vrot.slane %v2857, 1
      %v2859 = vadd.f32 %v2857, %v2858
      %v2860 = vsel %vm833, %v2783, 0.0
      %v2861 = vsel %vm833, %v2784, 0.0
      %v2862 = vadd.f32 %v2860, %v2861
      %v2863 = vsel %vm833, %v2785, 0.0
      %v2864 = vadd.f32 %v2862, %v2863
      %v2865 = vsel %vm833, %v2786, 0.0
      %v2866 = vadd.f32 %v2864, %v2865
      %v2867 = vrot.slane %v2866, 4
      %v2868 = vadd.f32 %v2866, %v2867
      %v2869 = vrot.slane %v2868, 2
      %v2870 = vadd.f32 %v2868, %v2869
      %v2871 = vrot.slane %v2870, 1
      %v2872 = vadd.f32 %v2870, %v2871
      %v2873 = vsel %vm833, %v2787, 0.0
      %v2874 = vsel %vm833, %v2788, 0.0
      %v2875 = vadd.f32 %v2873, %v2874
      %v2876 = vsel %vm833, %v2789, 0.0
      %v2877 = vadd.f32 %v2875, %v2876
      %v2878 = vsel %vm833, %v2790, 0.0
      %v2879 = vadd.f32 %v2877, %v2878
      %v2880 = vrot.slane %v2879, 4
      %v2881 = vadd.f32 %v2879, %v2880
      %v2882 = vrot.slane %v2881, 2
      %v2883 = vadd.f32 %v2881, %v2882
      %v2884 = vrot.slane %v2883, 1
      %v2885 = vadd.f32 %v2883, %v2884
      %v2886 = vsel %vm833, %v2791, 0.0
      %v2887 = vsel %vm833, %v2792, 0.0
      %v2888 = vadd.f32 %v2886, %v2887
      %v2889 = vsel %vm833, %v2793, 0.0
      %v2890 = vadd.f32 %v2888, %v2889
      %v2891 = vsel %vm833, %v2794, 0.0
      %v2892 = vadd.f32 %v2890, %v2891
      %v2893 = vrot.slane %v2892, 4
      %v2894 = vadd.f32 %v2892, %v2893
      %v2895 = vrot.slane %v2894, 2
      %v2896 = vadd.f32 %v2894, %v2895
      %v2897 = vrot.slane %v2896, 1
      %v2898 = vadd.f32 %v2896, %v2897
      %2900 = vrot.lane.b32.xlu0 %v1449, 96
      %v2901 = vpop.permute.xlu0 %2900
      %v2903 = vadd.f32 %v1357, %v2901
      %v2904 = vmul.f32 %v2807, 2.0
      %v2905 = vmul.f32 %v2820, 2.0
      %v2906 = vmul.f32 %v2833, 2.0
      %v2907 = vmul.f32 %v2846, 2.0
      %v2908 = vmul.f32 %v2859, 2.0
      %v2909 = vmul.f32 %v2872, 2.0
      %v2910 = vmul.f32 %v2885, 2.0
      %v2911 = vmul.f32 %v2898, 2.0
      %v2920 = vsel %vm1339, %v2905, %v2904
      %v2921 = vsel %vm1341, %v2906, %v2920
      %v2922 = vsel %vm1343, %v2907, %v2921
      %v2923 = vsel %vm1345, %v2908, %v2922
      %v2924 = vsel %vm1347, %v2909, %v2923
      %v2925 = vsel %vm1349, %v2910, %v2924
      %v2926 = vsel %vm1351, %v2911, %v2925
      %v2928 = vsub.f32 %v2903, %v2926
      %v2929 = vmax.f32 %v2928, 1e-12
      %v2930 = vrsqrt.pop %v2929
      %v2931 = vmul.f32 %v2929, %v2930
      %vm2932 = vcmp.eq.f32.partialorder %v2929, inf
      %v2933 = vsel %vm2932, %v2929, %v2931
      %vm2934 = vcmp.eq.f32.partialorder %v2929, 0.0
      %v2935 = vand.u32 %v2929, 2147483648
      %v2936 = vsel %vm2934, %v2935, %v2933
      %v2937 = vmul.f32 %v2936, 0.5
      %v2938 = vtanh.pop %v2937
      %2939 = vrot.lane.b32.xlu0 %v1177, 96
      %v2940 = vpop.permute.xlu0 %2939
      %2941 = vrot.lane.b32.xlu0 %v1182, 96
      %v2942 = vpop.permute.xlu0 %2941
      %2943 = vrot.lane.b32.xlu0 %v1187, 96
      %v2944 = vpop.permute.xlu0 %2943
      %2945 = vrot.lane.b32.xlu0 %v1192, 96
      %v2946 = vpop.permute.xlu0 %2945
      %v2951 = vmul.f32 %v1591, %v2940
      %v2952 = vmul.f32 %v1592, %v2942
      %v2953 = vmul.f32 %v1593, %v2944
      %v2954 = vmul.f32 %v1594, %v2946
      %v2955 = vmul.f32 %v1595, %v2940
      %v2956 = vmul.f32 %v1596, %v2942
      %v2957 = vmul.f32 %v1597, %v2944
      %v2958 = vmul.f32 %v1598, %v2946
      %v2959 = vmul.f32 %v1599, %v2940
      %v2960 = vmul.f32 %v1600, %v2942
      %v2961 = vmul.f32 %v1601, %v2944
      %v2962 = vmul.f32 %v1602, %v2946
      %v2963 = vmul.f32 %v1603, %v2940
      %v2964 = vmul.f32 %v1604, %v2942
      %v2965 = vmul.f32 %v1605, %v2944
      %v2966 = vmul.f32 %v1606, %v2946
      %v2967 = vmul.f32 %v1607, %v2940
      %v2968 = vmul.f32 %v1608, %v2942
      %v2969 = vmul.f32 %v1609, %v2944
      %v2970 = vmul.f32 %v1610, %v2946
      %v2971 = vmul.f32 %v1611, %v2940
      %v2972 = vmul.f32 %v1612, %v2942
      %v2973 = vmul.f32 %v1613, %v2944
      %v2974 = vmul.f32 %v1614, %v2946
      %v2975 = vmul.f32 %v1615, %v2940
      %v2976 = vmul.f32 %v1616, %v2942
      %v2977 = vmul.f32 %v1617, %v2944
      %v2978 = vmul.f32 %v1618, %v2946
      %v2979 = vmul.f32 %v1619, %v2940
      %v2980 = vmul.f32 %v1620, %v2942
      %v2981 = vmul.f32 %v1621, %v2944
      %v2982 = vmul.f32 %v1622, %v2946
      %v2983 = vsel %vm833, %v2951, 0.0
      %v2984 = vsel %vm833, %v2952, 0.0
      %v2985 = vadd.f32 %v2983, %v2984
      %v2986 = vsel %vm833, %v2953, 0.0
      %v2987 = vadd.f32 %v2985, %v2986
      %v2988 = vsel %vm833, %v2954, 0.0
      %v2989 = vadd.f32 %v2987, %v2988
      %v2990 = vrot.slane %v2989, 4
      %v2991 = vadd.f32 %v2989, %v2990
      %v2992 = vrot.slane %v2991, 2
      %v2993 = vadd.f32 %v2991, %v2992
      %v2994 = vrot.slane %v2993, 1
      %v2995 = vadd.f32 %v2993, %v2994
      %v2996 = vsel %vm833, %v2955, 0.0
      %v2997 = vsel %vm833, %v2956, 0.0
      %v2998 = vadd.f32 %v2996, %v2997
      %v2999 = vsel %vm833, %v2957, 0.0
      %v3000 = vadd.f32 %v2998, %v2999
      %v3001 = vsel %vm833, %v2958, 0.0
      %v3002 = vadd.f32 %v3000, %v3001
      %v3003 = vrot.slane %v3002, 4
      %v3004 = vadd.f32 %v3002, %v3003
      %v3005 = vrot.slane %v3004, 2
      %v3006 = vadd.f32 %v3004, %v3005
      %v3007 = vrot.slane %v3006, 1
      %v3008 = vadd.f32 %v3006, %v3007
      %v3009 = vsel %vm833, %v2959, 0.0
      %v3010 = vsel %vm833, %v2960, 0.0
      %v3011 = vadd.f32 %v3009, %v3010
      %v3012 = vsel %vm833, %v2961, 0.0
      %v3013 = vadd.f32 %v3011, %v3012
      %v3014 = vsel %vm833, %v2962, 0.0
      %v3015 = vadd.f32 %v3013, %v3014
      %v3016 = vrot.slane %v3015, 4
      %v3017 = vadd.f32 %v3015, %v3016
      %v3018 = vrot.slane %v3017, 2
      %v3019 = vadd.f32 %v3017, %v3018
      %v3020 = vrot.slane %v3019, 1
      %v3021 = vadd.f32 %v3019, %v3020
      %v3022 = vsel %vm833, %v2963, 0.0
      %v3023 = vsel %vm833, %v2964, 0.0
      %v3024 = vadd.f32 %v3022, %v3023
      %v3025 = vsel %vm833, %v2965, 0.0
      %v3026 = vadd.f32 %v3024, %v3025
      %v3027 = vsel %vm833, %v2966, 0.0
      %v3028 = vadd.f32 %v3026, %v3027
      %v3029 = vrot.slane %v3028, 4
      %v3030 = vadd.f32 %v3028, %v3029
      %v3031 = vrot.slane %v3030, 2
      %v3032 = vadd.f32 %v3030, %v3031
      %v3033 = vrot.slane %v3032, 1
      %v3034 = vadd.f32 %v3032, %v3033
      %v3035 = vsel %vm833, %v2967, 0.0
      %v3036 = vsel %vm833, %v2968, 0.0
      %v3037 = vadd.f32 %v3035, %v3036
      %v3038 = vsel %vm833, %v2969, 0.0
      %v3039 = vadd.f32 %v3037, %v3038
      %v3040 = vsel %vm833, %v2970, 0.0
      %v3041 = vadd.f32 %v3039, %v3040
      %v3042 = vrot.slane %v3041, 4
      %v3043 = vadd.f32 %v3041, %v3042
      %v3044 = vrot.slane %v3043, 2
      %v3045 = vadd.f32 %v3043, %v3044
      %v3046 = vrot.slane %v3045, 1
      %v3047 = vadd.f32 %v3045, %v3046
      %v3048 = vsel %vm833, %v2971, 0.0
      %v3049 = vsel %vm833, %v2972, 0.0
      %v3050 = vadd.f32 %v3048, %v3049
      %v3051 = vsel %vm833, %v2973, 0.0
      %v3052 = vadd.f32 %v3050, %v3051
      %v3053 = vsel %vm833, %v2974, 0.0
      %v3054 = vadd.f32 %v3052, %v3053
      %v3055 = vrot.slane %v3054, 4
      %v3056 = vadd.f32 %v3054, %v3055
      %v3057 = vrot.slane %v3056, 2
      %v3058 = vadd.f32 %v3056, %v3057
      %v3059 = vrot.slane %v3058, 1
      %v3060 = vadd.f32 %v3058, %v3059
      %v3061 = vsel %vm833, %v2975, 0.0
      %v3062 = vsel %vm833, %v2976, 0.0
      %v3063 = vadd.f32 %v3061, %v3062
      %v3064 = vsel %vm833, %v2977, 0.0
      %v3065 = vadd.f32 %v3063, %v3064
      %v3066 = vsel %vm833, %v2978, 0.0
      %v3067 = vadd.f32 %v3065, %v3066
      %v3068 = vrot.slane %v3067, 4
      %v3069 = vadd.f32 %v3067, %v3068
      %v3070 = vrot.slane %v3069, 2
      %v3071 = vadd.f32 %v3069, %v3070
      %v3072 = vrot.slane %v3071, 1
      %v3073 = vadd.f32 %v3071, %v3072
      %v3074 = vsel %vm833, %v2979, 0.0
      %v3075 = vsel %vm833, %v2980, 0.0
      %v3076 = vadd.f32 %v3074, %v3075
      %v3077 = vsel %vm833, %v2981, 0.0
      %v3078 = vadd.f32 %v3076, %v3077
      %v3079 = vsel %vm833, %v2982, 0.0
      %v3080 = vadd.f32 %v3078, %v3079
      %v3081 = vrot.slane %v3080, 4
      %v3082 = vadd.f32 %v3080, %v3081
      %v3083 = vrot.slane %v3082, 2
      %v3084 = vadd.f32 %v3082, %v3083
      %v3085 = vrot.slane %v3084, 1
      %v3086 = vadd.f32 %v3084, %v3085
      %3088 = vrot.lane.b32.xlu0 %v1462, 96
      %v3089 = vpop.permute.xlu0 %3088
      %v3091 = vadd.f32 %v1357, %v3089
      %v3092 = vmul.f32 %v2995, 2.0
      %v3093 = vmul.f32 %v3008, 2.0
      %v3094 = vmul.f32 %v3021, 2.0
      %v3095 = vmul.f32 %v3034, 2.0
      %v3096 = vmul.f32 %v3047, 2.0
      %v3097 = vmul.f32 %v3060, 2.0
      %v3098 = vmul.f32 %v3073, 2.0
      %v3099 = vmul.f32 %v3086, 2.0
      %v3108 = vsel %vm1339, %v3093, %v3092
      %v3109 = vsel %vm1341, %v3094, %v3108
      %v3110 = vsel %vm1343, %v3095, %v3109
      %v3111 = vsel %vm1345, %v3096, %v3110
      %v3112 = vsel %vm1347, %v3097, %v3111
      %v3113 = vsel %vm1349, %v3098, %v3112
      %v3114 = vsel %vm1351, %v3099, %v3113
      %v3116 = vsub.f32 %v3091, %v3114
      %v3117 = vmax.f32 %v3116, 1e-12
      %v3118 = vrsqrt.pop %v3117
      %v3119 = vmul.f32 %v3117, %v3118
      %vm3120 = vcmp.eq.f32.partialorder %v3117, inf
      %v3121 = vsel %vm3120, %v3117, %v3119
      %vm3122 = vcmp.eq.f32.partialorder %v3117, 0.0
      %v3123 = vand.u32 %v3117, 2147483648
      %v3124 = vsel %vm3122, %v3123, %v3121
      %v3125 = vmul.f32 %v3124, 0.5
      %v3126 = vtanh.pop %v3125
      %vm3127 = vcmp.eq.s32.totalorder %v583, 0
      %v3128 = vsel %vm3127, %v1810, inf
      %v3130 = vrot.slane %v3128, 7
      %vm3132 = vcmask 1040384
      %v3133 = vsel %vm3132, inf, %v3130
      %vm3134 = vcmp.eq.s32.totalorder %v583, 1
      %v3135 = vsel %vm3134, inf, %v3128
      %v3136 = vmin.f32 %v3135, %v3133
      %v3137 = vsel %vm3134, %v1810, 0.0
      %v3138 = vsel %vm3127, %v1998, 0.0
      %v3139 = vadd.f32 %v3137, %v3138
      %v3140 = vadd.f32 %v3136, %v3139
      %v3142 = vrot.slane %v3140, 7
      %v3144 = vsel %vm3132, inf, %v3142
      %vm3145 = vcmp.eq.s32.totalorder %v583, 2
      %v3146 = vsel %vm3145, inf, %v3140
      %v3147 = vmin.f32 %v3146, %v3144
      %v3148 = vsel %vm3145, %v1810, 0.0
      %v3149 = vsel %vm3134, %v1998, 0.0
      %v3150 = vadd.f32 %v3148, %v3149
      %v3151 = vsel %vm3127, %v2186, 0.0
      %v3152 = vadd.f32 %v3150, %v3151
      %v3153 = vadd.f32 %v3147, %v3152
      %v3155 = vrot.slane %v3153, 7
      %v3157 = vsel %vm3132, inf, %v3155
      %vm3158 = vcmp.eq.s32.totalorder %v583, 3
      %v3159 = vsel %vm3158, inf, %v3153
      %v3160 = vmin.f32 %v3159, %v3157
      %v3161 = vsel %vm3158, %v1810, 0.0
      %v3162 = vsel %vm3145, %v1998, 0.0
      %v3163 = vadd.f32 %v3161, %v3162
      %v3164 = vsel %vm3134, %v2186, 0.0
      %v3165 = vadd.f32 %v3163, %v3164
      %v3166 = vsel %vm3127, %v2374, 0.0
      %v3167 = vadd.f32 %v3165, %v3166
      %v3168 = vadd.f32 %v3160, %v3167
      %v3170 = vrot.slane %v3168, 7
      %v3172 = vsel %vm3132, inf, %v3170
      %vm3173 = vcmp.eq.s32.totalorder %v583, 4
      %v3174 = vsel %vm3173, inf, %v3168
      %v3175 = vmin.f32 %v3174, %v3172
      %v3176 = vsel %vm3173, %v1810, 0.0
      %v3177 = vsel %vm3158, %v1998, 0.0
      %v3178 = vadd.f32 %v3176, %v3177
      %v3179 = vsel %vm3145, %v2186, 0.0
      %v3180 = vadd.f32 %v3178, %v3179
      %v3181 = vsel %vm3134, %v2374, 0.0
      %v3182 = vadd.f32 %v3180, %v3181
      %v3183 = vsel %vm3127, %v2562, 0.0
      %v3184 = vadd.f32 %v3182, %v3183
      %v3185 = vadd.f32 %v3175, %v3184
      %v3187 = vrot.slane %v3185, 7
      %v3189 = vsel %vm3132, inf, %v3187
      %vm3190 = vcmp.eq.s32.totalorder %v583, 5
      %v3191 = vsel %vm3190, inf, %v3185
      %v3192 = vmin.f32 %v3191, %v3189
      %v3193 = vsel %vm3190, %v1810, 0.0
      %v3194 = vsel %vm3173, %v1998, 0.0
      %v3195 = vadd.f32 %v3193, %v3194
      %v3196 = vsel %vm3158, %v2186, 0.0
      %v3197 = vadd.f32 %v3195, %v3196
      %v3198 = vsel %vm3145, %v2374, 0.0
      %v3199 = vadd.f32 %v3197, %v3198
      %v3200 = vsel %vm3134, %v2562, 0.0
      %v3201 = vadd.f32 %v3199, %v3200
      %v3202 = vsel %vm3127, %v2750, 0.0
      %v3203 = vadd.f32 %v3201, %v3202
      %v3204 = vadd.f32 %v3192, %v3203
      %v3206 = vrot.slane %v3204, 7
      %v3208 = vsel %vm3132, inf, %v3206
      %vm3209 = vcmp.eq.s32.totalorder %v583, 6
      %v3210 = vsel %vm3209, inf, %v3204
      %v3211 = vmin.f32 %v3210, %v3208
      %v3212 = vsel %vm3209, %v1810, 0.0
      %v3213 = vsel %vm3190, %v1998, 0.0
      %v3214 = vadd.f32 %v3212, %v3213
      %v3215 = vsel %vm3173, %v2186, 0.0
      %v3216 = vadd.f32 %v3214, %v3215
      %v3217 = vsel %vm3158, %v2374, 0.0
      %v3218 = vadd.f32 %v3216, %v3217
      %v3219 = vsel %vm3145, %v2562, 0.0
      %v3220 = vadd.f32 %v3218, %v3219
      %v3221 = vsel %vm3134, %v2750, 0.0
      %v3222 = vadd.f32 %v3220, %v3221
      %v3223 = vsel %vm3127, %v2938, 0.0
      %v3224 = vadd.f32 %v3222, %v3223
      %v3225 = vadd.f32 %v3211, %v3224
      %v3227 = vrot.slane %v3225, 7
      %v3229 = vsel %vm3132, inf, %v3227
      %vm3230 = vcmp.eq.s32.totalorder %v583, 7
      %v3231 = vsel %vm3230, inf, %v3225
      %v3232 = vmin.f32 %v3231, %v3229
      %v3233 = vsel %vm3230, %v1810, 0.0
      %v3234 = vsel %vm3209, %v1998, 0.0
      %v3235 = vadd.f32 %v3233, %v3234
      %v3236 = vsel %vm3190, %v2186, 0.0
      %v3237 = vadd.f32 %v3235, %v3236
      %v3238 = vsel %vm3173, %v2374, 0.0
      %v3239 = vadd.f32 %v3237, %v3238
      %v3240 = vsel %vm3158, %v2562, 0.0
      %v3241 = vadd.f32 %v3239, %v3240
      %v3242 = vsel %vm3145, %v2750, 0.0
      %v3243 = vadd.f32 %v3241, %v3242
      %v3244 = vsel %vm3134, %v2938, 0.0
      %v3245 = vadd.f32 %v3243, %v3244
      %v3246 = vsel %vm3127, %v3126, 0.0
      %v3247 = vadd.f32 %v3245, %v3246
      %v3248 = vadd.f32 %v3232, %v3247
      %v3250 = vrot.slane %v3248, 7
      %v3252 = vsel %vm3132, inf, %v3250
      %v3253 = vmin.f32 %v3248, %v3252
      %v3254 = vsel %vm3230, %v1998, 0.0
      %v3255 = vsel %vm3209, %v2186, 0.0
      %v3256 = vadd.f32 %v3254, %v3255
      %v3257 = vsel %vm3190, %v2374, 0.0
      %v3258 = vadd.f32 %v3256, %v3257
      %v3259 = vsel %vm3173, %v2562, 0.0
      %v3260 = vadd.f32 %v3258, %v3259
      %v3261 = vsel %vm3158, %v2750, 0.0
      %v3262 = vadd.f32 %v3260, %v3261
      %v3263 = vsel %vm3145, %v2938, 0.0
      %v3264 = vadd.f32 %v3262, %v3263
      %v3265 = vsel %vm3134, %v3126, 0.0
      %v3266 = vadd.f32 %v3264, %v3265
      %v3267 = vadd.f32 %v3253, %v3266
      %v3269 = vrot.slane %v3267, 7
      %v3271 = vsel %vm3132, inf, %v3269
      %v3272 = vmin.f32 %v3267, %v3271
      %v3273 = vsel %vm3230, %v2186, 0.0
      %v3274 = vsel %vm3209, %v2374, 0.0
      %v3275 = vadd.f32 %v3273, %v3274
      %v3276 = vsel %vm3190, %v2562, 0.0
      %v3277 = vadd.f32 %v3275, %v3276
      %v3278 = vsel %vm3173, %v2750, 0.0
      %v3279 = vadd.f32 %v3277, %v3278
      %v3280 = vsel %vm3158, %v2938, 0.0
      %v3281 = vadd.f32 %v3279, %v3280
      %v3282 = vsel %vm3145, %v3126, 0.0
      %v3283 = vadd.f32 %v3281, %v3282
      %v3284 = vadd.f32 %v3272, %v3283
      %v3286 = vrot.slane %v3284, 7
      %v3288 = vsel %vm3132, inf, %v3286
      %v3289 = vmin.f32 %v3284, %v3288
      %v3290 = vsel %vm3230, %v2374, 0.0
      %v3291 = vsel %vm3209, %v2562, 0.0
      %v3292 = vadd.f32 %v3290, %v3291
      %v3293 = vsel %vm3190, %v2750, 0.0
      %v3294 = vadd.f32 %v3292, %v3293
      %v3295 = vsel %vm3173, %v2938, 0.0
      %v3296 = vadd.f32 %v3294, %v3295
      %v3297 = vsel %vm3158, %v3126, 0.0
      %v3298 = vadd.f32 %v3296, %v3297
      %v3299 = vadd.f32 %v3289, %v3298
      %v3301 = vrot.slane %v3299, 7
      %v3303 = vsel %vm3132, inf, %v3301
      %v3304 = vmin.f32 %v3299, %v3303
      %v3305 = vsel %vm3230, %v2562, 0.0
      %v3306 = vsel %vm3209, %v2750, 0.0
      %v3307 = vadd.f32 %v3305, %v3306
      %v3308 = vsel %vm3190, %v2938, 0.0
      %v3309 = vadd.f32 %v3307, %v3308
      %v3310 = vsel %vm3173, %v3126, 0.0
      %v3311 = vadd.f32 %v3309, %v3310
      %v3312 = vadd.f32 %v3304, %v3311
      %v3314 = vrot.slane %v3312, 7
      %v3316 = vsel %vm3132, inf, %v3314
      %v3317 = vmin.f32 %v3312, %v3316
      %v3318 = vsel %vm3230, %v2750, 0.0
      %v3319 = vsel %vm3209, %v2938, 0.0
      %v3320 = vadd.f32 %v3318, %v3319
      %v3321 = vsel %vm3190, %v3126, 0.0
      %v3322 = vadd.f32 %v3320, %v3321
      %v3323 = vadd.f32 %v3317, %v3322
      %v3325 = vrot.slane %v3323, 7
      %v3327 = vsel %vm3132, inf, %v3325
      %v3328 = vmin.f32 %v3323, %v3327
      %v3329 = vsel %vm3230, %v2938, 0.0
      %v3330 = vsel %vm3209, %v3126, 0.0
      %v3331 = vadd.f32 %v3329, %v3330
      %v3332 = vadd.f32 %v3328, %v3331
      %v3334 = vrot.slane %v3332, 7
      %v3336 = vsel %vm3132, inf, %v3334
      %v3337 = vmin.f32 %v3332, %v3336
      %v3338 = vsel %vm3230, %v3126, 0.0
      %v3339 = vadd.f32 %v3337, %v3338
      %v3341 = vrot.slane %v3339, 5
      %v3343 = vrot.slane %v3339, 4
      %3344 = vrot.lane.b32.xlu0 %v3343, 96
      %v3345 = vpop.permute.xlu0 %3344
      %v3347 = vsel %vm3132, %v574, %v581
      %vm3348 = vcmask 1041408
      %v3349 = vsel %vm3348, %v3347, %v3341
      %vm3350 = vcmask 1042432
      %v3351 = vsel %vm3350, %v3349, %v3345
      %vm3352 = vcmask 257024
      %3353 = vst.msk [vmem:[%s257] sm:$0xf] %vm3352, %v3351
      %p3354 = scmp.lt.s32.totalorder %s17, 1
      %s3355 = scalar_select %p3354, %s17, 1
      %s3356 = smul.addr %s3355, 4
      %s3357 = scalar_lea.vmem %s6, %s3356
      // Predicated region
      $region45: #{triplet_loss_aligned_reid.1} parent=43 // pred_check
        %p3358 = pneg %p171
      $region46: #{triplet_loss_aligned_reid.1} parent=43 // pred_check_branch
        %3360 = sbr.rel (%p3358) target = $region48
      $region47: #{triplet_loss_aligned_reid.1} parent=43 // pred_region
        _
      $region48: #{triplet_loss_aligned_reid.1} parent=43 // pred_fallthru
        _
    $region44: #{triplet_loss_aligned_reid.1} parent=5 // pred_fallthru
      _
    %p3361 = scmp.le.s32.totalorder 2, %s12
    // Predicated region
    $region49: #{triplet_loss_aligned_reid.1} parent=5 // pred_check
      %p3362 = pneg %p3361
    $region50: #{triplet_loss_aligned_reid.1} parent=5 // pred_check_branch
      %3364 = sbr.rel (%p3362) target = $region52
    $region51: #{triplet_loss_aligned_reid.1} parent=5 // pred_region
      %s3365 = ssub.s32 %s12, 2
      // Predicated region
      $region53: #{triplet_loss_aligned_reid.1} parent=51 // pred_check
        %p3366 = pneg %p177
      $region54: #{triplet_loss_aligned_reid.1} parent=51 // pred_check_branch
        %3368 = sbr.rel (%p3366) target = $region56
      $region55: #{triplet_loss_aligned_reid.1} parent=51 // pred_region
        %p3369 = scmp.lt.s32.totalorder %s18, 1
        %s3370 = scalar_select %p3369, %s18, 1
        %s3371 = smul.addr %s3370, 4
        %s3372 = scalar_lea.vmem %s6, %s3371
      $region56: #{triplet_loss_aligned_reid.1} parent=51 // pred_fallthru
        _
    $region52: #{triplet_loss_aligned_reid.1} parent=5 // pred_fallthru
      _
  $region6: #{triplet_loss_aligned_reid.1} parent=0 // loop_footer
    %s16 = sadd.s32 1, %s12
  $region7: #{triplet_loss_aligned_reid.1} parent=0 // loop_footer_branch
    %11 = sbr.rel target = $region3
  $region8: #{triplet_loss_aligned_reid.1} parent=0 // loop_exit
    _

</llo_original>
